<compile_context>
chip_gen: v7x
topology: tpu7x:2x2x1
jax: 0.10.0
libtpu: 0.0.40
codegen_flags: <defaults>
</compile_context>

<pallas_src>
import jax
import jax.numpy as jnp
import numpy as np
from jax import lax
from jax.experimental import pallas as pl
from jax.experimental.pallas import tpu as pltpu

EPS = 1e-5


def _down_kernel(x_ref,
                 w1_ref, g1_ref, be1_ref,
                 w2_ref, g2_ref, be2_ref,
                 out_ref, pad1, pad2):
    H, W, N, Cin = x_ref.shape
    Ho, Wo = H // 2, W // 2
    Cout = out_ref.shape[-1]
    P = Ho * Wo * N

    # ---- MaxPool2d(2): pair rows then columns. H, W are major dims, so these
    # reshapes / maxes never touch the (sublane, lane) = (N, C) tile. ----
    x = x_ref[...]                                    # (2Ho, 2Wo, N, Cin) bf16
    x = x.reshape(Ho, 2, 2 * Wo, N, Cin)
    x = jnp.maximum(x[:, 0], x[:, 1])                 # (Ho, 2Wo, N, Cin)
    x = x.reshape(Ho, Wo, 2, N, Cin)
    pooled = jnp.maximum(x[:, :, 0], x[:, :, 1])      # (Ho, Wo, N, Cin) bf16

    def fill_pad(pad_ref, interior, cin):
        # padding=1: zero only the 1-pixel border, then write the interior.
        zrow = jnp.zeros((1, Wo + 2, N, cin), pad_ref.dtype)
        zcol = jnp.zeros((Ho, 1, N, cin), pad_ref.dtype)
        pad_ref[0:1, :, :, :] = zrow
        pad_ref[Ho + 1:Ho + 2, :, :, :] = zrow
        pad_ref[1:Ho + 1, 0:1, :, :] = zcol
        pad_ref[1:Ho + 1, Wo + 1:Wo + 2, :, :] = zcol
        pad_ref[1:Ho + 1, 1:Wo + 1, :, :] = interior

    def conv3x3(pad_ref, w_ref, cin):
        # 9 accumulating bf16 matmuls (f32 accumulation) -- no im2col patch
        # buffer, no cross-lane concat repack. Tap slices are major-dim only,
        # so each reshape to (P, cin) is layout-trivial (N % 8 == 0).
        taps = [pad_ref[dy:dy + Ho, dx:dx + Wo, :, :].reshape(P, cin)
                for dy in range(3) for dx in range(3)]
        acc = jnp.dot(taps[0], w_ref[0], preferred_element_type=jnp.float32)
        for t in range(1, 9):
            acc = acc + jnp.dot(taps[t], w_ref[t],
                                preferred_element_type=jnp.float32)
        return acc                                    # (P, Cout) f32

    def bn_relu(y, g_ref, be_ref):
        # Training-mode batch stats over (N, H, W) per channel; folded scale.
        mean = jnp.mean(y, axis=0, keepdims=True)
        yc = y - mean
        var = jnp.mean(yc * yc, axis=0, keepdims=True)    # two-pass, stable
        scale = lax.rsqrt(var + EPS) * g_ref[...]         # (1, Cout), EUP rsqrt
        return jnp.maximum(yc * scale + be_ref[...], 0.0)

    fill_pad(pad1, pooled, Cin)
    h1 = bn_relu(conv3x3(pad1, w1_ref, Cin), g1_ref, be1_ref)       # (P, Cout)
    # Write conv1's output directly into pad2's interior (no round-trip value).
    fill_pad(pad2, h1.reshape(Ho, Wo, N, Cout).astype(pad2.dtype), Cout)
    h2 = bn_relu(conv3x3(pad2, w2_ref, Cout), g2_ref, be2_ref)      # (P, Cout)
    out_ref[...] = h2                                 # natural layout, f32


def down_forward(x_nchw, params):
    """Pallas implementation of down(in_ch, out_ch).forward on an NCHW input."""
    N, Cin, H, W = x_nchw.shape
    assert H % 2 == 0 and W % 2 == 0
    assert N % 8 == 0, "batch chosen as a multiple of 8 for layout-trivial flattening"
    Ho, Wo = H // 2, W // 2
    Cout = params["w1"].shape[0]

    # NCHW -> HWNC with the bf16 cast fused into the same copy.
    x = jnp.transpose(x_nchw, (2, 3, 0, 1)).astype(jnp.bfloat16)

    def prep_w(w):
        # PyTorch (Cout, Cin, 3, 3) -> (9, Cin, Cout); tap index t = dy*3 + dx.
        cout, cin = w.shape[0], w.shape[1]
        return jnp.transpose(w, (2, 3, 1, 0)).reshape(9, cin, cout).astype(jnp.bfloat16)

    w1 = prep_w(params["w1"])
    w2 = prep_w(params["w2"])
    g1 = params["gamma1"].reshape(1, Cout).astype(jnp.float32)
    be1 = params["beta1"].reshape(1, Cout).astype(jnp.float32)
    g2 = params["gamma2"].reshape(1, Cout).astype(jnp.float32)
    be2 = params["beta2"].reshape(1, Cout).astype(jnp.float32)
    # Conv biases b1/b2 intentionally not passed: a per-channel constant added
    # before training-mode BN is exactly cancelled by the mean subtraction.

    out_flat = pl.pallas_call(
        _down_kernel,
        out_shape=jax.ShapeDtypeStruct((Ho * Wo * N, Cout), jnp.float32),
        scratch_shapes=[
            pltpu.VMEM((Ho + 2, Wo + 2, N, Cin), jnp.bfloat16),    # padded conv1 input
            pltpu.VMEM((Ho + 2, Wo + 2, N, Cout), jnp.bfloat16),   # padded conv2 input
        ],
        compiler_params=pltpu.CompilerParams(vmem_limit_bytes=48 * 1024 * 1024),
    )(x, w1, g1, be1, w2, g2, be2)

    out_hwnc = out_flat.reshape(Ho, Wo, N, Cout)       # metadata-only
    return jnp.transpose(out_hwnc, (2, 3, 0, 1))       # back to NCHW


# ---------------- pure-JAX reference (same math, XLA ops) ----------------
def ref_forward(x, params):
    def pool(x):
        return jnp.maximum(jnp.maximum(x[:, :, 0::2, 0::2], x[:, :, 0::2, 1::2]),
                           jnp.maximum(x[:, :, 1::2, 0::2], x[:, :, 1::2, 1::2]))

    def conv_bn_relu(x, w, b, g, be):
        y = lax.conv_general_dilated(x, w, (1, 1), "SAME",
                                     dimension_numbers=("NCHW", "OIHW", "NCHW"))
        y = y + b[None, :, None, None]
        mean = y.mean(axis=(0, 2, 3), keepdims=True)
        var = ((y - mean) ** 2).mean(axis=(0, 2, 3), keepdims=True)
        y = (y - mean) / jnp.sqrt(var + EPS) * g[None, :, None, None] + be[None, :, None, None]
        return jnp.maximum(y, 0.0)

    x = pool(x)
    x = conv_bn_relu(x, params["w1"], params["b1"], params["gamma1"], params["beta1"])
    x = conv_bn_relu(x, params["w2"], params["b2"], params["gamma2"], params["beta2"])
    return x


if __name__ == "__main__":
    key = jax.random.PRNGKey(0)
    N, Cin, Cout, H, W = 8, 4, 8, 16, 16
    ks = jax.random.split(key, 9)
    params = {
        "w1": 0.2 * jax.random.normal(ks[0], (Cout, Cin, 3, 3), jnp.float32),
        "b1": 0.1 * jax.random.normal(ks[1], (Cout,), jnp.float32),
        "gamma1": 1.0 + 0.1 * jax.random.normal(ks[2], (Cout,), jnp.float32),
        "beta1": 0.1 * jax.random.normal(ks[3], (Cout,), jnp.float32),
        "w2": 0.2 * jax.random.normal(ks[4], (Cout, Cout, 3, 3), jnp.float32),
        "b2": 0.1 * jax.random.normal(ks[5], (Cout,), jnp.float32),
        "gamma2": 1.0 + 0.1 * jax.random.normal(ks[6], (Cout,), jnp.float32),
        "beta2": 0.1 * jax.random.normal(ks[7], (Cout,), jnp.float32),
    }
    x = jax.random.normal(ks[8], (N, Cin, H, W), jnp.float32)

    out = jax.block_until_ready(down_forward(x, params))
    ref = jax.block_until_ready(ref_forward(x, params))
    np.testing.assert_allclose(np.asarray(out), np.asarray(ref), rtol=2e-2, atol=2e-2)
    print("KERNEL_OK")
</pallas_src>

<mosaic_0001>
module attributes {stable_mosaic.version = 11 : i64} {
  func.func @_down_kernel(%arg0: memref<16x16x8x4xbf16, #tpu.memory_space<vmem>>, %arg1: memref<9x4x8xbf16, #tpu.memory_space<vmem>>, %arg2: memref<1x8xf32, #tpu.memory_space<vmem>>, %arg3: memref<1x8xf32, #tpu.memory_space<vmem>>, %arg4: memref<9x8x8xbf16, #tpu.memory_space<vmem>>, %arg5: memref<1x8xf32, #tpu.memory_space<vmem>>, %arg6: memref<1x8xf32, #tpu.memory_space<vmem>>, %arg7: memref<512x8xf32, #tpu.memory_space<vmem>>, %arg8: memref<10x10x8x4xbf16, #tpu.memory_space<vmem>>, %arg9: memref<10x10x8x8xbf16, #tpu.memory_space<vmem>>) attributes {dimension_semantics = [], scalar_prefetch = 0 : i64, scratch_operands = 2 : i64, tpu.core_type = #tpu.core_type<tc>} {
    %c0 = arith.constant 0 : index
    %c0_0 = arith.constant 0 : index
    %c0_1 = arith.constant 0 : index
    %c0_2 = arith.constant 0 : index
    %0 = vector.load %arg0[%c0, %c0_0, %c0_1, %c0_2] : memref<16x16x8x4xbf16, #tpu.memory_space<vmem>>, vector<16x16x8x4xbf16>
    %1 = vector.shape_cast %0 : vector<16x16x8x4xbf16> to vector<8x2x16x8x4xbf16>
    %2 = vector.extract_strided_slice %1 {offsets = [0, 0, 0, 0, 0], sizes = [8, 1, 16, 8, 4], strides = [1, 1, 1, 1, 1]} : vector<8x2x16x8x4xbf16> to vector<8x1x16x8x4xbf16>
    %3 = vector.shape_cast %2 : vector<8x1x16x8x4xbf16> to vector<8x16x8x4xbf16>
    %4 = vector.extract_strided_slice %1 {offsets = [0, 1, 0, 0, 0], sizes = [8, 1, 16, 8, 4], strides = [1, 1, 1, 1, 1]} : vector<8x2x16x8x4xbf16> to vector<8x1x16x8x4xbf16>
    %5 = vector.shape_cast %4 : vector<8x1x16x8x4xbf16> to vector<8x16x8x4xbf16>
    %6 = arith.maximumf %3, %5 : vector<8x16x8x4xbf16>
    %7 = vector.shape_cast %6 : vector<8x16x8x4xbf16> to vector<8x8x2x8x4xbf16>
    %8 = vector.extract_strided_slice %7 {offsets = [0, 0, 0, 0, 0], sizes = [8, 8, 1, 8, 4], strides = [1, 1, 1, 1, 1]} : vector<8x8x2x8x4xbf16> to vector<8x8x1x8x4xbf16>
    %9 = vector.shape_cast %8 : vector<8x8x1x8x4xbf16> to vector<8x8x8x4xbf16>
    %10 = vector.extract_strided_slice %7 {offsets = [0, 0, 1, 0, 0], sizes = [8, 8, 1, 8, 4], strides = [1, 1, 1, 1, 1]} : vector<8x8x2x8x4xbf16> to vector<8x8x1x8x4xbf16>
    %11 = vector.shape_cast %10 : vector<8x8x1x8x4xbf16> to vector<8x8x8x4xbf16>
    %12 = arith.maximumf %9, %11 : vector<8x8x8x4xbf16>
    %cst = arith.constant 0.000000e+00 : bf16
    %13 = vector.broadcast %cst : bf16 to vector<1x10x8x4xbf16>
    %cst_3 = arith.constant 0.000000e+00 : bf16
    %14 = vector.broadcast %cst_3 : bf16 to vector<8x1x8x4xbf16>
    %c0_4 = arith.constant 0 : index
    %c0_5 = arith.constant 0 : index
    %c0_6 = arith.constant 0 : index
    %c0_7 = arith.constant 0 : index
    %15 = vector.load %arg8[%c0_4, %c0_5, %c0_6, %c0_7] : memref<10x10x8x4xbf16, #tpu.memory_space<vmem>>, vector<1x10x8x4xbf16>
    tpu.vector_store %arg8[%c0_4, %c0_5, %c0_6, %c0_7], %13 {strides = array<i32>} : memref<10x10x8x4xbf16, #tpu.memory_space<vmem>>, vector<1x10x8x4xbf16>,
    %c9 = arith.constant 9 : index
    %c0_8 = arith.constant 0 : index
    %c0_9 = arith.constant 0 : index
    %c0_10 = arith.constant 0 : index
    %16 = vector.load %arg8[%c9, %c0_8, %c0_9, %c0_10] : memref<10x10x8x4xbf16, #tpu.memory_space<vmem>>, vector<1x10x8x4xbf16>
    tpu.vector_store %arg8[%c9, %c0_8, %c0_9, %c0_10], %13 {strides = array<i32>} : memref<10x10x8x4xbf16, #tpu.memory_space<vmem>>, vector<1x10x8x4xbf16>,
    %c1 = arith.constant 1 : index
    %c0_11 = arith.constant 0 : index
    %c0_12 = arith.constant 0 : index
    %c0_13 = arith.constant 0 : index
    %17 = vector.load %arg8[%c1, %c0_11, %c0_12, %c0_13] : memref<10x10x8x4xbf16, #tpu.memory_space<vmem>>, vector<8x1x8x4xbf16>
    tpu.vector_store %arg8[%c1, %c0_11, %c0_12, %c0_13], %14 {strides = array<i32>} : memref<10x10x8x4xbf16, #tpu.memory_space<vmem>>, vector<8x1x8x4xbf16>,
    %c1_14 = arith.constant 1 : index
    %c9_15 = arith.constant 9 : index
    %c0_16 = arith.constant 0 : index
    %c0_17 = arith.constant 0 : index
    %18 = vector.load %arg8[%c1_14, %c9_15, %c0_16, %c0_17] : memref<10x10x8x4xbf16, #tpu.memory_space<vmem>>, vector<8x1x8x4xbf16>
    tpu.vector_store %arg8[%c1_14, %c9_15, %c0_16, %c0_17], %14 {strides = array<i32>} : memref<10x10x8x4xbf16, #tpu.memory_space<vmem>>, vector<8x1x8x4xbf16>,
    %c1_18 = arith.constant 1 : index
    %c1_19 = arith.constant 1 : index
    %c0_20 = arith.constant 0 : index
    %c0_21 = arith.constant 0 : index
    %19 = vector.load %arg8[%c1_18, %c1_19, %c0_20, %c0_21] : memref<10x10x8x4xbf16, #tpu.memory_space<vmem>>, vector<8x8x8x4xbf16>
    tpu.vector_store %arg8[%c1_18, %c1_19, %c0_20, %c0_21], %12 {strides = array<i32>} : memref<10x10x8x4xbf16, #tpu.memory_space<vmem>>, vector<8x8x8x4xbf16>,
    %c0_22 = arith.constant 0 : index
    %c0_23 = arith.constant 0 : index
    %c0_24 = arith.constant 0 : index
    %c0_25 = arith.constant 0 : index
    %20 = vector.load %arg8[%c0_22, %c0_23, %c0_24, %c0_25] : memref<10x10x8x4xbf16, #tpu.memory_space<vmem>>, vector<8x8x8x4xbf16>
    %21 = vector.shape_cast %20 : vector<8x8x8x4xbf16> to vector<512x4xbf16>
    %c0_26 = arith.constant 0 : index
    %c1_27 = arith.constant 1 : index
    %c0_28 = arith.constant 0 : index
    %c0_29 = arith.constant 0 : index
    %22 = vector.load %arg8[%c0_26, %c1_27, %c0_28, %c0_29] : memref<10x10x8x4xbf16, #tpu.memory_space<vmem>>, vector<8x8x8x4xbf16>
    %23 = vector.shape_cast %22 : vector<8x8x8x4xbf16> to vector<512x4xbf16>
    %c0_30 = arith.constant 0 : index
    %c2 = arith.constant 2 : index
    %c0_31 = arith.constant 0 : index
    %c0_32 = arith.constant 0 : index
    %24 = vector.load %arg8[%c0_30, %c2, %c0_31, %c0_32] : memref<10x10x8x4xbf16, #tpu.memory_space<vmem>>, vector<8x8x8x4xbf16>
    %25 = vector.shape_cast %24 : vector<8x8x8x4xbf16> to vector<512x4xbf16>
    %c1_33 = arith.constant 1 : index
    %c0_34 = arith.constant 0 : index
    %c0_35 = arith.constant 0 : index
    %c0_36 = arith.constant 0 : index
    %26 = vector.load %arg8[%c1_33, %c0_34, %c0_35, %c0_36] : memref<10x10x8x4xbf16, #tpu.memory_space<vmem>>, vector<8x8x8x4xbf16>
    %27 = vector.shape_cast %26 : vector<8x8x8x4xbf16> to vector<512x4xbf16>
    %c1_37 = arith.constant 1 : index
    %c1_38 = arith.constant 1 : index
    %c0_39 = arith.constant 0 : index
    %c0_40 = arith.constant 0 : index
    %28 = vector.load %arg8[%c1_37, %c1_38, %c0_39, %c0_40] : memref<10x10x8x4xbf16, #tpu.memory_space<vmem>>, vector<8x8x8x4xbf16>
    %29 = vector.shape_cast %28 : vector<8x8x8x4xbf16> to vector<512x4xbf16>
    %c1_41 = arith.constant 1 : index
    %c2_42 = arith.constant 2 : index
    %c0_43 = arith.constant 0 : index
    %c0_44 = arith.constant 0 : index
    %30 = vector.load %arg8[%c1_41, %c2_42, %c0_43, %c0_44] : memref<10x10x8x4xbf16, #tpu.memory_space<vmem>>, vector<8x8x8x4xbf16>
    %31 = vector.shape_cast %30 : vector<8x8x8x4xbf16> to vector<512x4xbf16>
    %c2_45 = arith.constant 2 : index
    %c0_46 = arith.constant 0 : index
    %c0_47 = arith.constant 0 : index
    %c0_48 = arith.constant 0 : index
    %32 = vector.load %arg8[%c2_45, %c0_46, %c0_47, %c0_48] : memref<10x10x8x4xbf16, #tpu.memory_space<vmem>>, vector<8x8x8x4xbf16>
    %33 = vector.shape_cast %32 : vector<8x8x8x4xbf16> to vector<512x4xbf16>
    %c2_49 = arith.constant 2 : index
    %c1_50 = arith.constant 1 : index
    %c0_51 = arith.constant 0 : index
    %c0_52 = arith.constant 0 : index
    %34 = vector.load %arg8[%c2_49, %c1_50, %c0_51, %c0_52] : memref<10x10x8x4xbf16, #tpu.memory_space<vmem>>, vector<8x8x8x4xbf16>
    %35 = vector.shape_cast %34 : vector<8x8x8x4xbf16> to vector<512x4xbf16>
    %c2_53 = arith.constant 2 : index
    %c2_54 = arith.constant 2 : index
    %c0_55 = arith.constant 0 : index
    %c0_56 = arith.constant 0 : index
    %36 = vector.load %arg8[%c2_53, %c2_54, %c0_55, %c0_56] : memref<10x10x8x4xbf16, #tpu.memory_space<vmem>>, vector<8x8x8x4xbf16>
    %37 = vector.shape_cast %36 : vector<8x8x8x4xbf16> to vector<512x4xbf16>
    %c0_57 = arith.constant 0 : index
    %c0_58 = arith.constant 0 : index
    %c0_59 = arith.constant 0 : index
    %38 = vector.load %arg1[%c0_57, %c0_58, %c0_59] : memref<9x4x8xbf16, #tpu.memory_space<vmem>>, vector<1x4x8xbf16>
    %39 = vector.shape_cast %38 : vector<1x4x8xbf16> to vector<4x8xbf16>
    %cst_60 = arith.constant dense<0.000000e+00> : vector<512x8xf32>
    %40 = tpu.matmul %21, %39, %cst_60 {dimension_numbers = #tpu.dot_dimension_numbers<[1], [0], [0], [1], [0, 0, 1, 1], [], []>} : vector<512x4xbf16>, vector<4x8xbf16>, vector<512x8xf32> -> vector<512x8xf32>
    %c1_61 = arith.constant 1 : index
    %c0_62 = arith.constant 0 : index
    %c0_63 = arith.constant 0 : index
    %41 = vector.load %arg1[%c1_61, %c0_62, %c0_63] : memref<9x4x8xbf16, #tpu.memory_space<vmem>>, vector<1x4x8xbf16>
    %42 = vector.shape_cast %41 : vector<1x4x8xbf16> to vector<4x8xbf16>
    %cst_64 = arith.constant dense<0.000000e+00> : vector<512x8xf32>
    %43 = tpu.matmul %23, %42, %cst_64 {dimension_numbers = #tpu.dot_dimension_numbers<[1], [0], [0], [1], [0, 0, 1, 1], [], []>} : vector<512x4xbf16>, vector<4x8xbf16>, vector<512x8xf32> -> vector<512x8xf32>
    %44 = arith.addf %40, %43 : vector<512x8xf32>
    %c2_65 = arith.constant 2 : index
    %c0_66 = arith.constant 0 : index
    %c0_67 = arith.constant 0 : index
    %45 = vector.load %arg1[%c2_65, %c0_66, %c0_67] : memref<9x4x8xbf16, #tpu.memory_space<vmem>>, vector<1x4x8xbf16>
    %46 = vector.shape_cast %45 : vector<1x4x8xbf16> to vector<4x8xbf16>
    %cst_68 = arith.constant dense<0.000000e+00> : vector<512x8xf32>
    %47 = tpu.matmul %25, %46, %cst_68 {dimension_numbers = #tpu.dot_dimension_numbers<[1], [0], [0], [1], [0, 0, 1, 1], [], []>} : vector<512x4xbf16>, vector<4x8xbf16>, vector<512x8xf32> -> vector<512x8xf32>
    %48 = arith.addf %44, %47 : vector<512x8xf32>
    %c3 = arith.constant 3 : index
    %c0_69 = arith.constant 0 : index
    %c0_70 = arith.constant 0 : index
    %49 = vector.load %arg1[%c3, %c0_69, %c0_70] : memref<9x4x8xbf16, #tpu.memory_space<vmem>>, vector<1x4x8xbf16>
    %50 = vector.shape_cast %49 : vector<1x4x8xbf16> to vector<4x8xbf16>
    %cst_71 = arith.constant dense<0.000000e+00> : vector<512x8xf32>
    %51 = tpu.matmul %27, %50, %cst_71 {dimension_numbers = #tpu.dot_dimension_numbers<[1], [0], [0], [1], [0, 0, 1, 1], [], []>} : vector<512x4xbf16>, vector<4x8xbf16>, vector<512x8xf32> -> vector<512x8xf32>
    %52 = arith.addf %48, %51 : vector<512x8xf32>
    %c4 = arith.constant 4 : index
    %c0_72 = arith.constant 0 : index
    %c0_73 = arith.constant 0 : index
    %53 = vector.load %arg1[%c4, %c0_72, %c0_73] : memref<9x4x8xbf16, #tpu.memory_space<vmem>>, vector<1x4x8xbf16>
    %54 = vector.shape_cast %53 : vector<1x4x8xbf16> to vector<4x8xbf16>
    %cst_74 = arith.constant dense<0.000000e+00> : vector<512x8xf32>
    %55 = tpu.matmul %29, %54, %cst_74 {dimension_numbers = #tpu.dot_dimension_numbers<[1], [0], [0], [1], [0, 0, 1, 1], [], []>} : vector<512x4xbf16>, vector<4x8xbf16>, vector<512x8xf32> -> vector<512x8xf32>
    %56 = arith.addf %52, %55 : vector<512x8xf32>
    %c5 = arith.constant 5 : index
    %c0_75 = arith.constant 0 : index
    %c0_76 = arith.constant 0 : index
    %57 = vector.load %arg1[%c5, %c0_75, %c0_76] : memref<9x4x8xbf16, #tpu.memory_space<vmem>>, vector<1x4x8xbf16>
    %58 = vector.shape_cast %57 : vector<1x4x8xbf16> to vector<4x8xbf16>
    %cst_77 = arith.constant dense<0.000000e+00> : vector<512x8xf32>
    %59 = tpu.matmul %31, %58, %cst_77 {dimension_numbers = #tpu.dot_dimension_numbers<[1], [0], [0], [1], [0, 0, 1, 1], [], []>} : vector<512x4xbf16>, vector<4x8xbf16>, vector<512x8xf32> -> vector<512x8xf32>
    %60 = arith.addf %56, %59 : vector<512x8xf32>
    %c6 = arith.constant 6 : index
    %c0_78 = arith.constant 0 : index
    %c0_79 = arith.constant 0 : index
    %61 = vector.load %arg1[%c6, %c0_78, %c0_79] : memref<9x4x8xbf16, #tpu.memory_space<vmem>>, vector<1x4x8xbf16>
    %62 = vector.shape_cast %61 : vector<1x4x8xbf16> to vector<4x8xbf16>
    %cst_80 = arith.constant dense<0.000000e+00> : vector<512x8xf32>
    %63 = tpu.matmul %33, %62, %cst_80 {dimension_numbers = #tpu.dot_dimension_numbers<[1], [0], [0], [1], [0, 0, 1, 1], [], []>} : vector<512x4xbf16>, vector<4x8xbf16>, vector<512x8xf32> -> vector<512x8xf32>
    %64 = arith.addf %60, %63 : vector<512x8xf32>
    %c7 = arith.constant 7 : index
    %c0_81 = arith.constant 0 : index
    %c0_82 = arith.constant 0 : index
    %65 = vector.load %arg1[%c7, %c0_81, %c0_82] : memref<9x4x8xbf16, #tpu.memory_space<vmem>>, vector<1x4x8xbf16>
    %66 = vector.shape_cast %65 : vector<1x4x8xbf16> to vector<4x8xbf16>
    %cst_83 = arith.constant dense<0.000000e+00> : vector<512x8xf32>
    %67 = tpu.matmul %35, %66, %cst_83 {dimension_numbers = #tpu.dot_dimension_numbers<[1], [0], [0], [1], [0, 0, 1, 1], [], []>} : vector<512x4xbf16>, vector<4x8xbf16>, vector<512x8xf32> -> vector<512x8xf32>
    %68 = arith.addf %64, %67 : vector<512x8xf32>
    %c8 = arith.constant 8 : index
    %c0_84 = arith.constant 0 : index
    %c0_85 = arith.constant 0 : index
    %69 = vector.load %arg1[%c8, %c0_84, %c0_85] : memref<9x4x8xbf16, #tpu.memory_space<vmem>>, vector<1x4x8xbf16>
    %70 = vector.shape_cast %69 : vector<1x4x8xbf16> to vector<4x8xbf16>
    %cst_86 = arith.constant dense<0.000000e+00> : vector<512x8xf32>
    %71 = tpu.matmul %37, %70, %cst_86 {dimension_numbers = #tpu.dot_dimension_numbers<[1], [0], [0], [1], [0, 0, 1, 1], [], []>} : vector<512x4xbf16>, vector<4x8xbf16>, vector<512x8xf32> -> vector<512x8xf32>
    %72 = arith.addf %68, %71 : vector<512x8xf32>
    %cst_87 = arith.constant dense<0.000000e+00> : vector<8xf32>
    %73 = vector.multi_reduction <add>, %72, %cst_87 [0] : vector<512x8xf32> to vector<8xf32>
    %74 = vector.shape_cast %73 : vector<8xf32> to vector<1x8xf32>
    %cst_88 = arith.constant 5.120000e+02 : f32
    %75 = vector.broadcast %cst_88 : f32 to vector<1x8xf32>
    %76 = arith.divf %74, %75 : vector<1x8xf32>
    %77 = vector.broadcast %76 : vector<1x8xf32> to vector<512x8xf32>
    %78 = arith.subf %72, %77 : vector<512x8xf32>
    %79 = arith.mulf %78, %78 : vector<512x8xf32>
    %cst_89 = arith.constant dense<0.000000e+00> : vector<8xf32>
    %80 = vector.multi_reduction <add>, %79, %cst_89 [0] : vector<512x8xf32> to vector<8xf32>
    %81 = vector.shape_cast %80 : vector<8xf32> to vector<1x8xf32>
    %cst_90 = arith.constant 5.120000e+02 : f32
    %82 = vector.broadcast %cst_90 : f32 to vector<1x8xf32>
    %83 = arith.divf %81, %82 : vector<1x8xf32>
    %cst_91 = arith.constant 9.99999974E-6 : f32
    %84 = vector.broadcast %cst_91 : f32 to vector<1x8xf32>
    %85 = arith.addf %83, %84 : vector<1x8xf32>
    %86 = math.rsqrt %85 : vector<1x8xf32>
    %c0_92 = arith.constant 0 : index
    %c0_93 = arith.constant 0 : index
    %87 = vector.load %arg2[%c0_92, %c0_93] : memref<1x8xf32, #tpu.memory_space<vmem>>, vector<1x8xf32>
    %88 = arith.mulf %86, %87 : vector<1x8xf32>
    %89 = vector.broadcast %88 : vector<1x8xf32> to vector<512x8xf32>
    %90 = arith.mulf %78, %89 : vector<512x8xf32>
    %c0_94 = arith.constant 0 : index
    %c0_95 = arith.constant 0 : index
    %91 = vector.load %arg3[%c0_94, %c0_95] : memref<1x8xf32, #tpu.memory_space<vmem>>, vector<1x8xf32>
    %92 = vector.broadcast %91 : vector<1x8xf32> to vector<512x8xf32>
    %93 = arith.addf %90, %92 : vector<512x8xf32>
    %cst_96 = arith.constant 0.000000e+00 : f32
    %94 = vector.broadcast %cst_96 : f32 to vector<512x8xf32>
    %95 = arith.maximumf %93, %94 : vector<512x8xf32>
    %96 = vector.shape_cast %95 : vector<512x8xf32> to vector<8x8x8x8xf32>
    %97 = arith.truncf %96 : vector<8x8x8x8xf32> to vector<8x8x8x8xbf16>
    %cst_97 = arith.constant 0.000000e+00 : bf16
    %98 = vector.broadcast %cst_97 : bf16 to vector<1x10x8x8xbf16>
    %cst_98 = arith.constant 0.000000e+00 : bf16
    %99 = vector.broadcast %cst_98 : bf16 to vector<8x1x8x8xbf16>
    %c0_99 = arith.constant 0 : index
    %c0_100 = arith.constant 0 : index
    %c0_101 = arith.constant 0 : index
    %c0_102 = arith.constant 0 : index
    %100 = vector.load %arg9[%c0_99, %c0_100, %c0_101, %c0_102] : memref<10x10x8x8xbf16, #tpu.memory_space<vmem>>, vector<1x10x8x8xbf16>
    tpu.vector_store %arg9[%c0_99, %c0_100, %c0_101, %c0_102], %98 {strides = array<i32>} : memref<10x10x8x8xbf16, #tpu.memory_space<vmem>>, vector<1x10x8x8xbf16>,
    %c9_103 = arith.constant 9 : index
    %c0_104 = arith.constant 0 : index
    %c0_105 = arith.constant 0 : index
    %c0_106 = arith.constant 0 : index
    %101 = vector.load %arg9[%c9_103, %c0_104, %c0_105, %c0_106] : memref<10x10x8x8xbf16, #tpu.memory_space<vmem>>, vector<1x10x8x8xbf16>
    tpu.vector_store %arg9[%c9_103, %c0_104, %c0_105, %c0_106], %98 {strides = array<i32>} : memref<10x10x8x8xbf16, #tpu.memory_space<vmem>>, vector<1x10x8x8xbf16>,
    %c1_107 = arith.constant 1 : index
    %c0_108 = arith.constant 0 : index
    %c0_109 = arith.constant 0 : index
    %c0_110 = arith.constant 0 : index
    %102 = vector.load %arg9[%c1_107, %c0_108, %c0_109, %c0_110] : memref<10x10x8x8xbf16, #tpu.memory_space<vmem>>, vector<8x1x8x8xbf16>
    tpu.vector_store %arg9[%c1_107, %c0_108, %c0_109, %c0_110], %99 {strides = array<i32>} : memref<10x10x8x8xbf16, #tpu.memory_space<vmem>>, vector<8x1x8x8xbf16>,
    %c1_111 = arith.constant 1 : index
    %c9_112 = arith.constant 9 : index
    %c0_113 = arith.constant 0 : index
    %c0_114 = arith.constant 0 : index
    %103 = vector.load %arg9[%c1_111, %c9_112, %c0_113, %c0_114] : memref<10x10x8x8xbf16, #tpu.memory_space<vmem>>, vector<8x1x8x8xbf16>
    tpu.vector_store %arg9[%c1_111, %c9_112, %c0_113, %c0_114], %99 {strides = array<i32>} : memref<10x10x8x8xbf16, #tpu.memory_space<vmem>>, vector<8x1x8x8xbf16>,
    %c1_115 = arith.constant 1 : index
    %c1_116 = arith.constant 1 : index
    %c0_117 = arith.constant 0 : index
    %c0_118 = arith.constant 0 : index
    %104 = vector.load %arg9[%c1_115, %c1_116, %c0_117, %c0_118] : memref<10x10x8x8xbf16, #tpu.memory_space<vmem>>, vector<8x8x8x8xbf16>
    tpu.vector_store %arg9[%c1_115, %c1_116, %c0_117, %c0_118], %97 {strides = array<i32>} : memref<10x10x8x8xbf16, #tpu.memory_space<vmem>>, vector<8x8x8x8xbf16>,
    %c0_119 = arith.constant 0 : index
    %c0_120 = arith.constant 0 : index
    %c0_121 = arith.constant 0 : index
    %c0_122 = arith.constant 0 : index
    %105 = vector.load %arg9[%c0_119, %c0_120, %c0_121, %c0_122] : memref<10x10x8x8xbf16, #tpu.memory_space<vmem>>, vector<8x8x8x8xbf16>
    %106 = vector.shape_cast %105 : vector<8x8x8x8xbf16> to vector<512x8xbf16>
    %c0_123 = arith.constant 0 : index
    %c1_124 = arith.constant 1 : index
    %c0_125 = arith.constant 0 : index
    %c0_126 = arith.constant 0 : index
    %107 = vector.load %arg9[%c0_123, %c1_124, %c0_125, %c0_126] : memref<10x10x8x8xbf16, #tpu.memory_space<vmem>>, vector<8x8x8x8xbf16>
    %108 = vector.shape_cast %107 : vector<8x8x8x8xbf16> to vector<512x8xbf16>
    %c0_127 = arith.constant 0 : index
    %c2_128 = arith.constant 2 : index
    %c0_129 = arith.constant 0 : index
    %c0_130 = arith.constant 0 : index
    %109 = vector.load %arg9[%c0_127, %c2_128, %c0_129, %c0_130] : memref<10x10x8x8xbf16, #tpu.memory_space<vmem>>, vector<8x8x8x8xbf16>
    %110 = vector.shape_cast %109 : vector<8x8x8x8xbf16> to vector<512x8xbf16>
    %c1_131 = arith.constant 1 : index
    %c0_132 = arith.constant 0 : index
    %c0_133 = arith.constant 0 : index
    %c0_134 = arith.constant 0 : index
    %111 = vector.load %arg9[%c1_131, %c0_132, %c0_133, %c0_134] : memref<10x10x8x8xbf16, #tpu.memory_space<vmem>>, vector<8x8x8x8xbf16>
    %112 = vector.shape_cast %111 : vector<8x8x8x8xbf16> to vector<512x8xbf16>
    %c1_135 = arith.constant 1 : index
    %c1_136 = arith.constant 1 : index
    %c0_137 = arith.constant 0 : index
    %c0_138 = arith.constant 0 : index
    %113 = vector.load %arg9[%c1_135, %c1_136, %c0_137, %c0_138] : memref<10x10x8x8xbf16, #tpu.memory_space<vmem>>, vector<8x8x8x8xbf16>
    %114 = vector.shape_cast %113 : vector<8x8x8x8xbf16> to vector<512x8xbf16>
    %c1_139 = arith.constant 1 : index
    %c2_140 = arith.constant 2 : index
    %c0_141 = arith.constant 0 : index
    %c0_142 = arith.constant 0 : index
    %115 = vector.load %arg9[%c1_139, %c2_140, %c0_141, %c0_142] : memref<10x10x8x8xbf16, #tpu.memory_space<vmem>>, vector<8x8x8x8xbf16>
    %116 = vector.shape_cast %115 : vector<8x8x8x8xbf16> to vector<512x8xbf16>
    %c2_143 = arith.constant 2 : index
    %c0_144 = arith.constant 0 : index
    %c0_145 = arith.constant 0 : index
    %c0_146 = arith.constant 0 : index
    %117 = vector.load %arg9[%c2_143, %c0_144, %c0_145, %c0_146] : memref<10x10x8x8xbf16, #tpu.memory_space<vmem>>, vector<8x8x8x8xbf16>
    %118 = vector.shape_cast %117 : vector<8x8x8x8xbf16> to vector<512x8xbf16>
    %c2_147 = arith.constant 2 : index
    %c1_148 = arith.constant 1 : index
    %c0_149 = arith.constant 0 : index
    %c0_150 = arith.constant 0 : index
    %119 = vector.load %arg9[%c2_147, %c1_148, %c0_149, %c0_150] : memref<10x10x8x8xbf16, #tpu.memory_space<vmem>>, vector<8x8x8x8xbf16>
    %120 = vector.shape_cast %119 : vector<8x8x8x8xbf16> to vector<512x8xbf16>
    %c2_151 = arith.constant 2 : index
    %c2_152 = arith.constant 2 : index
    %c0_153 = arith.constant 0 : index
    %c0_154 = arith.constant 0 : index
    %121 = vector.load %arg9[%c2_151, %c2_152, %c0_153, %c0_154] : memref<10x10x8x8xbf16, #tpu.memory_space<vmem>>, vector<8x8x8x8xbf16>
    %122 = vector.shape_cast %121 : vector<8x8x8x8xbf16> to vector<512x8xbf16>
    %c0_155 = arith.constant 0 : index
    %c0_156 = arith.constant 0 : index
    %c0_157 = arith.constant 0 : index
    %123 = vector.load %arg4[%c0_155, %c0_156, %c0_157] : memref<9x8x8xbf16, #tpu.memory_space<vmem>>, vector<1x8x8xbf16>
    %124 = vector.shape_cast %123 : vector<1x8x8xbf16> to vector<8x8xbf16>
    %cst_158 = arith.constant dense<0.000000e+00> : vector<512x8xf32>
    %125 = tpu.matmul %106, %124, %cst_158 {dimension_numbers = #tpu.dot_dimension_numbers<[1], [0], [0], [1], [0, 0, 1, 1], [], []>} : vector<512x8xbf16>, vector<8x8xbf16>, vector<512x8xf32> -> vector<512x8xf32>
    %c1_159 = arith.constant 1 : index
    %c0_160 = arith.constant 0 : index
    %c0_161 = arith.constant 0 : index
    %126 = vector.load %arg4[%c1_159, %c0_160, %c0_161] : memref<9x8x8xbf16, #tpu.memory_space<vmem>>, vector<1x8x8xbf16>
    %127 = vector.shape_cast %126 : vector<1x8x8xbf16> to vector<8x8xbf16>
    %cst_162 = arith.constant dense<0.000000e+00> : vector<512x8xf32>
    %128 = tpu.matmul %108, %127, %cst_162 {dimension_numbers = #tpu.dot_dimension_numbers<[1], [0], [0], [1], [0, 0, 1, 1], [], []>} : vector<512x8xbf16>, vector<8x8xbf16>, vector<512x8xf32> -> vector<512x8xf32>
    %129 = arith.addf %125, %128 : vector<512x8xf32>
    %c2_163 = arith.constant 2 : index
    %c0_164 = arith.constant 0 : index
    %c0_165 = arith.constant 0 : index
    %130 = vector.load %arg4[%c2_163, %c0_164, %c0_165] : memref<9x8x8xbf16, #tpu.memory_space<vmem>>, vector<1x8x8xbf16>
    %131 = vector.shape_cast %130 : vector<1x8x8xbf16> to vector<8x8xbf16>
    %cst_166 = arith.constant dense<0.000000e+00> : vector<512x8xf32>
    %132 = tpu.matmul %110, %131, %cst_166 {dimension_numbers = #tpu.dot_dimension_numbers<[1], [0], [0], [1], [0, 0, 1, 1], [], []>} : vector<512x8xbf16>, vector<8x8xbf16>, vector<512x8xf32> -> vector<512x8xf32>
    %133 = arith.addf %129, %132 : vector<512x8xf32>
    %c3_167 = arith.constant 3 : index
    %c0_168 = arith.constant 0 : index
    %c0_169 = arith.constant 0 : index
    %134 = vector.load %arg4[%c3_167, %c0_168, %c0_169] : memref<9x8x8xbf16, #tpu.memory_space<vmem>>, vector<1x8x8xbf16>
    %135 = vector.shape_cast %134 : vector<1x8x8xbf16> to vector<8x8xbf16>
    %cst_170 = arith.constant dense<0.000000e+00> : vector<512x8xf32>
    %136 = tpu.matmul %112, %135, %cst_170 {dimension_numbers = #tpu.dot_dimension_numbers<[1], [0], [0], [1], [0, 0, 1, 1], [], []>} : vector<512x8xbf16>, vector<8x8xbf16>, vector<512x8xf32> -> vector<512x8xf32>
    %137 = arith.addf %133, %136 : vector<512x8xf32>
    %c4_171 = arith.constant 4 : index
    %c0_172 = arith.constant 0 : index
    %c0_173 = arith.constant 0 : index
    %138 = vector.load %arg4[%c4_171, %c0_172, %c0_173] : memref<9x8x8xbf16, #tpu.memory_space<vmem>>, vector<1x8x8xbf16>
    %139 = vector.shape_cast %138 : vector<1x8x8xbf16> to vector<8x8xbf16>
    %cst_174 = arith.constant dense<0.000000e+00> : vector<512x8xf32>
    %140 = tpu.matmul %114, %139, %cst_174 {dimension_numbers = #tpu.dot_dimension_numbers<[1], [0], [0], [1], [0, 0, 1, 1], [], []>} : vector<512x8xbf16>, vector<8x8xbf16>, vector<512x8xf32> -> vector<512x8xf32>
    %141 = arith.addf %137, %140 : vector<512x8xf32>
    %c5_175 = arith.constant 5 : index
    %c0_176 = arith.constant 0 : index
    %c0_177 = arith.constant 0 : index
    %142 = vector.load %arg4[%c5_175, %c0_176, %c0_177] : memref<9x8x8xbf16, #tpu.memory_space<vmem>>, vector<1x8x8xbf16>
    %143 = vector.shape_cast %142 : vector<1x8x8xbf16> to vector<8x8xbf16>
    %cst_178 = arith.constant dense<0.000000e+00> : vector<512x8xf32>
    %144 = tpu.matmul %116, %143, %cst_178 {dimension_numbers = #tpu.dot_dimension_numbers<[1], [0], [0], [1], [0, 0, 1, 1], [], []>} : vector<512x8xbf16>, vector<8x8xbf16>, vector<512x8xf32> -> vector<512x8xf32>
    %145 = arith.addf %141, %144 : vector<512x8xf32>
    %c6_179 = arith.constant 6 : index
    %c0_180 = arith.constant 0 : index
    %c0_181 = arith.constant 0 : index
    %146 = vector.load %arg4[%c6_179, %c0_180, %c0_181] : memref<9x8x8xbf16, #tpu.memory_space<vmem>>, vector<1x8x8xbf16>
    %147 = vector.shape_cast %146 : vector<1x8x8xbf16> to vector<8x8xbf16>
    %cst_182 = arith.constant dense<0.000000e+00> : vector<512x8xf32>
    %148 = tpu.matmul %118, %147, %cst_182 {dimension_numbers = #tpu.dot_dimension_numbers<[1], [0], [0], [1], [0, 0, 1, 1], [], []>} : vector<512x8xbf16>, vector<8x8xbf16>, vector<512x8xf32> -> vector<512x8xf32>
    %149 = arith.addf %145, %148 : vector<512x8xf32>
    %c7_183 = arith.constant 7 : index
    %c0_184 = arith.constant 0 : index
    %c0_185 = arith.constant 0 : index
    %150 = vector.load %arg4[%c7_183, %c0_184, %c0_185] : memref<9x8x8xbf16, #tpu.memory_space<vmem>>, vector<1x8x8xbf16>
    %151 = vector.shape_cast %150 : vector<1x8x8xbf16> to vector<8x8xbf16>
    %cst_186 = arith.constant dense<0.000000e+00> : vector<512x8xf32>
    %152 = tpu.matmul %120, %151, %cst_186 {dimension_numbers = #tpu.dot_dimension_numbers<[1], [0], [0], [1], [0, 0, 1, 1], [], []>} : vector<512x8xbf16>, vector<8x8xbf16>, vector<512x8xf32> -> vector<512x8xf32>
    %153 = arith.addf %149, %152 : vector<512x8xf32>
    %c8_187 = arith.constant 8 : index
    %c0_188 = arith.constant 0 : index
    %c0_189 = arith.constant 0 : index
    %154 = vector.load %arg4[%c8_187, %c0_188, %c0_189] : memref<9x8x8xbf16, #tpu.memory_space<vmem>>, vector<1x8x8xbf16>
    %155 = vector.shape_cast %154 : vector<1x8x8xbf16> to vector<8x8xbf16>
    %cst_190 = arith.constant dense<0.000000e+00> : vector<512x8xf32>
    %156 = tpu.matmul %122, %155, %cst_190 {dimension_numbers = #tpu.dot_dimension_numbers<[1], [0], [0], [1], [0, 0, 1, 1], [], []>} : vector<512x8xbf16>, vector<8x8xbf16>, vector<512x8xf32> -> vector<512x8xf32>
    %157 = arith.addf %153, %156 : vector<512x8xf32>
    %cst_191 = arith.constant dense<0.000000e+00> : vector<8xf32>
    %158 = vector.multi_reduction <add>, %157, %cst_191 [0] : vector<512x8xf32> to vector<8xf32>
    %159 = vector.shape_cast %158 : vector<8xf32> to vector<1x8xf32>
    %cst_192 = arith.constant 5.120000e+02 : f32
    %160 = vector.broadcast %cst_192 : f32 to vector<1x8xf32>
    %161 = arith.divf %159, %160 : vector<1x8xf32>
    %162 = vector.broadcast %161 : vector<1x8xf32> to vector<512x8xf32>
    %163 = arith.subf %157, %162 : vector<512x8xf32>
    %164 = arith.mulf %163, %163 : vector<512x8xf32>
    %cst_193 = arith.constant dense<0.000000e+00> : vector<8xf32>
    %165 = vector.multi_reduction <add>, %164, %cst_193 [0] : vector<512x8xf32> to vector<8xf32>
    %166 = vector.shape_cast %165 : vector<8xf32> to vector<1x8xf32>
    %cst_194 = arith.constant 5.120000e+02 : f32
    %167 = vector.broadcast %cst_194 : f32 to vector<1x8xf32>
    %168 = arith.divf %166, %167 : vector<1x8xf32>
    %cst_195 = arith.constant 9.99999974E-6 : f32
    %169 = vector.broadcast %cst_195 : f32 to vector<1x8xf32>
    %170 = arith.addf %168, %169 : vector<1x8xf32>
    %171 = math.rsqrt %170 : vector<1x8xf32>
    %c0_196 = arith.constant 0 : index
    %c0_197 = arith.constant 0 : index
    %172 = vector.load %arg5[%c0_196, %c0_197] : memref<1x8xf32, #tpu.memory_space<vmem>>, vector<1x8xf32>
    %173 = arith.mulf %171, %172 : vector<1x8xf32>
    %174 = vector.broadcast %173 : vector<1x8xf32> to vector<512x8xf32>
    %175 = arith.mulf %163, %174 : vector<512x8xf32>
    %c0_198 = arith.constant 0 : index
    %c0_199 = arith.constant 0 : index
    %176 = vector.load %arg6[%c0_198, %c0_199] : memref<1x8xf32, #tpu.memory_space<vmem>>, vector<1x8xf32>
    %177 = vector.broadcast %176 : vector<1x8xf32> to vector<512x8xf32>
    %178 = arith.addf %175, %177 : vector<512x8xf32>
    %cst_200 = arith.constant 0.000000e+00 : f32
    %179 = vector.broadcast %cst_200 : f32 to vector<512x8xf32>
    %180 = arith.maximumf %178, %179 : vector<512x8xf32>
    %c0_201 = arith.constant 0 : index
    %c0_202 = arith.constant 0 : index
    %181 = vector.load %arg7[%c0_201, %c0_202] : memref<512x8xf32, #tpu.memory_space<vmem>>, vector<512x8xf32>
    tpu.vector_store %arg7[%c0_201, %c0_202], %180 {strides = array<i32>} : memref<512x8xf32, #tpu.memory_space<vmem>>, vector<512x8xf32>,
    return
  }
}

</mosaic_0001>

<llo_original>
// kernel: tpu_custom_call.1
$region0: #{tpu_custom_call.1}
  #allocation0 [shape = 'u32[]', space=smem, size = 0x4, offset = 0x4, fixed_abs, tag = 'smem constant byte address 0x4 - core index']
  #allocation1 [shape = 'u32[144,128]{1,0:T(1,128)}', space=vmem, size = 0x12000, scoped, tag = 'internal scratch']
  #allocation2 [shape = 'bf16[10,10,8,4]{3,2,1,0:T(8,128)(2,1)}', space=vmem, size = 0x32000, scoped, tag = 'scratch operand']
  #allocation3 [shape = 'bf16[10,10,8,8]{3,2,1,0:T(8,128)(2,1)}', space=vmem, size = 0x32000, scoped, tag = 'scratch operand']
  %s0 = inlined_call_operand.vmem [shape: bf16[16,16,8,4], index: 0, kind: input, shape index: {}]
  %s1 = inlined_call_operand.vmem [shape: bf16[9,4,8], index: 1, kind: input, shape index: {}]
  %s2 = inlined_call_operand.vmem [shape: f32[1,8], index: 2, kind: input, shape index: {}]
  %s3 = inlined_call_operand.vmem [shape: f32[1,8], index: 3, kind: input, shape index: {}]
  %s4 = inlined_call_operand.vmem [shape: bf16[9,8,8], index: 4, kind: input, shape index: {}]
  %s5 = inlined_call_operand.vmem [shape: f32[1,8], index: 5, kind: input, shape index: {}]
  %s6 = inlined_call_operand.vmem [shape: f32[1,8], index: 6, kind: input, shape index: {}]
  %s7 = inlined_call_operand.vmem [shape: f32[512,8], index: 7, kind: output, shape index: {}]
  %s8 = sld [smem:[#allocation0]]
  $region38: #{tpu_custom_call.1} parent=0
    _
  %s10 = ssub.s32 1, %s8
  %s11 = scalar_select 0, %s10, %s8
  // Predicated region
  $region2: #{tpu_custom_call.1} parent=0 // pred_check
    _
  $region3: #{tpu_custom_call.1} parent=0 // pred_check_branch
    %13 = sbr.rel (0) target = $region5
  $region4: #{tpu_custom_call.1} parent=0 // pred_region
    _
  $region5: #{tpu_custom_call.1} parent=0 // pred_fallthru
    _
  // Predicated region
  $region6: #{tpu_custom_call.1} parent=0 // pred_check
    _
  $region7: #{tpu_custom_call.1} parent=0 // pred_check_branch
    %15 = sbr.rel (0) target = $region9
  $region8: #{tpu_custom_call.1} parent=0 // pred_region
    _
  $region9: #{tpu_custom_call.1} parent=0 // pred_fallthru
    _
  // Predicated region
  $region10: #{tpu_custom_call.1} parent=0 // pred_check
    _
  $region11: #{tpu_custom_call.1} parent=0 // pred_check_branch
    %17 = sbr.rel (0) target = $region13
  $region12: #{tpu_custom_call.1} parent=0 // pred_region
    _
  $region13: #{tpu_custom_call.1} parent=0 // pred_fallthru
    _
  // Predicated region
  $region14: #{tpu_custom_call.1} parent=0 // pred_check
    _
  $region15: #{tpu_custom_call.1} parent=0 // pred_check_branch
    %19 = sbr.rel (0) target = $region17
  $region16: #{tpu_custom_call.1} parent=0 // pred_region
    _
  $region17: #{tpu_custom_call.1} parent=0 // pred_fallthru
    _
  // Predicated region
  $region18: #{tpu_custom_call.1} parent=0 // pred_check
    _
  $region19: #{tpu_custom_call.1} parent=0 // pred_check_branch
    %21 = sbr.rel (0) target = $region21
  $region20: #{tpu_custom_call.1} parent=0 // pred_region
    _
  $region21: #{tpu_custom_call.1} parent=0 // pred_fallthru
    _
  // Predicated region
  $region22: #{tpu_custom_call.1} parent=0 // pred_check
    _
  $region23: #{tpu_custom_call.1} parent=0 // pred_check_branch
    %23 = sbr.rel (0) target = $region25
  $region24: #{tpu_custom_call.1} parent=0 // pred_region
    _
  $region25: #{tpu_custom_call.1} parent=0 // pred_fallthru
    _
  // Predicated region
  $region26: #{tpu_custom_call.1} parent=0 // pred_check
    _
  $region27: #{tpu_custom_call.1} parent=0 // pred_check_branch
    %25 = sbr.rel (0) target = $region29
  $region28: #{tpu_custom_call.1} parent=0 // pred_region
    _
  $region29: #{tpu_custom_call.1} parent=0 // pred_fallthru
    _
  %v27 = vld [vmem:[%s0] sm:$0xf]
  %v28 = vld [vmem:[%s0 + $0x4] sm:$0xf]
  %v29 = vld [vmem:[%s0 + $0x8] sm:$0xf]
  %v30 = vld [vmem:[%s0 + $0xc] sm:$0xf]
  %v31 = vld [vmem:[%s0 + $0x10] sm:$0xf]
  %v32 = vld [vmem:[%s0 + $0x14] sm:$0xf]
  %v33 = vld [vmem:[%s0 + $0x18] sm:$0xf]
  %v34 = vld [vmem:[%s0 + $0x1c] sm:$0xf]
  %v35 = vld [vmem:[%s0 + $0x20] sm:$0xf]
  %v36 = vld [vmem:[%s0 + $0x24] sm:$0xf]
  %v37 = vld [vmem:[%s0 + $0x28] sm:$0xf]
  %v38 = vld [vmem:[%s0 + $0x2c] sm:$0xf]
  %v39 = vld [vmem:[%s0 + $0x30] sm:$0xf]
  %v40 = vld [vmem:[%s0 + $0x34] sm:$0xf]
  %v41 = vld [vmem:[%s0 + $0x38] sm:$0xf]
  %v42 = vld [vmem:[%s0 + $0x3c] sm:$0xf]
  %v43 = vld [vmem:[%s0 + $0x40] sm:$0xf]
  %v44 = vld [vmem:[%s0 + $0x44] sm:$0xf]
  %v45 = vld [vmem:[%s0 + $0x48] sm:$0xf]
  %v46 = vld [vmem:[%s0 + $0x4c] sm:$0xf]
  %v47 = vld [vmem:[%s0 + $0x50] sm:$0xf]
  %v48 = vld [vmem:[%s0 + $0x54] sm:$0xf]
  %v49 = vld [vmem:[%s0 + $0x58] sm:$0xf]
  %v50 = vld [vmem:[%s0 + $0x5c] sm:$0xf]
  %v51 = vld [vmem:[%s0 + $0x60] sm:$0xf]
  %v52 = vld [vmem:[%s0 + $0x64] sm:$0xf]
  %v53 = vld [vmem:[%s0 + $0x68] sm:$0xf]
  %v54 = vld [vmem:[%s0 + $0x6c] sm:$0xf]
  %v55 = vld [vmem:[%s0 + $0x70] sm:$0xf]
  %v56 = vld [vmem:[%s0 + $0x74] sm:$0xf]
  %v57 = vld [vmem:[%s0 + $0x78] sm:$0xf]
  %v58 = vld [vmem:[%s0 + $0x7c] sm:$0xf]
  %v59 = vld [vmem:[%s0 + $0x80] sm:$0xf]
  %v60 = vld [vmem:[%s0 + $0x84] sm:$0xf]
  %v61 = vld [vmem:[%s0 + $0x88] sm:$0xf]
  %v62 = vld [vmem:[%s0 + $0x8c] sm:$0xf]
  %v63 = vld [vmem:[%s0 + $0x90] sm:$0xf]
  %v64 = vld [vmem:[%s0 + $0x94] sm:$0xf]
  %v65 = vld [vmem:[%s0 + $0x98] sm:$0xf]
  %v66 = vld [vmem:[%s0 + $0x9c] sm:$0xf]
  %v67 = vld [vmem:[%s0 + $0xa0] sm:$0xf]
  %v68 = vld [vmem:[%s0 + $0xa4] sm:$0xf]
  %v69 = vld [vmem:[%s0 + $0xa8] sm:$0xf]
  %v70 = vld [vmem:[%s0 + $0xac] sm:$0xf]
  %v71 = vld [vmem:[%s0 + $0xb0] sm:$0xf]
  %v72 = vld [vmem:[%s0 + $0xb4] sm:$0xf]
  %v73 = vld [vmem:[%s0 + $0xb8] sm:$0xf]
  %v74 = vld [vmem:[%s0 + $0xbc] sm:$0xf]
  %v75 = vld [vmem:[%s0 + $0xc0] sm:$0xf]
  %v76 = vld [vmem:[%s0 + $0xc4] sm:$0xf]
  %v77 = vld [vmem:[%s0 + $0xc8] sm:$0xf]
  %v78 = vld [vmem:[%s0 + $0xcc] sm:$0xf]
  %v79 = vld [vmem:[%s0 + $0xd0] sm:$0xf]
  %v80 = vld [vmem:[%s0 + $0xd4] sm:$0xf]
  %v81 = vld [vmem:[%s0 + $0xd8] sm:$0xf]
  %v82 = vld [vmem:[%s0 + $0xdc] sm:$0xf]
  %v83 = vld [vmem:[%s0 + $0xe0] sm:$0xf]
  %v84 = vld [vmem:[%s0 + $0xe4] sm:$0xf]
  %v85 = vld [vmem:[%s0 + $0xe8] sm:$0xf]
  %v86 = vld [vmem:[%s0 + $0xec] sm:$0xf]
  %v87 = vld [vmem:[%s0 + $0xf0] sm:$0xf]
  %v88 = vld [vmem:[%s0 + $0xf4] sm:$0xf]
  %v89 = vld [vmem:[%s0 + $0xf8] sm:$0xf]
  %v90 = vld [vmem:[%s0 + $0xfc] sm:$0xf]
  %v91 = vld [vmem:[%s0 + $0x100] sm:$0xf]
  %v92 = vld [vmem:[%s0 + $0x104] sm:$0xf]
  %v93 = vld [vmem:[%s0 + $0x108] sm:$0xf]
  %v94 = vld [vmem:[%s0 + $0x10c] sm:$0xf]
  %v95 = vld [vmem:[%s0 + $0x110] sm:$0xf]
  %v96 = vld [vmem:[%s0 + $0x114] sm:$0xf]
  %v97 = vld [vmem:[%s0 + $0x118] sm:$0xf]
  %v98 = vld [vmem:[%s0 + $0x11c] sm:$0xf]
  %v99 = vld [vmem:[%s0 + $0x120] sm:$0xf]
  %v100 = vld [vmem:[%s0 + $0x124] sm:$0xf]
  %v101 = vld [vmem:[%s0 + $0x128] sm:$0xf]
  %v102 = vld [vmem:[%s0 + $0x12c] sm:$0xf]
  %v103 = vld [vmem:[%s0 + $0x130] sm:$0xf]
  %v104 = vld [vmem:[%s0 + $0x134] sm:$0xf]
  %v105 = vld [vmem:[%s0 + $0x138] sm:$0xf]
  %v106 = vld [vmem:[%s0 + $0x13c] sm:$0xf]
  %v107 = vld [vmem:[%s0 + $0x140] sm:$0xf]
  %v108 = vld [vmem:[%s0 + $0x144] sm:$0xf]
  %v109 = vld [vmem:[%s0 + $0x148] sm:$0xf]
  %v110 = vld [vmem:[%s0 + $0x14c] sm:$0xf]
  %v111 = vld [vmem:[%s0 + $0x150] sm:$0xf]
  %v112 = vld [vmem:[%s0 + $0x154] sm:$0xf]
  %v113 = vld [vmem:[%s0 + $0x158] sm:$0xf]
  %v114 = vld [vmem:[%s0 + $0x15c] sm:$0xf]
  %v115 = vld [vmem:[%s0 + $0x160] sm:$0xf]
  %v116 = vld [vmem:[%s0 + $0x164] sm:$0xf]
  %v117 = vld [vmem:[%s0 + $0x168] sm:$0xf]
  %v118 = vld [vmem:[%s0 + $0x16c] sm:$0xf]
  %v119 = vld [vmem:[%s0 + $0x170] sm:$0xf]
  %v120 = vld [vmem:[%s0 + $0x174] sm:$0xf]
  %v121 = vld [vmem:[%s0 + $0x178] sm:$0xf]
  %v122 = vld [vmem:[%s0 + $0x17c] sm:$0xf]
  %v123 = vld [vmem:[%s0 + $0x180] sm:$0xf]
  %v124 = vld [vmem:[%s0 + $0x184] sm:$0xf]
  %v125 = vld [vmem:[%s0 + $0x188] sm:$0xf]
  %v126 = vld [vmem:[%s0 + $0x18c] sm:$0xf]
  %v127 = vld [vmem:[%s0 + $0x190] sm:$0xf]
  %v128 = vld [vmem:[%s0 + $0x194] sm:$0xf]
  %v129 = vld [vmem:[%s0 + $0x198] sm:$0xf]
  %v130 = vld [vmem:[%s0 + $0x19c] sm:$0xf]
  %v131 = vld [vmem:[%s0 + $0x1a0] sm:$0xf]
  %v132 = vld [vmem:[%s0 + $0x1a4] sm:$0xf]
  %v133 = vld [vmem:[%s0 + $0x1a8] sm:$0xf]
  %v134 = vld [vmem:[%s0 + $0x1ac] sm:$0xf]
  %v135 = vld [vmem:[%s0 + $0x1b0] sm:$0xf]
  %v136 = vld [vmem:[%s0 + $0x1b4] sm:$0xf]
  %v137 = vld [vmem:[%s0 + $0x1b8] sm:$0xf]
  %v138 = vld [vmem:[%s0 + $0x1bc] sm:$0xf]
  %v139 = vld [vmem:[%s0 + $0x1c0] sm:$0xf]
  %v140 = vld [vmem:[%s0 + $0x1c4] sm:$0xf]
  %v141 = vld [vmem:[%s0 + $0x1c8] sm:$0xf]
  %v142 = vld [vmem:[%s0 + $0x1cc] sm:$0xf]
  %v143 = vld [vmem:[%s0 + $0x1d0] sm:$0xf]
  %v144 = vld [vmem:[%s0 + $0x1d4] sm:$0xf]
  %v145 = vld [vmem:[%s0 + $0x1d8] sm:$0xf]
  %v146 = vld [vmem:[%s0 + $0x1dc] sm:$0xf]
  %v147 = vld [vmem:[%s0 + $0x1e0] sm:$0xf]
  %v148 = vld [vmem:[%s0 + $0x1e4] sm:$0xf]
  %v149 = vld [vmem:[%s0 + $0x1e8] sm:$0xf]
  %v150 = vld [vmem:[%s0 + $0x1ec] sm:$0xf]
  %v151 = vld [vmem:[%s0 + $0x1f0] sm:$0xf]
  %v152 = vld [vmem:[%s0 + $0x1f4] sm:$0xf]
  %v153 = vld [vmem:[%s0 + $0x1f8] sm:$0xf]
  %v154 = vld [vmem:[%s0 + $0x1fc] sm:$0xf]
  %v155 = vld [vmem:[%s0 + $0x200] sm:$0xf]
  %v156 = vld [vmem:[%s0 + $0x204] sm:$0xf]
  %v157 = vld [vmem:[%s0 + $0x208] sm:$0xf]
  %v158 = vld [vmem:[%s0 + $0x20c] sm:$0xf]
  %v159 = vld [vmem:[%s0 + $0x210] sm:$0xf]
  %v160 = vld [vmem:[%s0 + $0x214] sm:$0xf]
  %v161 = vld [vmem:[%s0 + $0x218] sm:$0xf]
  %v162 = vld [vmem:[%s0 + $0x21c] sm:$0xf]
  %v163 = vld [vmem:[%s0 + $0x220] sm:$0xf]
  %v164 = vld [vmem:[%s0 + $0x224] sm:$0xf]
  %v165 = vld [vmem:[%s0 + $0x228] sm:$0xf]
  %v166 = vld [vmem:[%s0 + $0x22c] sm:$0xf]
  %v167 = vld [vmem:[%s0 + $0x230] sm:$0xf]
  %v168 = vld [vmem:[%s0 + $0x234] sm:$0xf]
  %v169 = vld [vmem:[%s0 + $0x238] sm:$0xf]
  %v170 = vld [vmem:[%s0 + $0x23c] sm:$0xf]
  %v171 = vld [vmem:[%s0 + $0x240] sm:$0xf]
  %v172 = vld [vmem:[%s0 + $0x244] sm:$0xf]
  %v173 = vld [vmem:[%s0 + $0x248] sm:$0xf]
  %v174 = vld [vmem:[%s0 + $0x24c] sm:$0xf]
  %v175 = vld [vmem:[%s0 + $0x250] sm:$0xf]
  %v176 = vld [vmem:[%s0 + $0x254] sm:$0xf]
  %v177 = vld [vmem:[%s0 + $0x258] sm:$0xf]
  %v178 = vld [vmem:[%s0 + $0x25c] sm:$0xf]
  %v179 = vld [vmem:[%s0 + $0x260] sm:$0xf]
  %v180 = vld [vmem:[%s0 + $0x264] sm:$0xf]
  %v181 = vld [vmem:[%s0 + $0x268] sm:$0xf]
  %v182 = vld [vmem:[%s0 + $0x26c] sm:$0xf]
  %v183 = vld [vmem:[%s0 + $0x270] sm:$0xf]
  %v184 = vld [vmem:[%s0 + $0x274] sm:$0xf]
  %v185 = vld [vmem:[%s0 + $0x278] sm:$0xf]
  %v186 = vld [vmem:[%s0 + $0x27c] sm:$0xf]
  %v187 = vld [vmem:[%s0 + $0x280] sm:$0xf]
  %v188 = vld [vmem:[%s0 + $0x284] sm:$0xf]
  %v189 = vld [vmem:[%s0 + $0x288] sm:$0xf]
  %v190 = vld [vmem:[%s0 + $0x28c] sm:$0xf]
  %v191 = vld [vmem:[%s0 + $0x290] sm:$0xf]
  %v192 = vld [vmem:[%s0 + $0x294] sm:$0xf]
  %v193 = vld [vmem:[%s0 + $0x298] sm:$0xf]
  %v194 = vld [vmem:[%s0 + $0x29c] sm:$0xf]
  %v195 = vld [vmem:[%s0 + $0x2a0] sm:$0xf]
  %v196 = vld [vmem:[%s0 + $0x2a4] sm:$0xf]
  %v197 = vld [vmem:[%s0 + $0x2a8] sm:$0xf]
  %v198 = vld [vmem:[%s0 + $0x2ac] sm:$0xf]
  %v199 = vld [vmem:[%s0 + $0x2b0] sm:$0xf]
  %v200 = vld [vmem:[%s0 + $0x2b4] sm:$0xf]
  %v201 = vld [vmem:[%s0 + $0x2b8] sm:$0xf]
  %v202 = vld [vmem:[%s0 + $0x2bc] sm:$0xf]
  %v203 = vld [vmem:[%s0 + $0x2c0] sm:$0xf]
  %v204 = vld [vmem:[%s0 + $0x2c4] sm:$0xf]
  %v205 = vld [vmem:[%s0 + $0x2c8] sm:$0xf]
  %v206 = vld [vmem:[%s0 + $0x2cc] sm:$0xf]
  %v207 = vld [vmem:[%s0 + $0x2d0] sm:$0xf]
  %v208 = vld [vmem:[%s0 + $0x2d4] sm:$0xf]
  %v209 = vld [vmem:[%s0 + $0x2d8] sm:$0xf]
  %v210 = vld [vmem:[%s0 + $0x2dc] sm:$0xf]
  %v211 = vld [vmem:[%s0 + $0x2e0] sm:$0xf]
  %v212 = vld [vmem:[%s0 + $0x2e4] sm:$0xf]
  %v213 = vld [vmem:[%s0 + $0x2e8] sm:$0xf]
  %v214 = vld [vmem:[%s0 + $0x2ec] sm:$0xf]
  %v215 = vld [vmem:[%s0 + $0x2f0] sm:$0xf]
  %v216 = vld [vmem:[%s0 + $0x2f4] sm:$0xf]
  %v217 = vld [vmem:[%s0 + $0x2f8] sm:$0xf]
  %v218 = vld [vmem:[%s0 + $0x2fc] sm:$0xf]
  %v219 = vld [vmem:[%s0 + $0x300] sm:$0xf]
  %v220 = vld [vmem:[%s0 + $0x304] sm:$0xf]
  %v221 = vld [vmem:[%s0 + $0x308] sm:$0xf]
  %v222 = vld [vmem:[%s0 + $0x30c] sm:$0xf]
  %v223 = vld [vmem:[%s0 + $0x310] sm:$0xf]
  %v224 = vld [vmem:[%s0 + $0x314] sm:$0xf]
  %v225 = vld [vmem:[%s0 + $0x318] sm:$0xf]
  %v226 = vld [vmem:[%s0 + $0x31c] sm:$0xf]
  %v227 = vld [vmem:[%s0 + $0x320] sm:$0xf]
  %v228 = vld [vmem:[%s0 + $0x324] sm:$0xf]
  %v229 = vld [vmem:[%s0 + $0x328] sm:$0xf]
  %v230 = vld [vmem:[%s0 + $0x32c] sm:$0xf]
  %v231 = vld [vmem:[%s0 + $0x330] sm:$0xf]
  %v232 = vld [vmem:[%s0 + $0x334] sm:$0xf]
  %v233 = vld [vmem:[%s0 + $0x338] sm:$0xf]
  %v234 = vld [vmem:[%s0 + $0x33c] sm:$0xf]
  %v235 = vld [vmem:[%s0 + $0x340] sm:$0xf]
  %v236 = vld [vmem:[%s0 + $0x344] sm:$0xf]
  %v237 = vld [vmem:[%s0 + $0x348] sm:$0xf]
  %v238 = vld [vmem:[%s0 + $0x34c] sm:$0xf]
  %v239 = vld [vmem:[%s0 + $0x350] sm:$0xf]
  %v240 = vld [vmem:[%s0 + $0x354] sm:$0xf]
  %v241 = vld [vmem:[%s0 + $0x358] sm:$0xf]
  %v242 = vld [vmem:[%s0 + $0x35c] sm:$0xf]
  %v243 = vld [vmem:[%s0 + $0x360] sm:$0xf]
  %v244 = vld [vmem:[%s0 + $0x364] sm:$0xf]
  %v245 = vld [vmem:[%s0 + $0x368] sm:$0xf]
  %v246 = vld [vmem:[%s0 + $0x36c] sm:$0xf]
  %v247 = vld [vmem:[%s0 + $0x370] sm:$0xf]
  %v248 = vld [vmem:[%s0 + $0x374] sm:$0xf]
  %v249 = vld [vmem:[%s0 + $0x378] sm:$0xf]
  %v250 = vld [vmem:[%s0 + $0x37c] sm:$0xf]
  %v251 = vld [vmem:[%s0 + $0x380] sm:$0xf]
  %v252 = vld [vmem:[%s0 + $0x384] sm:$0xf]
  %v253 = vld [vmem:[%s0 + $0x388] sm:$0xf]
  %v254 = vld [vmem:[%s0 + $0x38c] sm:$0xf]
  %v255 = vld [vmem:[%s0 + $0x390] sm:$0xf]
  %v256 = vld [vmem:[%s0 + $0x394] sm:$0xf]
  %v257 = vld [vmem:[%s0 + $0x398] sm:$0xf]
  %v258 = vld [vmem:[%s0 + $0x39c] sm:$0xf]
  %v259 = vld [vmem:[%s0 + $0x3a0] sm:$0xf]
  %v260 = vld [vmem:[%s0 + $0x3a4] sm:$0xf]
  %v261 = vld [vmem:[%s0 + $0x3a8] sm:$0xf]
  %v262 = vld [vmem:[%s0 + $0x3ac] sm:$0xf]
  %v263 = vld [vmem:[%s0 + $0x3b0] sm:$0xf]
  %v264 = vld [vmem:[%s0 + $0x3b4] sm:$0xf]
  %v265 = vld [vmem:[%s0 + $0x3b8] sm:$0xf]
  %v266 = vld [vmem:[%s0 + $0x3bc] sm:$0xf]
  %v267 = vld [vmem:[%s0 + $0x3c0] sm:$0xf]
  %v268 = vld [vmem:[%s0 + $0x3c4] sm:$0xf]
  %v269 = vld [vmem:[%s0 + $0x3c8] sm:$0xf]
  %v270 = vld [vmem:[%s0 + $0x3cc] sm:$0xf]
  %v271 = vld [vmem:[%s0 + $0x3d0] sm:$0xf]
  %v272 = vld [vmem:[%s0 + $0x3d4] sm:$0xf]
  %v273 = vld [vmem:[%s0 + $0x3d8] sm:$0xf]
  %v274 = vld [vmem:[%s0 + $0x3dc] sm:$0xf]
  %v275 = vld [vmem:[%s0 + $0x3e0] sm:$0xf]
  %v276 = vld [vmem:[%s0 + $0x3e4] sm:$0xf]
  %v277 = vld [vmem:[%s0 + $0x3e8] sm:$0xf]
  %v278 = vld [vmem:[%s0 + $0x3ec] sm:$0xf]
  %v279 = vld [vmem:[%s0 + $0x3f0] sm:$0xf]
  %v280 = vld [vmem:[%s0 + $0x3f4] sm:$0xf]
  %v281 = vld [vmem:[%s0 + $0x3f8] sm:$0xf]
  %v282 = vld [vmem:[%s0 + $0x3fc] sm:$0xf]
  %v283 = vmax.bf16 %v27, %v43
  %v284 = vmax.bf16 %v28, %v44
  %v285 = vmax.bf16 %v29, %v45
  %v286 = vmax.bf16 %v30, %v46
  %v287 = vmax.bf16 %v31, %v47
  %v288 = vmax.bf16 %v32, %v48
  %v289 = vmax.bf16 %v33, %v49
  %v290 = vmax.bf16 %v34, %v50
  %v291 = vmax.bf16 %v35, %v51
  %v292 = vmax.bf16 %v36, %v52
  %v293 = vmax.bf16 %v37, %v53
  %v294 = vmax.bf16 %v38, %v54
  %v295 = vmax.bf16 %v39, %v55
  %v296 = vmax.bf16 %v40, %v56
  %v297 = vmax.bf16 %v41, %v57
  %v298 = vmax.bf16 %v42, %v58
  %v299 = vmax.bf16 %v59, %v75
  %v300 = vmax.bf16 %v60, %v76
  %v301 = vmax.bf16 %v61, %v77
  %v302 = vmax.bf16 %v62, %v78
  %v303 = vmax.bf16 %v63, %v79
  %v304 = vmax.bf16 %v64, %v80
  %v305 = vmax.bf16 %v65, %v81
  %v306 = vmax.bf16 %v66, %v82
  %v307 = vmax.bf16 %v67, %v83
  %v308 = vmax.bf16 %v68, %v84
  %v309 = vmax.bf16 %v69, %v85
  %v310 = vmax.bf16 %v70, %v86
  %v311 = vmax.bf16 %v71, %v87
  %v312 = vmax.bf16 %v72, %v88
  %v313 = vmax.bf16 %v73, %v89
  %v314 = vmax.bf16 %v74, %v90
  %v315 = vmax.bf16 %v91, %v107
  %v316 = vmax.bf16 %v92, %v108
  %v317 = vmax.bf16 %v93, %v109
  %v318 = vmax.bf16 %v94, %v110
  %v319 = vmax.bf16 %v95, %v111
  %v320 = vmax.bf16 %v96, %v112
  %v321 = vmax.bf16 %v97, %v113
  %v322 = vmax.bf16 %v98, %v114
  %v323 = vmax.bf16 %v99, %v115
  %v324 = vmax.bf16 %v100, %v116
  %v325 = vmax.bf16 %v101, %v117
  %v326 = vmax.bf16 %v102, %v118
  %v327 = vmax.bf16 %v103, %v119
  %v328 = vmax.bf16 %v104, %v120
  %v329 = vmax.bf16 %v105, %v121
  %v330 = vmax.bf16 %v106, %v122
  %v331 = vmax.bf16 %v123, %v139
  %v332 = vmax.bf16 %v124, %v140
  %v333 = vmax.bf16 %v125, %v141
  %v334 = vmax.bf16 %v126, %v142
  %v335 = vmax.bf16 %v127, %v143
  %v336 = vmax.bf16 %v128, %v144
  %v337 = vmax.bf16 %v129, %v145
  %v338 = vmax.bf16 %v130, %v146
  %v339 = vmax.bf16 %v131, %v147
  %v340 = vmax.bf16 %v132, %v148
  %v341 = vmax.bf16 %v133, %v149
  %v342 = vmax.bf16 %v134, %v150
  %v343 = vmax.bf16 %v135, %v151
  %v344 = vmax.bf16 %v136, %v152
  %v345 = vmax.bf16 %v137, %v153
  %v346 = vmax.bf16 %v138, %v154
  %v347 = vmax.bf16 %v155, %v171
  %v348 = vmax.bf16 %v156, %v172
  %v349 = vmax.bf16 %v157, %v173
  %v350 = vmax.bf16 %v158, %v174
  %v351 = vmax.bf16 %v159, %v175
  %v352 = vmax.bf16 %v160, %v176
  %v353 = vmax.bf16 %v161, %v177
  %v354 = vmax.bf16 %v162, %v178
  %v355 = vmax.bf16 %v163, %v179
  %v356 = vmax.bf16 %v164, %v180
  %v357 = vmax.bf16 %v165, %v181
  %v358 = vmax.bf16 %v166, %v182
  %v359 = vmax.bf16 %v167, %v183
  %v360 = vmax.bf16 %v168, %v184
  %v361 = vmax.bf16 %v169, %v185
  %v362 = vmax.bf16 %v170, %v186
  %v363 = vmax.bf16 %v187, %v203
  %v364 = vmax.bf16 %v188, %v204
  %v365 = vmax.bf16 %v189, %v205
  %v366 = vmax.bf16 %v190, %v206
  %v367 = vmax.bf16 %v191, %v207
  %v368 = vmax.bf16 %v192, %v208
  %v369 = vmax.bf16 %v193, %v209
  %v370 = vmax.bf16 %v194, %v210
  %v371 = vmax.bf16 %v195, %v211
  %v372 = vmax.bf16 %v196, %v212
  %v373 = vmax.bf16 %v197, %v213
  %v374 = vmax.bf16 %v198, %v214
  %v375 = vmax.bf16 %v199, %v215
  %v376 = vmax.bf16 %v200, %v216
  %v377 = vmax.bf16 %v201, %v217
  %v378 = vmax.bf16 %v202, %v218
  %v379 = vmax.bf16 %v219, %v235
  %v380 = vmax.bf16 %v220, %v236
  %v381 = vmax.bf16 %v221, %v237
  %v382 = vmax.bf16 %v222, %v238
  %v383 = vmax.bf16 %v223, %v239
  %v384 = vmax.bf16 %v224, %v240
  %v385 = vmax.bf16 %v225, %v241
  %v386 = vmax.bf16 %v226, %v242
  %v387 = vmax.bf16 %v227, %v243
  %v388 = vmax.bf16 %v228, %v244
  %v389 = vmax.bf16 %v229, %v245
  %v390 = vmax.bf16 %v230, %v246
  %v391 = vmax.bf16 %v231, %v247
  %v392 = vmax.bf16 %v232, %v248
  %v393 = vmax.bf16 %v233, %v249
  %v394 = vmax.bf16 %v234, %v250
  %v395 = vmax.bf16 %v251, %v267
  %v396 = vmax.bf16 %v252, %v268
  %v397 = vmax.bf16 %v253, %v269
  %v398 = vmax.bf16 %v254, %v270
  %v399 = vmax.bf16 %v255, %v271
  %v400 = vmax.bf16 %v256, %v272
  %v401 = vmax.bf16 %v257, %v273
  %v402 = vmax.bf16 %v258, %v274
  %v403 = vmax.bf16 %v259, %v275
  %v404 = vmax.bf16 %v260, %v276
  %v405 = vmax.bf16 %v261, %v277
  %v406 = vmax.bf16 %v262, %v278
  %v407 = vmax.bf16 %v263, %v279
  %v408 = vmax.bf16 %v264, %v280
  %v409 = vmax.bf16 %v265, %v281
  %v410 = vmax.bf16 %v266, %v282
  %v411 = vmax.bf16 %v283, %v284
  %v412 = vmax.bf16 %v285, %v286
  %v413 = vmax.bf16 %v287, %v288
  %v414 = vmax.bf16 %v289, %v290
  %v415 = vmax.bf16 %v291, %v292
  %v416 = vmax.bf16 %v293, %v294
  %v417 = vmax.bf16 %v295, %v296
  %v418 = vmax.bf16 %v297, %v298
  %v419 = vmax.bf16 %v299, %v300
  %v420 = vmax.bf16 %v301, %v302
  %v421 = vmax.bf16 %v303, %v304
  %v422 = vmax.bf16 %v305, %v306
  %v423 = vmax.bf16 %v307, %v308
  %v424 = vmax.bf16 %v309, %v310
  %v425 = vmax.bf16 %v311, %v312
  %v426 = vmax.bf16 %v313, %v314
  %v427 = vmax.bf16 %v315, %v316
  %v428 = vmax.bf16 %v317, %v318
  %v429 = vmax.bf16 %v319, %v320
  %v430 = vmax.bf16 %v321, %v322
  %v431 = vmax.bf16 %v323, %v324
  %v432 = vmax.bf16 %v325, %v326
  %v433 = vmax.bf16 %v327, %v328
  %v434 = vmax.bf16 %v329, %v330
  %v435 = vmax.bf16 %v331, %v332
  %v436 = vmax.bf16 %v333, %v334
  %v437 = vmax.bf16 %v335, %v336
  %v438 = vmax.bf16 %v337, %v338
  %v439 = vmax.bf16 %v339, %v340
  %v440 = vmax.bf16 %v341, %v342
  %v441 = vmax.bf16 %v343, %v344
  %v442 = vmax.bf16 %v345, %v346
  %v443 = vmax.bf16 %v347, %v348
  %v444 = vmax.bf16 %v349, %v350
  %v445 = vmax.bf16 %v351, %v352
  %v446 = vmax.bf16 %v353, %v354
  %v447 = vmax.bf16 %v355, %v356
  %v448 = vmax.bf16 %v357, %v358
  %v449 = vmax.bf16 %v359, %v360
  %v450 = vmax.bf16 %v361, %v362
  %v451 = vmax.bf16 %v363, %v364
  %v452 = vmax.bf16 %v365, %v366
  %v453 = vmax.bf16 %v367, %v368
  %v454 = vmax.bf16 %v369, %v370
  %v455 = vmax.bf16 %v371, %v372
  %v456 = vmax.bf16 %v373, %v374
  %v457 = vmax.bf16 %v375, %v376
  %v458 = vmax.bf16 %v377, %v378
  %v459 = vmax.bf16 %v379, %v380
  %v460 = vmax.bf16 %v381, %v382
  %v461 = vmax.bf16 %v383, %v384
  %v462 = vmax.bf16 %v385, %v386
  %v463 = vmax.bf16 %v387, %v388
  %v464 = vmax.bf16 %v389, %v390
  %v465 = vmax.bf16 %v391, %v392
  %v466 = vmax.bf16 %v393, %v394
  %v467 = vmax.bf16 %v395, %v396
  %v468 = vmax.bf16 %v397, %v398
  %v469 = vmax.bf16 %v399, %v400
  %v470 = vmax.bf16 %v401, %v402
  %v471 = vmax.bf16 %v403, %v404
  %v472 = vmax.bf16 %v405, %v406
  %v473 = vmax.bf16 %v407, %v408
  %v474 = vmax.bf16 %v409, %v410
  %vm475 = vcmask 27648
  %476 = vst.msk [vmem:[#allocation2] sm:$0xf] %vm475, 0
  %477 = vst.msk [vmem:[#allocation2 + $0x4] sm:$0xf] %vm475, 0
  %478 = vst.msk [vmem:[#allocation2 + $0x8] sm:$0xf] %vm475, 0
  %479 = vst.msk [vmem:[#allocation2 + $0xc] sm:$0xf] %vm475, 0
  %480 = vst.msk [vmem:[#allocation2 + $0x10] sm:$0xf] %vm475, 0
  %481 = vst.msk [vmem:[#allocation2 + $0x14] sm:$0xf] %vm475, 0
  %482 = vst.msk [vmem:[#allocation2 + $0x18] sm:$0xf] %vm475, 0
  %483 = vst.msk [vmem:[#allocation2 + $0x1c] sm:$0xf] %vm475, 0
  %484 = vst.msk [vmem:[#allocation2 + $0x20] sm:$0xf] %vm475, 0
  %485 = vst.msk [vmem:[#allocation2 + $0x24] sm:$0xf] %vm475, 0
  %s486 = scalar_lea.vmem [#allocation2], 360
  %487 = vst.msk [vmem:[%s486] sm:$0xf] %vm475, 0
  %488 = vst.msk [vmem:[%s486 + $0x4] sm:$0xf] %vm475, 0
  %489 = vst.msk [vmem:[%s486 + $0x8] sm:$0xf] %vm475, 0
  %490 = vst.msk [vmem:[%s486 + $0xc] sm:$0xf] %vm475, 0
  %491 = vst.msk [vmem:[%s486 + $0x10] sm:$0xf] %vm475, 0
  %492 = vst.msk [vmem:[%s486 + $0x14] sm:$0xf] %vm475, 0
  %493 = vst.msk [vmem:[%s486 + $0x18] sm:$0xf] %vm475, 0
  %494 = vst.msk [vmem:[%s486 + $0x1c] sm:$0xf] %vm475, 0
  %495 = vst.msk [vmem:[%s486 + $0x20] sm:$0xf] %vm475, 0
  %496 = vst.msk [vmem:[%s486 + $0x24] sm:$0xf] %vm475, 0
  %s497 = scalar_lea.vmem [#allocation2], 40
  %498 = vst.msk [vmem:[%s497] sm:$0xf] %vm475, 0
  %499 = vst.msk [vmem:[%s497 + $0x28] sm:$0xf] %vm475, 0
  %500 = vst.msk [vmem:[%s497 + $0x50] sm:$0xf] %vm475, 0
  %501 = vst.msk [vmem:[%s497 + $0x78] sm:$0xf] %vm475, 0
  %502 = vst.msk [vmem:[%s497 + $0xa0] sm:$0xf] %vm475, 0
  %503 = vst.msk [vmem:[%s497 + $0xc8] sm:$0xf] %vm475, 0
  %504 = vst.msk [vmem:[%s497 + $0xf0] sm:$0xf] %vm475, 0
  %505 = vst.msk [vmem:[%s497 + $0x118] sm:$0xf] %vm475, 0
  %s506 = scalar_lea.vmem [#allocation2], 76
  %507 = vst.msk [vmem:[%s506] sm:$0xf] %vm475, 0
  %508 = vst.msk [vmem:[%s506 + $0x28] sm:$0xf] %vm475, 0
  %509 = vst.msk [vmem:[%s506 + $0x50] sm:$0xf] %vm475, 0
  %510 = vst.msk [vmem:[%s506 + $0x78] sm:$0xf] %vm475, 0
  %511 = vst.msk [vmem:[%s506 + $0xa0] sm:$0xf] %vm475, 0
  %512 = vst.msk [vmem:[%s506 + $0xc8] sm:$0xf] %vm475, 0
  %513 = vst.msk [vmem:[%s506 + $0xf0] sm:$0xf] %vm475, 0
  %514 = vst.msk [vmem:[%s506 + $0x118] sm:$0xf] %vm475, 0
  %s515 = scalar_lea.vmem [#allocation2], 44
  %516 = vst.msk [vmem:[%s515] sm:$0xf] %vm475, %v411
  %517 = vst.msk [vmem:[%s515 + $0x4] sm:$0xf] %vm475, %v412
  %518 = vst.msk [vmem:[%s515 + $0x8] sm:$0xf] %vm475, %v413
  %519 = vst.msk [vmem:[%s515 + $0xc] sm:$0xf] %vm475, %v414
  %520 = vst.msk [vmem:[%s515 + $0x10] sm:$0xf] %vm475, %v415
  %521 = vst.msk [vmem:[%s515 + $0x14] sm:$0xf] %vm475, %v416
  %522 = vst.msk [vmem:[%s515 + $0x18] sm:$0xf] %vm475, %v417
  %523 = vst.msk [vmem:[%s515 + $0x1c] sm:$0xf] %vm475, %v418
  %524 = vst.msk [vmem:[%s515 + $0x28] sm:$0xf] %vm475, %v419
  %525 = vst.msk [vmem:[%s515 + $0x2c] sm:$0xf] %vm475, %v420
  %526 = vst.msk [vmem:[%s515 + $0x30] sm:$0xf] %vm475, %v421
  %527 = vst.msk [vmem:[%s515 + $0x34] sm:$0xf] %vm475, %v422
  %528 = vst.msk [vmem:[%s515 + $0x38] sm:$0xf] %vm475, %v423
  %529 = vst.msk [vmem:[%s515 + $0x3c] sm:$0xf] %vm475, %v424
  %530 = vst.msk [vmem:[%s515 + $0x40] sm:$0xf] %vm475, %v425
  %531 = vst.msk [vmem:[%s515 + $0x44] sm:$0xf] %vm475, %v426
  %532 = vst.msk [vmem:[%s515 + $0x50] sm:$0xf] %vm475, %v427
  %533 = vst.msk [vmem:[%s515 + $0x54] sm:$0xf] %vm475, %v428
  %534 = vst.msk [vmem:[%s515 + $0x58] sm:$0xf] %vm475, %v429
  %535 = vst.msk [vmem:[%s515 + $0x5c] sm:$0xf] %vm475, %v430
  %536 = vst.msk [vmem:[%s515 + $0x60] sm:$0xf] %vm475, %v431
  %537 = vst.msk [vmem:[%s515 + $0x64] sm:$0xf] %vm475, %v432
  %538 = vst.msk [vmem:[%s515 + $0x68] sm:$0xf] %vm475, %v433
  %539 = vst.msk [vmem:[%s515 + $0x6c] sm:$0xf] %vm475, %v434
  %540 = vst.msk [vmem:[%s515 + $0x78] sm:$0xf] %vm475, %v435
  %541 = vst.msk [vmem:[%s515 + $0x7c] sm:$0xf] %vm475, %v436
  %542 = vst.msk [vmem:[%s515 + $0x80] sm:$0xf] %vm475, %v437
  %543 = vst.msk [vmem:[%s515 + $0x84] sm:$0xf] %vm475, %v438
  %544 = vst.msk [vmem:[%s515 + $0x88] sm:$0xf] %vm475, %v439
  %545 = vst.msk [vmem:[%s515 + $0x8c] sm:$0xf] %vm475, %v440
  %546 = vst.msk [vmem:[%s515 + $0x90] sm:$0xf] %vm475, %v441
  %547 = vst.msk [vmem:[%s515 + $0x94] sm:$0xf] %vm475, %v442
  %548 = vst.msk [vmem:[%s515 + $0xa0] sm:$0xf] %vm475, %v443
  %549 = vst.msk [vmem:[%s515 + $0xa4] sm:$0xf] %vm475, %v444
  %550 = vst.msk [vmem:[%s515 + $0xa8] sm:$0xf] %vm475, %v445
  %551 = vst.msk [vmem:[%s515 + $0xac] sm:$0xf] %vm475, %v446
  %552 = vst.msk [vmem:[%s515 + $0xb0] sm:$0xf] %vm475, %v447
  %553 = vst.msk [vmem:[%s515 + $0xb4] sm:$0xf] %vm475, %v448
  %554 = vst.msk [vmem:[%s515 + $0xb8] sm:$0xf] %vm475, %v449
  %555 = vst.msk [vmem:[%s515 + $0xbc] sm:$0xf] %vm475, %v450
  %556 = vst.msk [vmem:[%s515 + $0xc8] sm:$0xf] %vm475, %v451
  %557 = vst.msk [vmem:[%s515 + $0xcc] sm:$0xf] %vm475, %v452
  %558 = vst.msk [vmem:[%s515 + $0xd0] sm:$0xf] %vm475, %v453
  %559 = vst.msk [vmem:[%s515 + $0xd4] sm:$0xf] %vm475, %v454
  %560 = vst.msk [vmem:[%s515 + $0xd8] sm:$0xf] %vm475, %v455
  %561 = vst.msk [vmem:[%s515 + $0xdc] sm:$0xf] %vm475, %v456
  %562 = vst.msk [vmem:[%s515 + $0xe0] sm:$0xf] %vm475, %v457
  %563 = vst.msk [vmem:[%s515 + $0xe4] sm:$0xf] %vm475, %v458
  %564 = vst.msk [vmem:[%s515 + $0xf0] sm:$0xf] %vm475, %v459
  %565 = vst.msk [vmem:[%s515 + $0xf4] sm:$0xf] %vm475, %v460
  %566 = vst.msk [vmem:[%s515 + $0xf8] sm:$0xf] %vm475, %v461
  %567 = vst.msk [vmem:[%s515 + $0xfc] sm:$0xf] %vm475, %v462
  %568 = vst.msk [vmem:[%s515 + $0x100] sm:$0xf] %vm475, %v463
  %569 = vst.msk [vmem:[%s515 + $0x104] sm:$0xf] %vm475, %v464
  %570 = vst.msk [vmem:[%s515 + $0x108] sm:$0xf] %vm475, %v465
  %571 = vst.msk [vmem:[%s515 + $0x10c] sm:$0xf] %vm475, %v466
  %572 = vst.msk [vmem:[%s515 + $0x118] sm:$0xf] %vm475, %v467
  %573 = vst.msk [vmem:[%s515 + $0x11c] sm:$0xf] %vm475, %v468
  %574 = vst.msk [vmem:[%s515 + $0x120] sm:$0xf] %vm475, %v469
  %575 = vst.msk [vmem:[%s515 + $0x124] sm:$0xf] %vm475, %v470
  %576 = vst.msk [vmem:[%s515 + $0x128] sm:$0xf] %vm475, %v471
  %577 = vst.msk [vmem:[%s515 + $0x12c] sm:$0xf] %vm475, %v472
  %578 = vst.msk [vmem:[%s515 + $0x130] sm:$0xf] %vm475, %v473
  %579 = vst.msk [vmem:[%s515 + $0x134] sm:$0xf] %vm475, %v474
  %v580 = vld [vmem:[#allocation2] sm:$0xf]
  %v581 = vld [vmem:[#allocation2 + $0x4] sm:$0xf]
  %v582 = vld [vmem:[#allocation2 + $0x8] sm:$0xf]
  %v583 = vld [vmem:[#allocation2 + $0xc] sm:$0xf]
  %v584 = vld [vmem:[#allocation2 + $0x10] sm:$0xf]
  %v585 = vld [vmem:[#allocation2 + $0x14] sm:$0xf]
  %v586 = vld [vmem:[#allocation2 + $0x18] sm:$0xf]
  %v587 = vld [vmem:[#allocation2 + $0x1c] sm:$0xf]
  %v588 = vld [vmem:[#allocation2 + $0x28] sm:$0xf]
  %v589 = vld [vmem:[#allocation2 + $0x2c] sm:$0xf]
  %v590 = vld [vmem:[#allocation2 + $0x30] sm:$0xf]
  %v591 = vld [vmem:[#allocation2 + $0x34] sm:$0xf]
  %v592 = vld [vmem:[#allocation2 + $0x38] sm:$0xf]
  %v593 = vld [vmem:[#allocation2 + $0x3c] sm:$0xf]
  %v594 = vld [vmem:[#allocation2 + $0x40] sm:$0xf]
  %v595 = vld [vmem:[#allocation2 + $0x44] sm:$0xf]
  %v596 = vld [vmem:[#allocation2 + $0x50] sm:$0xf]
  %v597 = vld [vmem:[#allocation2 + $0x54] sm:$0xf]
  %v598 = vld [vmem:[#allocation2 + $0x58] sm:$0xf]
  %v599 = vld [vmem:[#allocation2 + $0x5c] sm:$0xf]
  %v600 = vld [vmem:[#allocation2 + $0x60] sm:$0xf]
  %v601 = vld [vmem:[#allocation2 + $0x64] sm:$0xf]
  %v602 = vld [vmem:[#allocation2 + $0x68] sm:$0xf]
  %v603 = vld [vmem:[#allocation2 + $0x6c] sm:$0xf]
  %v604 = vld [vmem:[#allocation2 + $0x78] sm:$0xf]
  %v605 = vld [vmem:[#allocation2 + $0x7c] sm:$0xf]
  %v606 = vld [vmem:[#allocation2 + $0x80] sm:$0xf]
  %v607 = vld [vmem:[#allocation2 + $0x84] sm:$0xf]
  %v608 = vld [vmem:[#allocation2 + $0x88] sm:$0xf]
  %v609 = vld [vmem:[#allocation2 + $0x8c] sm:$0xf]
  %v610 = vld [vmem:[#allocation2 + $0x90] sm:$0xf]
  %v611 = vld [vmem:[#allocation2 + $0x94] sm:$0xf]
  %v612 = vld [vmem:[#allocation2 + $0xa0] sm:$0xf]
  %v613 = vld [vmem:[#allocation2 + $0xa4] sm:$0xf]
  %v614 = vld [vmem:[#allocation2 + $0xa8] sm:$0xf]
  %v615 = vld [vmem:[#allocation2 + $0xac] sm:$0xf]
  %v616 = vld [vmem:[#allocation2 + $0xb0] sm:$0xf]
  %v617 = vld [vmem:[#allocation2 + $0xb4] sm:$0xf]
  %v618 = vld [vmem:[#allocation2 + $0xb8] sm:$0xf]
  %v619 = vld [vmem:[#allocation2 + $0xbc] sm:$0xf]
  %v620 = vld [vmem:[#allocation2 + $0xc8] sm:$0xf]
  %v621 = vld [vmem:[#allocation2 + $0xcc] sm:$0xf]
  %v622 = vld [vmem:[#allocation2 + $0xd0] sm:$0xf]
  %v623 = vld [vmem:[#allocation2 + $0xd4] sm:$0xf]
  %v624 = vld [vmem:[#allocation2 + $0xd8] sm:$0xf]
  %v625 = vld [vmem:[#allocation2 + $0xdc] sm:$0xf]
  %v626 = vld [vmem:[#allocation2 + $0xe0] sm:$0xf]
  %v627 = vld [vmem:[#allocation2 + $0xe4] sm:$0xf]
  %v628 = vld [vmem:[#allocation2 + $0xf0] sm:$0xf]
  %v629 = vld [vmem:[#allocation2 + $0xf4] sm:$0xf]
  %v630 = vld [vmem:[#allocation2 + $0xf8] sm:$0xf]
  %v631 = vld [vmem:[#allocation2 + $0xfc] sm:$0xf]
  %v632 = vld [vmem:[#allocation2 + $0x100] sm:$0xf]
  %v633 = vld [vmem:[#allocation2 + $0x104] sm:$0xf]
  %v634 = vld [vmem:[#allocation2 + $0x108] sm:$0xf]
  %v635 = vld [vmem:[#allocation2 + $0x10c] sm:$0xf]
  %v636 = vld [vmem:[#allocation2 + $0x118] sm:$0xf]
  %v637 = vld [vmem:[#allocation2 + $0x11c] sm:$0xf]
  %v638 = vld [vmem:[#allocation2 + $0x120] sm:$0xf]
  %v639 = vld [vmem:[#allocation2 + $0x124] sm:$0xf]
  %v640 = vld [vmem:[#allocation2 + $0x128] sm:$0xf]
  %v641 = vld [vmem:[#allocation2 + $0x12c] sm:$0xf]
  %v642 = vld [vmem:[#allocation2 + $0x130] sm:$0xf]
  %v643 = vld [vmem:[#allocation2 + $0x134] sm:$0xf]
  %s644 = scalar_lea.vmem [#allocation2], 4
  %v645 = vld [vmem:[%s644] sm:$0xf]
  %v646 = vld [vmem:[%s644 + $0x4] sm:$0xf]
  %v647 = vld [vmem:[%s644 + $0x8] sm:$0xf]
  %v648 = vld [vmem:[%s644 + $0xc] sm:$0xf]
  %v649 = vld [vmem:[%s644 + $0x10] sm:$0xf]
  %v650 = vld [vmem:[%s644 + $0x14] sm:$0xf]
  %v651 = vld [vmem:[%s644 + $0x18] sm:$0xf]
  %v652 = vld [vmem:[%s644 + $0x1c] sm:$0xf]
  %v653 = vld [vmem:[%s644 + $0x28] sm:$0xf]
  %v654 = vld [vmem:[%s644 + $0x2c] sm:$0xf]
  %v655 = vld [vmem:[%s644 + $0x30] sm:$0xf]
  %v656 = vld [vmem:[%s644 + $0x34] sm:$0xf]
  %v657 = vld [vmem:[%s644 + $0x38] sm:$0xf]
  %v658 = vld [vmem:[%s644 + $0x3c] sm:$0xf]
  %v659 = vld [vmem:[%s644 + $0x40] sm:$0xf]
  %v660 = vld [vmem:[%s644 + $0x44] sm:$0xf]
  %v661 = vld [vmem:[%s644 + $0x50] sm:$0xf]
  %v662 = vld [vmem:[%s644 + $0x54] sm:$0xf]
  %v663 = vld [vmem:[%s644 + $0x58] sm:$0xf]
  %v664 = vld [vmem:[%s644 + $0x5c] sm:$0xf]
  %v665 = vld [vmem:[%s644 + $0x60] sm:$0xf]
  %v666 = vld [vmem:[%s644 + $0x64] sm:$0xf]
  %v667 = vld [vmem:[%s644 + $0x68] sm:$0xf]
  %v668 = vld [vmem:[%s644 + $0x6c] sm:$0xf]
  %v669 = vld [vmem:[%s644 + $0x78] sm:$0xf]
  %v670 = vld [vmem:[%s644 + $0x7c] sm:$0xf]
  %v671 = vld [vmem:[%s644 + $0x80] sm:$0xf]
  %v672 = vld [vmem:[%s644 + $0x84] sm:$0xf]
  %v673 = vld [vmem:[%s644 + $0x88] sm:$0xf]
  %v674 = vld [vmem:[%s644 + $0x8c] sm:$0xf]
  %v675 = vld [vmem:[%s644 + $0x90] sm:$0xf]
  %v676 = vld [vmem:[%s644 + $0x94] sm:$0xf]
  %v677 = vld [vmem:[%s644 + $0xa0] sm:$0xf]
  %v678 = vld [vmem:[%s644 + $0xa4] sm:$0xf]
  %v679 = vld [vmem:[%s644 + $0xa8] sm:$0xf]
  %v680 = vld [vmem:[%s644 + $0xac] sm:$0xf]
  %v681 = vld [vmem:[%s644 + $0xb0] sm:$0xf]
  %v682 = vld [vmem:[%s644 + $0xb4] sm:$0xf]
  %v683 = vld [vmem:[%s644 + $0xb8] sm:$0xf]
  %v684 = vld [vmem:[%s644 + $0xbc] sm:$0xf]
  %v685 = vld [vmem:[%s644 + $0xc8] sm:$0xf]
  %v686 = vld [vmem:[%s644 + $0xcc] sm:$0xf]
  %v687 = vld [vmem:[%s644 + $0xd0] sm:$0xf]
  %v688 = vld [vmem:[%s644 + $0xd4] sm:$0xf]
  %v689 = vld [vmem:[%s644 + $0xd8] sm:$0xf]
  %v690 = vld [vmem:[%s644 + $0xdc] sm:$0xf]
  %v691 = vld [vmem:[%s644 + $0xe0] sm:$0xf]
  %v692 = vld [vmem:[%s644 + $0xe4] sm:$0xf]
  %v693 = vld [vmem:[%s644 + $0xf0] sm:$0xf]
  %v694 = vld [vmem:[%s644 + $0xf4] sm:$0xf]
  %v695 = vld [vmem:[%s644 + $0xf8] sm:$0xf]
  %v696 = vld [vmem:[%s644 + $0xfc] sm:$0xf]
  %v697 = vld [vmem:[%s644 + $0x100] sm:$0xf]
  %v698 = vld [vmem:[%s644 + $0x104] sm:$0xf]
  %v699 = vld [vmem:[%s644 + $0x108] sm:$0xf]
  %v700 = vld [vmem:[%s644 + $0x10c] sm:$0xf]
  %v701 = vld [vmem:[%s644 + $0x118] sm:$0xf]
  %v702 = vld [vmem:[%s644 + $0x11c] sm:$0xf]
  %v703 = vld [vmem:[%s644 + $0x120] sm:$0xf]
  %v704 = vld [vmem:[%s644 + $0x124] sm:$0xf]
  %v705 = vld [vmem:[%s644 + $0x128] sm:$0xf]
  %v706 = vld [vmem:[%s644 + $0x12c] sm:$0xf]
  %v707 = vld [vmem:[%s644 + $0x130] sm:$0xf]
  %v708 = vld [vmem:[%s644 + $0x134] sm:$0xf]
  %s709 = scalar_lea.vmem [#allocation2], 8
  %v710 = vld [vmem:[%s709] sm:$0xf]
  %v711 = vld [vmem:[%s709 + $0x4] sm:$0xf]
  %v712 = vld [vmem:[%s709 + $0x8] sm:$0xf]
  %v713 = vld [vmem:[%s709 + $0xc] sm:$0xf]
  %v714 = vld [vmem:[%s709 + $0x10] sm:$0xf]
  %v715 = vld [vmem:[%s709 + $0x14] sm:$0xf]
  %v716 = vld [vmem:[%s709 + $0x18] sm:$0xf]
  %v717 = vld [vmem:[%s709 + $0x1c] sm:$0xf]
  %v718 = vld [vmem:[%s709 + $0x28] sm:$0xf]
  %v719 = vld [vmem:[%s709 + $0x2c] sm:$0xf]
  %v720 = vld [vmem:[%s709 + $0x30] sm:$0xf]
  %v721 = vld [vmem:[%s709 + $0x34] sm:$0xf]
  %v722 = vld [vmem:[%s709 + $0x38] sm:$0xf]
  %v723 = vld [vmem:[%s709 + $0x3c] sm:$0xf]
  %v724 = vld [vmem:[%s709 + $0x40] sm:$0xf]
  %v725 = vld [vmem:[%s709 + $0x44] sm:$0xf]
  %v726 = vld [vmem:[%s709 + $0x50] sm:$0xf]
  %v727 = vld [vmem:[%s709 + $0x54] sm:$0xf]
  %v728 = vld [vmem:[%s709 + $0x58] sm:$0xf]
  %v729 = vld [vmem:[%s709 + $0x5c] sm:$0xf]
  %v730 = vld [vmem:[%s709 + $0x60] sm:$0xf]
  %v731 = vld [vmem:[%s709 + $0x64] sm:$0xf]
  %v732 = vld [vmem:[%s709 + $0x68] sm:$0xf]
  %v733 = vld [vmem:[%s709 + $0x6c] sm:$0xf]
  %v734 = vld [vmem:[%s709 + $0x78] sm:$0xf]
  %v735 = vld [vmem:[%s709 + $0x7c] sm:$0xf]
  %v736 = vld [vmem:[%s709 + $0x80] sm:$0xf]
  %v737 = vld [vmem:[%s709 + $0x84] sm:$0xf]
  %v738 = vld [vmem:[%s709 + $0x88] sm:$0xf]
  %v739 = vld [vmem:[%s709 + $0x8c] sm:$0xf]
  %v740 = vld [vmem:[%s709 + $0x90] sm:$0xf]
  %v741 = vld [vmem:[%s709 + $0x94] sm:$0xf]
  %v742 = vld [vmem:[%s709 + $0xa0] sm:$0xf]
  %v743 = vld [vmem:[%s709 + $0xa4] sm:$0xf]
  %v744 = vld [vmem:[%s709 + $0xa8] sm:$0xf]
  %v745 = vld [vmem:[%s709 + $0xac] sm:$0xf]
  %v746 = vld [vmem:[%s709 + $0xb0] sm:$0xf]
  %v747 = vld [vmem:[%s709 + $0xb4] sm:$0xf]
  %v748 = vld [vmem:[%s709 + $0xb8] sm:$0xf]
  %v749 = vld [vmem:[%s709 + $0xbc] sm:$0xf]
  %v750 = vld [vmem:[%s709 + $0xc8] sm:$0xf]
  %v751 = vld [vmem:[%s709 + $0xcc] sm:$0xf]
  %v752 = vld [vmem:[%s709 + $0xd0] sm:$0xf]
  %v753 = vld [vmem:[%s709 + $0xd4] sm:$0xf]
  %v754 = vld [vmem:[%s709 + $0xd8] sm:$0xf]
  %v755 = vld [vmem:[%s709 + $0xdc] sm:$0xf]
  %v756 = vld [vmem:[%s709 + $0xe0] sm:$0xf]
  %v757 = vld [vmem:[%s709 + $0xe4] sm:$0xf]
  %v758 = vld [vmem:[%s709 + $0xf0] sm:$0xf]
  %v759 = vld [vmem:[%s709 + $0xf4] sm:$0xf]
  %v760 = vld [vmem:[%s709 + $0xf8] sm:$0xf]
  %v761 = vld [vmem:[%s709 + $0xfc] sm:$0xf]
  %v762 = vld [vmem:[%s709 + $0x100] sm:$0xf]
  %v763 = vld [vmem:[%s709 + $0x104] sm:$0xf]
  %v764 = vld [vmem:[%s709 + $0x108] sm:$0xf]
  %v765 = vld [vmem:[%s709 + $0x10c] sm:$0xf]
  %v766 = vld [vmem:[%s709 + $0x118] sm:$0xf]
  %v767 = vld [vmem:[%s709 + $0x11c] sm:$0xf]
  %v768 = vld [vmem:[%s709 + $0x120] sm:$0xf]
  %v769 = vld [vmem:[%s709 + $0x124] sm:$0xf]
  %v770 = vld [vmem:[%s709 + $0x128] sm:$0xf]
  %v771 = vld [vmem:[%s709 + $0x12c] sm:$0xf]
  %v772 = vld [vmem:[%s709 + $0x130] sm:$0xf]
  %v773 = vld [vmem:[%s709 + $0x134] sm:$0xf]
  %v774 = vld [vmem:[%s497] sm:$0xf]
  %v775 = vld [vmem:[%s497 + $0x4] sm:$0xf]
  %v776 = vld [vmem:[%s497 + $0x8] sm:$0xf]
  %v777 = vld [vmem:[%s497 + $0xc] sm:$0xf]
  %v778 = vld [vmem:[%s497 + $0x10] sm:$0xf]
  %v779 = vld [vmem:[%s497 + $0x14] sm:$0xf]
  %v780 = vld [vmem:[%s497 + $0x18] sm:$0xf]
  %v781 = vld [vmem:[%s497 + $0x1c] sm:$0xf]
  %v782 = vld [vmem:[%s497 + $0x28] sm:$0xf]
  %v783 = vld [vmem:[%s497 + $0x2c] sm:$0xf]
  %v784 = vld [vmem:[%s497 + $0x30] sm:$0xf]
  %v785 = vld [vmem:[%s497 + $0x34] sm:$0xf]
  %v786 = vld [vmem:[%s497 + $0x38] sm:$0xf]
  %v787 = vld [vmem:[%s497 + $0x3c] sm:$0xf]
  %v788 = vld [vmem:[%s497 + $0x40] sm:$0xf]
  %v789 = vld [vmem:[%s497 + $0x44] sm:$0xf]
  %v790 = vld [vmem:[%s497 + $0x50] sm:$0xf]
  %v791 = vld [vmem:[%s497 + $0x54] sm:$0xf]
  %v792 = vld [vmem:[%s497 + $0x58] sm:$0xf]
  %v793 = vld [vmem:[%s497 + $0x5c] sm:$0xf]
  %v794 = vld [vmem:[%s497 + $0x60] sm:$0xf]
  %v795 = vld [vmem:[%s497 + $0x64] sm:$0xf]
  %v796 = vld [vmem:[%s497 + $0x68] sm:$0xf]
  %v797 = vld [vmem:[%s497 + $0x6c] sm:$0xf]
  %v798 = vld [vmem:[%s497 + $0x78] sm:$0xf]
  %v799 = vld [vmem:[%s497 + $0x7c] sm:$0xf]
  %v800 = vld [vmem:[%s497 + $0x80] sm:$0xf]
  %v801 = vld [vmem:[%s497 + $0x84] sm:$0xf]
  %v802 = vld [vmem:[%s497 + $0x88] sm:$0xf]
  %v803 = vld [vmem:[%s497 + $0x8c] sm:$0xf]
  %v804 = vld [vmem:[%s497 + $0x90] sm:$0xf]
  %v805 = vld [vmem:[%s497 + $0x94] sm:$0xf]
  %v806 = vld [vmem:[%s497 + $0xa0] sm:$0xf]
  %v807 = vld [vmem:[%s497 + $0xa4] sm:$0xf]
  %v808 = vld [vmem:[%s497 + $0xa8] sm:$0xf]
  %v809 = vld [vmem:[%s497 + $0xac] sm:$0xf]
  %v810 = vld [vmem:[%s497 + $0xb0] sm:$0xf]
  %v811 = vld [vmem:[%s497 + $0xb4] sm:$0xf]
  %v812 = vld [vmem:[%s497 + $0xb8] sm:$0xf]
  %v813 = vld [vmem:[%s497 + $0xbc] sm:$0xf]
  %v814 = vld [vmem:[%s497 + $0xc8] sm:$0xf]
  %v815 = vld [vmem:[%s497 + $0xcc] sm:$0xf]
  %v816 = vld [vmem:[%s497 + $0xd0] sm:$0xf]
  %v817 = vld [vmem:[%s497 + $0xd4] sm:$0xf]
  %v818 = vld [vmem:[%s497 + $0xd8] sm:$0xf]
  %v819 = vld [vmem:[%s497 + $0xdc] sm:$0xf]
  %v820 = vld [vmem:[%s497 + $0xe0] sm:$0xf]
  %v821 = vld [vmem:[%s497 + $0xe4] sm:$0xf]
  %v822 = vld [vmem:[%s497 + $0xf0] sm:$0xf]
  %v823 = vld [vmem:[%s497 + $0xf4] sm:$0xf]
  %v824 = vld [vmem:[%s497 + $0xf8] sm:$0xf]
  %v825 = vld [vmem:[%s497 + $0xfc] sm:$0xf]
  %v826 = vld [vmem:[%s497 + $0x100] sm:$0xf]
  %v827 = vld [vmem:[%s497 + $0x104] sm:$0xf]
  %v828 = vld [vmem:[%s497 + $0x108] sm:$0xf]
  %v829 = vld [vmem:[%s497 + $0x10c] sm:$0xf]
  %v830 = vld [vmem:[%s497 + $0x118] sm:$0xf]
  %v831 = vld [vmem:[%s497 + $0x11c] sm:$0xf]
  %v832 = vld [vmem:[%s497 + $0x120] sm:$0xf]
  %v833 = vld [vmem:[%s497 + $0x124] sm:$0xf]
  %v834 = vld [vmem:[%s497 + $0x128] sm:$0xf]
  %v835 = vld [vmem:[%s497 + $0x12c] sm:$0xf]
  %v836 = vld [vmem:[%s497 + $0x130] sm:$0xf]
  %v837 = vld [vmem:[%s497 + $0x134] sm:$0xf]
  %v838 = vld [vmem:[%s515] sm:$0xf]
  %v839 = vld [vmem:[%s515 + $0x4] sm:$0xf]
  %v840 = vld [vmem:[%s515 + $0x8] sm:$0xf]
  %v841 = vld [vmem:[%s515 + $0xc] sm:$0xf]
  %v842 = vld [vmem:[%s515 + $0x10] sm:$0xf]
  %v843 = vld [vmem:[%s515 + $0x14] sm:$0xf]
  %v844 = vld [vmem:[%s515 + $0x18] sm:$0xf]
  %v845 = vld [vmem:[%s515 + $0x1c] sm:$0xf]
  %v846 = vld [vmem:[%s515 + $0x28] sm:$0xf]
  %v847 = vld [vmem:[%s515 + $0x2c] sm:$0xf]
  %v848 = vld [vmem:[%s515 + $0x30] sm:$0xf]
  %v849 = vld [vmem:[%s515 + $0x34] sm:$0xf]
  %v850 = vld [vmem:[%s515 + $0x38] sm:$0xf]
  %v851 = vld [vmem:[%s515 + $0x3c] sm:$0xf]
  %v852 = vld [vmem:[%s515 + $0x40] sm:$0xf]
  %v853 = vld [vmem:[%s515 + $0x44] sm:$0xf]
  %v854 = vld [vmem:[%s515 + $0x50] sm:$0xf]
  %v855 = vld [vmem:[%s515 + $0x54] sm:$0xf]
  %v856 = vld [vmem:[%s515 + $0x58] sm:$0xf]
  %v857 = vld [vmem:[%s515 + $0x5c] sm:$0xf]
  %v858 = vld [vmem:[%s515 + $0x60] sm:$0xf]
  %v859 = vld [vmem:[%s515 + $0x64] sm:$0xf]
  %v860 = vld [vmem:[%s515 + $0x68] sm:$0xf]
  %v861 = vld [vmem:[%s515 + $0x6c] sm:$0xf]
  %v862 = vld [vmem:[%s515 + $0x78] sm:$0xf]
  %v863 = vld [vmem:[%s515 + $0x7c] sm:$0xf]
  %v864 = vld [vmem:[%s515 + $0x80] sm:$0xf]
  %v865 = vld [vmem:[%s515 + $0x84] sm:$0xf]
  %v866 = vld [vmem:[%s515 + $0x88] sm:$0xf]
  %v867 = vld [vmem:[%s515 + $0x8c] sm:$0xf]
  %v868 = vld [vmem:[%s515 + $0x90] sm:$0xf]
  %v869 = vld [vmem:[%s515 + $0x94] sm:$0xf]
  %v870 = vld [vmem:[%s515 + $0xa0] sm:$0xf]
  %v871 = vld [vmem:[%s515 + $0xa4] sm:$0xf]
  %v872 = vld [vmem:[%s515 + $0xa8] sm:$0xf]
  %v873 = vld [vmem:[%s515 + $0xac] sm:$0xf]
  %v874 = vld [vmem:[%s515 + $0xb0] sm:$0xf]
  %v875 = vld [vmem:[%s515 + $0xb4] sm:$0xf]
  %v876 = vld [vmem:[%s515 + $0xb8] sm:$0xf]
  %v877 = vld [vmem:[%s515 + $0xbc] sm:$0xf]
  %v878 = vld [vmem:[%s515 + $0xc8] sm:$0xf]
  %v879 = vld [vmem:[%s515 + $0xcc] sm:$0xf]
  %v880 = vld [vmem:[%s515 + $0xd0] sm:$0xf]
  %v881 = vld [vmem:[%s515 + $0xd4] sm:$0xf]
  %v882 = vld [vmem:[%s515 + $0xd8] sm:$0xf]
  %v883 = vld [vmem:[%s515 + $0xdc] sm:$0xf]
  %v884 = vld [vmem:[%s515 + $0xe0] sm:$0xf]
  %v885 = vld [vmem:[%s515 + $0xe4] sm:$0xf]
  %v886 = vld [vmem:[%s515 + $0xf0] sm:$0xf]
  %v887 = vld [vmem:[%s515 + $0xf4] sm:$0xf]
  %v888 = vld [vmem:[%s515 + $0xf8] sm:$0xf]
  %v889 = vld [vmem:[%s515 + $0xfc] sm:$0xf]
  %v890 = vld [vmem:[%s515 + $0x100] sm:$0xf]
  %v891 = vld [vmem:[%s515 + $0x104] sm:$0xf]
  %v892 = vld [vmem:[%s515 + $0x108] sm:$0xf]
  %v893 = vld [vmem:[%s515 + $0x10c] sm:$0xf]
  %v894 = vld [vmem:[%s515 + $0x118] sm:$0xf]
  %v895 = vld [vmem:[%s515 + $0x11c] sm:$0xf]
  %v896 = vld [vmem:[%s515 + $0x120] sm:$0xf]
  %v897 = vld [vmem:[%s515 + $0x124] sm:$0xf]
  %v898 = vld [vmem:[%s515 + $0x128] sm:$0xf]
  %v899 = vld [vmem:[%s515 + $0x12c] sm:$0xf]
  %v900 = vld [vmem:[%s515 + $0x130] sm:$0xf]
  %v901 = vld [vmem:[%s515 + $0x134] sm:$0xf]
  %s902 = scalar_lea.vmem [#allocation2], 48
  %v903 = vld [vmem:[%s902] sm:$0xf]
  %v904 = vld [vmem:[%s902 + $0x4] sm:$0xf]
  %v905 = vld [vmem:[%s902 + $0x8] sm:$0xf]
  %v906 = vld [vmem:[%s902 + $0xc] sm:$0xf]
  %v907 = vld [vmem:[%s902 + $0x10] sm:$0xf]
  %v908 = vld [vmem:[%s902 + $0x14] sm:$0xf]
  %v909 = vld [vmem:[%s902 + $0x18] sm:$0xf]
  %v910 = vld [vmem:[%s902 + $0x1c] sm:$0xf]
  %v911 = vld [vmem:[%s902 + $0x28] sm:$0xf]
  %v912 = vld [vmem:[%s902 + $0x2c] sm:$0xf]
  %v913 = vld [vmem:[%s902 + $0x30] sm:$0xf]
  %v914 = vld [vmem:[%s902 + $0x34] sm:$0xf]
  %v915 = vld [vmem:[%s902 + $0x38] sm:$0xf]
  %v916 = vld [vmem:[%s902 + $0x3c] sm:$0xf]
  %v917 = vld [vmem:[%s902 + $0x40] sm:$0xf]
  %v918 = vld [vmem:[%s902 + $0x44] sm:$0xf]
  %v919 = vld [vmem:[%s902 + $0x50] sm:$0xf]
  %v920 = vld [vmem:[%s902 + $0x54] sm:$0xf]
  %v921 = vld [vmem:[%s902 + $0x58] sm:$0xf]
  %v922 = vld [vmem:[%s902 + $0x5c] sm:$0xf]
  %v923 = vld [vmem:[%s902 + $0x60] sm:$0xf]
  %v924 = vld [vmem:[%s902 + $0x64] sm:$0xf]
  %v925 = vld [vmem:[%s902 + $0x68] sm:$0xf]
  %v926 = vld [vmem:[%s902 + $0x6c] sm:$0xf]
  %v927 = vld [vmem:[%s902 + $0x78] sm:$0xf]
  %v928 = vld [vmem:[%s902 + $0x7c] sm:$0xf]
  %v929 = vld [vmem:[%s902 + $0x80] sm:$0xf]
  %v930 = vld [vmem:[%s902 + $0x84] sm:$0xf]
  %v931 = vld [vmem:[%s902 + $0x88] sm:$0xf]
  %v932 = vld [vmem:[%s902 + $0x8c] sm:$0xf]
  %v933 = vld [vmem:[%s902 + $0x90] sm:$0xf]
  %v934 = vld [vmem:[%s902 + $0x94] sm:$0xf]
  %v935 = vld [vmem:[%s902 + $0xa0] sm:$0xf]
  %v936 = vld [vmem:[%s902 + $0xa4] sm:$0xf]
  %v937 = vld [vmem:[%s902 + $0xa8] sm:$0xf]
  %v938 = vld [vmem:[%s902 + $0xac] sm:$0xf]
  %v939 = vld [vmem:[%s902 + $0xb0] sm:$0xf]
  %v940 = vld [vmem:[%s902 + $0xb4] sm:$0xf]
  %v941 = vld [vmem:[%s902 + $0xb8] sm:$0xf]
  %v942 = vld [vmem:[%s902 + $0xbc] sm:$0xf]
  %v943 = vld [vmem:[%s902 + $0xc8] sm:$0xf]
  %v944 = vld [vmem:[%s902 + $0xcc] sm:$0xf]
  %v945 = vld [vmem:[%s902 + $0xd0] sm:$0xf]
  %v946 = vld [vmem:[%s902 + $0xd4] sm:$0xf]
  %v947 = vld [vmem:[%s902 + $0xd8] sm:$0xf]
  %v948 = vld [vmem:[%s902 + $0xdc] sm:$0xf]
  %v949 = vld [vmem:[%s902 + $0xe0] sm:$0xf]
  %v950 = vld [vmem:[%s902 + $0xe4] sm:$0xf]
  %v951 = vld [vmem:[%s902 + $0xf0] sm:$0xf]
  %v952 = vld [vmem:[%s902 + $0xf4] sm:$0xf]
  %v953 = vld [vmem:[%s902 + $0xf8] sm:$0xf]
  %v954 = vld [vmem:[%s902 + $0xfc] sm:$0xf]
  %v955 = vld [vmem:[%s902 + $0x100] sm:$0xf]
  %v956 = vld [vmem:[%s902 + $0x104] sm:$0xf]
  %v957 = vld [vmem:[%s902 + $0x108] sm:$0xf]
  %v958 = vld [vmem:[%s902 + $0x10c] sm:$0xf]
  %v959 = vld [vmem:[%s902 + $0x118] sm:$0xf]
  %v960 = vld [vmem:[%s902 + $0x11c] sm:$0xf]
  %v961 = vld [vmem:[%s902 + $0x120] sm:$0xf]
  %v962 = vld [vmem:[%s902 + $0x124] sm:$0xf]
  %v963 = vld [vmem:[%s902 + $0x128] sm:$0xf]
  %v964 = vld [vmem:[%s902 + $0x12c] sm:$0xf]
  %v965 = vld [vmem:[%s902 + $0x130] sm:$0xf]
  %v966 = vld [vmem:[%s902 + $0x134] sm:$0xf]
  %s967 = scalar_lea.vmem [#allocation2], 80
  %v968 = vld [vmem:[%s967] sm:$0xf]
  %v969 = vld [vmem:[%s967 + $0x4] sm:$0xf]
  %v970 = vld [vmem:[%s967 + $0x8] sm:$0xf]
  %v971 = vld [vmem:[%s967 + $0xc] sm:$0xf]
  %v972 = vld [vmem:[%s967 + $0x10] sm:$0xf]
  %v973 = vld [vmem:[%s967 + $0x14] sm:$0xf]
  %v974 = vld [vmem:[%s967 + $0x18] sm:$0xf]
  %v975 = vld [vmem:[%s967 + $0x1c] sm:$0xf]
  %v976 = vld [vmem:[%s967 + $0x28] sm:$0xf]
  %v977 = vld [vmem:[%s967 + $0x2c] sm:$0xf]
  %v978 = vld [vmem:[%s967 + $0x30] sm:$0xf]
  %v979 = vld [vmem:[%s967 + $0x34] sm:$0xf]
  %v980 = vld [vmem:[%s967 + $0x38] sm:$0xf]
  %v981 = vld [vmem:[%s967 + $0x3c] sm:$0xf]
  %v982 = vld [vmem:[%s967 + $0x40] sm:$0xf]
  %v983 = vld [vmem:[%s967 + $0x44] sm:$0xf]
  %v984 = vld [vmem:[%s967 + $0x50] sm:$0xf]
  %v985 = vld [vmem:[%s967 + $0x54] sm:$0xf]
  %v986 = vld [vmem:[%s967 + $0x58] sm:$0xf]
  %v987 = vld [vmem:[%s967 + $0x5c] sm:$0xf]
  %v988 = vld [vmem:[%s967 + $0x60] sm:$0xf]
  %v989 = vld [vmem:[%s967 + $0x64] sm:$0xf]
  %v990 = vld [vmem:[%s967 + $0x68] sm:$0xf]
  %v991 = vld [vmem:[%s967 + $0x6c] sm:$0xf]
  %v992 = vld [vmem:[%s967 + $0x78] sm:$0xf]
  %v993 = vld [vmem:[%s967 + $0x7c] sm:$0xf]
  %v994 = vld [vmem:[%s967 + $0x80] sm:$0xf]
  %v995 = vld [vmem:[%s967 + $0x84] sm:$0xf]
  %v996 = vld [vmem:[%s967 + $0x88] sm:$0xf]
  %v997 = vld [vmem:[%s967 + $0x8c] sm:$0xf]
  %v998 = vld [vmem:[%s967 + $0x90] sm:$0xf]
  %v999 = vld [vmem:[%s967 + $0x94] sm:$0xf]
  %v1000 = vld [vmem:[%s967 + $0xa0] sm:$0xf]
  %v1001 = vld [vmem:[%s967 + $0xa4] sm:$0xf]
  %v1002 = vld [vmem:[%s967 + $0xa8] sm:$0xf]
  %v1003 = vld [vmem:[%s967 + $0xac] sm:$0xf]
  %v1004 = vld [vmem:[%s967 + $0xb0] sm:$0xf]
  %v1005 = vld [vmem:[%s967 + $0xb4] sm:$0xf]
  %v1006 = vld [vmem:[%s967 + $0xb8] sm:$0xf]
  %v1007 = vld [vmem:[%s967 + $0xbc] sm:$0xf]
  %v1008 = vld [vmem:[%s967 + $0xc8] sm:$0xf]
  %v1009 = vld [vmem:[%s967 + $0xcc] sm:$0xf]
  %v1010 = vld [vmem:[%s967 + $0xd0] sm:$0xf]
  %v1011 = vld [vmem:[%s967 + $0xd4] sm:$0xf]
  %v1012 = vld [vmem:[%s967 + $0xd8] sm:$0xf]
  %v1013 = vld [vmem:[%s967 + $0xdc] sm:$0xf]
  %v1014 = vld [vmem:[%s967 + $0xe0] sm:$0xf]
  %v1015 = vld [vmem:[%s967 + $0xe4] sm:$0xf]
  %v1016 = vld [vmem:[%s967 + $0xf0] sm:$0xf]
  %v1017 = vld [vmem:[%s967 + $0xf4] sm:$0xf]
  %v1018 = vld [vmem:[%s967 + $0xf8] sm:$0xf]
  %v1019 = vld [vmem:[%s967 + $0xfc] sm:$0xf]
  %v1020 = vld [vmem:[%s967 + $0x100] sm:$0xf]
  %v1021 = vld [vmem:[%s967 + $0x104] sm:$0xf]
  %v1022 = vld [vmem:[%s967 + $0x108] sm:$0xf]
  %v1023 = vld [vmem:[%s967 + $0x10c] sm:$0xf]
  %v1024 = vld [vmem:[%s967 + $0x118] sm:$0xf]
  %v1025 = vld [vmem:[%s967 + $0x11c] sm:$0xf]
  %v1026 = vld [vmem:[%s967 + $0x120] sm:$0xf]
  %v1027 = vld [vmem:[%s967 + $0x124] sm:$0xf]
  %v1028 = vld [vmem:[%s967 + $0x128] sm:$0xf]
  %v1029 = vld [vmem:[%s967 + $0x12c] sm:$0xf]
  %v1030 = vld [vmem:[%s967 + $0x130] sm:$0xf]
  %v1031 = vld [vmem:[%s967 + $0x134] sm:$0xf]
  %s1032 = scalar_lea.vmem [#allocation2], 84
  %v1033 = vld [vmem:[%s1032] sm:$0xf]
  %v1034 = vld [vmem:[%s1032 + $0x4] sm:$0xf]
  %v1035 = vld [vmem:[%s1032 + $0x8] sm:$0xf]
  %v1036 = vld [vmem:[%s1032 + $0xc] sm:$0xf]
  %v1037 = vld [vmem:[%s1032 + $0x10] sm:$0xf]
  %v1038 = vld [vmem:[%s1032 + $0x14] sm:$0xf]
  %v1039 = vld [vmem:[%s1032 + $0x18] sm:$0xf]
  %v1040 = vld [vmem:[%s1032 + $0x1c] sm:$0xf]
  %v1041 = vld [vmem:[%s1032 + $0x28] sm:$0xf]
  %v1042 = vld [vmem:[%s1032 + $0x2c] sm:$0xf]
  %v1043 = vld [vmem:[%s1032 + $0x30] sm:$0xf]
  %v1044 = vld [vmem:[%s1032 + $0x34] sm:$0xf]
  %v1045 = vld [vmem:[%s1032 + $0x38] sm:$0xf]
  %v1046 = vld [vmem:[%s1032 + $0x3c] sm:$0xf]
  %v1047 = vld [vmem:[%s1032 + $0x40] sm:$0xf]
  %v1048 = vld [vmem:[%s1032 + $0x44] sm:$0xf]
  %v1049 = vld [vmem:[%s1032 + $0x50] sm:$0xf]
  %v1050 = vld [vmem:[%s1032 + $0x54] sm:$0xf]
  %v1051 = vld [vmem:[%s1032 + $0x58] sm:$0xf]
  %v1052 = vld [vmem:[%s1032 + $0x5c] sm:$0xf]
  %v1053 = vld [vmem:[%s1032 + $0x60] sm:$0xf]
  %v1054 = vld [vmem:[%s1032 + $0x64] sm:$0xf]
  %v1055 = vld [vmem:[%s1032 + $0x68] sm:$0xf]
  %v1056 = vld [vmem:[%s1032 + $0x6c] sm:$0xf]
  %v1057 = vld [vmem:[%s1032 + $0x78] sm:$0xf]
  %v1058 = vld [vmem:[%s1032 + $0x7c] sm:$0xf]
  %v1059 = vld [vmem:[%s1032 + $0x80] sm:$0xf]
  %v1060 = vld [vmem:[%s1032 + $0x84] sm:$0xf]
  %v1061 = vld [vmem:[%s1032 + $0x88] sm:$0xf]
  %v1062 = vld [vmem:[%s1032 + $0x8c] sm:$0xf]
  %v1063 = vld [vmem:[%s1032 + $0x90] sm:$0xf]
  %v1064 = vld [vmem:[%s1032 + $0x94] sm:$0xf]
  %v1065 = vld [vmem:[%s1032 + $0xa0] sm:$0xf]
  %v1066 = vld [vmem:[%s1032 + $0xa4] sm:$0xf]
  %v1067 = vld [vmem:[%s1032 + $0xa8] sm:$0xf]
  %v1068 = vld [vmem:[%s1032 + $0xac] sm:$0xf]
  %v1069 = vld [vmem:[%s1032 + $0xb0] sm:$0xf]
  %v1070 = vld [vmem:[%s1032 + $0xb4] sm:$0xf]
  %v1071 = vld [vmem:[%s1032 + $0xb8] sm:$0xf]
  %v1072 = vld [vmem:[%s1032 + $0xbc] sm:$0xf]
  %v1073 = vld [vmem:[%s1032 + $0xc8] sm:$0xf]
  %v1074 = vld [vmem:[%s1032 + $0xcc] sm:$0xf]
  %v1075 = vld [vmem:[%s1032 + $0xd0] sm:$0xf]
  %v1076 = vld [vmem:[%s1032 + $0xd4] sm:$0xf]
  %v1077 = vld [vmem:[%s1032 + $0xd8] sm:$0xf]
  %v1078 = vld [vmem:[%s1032 + $0xdc] sm:$0xf]
  %v1079 = vld [vmem:[%s1032 + $0xe0] sm:$0xf]
  %v1080 = vld [vmem:[%s1032 + $0xe4] sm:$0xf]
  %v1081 = vld [vmem:[%s1032 + $0xf0] sm:$0xf]
  %v1082 = vld [vmem:[%s1032 + $0xf4] sm:$0xf]
  %v1083 = vld [vmem:[%s1032 + $0xf8] sm:$0xf]
  %v1084 = vld [vmem:[%s1032 + $0xfc] sm:$0xf]
  %v1085 = vld [vmem:[%s1032 + $0x100] sm:$0xf]
  %v1086 = vld [vmem:[%s1032 + $0x104] sm:$0xf]
  %v1087 = vld [vmem:[%s1032 + $0x108] sm:$0xf]
  %v1088 = vld [vmem:[%s1032 + $0x10c] sm:$0xf]
  %v1089 = vld [vmem:[%s1032 + $0x118] sm:$0xf]
  %v1090 = vld [vmem:[%s1032 + $0x11c] sm:$0xf]
  %v1091 = vld [vmem:[%s1032 + $0x120] sm:$0xf]
  %v1092 = vld [vmem:[%s1032 + $0x124] sm:$0xf]
  %v1093 = vld [vmem:[%s1032 + $0x128] sm:$0xf]
  %v1094 = vld [vmem:[%s1032 + $0x12c] sm:$0xf]
  %v1095 = vld [vmem:[%s1032 + $0x130] sm:$0xf]
  %v1096 = vld [vmem:[%s1032 + $0x134] sm:$0xf]
  %s1097 = scalar_lea.vmem [#allocation2], 88
  %v1098 = vld [vmem:[%s1097] sm:$0xf]
  %v1099 = vld [vmem:[%s1097 + $0x4] sm:$0xf]
  %v1100 = vld [vmem:[%s1097 + $0x8] sm:$0xf]
  %v1101 = vld [vmem:[%s1097 + $0xc] sm:$0xf]
  %v1102 = vld [vmem:[%s1097 + $0x10] sm:$0xf]
  %v1103 = vld [vmem:[%s1097 + $0x14] sm:$0xf]
  %v1104 = vld [vmem:[%s1097 + $0x18] sm:$0xf]
  %v1105 = vld [vmem:[%s1097 + $0x1c] sm:$0xf]
  %v1106 = vld [vmem:[%s1097 + $0x28] sm:$0xf]
  %v1107 = vld [vmem:[%s1097 + $0x2c] sm:$0xf]
  %v1108 = vld [vmem:[%s1097 + $0x30] sm:$0xf]
  %v1109 = vld [vmem:[%s1097 + $0x34] sm:$0xf]
  %v1110 = vld [vmem:[%s1097 + $0x38] sm:$0xf]
  %v1111 = vld [vmem:[%s1097 + $0x3c] sm:$0xf]
  %v1112 = vld [vmem:[%s1097 + $0x40] sm:$0xf]
  %v1113 = vld [vmem:[%s1097 + $0x44] sm:$0xf]
  %v1114 = vld [vmem:[%s1097 + $0x50] sm:$0xf]
  %v1115 = vld [vmem:[%s1097 + $0x54] sm:$0xf]
  %v1116 = vld [vmem:[%s1097 + $0x58] sm:$0xf]
  %v1117 = vld [vmem:[%s1097 + $0x5c] sm:$0xf]
  %v1118 = vld [vmem:[%s1097 + $0x60] sm:$0xf]
  %v1119 = vld [vmem:[%s1097 + $0x64] sm:$0xf]
  %v1120 = vld [vmem:[%s1097 + $0x68] sm:$0xf]
  %v1121 = vld [vmem:[%s1097 + $0x6c] sm:$0xf]
  %v1122 = vld [vmem:[%s1097 + $0x78] sm:$0xf]
  %v1123 = vld [vmem:[%s1097 + $0x7c] sm:$0xf]
  %v1124 = vld [vmem:[%s1097 + $0x80] sm:$0xf]
  %v1125 = vld [vmem:[%s1097 + $0x84] sm:$0xf]
  %v1126 = vld [vmem:[%s1097 + $0x88] sm:$0xf]
  %v1127 = vld [vmem:[%s1097 + $0x8c] sm:$0xf]
  %v1128 = vld [vmem:[%s1097 + $0x90] sm:$0xf]
  %v1129 = vld [vmem:[%s1097 + $0x94] sm:$0xf]
  %v1130 = vld [vmem:[%s1097 + $0xa0] sm:$0xf]
  %v1131 = vld [vmem:[%s1097 + $0xa4] sm:$0xf]
  %v1132 = vld [vmem:[%s1097 + $0xa8] sm:$0xf]
  %v1133 = vld [vmem:[%s1097 + $0xac] sm:$0xf]
  %v1134 = vld [vmem:[%s1097 + $0xb0] sm:$0xf]
  %v1135 = vld [vmem:[%s1097 + $0xb4] sm:$0xf]
  %v1136 = vld [vmem:[%s1097 + $0xb8] sm:$0xf]
  %v1137 = vld [vmem:[%s1097 + $0xbc] sm:$0xf]
  %v1138 = vld [vmem:[%s1097 + $0xc8] sm:$0xf]
  %v1139 = vld [vmem:[%s1097 + $0xcc] sm:$0xf]
  %v1140 = vld [vmem:[%s1097 + $0xd0] sm:$0xf]
  %v1141 = vld [vmem:[%s1097 + $0xd4] sm:$0xf]
  %v1142 = vld [vmem:[%s1097 + $0xd8] sm:$0xf]
  %v1143 = vld [vmem:[%s1097 + $0xdc] sm:$0xf]
  %v1144 = vld [vmem:[%s1097 + $0xe0] sm:$0xf]
  %v1145 = vld [vmem:[%s1097 + $0xe4] sm:$0xf]
  %v1146 = vld [vmem:[%s1097 + $0xf0] sm:$0xf]
  %v1147 = vld [vmem:[%s1097 + $0xf4] sm:$0xf]
  %v1148 = vld [vmem:[%s1097 + $0xf8] sm:$0xf]
  %v1149 = vld [vmem:[%s1097 + $0xfc] sm:$0xf]
  %v1150 = vld [vmem:[%s1097 + $0x100] sm:$0xf]
  %v1151 = vld [vmem:[%s1097 + $0x104] sm:$0xf]
  %v1152 = vld [vmem:[%s1097 + $0x108] sm:$0xf]
  %v1153 = vld [vmem:[%s1097 + $0x10c] sm:$0xf]
  %v1154 = vld [vmem:[%s1097 + $0x118] sm:$0xf]
  %v1155 = vld [vmem:[%s1097 + $0x11c] sm:$0xf]
  %v1156 = vld [vmem:[%s1097 + $0x120] sm:$0xf]
  %v1157 = vld [vmem:[%s1097 + $0x124] sm:$0xf]
  %v1158 = vld [vmem:[%s1097 + $0x128] sm:$0xf]
  %v1159 = vld [vmem:[%s1097 + $0x12c] sm:$0xf]
  %v1160 = vld [vmem:[%s1097 + $0x130] sm:$0xf]
  %v1161 = vld [vmem:[%s1097 + $0x134] sm:$0xf]
  %v1162 = vld [vmem:[%s1] sm:$0x3]
  %s1163 = scalar_lea.vmem %s1, 2
  %v1164 = vld [vmem:[%s1163] sm:$0x3]
  %v1229 = vunpack.c.l.b16 %v645
  %v1230 = vunpack.c.l.b16 %v646
  %v1231 = vunpack.c.l.b16 %v647
  %v1232 = vunpack.c.l.b16 %v648
  %v1233 = vunpack.c.l.b16 %v649
  %v1234 = vunpack.c.l.b16 %v650
  %v1235 = vunpack.c.l.b16 %v651
  %v1236 = vunpack.c.l.b16 %v652
  %v1237 = vunpack.c.l.b16 %v653
  %v1238 = vunpack.c.l.b16 %v654
  %v1239 = vunpack.c.l.b16 %v655
  %v1240 = vunpack.c.l.b16 %v656
  %v1241 = vunpack.c.l.b16 %v657
  %v1242 = vunpack.c.l.b16 %v658
  %v1243 = vunpack.c.l.b16 %v659
  %v1244 = vunpack.c.l.b16 %v660
  %v1245 = vunpack.c.l.b16 %v661
  %v1246 = vunpack.c.l.b16 %v662
  %v1247 = vunpack.c.l.b16 %v663
  %v1248 = vunpack.c.l.b16 %v664
  %v1249 = vunpack.c.l.b16 %v665
  %v1250 = vunpack.c.l.b16 %v666
  %v1251 = vunpack.c.l.b16 %v667
  %v1252 = vunpack.c.l.b16 %v668
  %v1253 = vunpack.c.l.b16 %v669
  %v1254 = vunpack.c.l.b16 %v670
  %v1255 = vunpack.c.l.b16 %v671
  %v1256 = vunpack.c.l.b16 %v672
  %v1257 = vunpack.c.l.b16 %v673
  %v1258 = vunpack.c.l.b16 %v674
  %v1259 = vunpack.c.l.b16 %v675
  %v1260 = vunpack.c.l.b16 %v676
  %v1261 = vunpack.c.l.b16 %v677
  %v1262 = vunpack.c.l.b16 %v678
  %v1263 = vunpack.c.l.b16 %v679
  %v1264 = vunpack.c.l.b16 %v680
  %v1265 = vunpack.c.l.b16 %v681
  %v1266 = vunpack.c.l.b16 %v682
  %v1267 = vunpack.c.l.b16 %v683
  %v1268 = vunpack.c.l.b16 %v684
  %v1269 = vunpack.c.l.b16 %v685
  %v1270 = vunpack.c.l.b16 %v686
  %v1271 = vunpack.c.l.b16 %v687
  %v1272 = vunpack.c.l.b16 %v688
  %v1273 = vunpack.c.l.b16 %v689
  %v1274 = vunpack.c.l.b16 %v690
  %v1275 = vunpack.c.l.b16 %v691
  %v1276 = vunpack.c.l.b16 %v692
  %v1277 = vunpack.c.l.b16 %v693
  %v1278 = vunpack.c.l.b16 %v694
  %v1279 = vunpack.c.l.b16 %v695
  %v1280 = vunpack.c.l.b16 %v696
  %v1281 = vunpack.c.l.b16 %v697
  %v1282 = vunpack.c.l.b16 %v698
  %v1283 = vunpack.c.l.b16 %v699
  %v1284 = vunpack.c.l.b16 %v700
  %v1285 = vunpack.c.l.b16 %v701
  %v1286 = vunpack.c.l.b16 %v702
  %v1287 = vunpack.c.l.b16 %v703
  %v1288 = vunpack.c.l.b16 %v704
  %v1289 = vunpack.c.l.b16 %v705
  %v1290 = vunpack.c.l.b16 %v706
  %v1291 = vunpack.c.l.b16 %v707
  %v1292 = vunpack.c.l.b16 %v708
  %v1293 = vpack.c.b16 %v1230, %v1229
  %v1294 = vpack.c.b16 %v1232, %v1231
  %v1295 = vpack.c.b16 %v1234, %v1233
  %v1296 = vpack.c.b16 %v1236, %v1235
  %v1297 = vpack.c.b16 %v1238, %v1237
  %v1298 = vpack.c.b16 %v1240, %v1239
  %v1299 = vpack.c.b16 %v1242, %v1241
  %v1300 = vpack.c.b16 %v1244, %v1243
  %v1301 = vpack.c.b16 %v1246, %v1245
  %v1302 = vpack.c.b16 %v1248, %v1247
  %v1303 = vpack.c.b16 %v1250, %v1249
  %v1304 = vpack.c.b16 %v1252, %v1251
  %v1305 = vpack.c.b16 %v1254, %v1253
  %v1306 = vpack.c.b16 %v1256, %v1255
  %v1307 = vpack.c.b16 %v1258, %v1257
  %v1308 = vpack.c.b16 %v1260, %v1259
  %v1309 = vpack.c.b16 %v1262, %v1261
  %v1310 = vpack.c.b16 %v1264, %v1263
  %v1311 = vpack.c.b16 %v1266, %v1265
  %v1312 = vpack.c.b16 %v1268, %v1267
  %v1313 = vpack.c.b16 %v1270, %v1269
  %v1314 = vpack.c.b16 %v1272, %v1271
  %v1315 = vpack.c.b16 %v1274, %v1273
  %v1316 = vpack.c.b16 %v1276, %v1275
  %v1317 = vpack.c.b16 %v1278, %v1277
  %v1318 = vpack.c.b16 %v1280, %v1279
  %v1319 = vpack.c.b16 %v1282, %v1281
  %v1320 = vpack.c.b16 %v1284, %v1283
  %v1321 = vpack.c.b16 %v1286, %v1285
  %v1322 = vpack.c.b16 %v1288, %v1287
  %v1323 = vpack.c.b16 %v1290, %v1289
  %v1324 = vpack.c.b16 %v1292, %v1291
  %vm1325 = vcmask 31744
  %v1327 = vsel %vm1325, %v1293, 0
  %v1330 = vsel %vm1325, %v1294, 0
  %v1333 = vsel %vm1325, %v1295, 0
  %v1336 = vsel %vm1325, %v1296, 0
  %v1339 = vsel %vm1325, %v1297, 0
  %v1342 = vsel %vm1325, %v1298, 0
  %v1345 = vsel %vm1325, %v1299, 0
  %v1348 = vsel %vm1325, %v1300, 0
  %v1351 = vsel %vm1325, %v1301, 0
  %v1354 = vsel %vm1325, %v1302, 0
  %v1357 = vsel %vm1325, %v1303, 0
  %v1360 = vsel %vm1325, %v1304, 0
  %v1363 = vsel %vm1325, %v1305, 0
  %v1366 = vsel %vm1325, %v1306, 0
  %v1369 = vsel %vm1325, %v1307, 0
  %v1372 = vsel %vm1325, %v1308, 0
  %v1375 = vsel %vm1325, %v1309, 0
  %v1378 = vsel %vm1325, %v1310, 0
  %v1381 = vsel %vm1325, %v1311, 0
  %v1384 = vsel %vm1325, %v1312, 0
  %v1387 = vsel %vm1325, %v1313, 0
  %v1390 = vsel %vm1325, %v1314, 0
  %v1393 = vsel %vm1325, %v1315, 0
  %v1396 = vsel %vm1325, %v1316, 0
  %v1399 = vsel %vm1325, %v1317, 0
  %v1402 = vsel %vm1325, %v1318, 0
  %v1405 = vsel %vm1325, %v1319, 0
  %v1408 = vsel %vm1325, %v1320, 0
  %v1411 = vsel %vm1325, %v1321, 0
  %v1414 = vsel %vm1325, %v1322, 0
  %v1417 = vsel %vm1325, %v1323, 0
  %v1420 = vsel %vm1325, %v1324, 0
  %vm1422 = vcmask 1041408
  %v1424 = vsel %vm1422, %v1164, 0
  %1426 = vmatprep.subr.bf16.mxu0 0
  %1427 = vmatpush1.bf16.msra.mxu0 %v1424
  %1428 = vmatprep.subr.bf16.mxu0 0
  %1429 = vmatpush1.bf16.msra.mxu0 0
  %1430 = vmatprep.subr.bf16.mxu0 0
  %1431 = vmatpush1.bf16.msra.mxu0 0
  %1432 = vmatprep.subr.bf16.mxu0 0
  %1433 = vmatpush1.bf16.msra.mxu0 0
  %1434 = vmatprep.subr.bf16.mxu0 0
  %1435 = vmatpush1.bf16.msra.mxu0 0
  %1436 = vmatprep.subr.bf16.mxu0 0
  %1437 = vmatpush1.bf16.msra.mxu0 0
  %1438 = vmatprep.subr.bf16.mxu0 0
  %1439 = vmatpush1.bf16.msra.mxu0 0
  %1440 = vmatprep.subr.bf16.mxu0 0
  %1441 = vmatpush1.bf16.msra.mxu0 0
  %1442 = vmatprep.subr.bf16.mxu0 0
  %1443 = vmatpush1.bf16.msra.mxu0 0
  %1444 = vmatprep.subr.bf16.mxu0 0
  %1445 = vmatpush1.bf16.msra.mxu0 0
  %1446 = vmatprep.subr.bf16.mxu0 0
  %1447 = vmatpush1.bf16.msra.mxu0 0
  %1448 = vmatprep.subr.bf16.mxu0 0
  %1449 = vmatpush1.bf16.msra.mxu0 0
  %1450 = vmatprep.subr.bf16.mxu0 0
  %1451 = vmatpush1.bf16.msra.mxu0 0
  %1452 = vmatprep.subr.bf16.mxu0 0
  %1453 = vmatpush1.bf16.msra.mxu0 0
  %1454 = vmatprep.subr.bf16.mxu0 0
  %1455 = vmatpush1.bf16.msra.mxu0 0
  %1456 = vmatprep.subr.bf16.mxu0 0
  %1457 = vmatpush1.bf16.msra.mxu0 0
  %1458 = vmatprep.mubr.bf16.mxu0 0
  %1459 = vmatmul.mubr.bf16.gmra.mrb[0].mxu0 %v1327
  %v1460 = vpop.f32.mrb[0].mxu0
  %v1461 = vadd.f32 0.0, %v1460
  %v1462 = vpop.f32.mrb[0].mxu0
  %v1463 = vpop.f32.mrb[0].mxu0
  %v1464 = vadd.f32 0.0, %v1463
  %v1465 = vpop.f32.mrb[0].mxu0
  %1466 = vmatprep.mubr.bf16.mxu0 0
  %1467 = vmatmul.mubr.bf16.gmra.mrb[0].mxu0 %v1330
  %v1468 = vpop.f32.mrb[0].mxu0
  %v1469 = vadd.f32 0.0, %v1468
  %v1470 = vpop.f32.mrb[0].mxu0
  %v1471 = vpop.f32.mrb[0].mxu0
  %v1472 = vadd.f32 0.0, %v1471
  %v1473 = vpop.f32.mrb[0].mxu0
  %1474 = vmatprep.mubr.bf16.mxu0 0
  %1475 = vmatmul.mubr.bf16.gmra.mrb[0].mxu0 %v1333
  %v1476 = vpop.f32.mrb[0].mxu0
  %v1477 = vadd.f32 0.0, %v1476
  %v1478 = vpop.f32.mrb[0].mxu0
  %v1479 = vpop.f32.mrb[0].mxu0
  %v1480 = vadd.f32 0.0, %v1479
  %v1481 = vpop.f32.mrb[0].mxu0
  %1482 = vmatprep.mubr.bf16.mxu0 0
  %1483 = vmatmul.mubr.bf16.gmra.mrb[0].mxu0 %v1336
  %v1484 = vpop.f32.mrb[0].mxu0
  %v1485 = vadd.f32 0.0, %v1484
  %v1486 = vpop.f32.mrb[0].mxu0
  %v1487 = vpop.f32.mrb[0].mxu0
  %v1488 = vadd.f32 0.0, %v1487
  %v1489 = vpop.f32.mrb[0].mxu0
  %1490 = vmatprep.mubr.bf16.mxu0 0
  %1491 = vmatmul.mubr.bf16.gmra.mrb[0].mxu0 %v1339
  %v1492 = vpop.f32.mrb[0].mxu0
  %v1493 = vadd.f32 0.0, %v1492
  %v1494 = vpop.f32.mrb[0].mxu0
  %v1495 = vpop.f32.mrb[0].mxu0
  %v1496 = vadd.f32 0.0, %v1495
  %v1497 = vpop.f32.mrb[0].mxu0
  %1498 = vmatprep.mubr.bf16.mxu0 0
  %1499 = vmatmul.mubr.bf16.gmra.mrb[0].mxu0 %v1342
  %v1500 = vpop.f32.mrb[0].mxu0
  %v1501 = vadd.f32 0.0, %v1500
  %v1502 = vpop.f32.mrb[0].mxu0
  %v1503 = vpop.f32.mrb[0].mxu0
  %v1504 = vadd.f32 0.0, %v1503
  %v1505 = vpop.f32.mrb[0].mxu0
  %1506 = vmatprep.mubr.bf16.mxu0 0
  %1507 = vmatmul.mubr.bf16.gmra.mrb[0].mxu0 %v1345
  %v1508 = vpop.f32.mrb[0].mxu0
  %v1509 = vadd.f32 0.0, %v1508
  %v1510 = vpop.f32.mrb[0].mxu0
  %v1511 = vpop.f32.mrb[0].mxu0
  %v1512 = vadd.f32 0.0, %v1511
  %v1513 = vpop.f32.mrb[0].mxu0
  %1514 = vmatprep.mubr.bf16.mxu0 0
  %1515 = vmatmul.mubr.bf16.gmra.mrb[0].mxu0 %v1348
  %v1516 = vpop.f32.mrb[0].mxu0
  %v1517 = vadd.f32 0.0, %v1516
  %v1518 = vpop.f32.mrb[0].mxu0
  %v1519 = vpop.f32.mrb[0].mxu0
  %v1520 = vadd.f32 0.0, %v1519
  %v1521 = vpop.f32.mrb[0].mxu0
  %1522 = vmatprep.mubr.bf16.mxu0 0
  %1523 = vmatmul.mubr.bf16.gmra.mrb[0].mxu0 %v1351
  %v1524 = vpop.f32.mrb[0].mxu0
  %v1525 = vadd.f32 0.0, %v1524
  %v1526 = vpop.f32.mrb[0].mxu0
  %v1527 = vpop.f32.mrb[0].mxu0
  %v1528 = vadd.f32 0.0, %v1527
  %v1529 = vpop.f32.mrb[0].mxu0
  %1530 = vmatprep.mubr.bf16.mxu0 0
  %1531 = vmatmul.mubr.bf16.gmra.mrb[0].mxu0 %v1354
  %v1532 = vpop.f32.mrb[0].mxu0
  %v1533 = vadd.f32 0.0, %v1532
  %v1534 = vpop.f32.mrb[0].mxu0
  %v1535 = vpop.f32.mrb[0].mxu0
  %v1536 = vadd.f32 0.0, %v1535
  %v1537 = vpop.f32.mrb[0].mxu0
  %1538 = vmatprep.mubr.bf16.mxu0 0
  %1539 = vmatmul.mubr.bf16.gmra.mrb[0].mxu0 %v1357
  %v1540 = vpop.f32.mrb[0].mxu0
  %v1541 = vadd.f32 0.0, %v1540
  %v1542 = vpop.f32.mrb[0].mxu0
  %v1543 = vpop.f32.mrb[0].mxu0
  %v1544 = vadd.f32 0.0, %v1543
  %v1545 = vpop.f32.mrb[0].mxu0
  %1546 = vmatprep.mubr.bf16.mxu0 0
  %1547 = vmatmul.mubr.bf16.gmra.mrb[0].mxu0 %v1360
  %v1548 = vpop.f32.mrb[0].mxu0
  %v1549 = vadd.f32 0.0, %v1548
  %v1550 = vpop.f32.mrb[0].mxu0
  %v1551 = vpop.f32.mrb[0].mxu0
  %v1552 = vadd.f32 0.0, %v1551
  %v1553 = vpop.f32.mrb[0].mxu0
  %1554 = vmatprep.mubr.bf16.mxu0 0
  %1555 = vmatmul.mubr.bf16.gmra.mrb[0].mxu0 %v1363
  %v1556 = vpop.f32.mrb[0].mxu0
  %v1557 = vadd.f32 0.0, %v1556
  %v1558 = vpop.f32.mrb[0].mxu0
  %v1559 = vpop.f32.mrb[0].mxu0
  %v1560 = vadd.f32 0.0, %v1559
  %v1561 = vpop.f32.mrb[0].mxu0
  %1562 = vmatprep.mubr.bf16.mxu0 0
  %1563 = vmatmul.mubr.bf16.gmra.mrb[0].mxu0 %v1366
  %v1564 = vpop.f32.mrb[0].mxu0
  %v1565 = vadd.f32 0.0, %v1564
  %v1566 = vpop.f32.mrb[0].mxu0
  %v1567 = vpop.f32.mrb[0].mxu0
  %v1568 = vadd.f32 0.0, %v1567
  %v1569 = vpop.f32.mrb[0].mxu0
  %1570 = vmatprep.mubr.bf16.mxu0 0
  %1571 = vmatmul.mubr.bf16.gmra.mrb[0].mxu0 %v1369
  %v1572 = vpop.f32.mrb[0].mxu0
  %v1573 = vadd.f32 0.0, %v1572
  %v1574 = vpop.f32.mrb[0].mxu0
  %v1575 = vpop.f32.mrb[0].mxu0
  %v1576 = vadd.f32 0.0, %v1575
  %v1577 = vpop.f32.mrb[0].mxu0
  %1578 = vmatprep.mubr.bf16.mxu0 0
  %1579 = vmatmul.mubr.bf16.gmra.mrb[0].mxu0 %v1372
  %v1580 = vpop.f32.mrb[0].mxu0
  %v1581 = vadd.f32 0.0, %v1580
  %v1582 = vpop.f32.mrb[0].mxu0
  %v1583 = vpop.f32.mrb[0].mxu0
  %v1584 = vadd.f32 0.0, %v1583
  %v1585 = vpop.f32.mrb[0].mxu0
  %1586 = vmatprep.mubr.bf16.mxu0 0
  %1587 = vmatmul.mubr.bf16.gmra.mrb[0].mxu0 %v1375
  %v1588 = vpop.f32.mrb[0].mxu0
  %v1589 = vadd.f32 0.0, %v1588
  %v1590 = vpop.f32.mrb[0].mxu0
  %v1591 = vpop.f32.mrb[0].mxu0
  %v1592 = vadd.f32 0.0, %v1591
  %v1593 = vpop.f32.mrb[0].mxu0
  %1594 = vmatprep.mubr.bf16.mxu0 0
  %1595 = vmatmul.mubr.bf16.gmra.mrb[0].mxu0 %v1378
  %v1596 = vpop.f32.mrb[0].mxu0
  %v1597 = vadd.f32 0.0, %v1596
  %v1598 = vpop.f32.mrb[0].mxu0
  %v1599 = vpop.f32.mrb[0].mxu0
  %v1600 = vadd.f32 0.0, %v1599
  %v1601 = vpop.f32.mrb[0].mxu0
  %1602 = vmatprep.mubr.bf16.mxu0 0
  %1603 = vmatmul.mubr.bf16.gmra.mrb[0].mxu0 %v1381
  %v1604 = vpop.f32.mrb[0].mxu0
  %v1605 = vadd.f32 0.0, %v1604
  %v1606 = vpop.f32.mrb[0].mxu0
  %v1607 = vpop.f32.mrb[0].mxu0
  %v1608 = vadd.f32 0.0, %v1607
  %v1609 = vpop.f32.mrb[0].mxu0
  %1610 = vmatprep.mubr.bf16.mxu0 0
  %1611 = vmatmul.mubr.bf16.gmra.mrb[0].mxu0 %v1384
  %v1612 = vpop.f32.mrb[0].mxu0
  %v1613 = vadd.f32 0.0, %v1612
  %v1614 = vpop.f32.mrb[0].mxu0
  %v1615 = vpop.f32.mrb[0].mxu0
  %v1616 = vadd.f32 0.0, %v1615
  %v1617 = vpop.f32.mrb[0].mxu0
  %1618 = vmatprep.mubr.bf16.mxu0 0
  %1619 = vmatmul.mubr.bf16.gmra.mrb[0].mxu0 %v1387
  %v1620 = vpop.f32.mrb[0].mxu0
  %v1621 = vadd.f32 0.0, %v1620
  %v1622 = vpop.f32.mrb[0].mxu0
  %v1623 = vpop.f32.mrb[0].mxu0
  %v1624 = vadd.f32 0.0, %v1623
  %v1625 = vpop.f32.mrb[0].mxu0
  %1626 = vmatprep.mubr.bf16.mxu0 0
  %1627 = vmatmul.mubr.bf16.gmra.mrb[0].mxu0 %v1390
  %v1628 = vpop.f32.mrb[0].mxu0
  %v1629 = vadd.f32 0.0, %v1628
  %v1630 = vpop.f32.mrb[0].mxu0
  %v1631 = vpop.f32.mrb[0].mxu0
  %v1632 = vadd.f32 0.0, %v1631
  %v1633 = vpop.f32.mrb[0].mxu0
  %1634 = vmatprep.mubr.bf16.mxu0 0
  %1635 = vmatmul.mubr.bf16.gmra.mrb[0].mxu0 %v1393
  %v1636 = vpop.f32.mrb[0].mxu0
  %v1637 = vadd.f32 0.0, %v1636
  %v1638 = vpop.f32.mrb[0].mxu0
  %v1639 = vpop.f32.mrb[0].mxu0
  %v1640 = vadd.f32 0.0, %v1639
  %v1641 = vpop.f32.mrb[0].mxu0
  %1642 = vmatprep.mubr.bf16.mxu0 0
  %1643 = vmatmul.mubr.bf16.gmra.mrb[0].mxu0 %v1396
  %v1644 = vpop.f32.mrb[0].mxu0
  %v1645 = vadd.f32 0.0, %v1644
  %v1646 = vpop.f32.mrb[0].mxu0
  %v1647 = vpop.f32.mrb[0].mxu0
  %v1648 = vadd.f32 0.0, %v1647
  %v1649 = vpop.f32.mrb[0].mxu0
  %1650 = vmatprep.mubr.bf16.mxu0 0
  %1651 = vmatmul.mubr.bf16.gmra.mrb[0].mxu0 %v1399
  %v1652 = vpop.f32.mrb[0].mxu0
  %v1653 = vadd.f32 0.0, %v1652
  %v1654 = vpop.f32.mrb[0].mxu0
  %v1655 = vpop.f32.mrb[0].mxu0
  %v1656 = vadd.f32 0.0, %v1655
  %v1657 = vpop.f32.mrb[0].mxu0
  %1658 = vmatprep.mubr.bf16.mxu0 0
  %1659 = vmatmul.mubr.bf16.gmra.mrb[0].mxu0 %v1402
  %v1660 = vpop.f32.mrb[0].mxu0
  %v1661 = vadd.f32 0.0, %v1660
  %v1662 = vpop.f32.mrb[0].mxu0
  %v1663 = vpop.f32.mrb[0].mxu0
  %v1664 = vadd.f32 0.0, %v1663
  %v1665 = vpop.f32.mrb[0].mxu0
  %1666 = vmatprep.mubr.bf16.mxu0 0
  %1667 = vmatmul.mubr.bf16.gmra.mrb[0].mxu0 %v1405
  %v1668 = vpop.f32.mrb[0].mxu0
  %v1669 = vadd.f32 0.0, %v1668
  %v1670 = vpop.f32.mrb[0].mxu0
  %v1671 = vpop.f32.mrb[0].mxu0
  %v1672 = vadd.f32 0.0, %v1671
  %v1673 = vpop.f32.mrb[0].mxu0
  %1674 = vmatprep.mubr.bf16.mxu0 0
  %1675 = vmatmul.mubr.bf16.gmra.mrb[0].mxu0 %v1408
  %v1676 = vpop.f32.mrb[0].mxu0
  %v1677 = vadd.f32 0.0, %v1676
  %v1678 = vpop.f32.mrb[0].mxu0
  %v1679 = vpop.f32.mrb[0].mxu0
  %v1680 = vadd.f32 0.0, %v1679
  %v1681 = vpop.f32.mrb[0].mxu0
  %1682 = vmatprep.mubr.bf16.mxu0 0
  %1683 = vmatmul.mubr.bf16.gmra.mrb[0].mxu0 %v1411
  %v1684 = vpop.f32.mrb[0].mxu0
  %v1685 = vadd.f32 0.0, %v1684
  %v1686 = vpop.f32.mrb[0].mxu0
  %v1687 = vpop.f32.mrb[0].mxu0
  %v1688 = vadd.f32 0.0, %v1687
  %v1689 = vpop.f32.mrb[0].mxu0
  %1690 = vmatprep.mubr.bf16.mxu0 0
  %1691 = vmatmul.mubr.bf16.gmra.mrb[0].mxu0 %v1414
  %v1692 = vpop.f32.mrb[0].mxu0
  %v1693 = vadd.f32 0.0, %v1692
  %v1694 = vpop.f32.mrb[0].mxu0
  %v1695 = vpop.f32.mrb[0].mxu0
  %v1696 = vadd.f32 0.0, %v1695
  %v1697 = vpop.f32.mrb[0].mxu0
  %1698 = vmatprep.mubr.bf16.mxu0 0
  %1699 = vmatmul.mubr.bf16.gmra.mrb[0].mxu0 %v1417
  %v1700 = vpop.f32.mrb[0].mxu0
  %v1701 = vadd.f32 0.0, %v1700
  %v1702 = vpop.f32.mrb[0].mxu0
  %v1703 = vpop.f32.mrb[0].mxu0
  %v1704 = vadd.f32 0.0, %v1703
  %v1705 = vpop.f32.mrb[0].mxu0
  %1706 = vmatprep.mubr.bf16.mxu0 0
  %1707 = vmatmul.mubr.bf16.gmra.mrb[0].mxu0 %v1420
  %v1708 = vpop.f32.mrb[0].mxu0
  %v1709 = vadd.f32 0.0, %v1708
  %v1710 = vpop.f32.mrb[0].mxu0
  %v1711 = vpop.f32.mrb[0].mxu0
  %v1712 = vadd.f32 0.0, %v1711
  %v1713 = vpop.f32.mrb[0].mxu0
  %1714 = vdwg.mxu0
  %v1779 = vunpack.c.l.b16 %v580
  %v1780 = vunpack.c.l.b16 %v581
  %v1781 = vunpack.c.l.b16 %v582
  %v1782 = vunpack.c.l.b16 %v583
  %v1783 = vunpack.c.l.b16 %v584
  %v1784 = vunpack.c.l.b16 %v585
  %v1785 = vunpack.c.l.b16 %v586
  %v1786 = vunpack.c.l.b16 %v587
  %v1787 = vunpack.c.l.b16 %v588
  %v1788 = vunpack.c.l.b16 %v589
  %v1789 = vunpack.c.l.b16 %v590
  %v1790 = vunpack.c.l.b16 %v591
  %v1791 = vunpack.c.l.b16 %v592
  %v1792 = vunpack.c.l.b16 %v593
  %v1793 = vunpack.c.l.b16 %v594
  %v1794 = vunpack.c.l.b16 %v595
  %v1795 = vunpack.c.l.b16 %v596
  %v1796 = vunpack.c.l.b16 %v597
  %v1797 = vunpack.c.l.b16 %v598
  %v1798 = vunpack.c.l.b16 %v599
  %v1799 = vunpack.c.l.b16 %v600
  %v1800 = vunpack.c.l.b16 %v601
  %v1801 = vunpack.c.l.b16 %v602
  %v1802 = vunpack.c.l.b16 %v603
  %v1803 = vunpack.c.l.b16 %v604
  %v1804 = vunpack.c.l.b16 %v605
  %v1805 = vunpack.c.l.b16 %v606
  %v1806 = vunpack.c.l.b16 %v607
  %v1807 = vunpack.c.l.b16 %v608
  %v1808 = vunpack.c.l.b16 %v609
  %v1809 = vunpack.c.l.b16 %v610
  %v1810 = vunpack.c.l.b16 %v611
  %v1811 = vunpack.c.l.b16 %v612
  %v1812 = vunpack.c.l.b16 %v613
  %v1813 = vunpack.c.l.b16 %v614
  %v1814 = vunpack.c.l.b16 %v615
  %v1815 = vunpack.c.l.b16 %v616
  %v1816 = vunpack.c.l.b16 %v617
  %v1817 = vunpack.c.l.b16 %v618
  %v1818 = vunpack.c.l.b16 %v619
  %v1819 = vunpack.c.l.b16 %v620
  %v1820 = vunpack.c.l.b16 %v621
  %v1821 = vunpack.c.l.b16 %v622
  %v1822 = vunpack.c.l.b16 %v623
  %v1823 = vunpack.c.l.b16 %v624
  %v1824 = vunpack.c.l.b16 %v625
  %v1825 = vunpack.c.l.b16 %v626
  %v1826 = vunpack.c.l.b16 %v627
  %v1827 = vunpack.c.l.b16 %v628
  %v1828 = vunpack.c.l.b16 %v629
  %v1829 = vunpack.c.l.b16 %v630
  %v1830 = vunpack.c.l.b16 %v631
  %v1831 = vunpack.c.l.b16 %v632
  %v1832 = vunpack.c.l.b16 %v633
  %v1833 = vunpack.c.l.b16 %v634
  %v1834 = vunpack.c.l.b16 %v635
  %v1835 = vunpack.c.l.b16 %v636
  %v1836 = vunpack.c.l.b16 %v637
  %v1837 = vunpack.c.l.b16 %v638
  %v1838 = vunpack.c.l.b16 %v639
  %v1839 = vunpack.c.l.b16 %v640
  %v1840 = vunpack.c.l.b16 %v641
  %v1841 = vunpack.c.l.b16 %v642
  %v1842 = vunpack.c.l.b16 %v643
  %v1843 = vpack.c.b16 %v1780, %v1779
  %v1844 = vpack.c.b16 %v1782, %v1781
  %v1845 = vpack.c.b16 %v1784, %v1783
  %v1846 = vpack.c.b16 %v1786, %v1785
  %v1847 = vpack.c.b16 %v1788, %v1787
  %v1848 = vpack.c.b16 %v1790, %v1789
  %v1849 = vpack.c.b16 %v1792, %v1791
  %v1850 = vpack.c.b16 %v1794, %v1793
  %v1851 = vpack.c.b16 %v1796, %v1795
  %v1852 = vpack.c.b16 %v1798, %v1797
  %v1853 = vpack.c.b16 %v1800, %v1799
  %v1854 = vpack.c.b16 %v1802, %v1801
  %v1855 = vpack.c.b16 %v1804, %v1803
  %v1856 = vpack.c.b16 %v1806, %v1805
  %v1857 = vpack.c.b16 %v1808, %v1807
  %v1858 = vpack.c.b16 %v1810, %v1809
  %v1859 = vpack.c.b16 %v1812, %v1811
  %v1860 = vpack.c.b16 %v1814, %v1813
  %v1861 = vpack.c.b16 %v1816, %v1815
  %v1862 = vpack.c.b16 %v1818, %v1817
  %v1863 = vpack.c.b16 %v1820, %v1819
  %v1864 = vpack.c.b16 %v1822, %v1821
  %v1865 = vpack.c.b16 %v1824, %v1823
  %v1866 = vpack.c.b16 %v1826, %v1825
  %v1867 = vpack.c.b16 %v1828, %v1827
  %v1868 = vpack.c.b16 %v1830, %v1829
  %v1869 = vpack.c.b16 %v1832, %v1831
  %v1870 = vpack.c.b16 %v1834, %v1833
  %v1871 = vpack.c.b16 %v1836, %v1835
  %v1872 = vpack.c.b16 %v1838, %v1837
  %v1873 = vpack.c.b16 %v1840, %v1839
  %v1874 = vpack.c.b16 %v1842, %v1841
  %v1876 = vsel %vm1325, %v1843, 0
  %v1879 = vsel %vm1325, %v1844, 0
  %v1882 = vsel %vm1325, %v1845, 0
  %v1885 = vsel %vm1325, %v1846, 0
  %v1888 = vsel %vm1325, %v1847, 0
  %v1891 = vsel %vm1325, %v1848, 0
  %v1894 = vsel %vm1325, %v1849, 0
  %v1897 = vsel %vm1325, %v1850, 0
  %v1900 = vsel %vm1325, %v1851, 0
  %v1903 = vsel %vm1325, %v1852, 0
  %v1906 = vsel %vm1325, %v1853, 0
  %v1909 = vsel %vm1325, %v1854, 0
  %v1912 = vsel %vm1325, %v1855, 0
  %v1915 = vsel %vm1325, %v1856, 0
  %v1918 = vsel %vm1325, %v1857, 0
  %v1921 = vsel %vm1325, %v1858, 0
  %v1924 = vsel %vm1325, %v1859, 0
  %v1927 = vsel %vm1325, %v1860, 0
  %v1930 = vsel %vm1325, %v1861, 0
  %v1933 = vsel %vm1325, %v1862, 0
  %v1936 = vsel %vm1325, %v1863, 0
  %v1939 = vsel %vm1325, %v1864, 0
  %v1942 = vsel %vm1325, %v1865, 0
  %v1945 = vsel %vm1325, %v1866, 0
  %v1948 = vsel %vm1325, %v1867, 0
  %v1951 = vsel %vm1325, %v1868, 0
  %v1954 = vsel %vm1325, %v1869, 0
  %v1957 = vsel %vm1325, %v1870, 0
  %v1960 = vsel %vm1325, %v1871, 0
  %v1963 = vsel %vm1325, %v1872, 0
  %v1966 = vsel %vm1325, %v1873, 0
  %v1969 = vsel %vm1325, %v1874, 0
  %v1972 = vsel %vm1422, %v1162, 0
  %1974 = vmatprep.subr.bf16.mxu0 0
  %1975 = vmatpush1.bf16.msra.mxu0 %v1972
  %1976 = vmatprep.subr.bf16.mxu0 0
  %1977 = vmatpush1.bf16.msra.mxu0 0
  %1978 = vmatprep.subr.bf16.mxu0 0
  %1979 = vmatpush1.bf16.msra.mxu0 0
  %1980 = vmatprep.subr.bf16.mxu0 0
  %1981 = vmatpush1.bf16.msra.mxu0 0
  %1982 = vmatprep.subr.bf16.mxu0 0
  %1983 = vmatpush1.bf16.msra.mxu0 0
  %1984 = vmatprep.subr.bf16.mxu0 0
  %1985 = vmatpush1.bf16.msra.mxu0 0
  %1986 = vmatprep.subr.bf16.mxu0 0
  %1987 = vmatpush1.bf16.msra.mxu0 0
  %1988 = vmatprep.subr.bf16.mxu0 0
  %1989 = vmatpush1.bf16.msra.mxu0 0
  %1990 = vmatprep.subr.bf16.mxu0 0
  %1991 = vmatpush1.bf16.msra.mxu0 0
  %1992 = vmatprep.subr.bf16.mxu0 0
  %1993 = vmatpush1.bf16.msra.mxu0 0
  %1994 = vmatprep.subr.bf16.mxu0 0
  %1995 = vmatpush1.bf16.msra.mxu0 0
  %1996 = vmatprep.subr.bf16.mxu0 0
  %1997 = vmatpush1.bf16.msra.mxu0 0
  %1998 = vmatprep.subr.bf16.mxu0 0
  %1999 = vmatpush1.bf16.msra.mxu0 0
  %2000 = vmatprep.subr.bf16.mxu0 0
  %2001 = vmatpush1.bf16.msra.mxu0 0
  %2002 = vmatprep.subr.bf16.mxu0 0
  %2003 = vmatpush1.bf16.msra.mxu0 0
  %2004 = vmatprep.subr.bf16.mxu0 0
  %2005 = vmatpush1.bf16.msra.mxu0 0
  %2006 = vmatprep.mubr.bf16.mxu0 0
  %2007 = vmatmul.mubr.bf16.gmra.mrb[0].mxu0 %v1876
  %v2008 = vpop.f32.mrb[0].mxu0
  %v2009 = vadd.f32 %v1461, %v2008
  %v2010 = vpop.f32.mrb[0].mxu0
  %v2011 = vpop.f32.mrb[0].mxu0
  %v2012 = vadd.f32 %v1464, %v2011
  %v2013 = vpop.f32.mrb[0].mxu0
  %2014 = vmatprep.mubr.bf16.mxu0 0
  %2015 = vmatmul.mubr.bf16.gmra.mrb[0].mxu0 %v1879
  %v2016 = vpop.f32.mrb[0].mxu0
  %v2017 = vadd.f32 %v1469, %v2016
  %v2018 = vpop.f32.mrb[0].mxu0
  %v2019 = vpop.f32.mrb[0].mxu0
  %v2020 = vadd.f32 %v1472, %v2019
  %v2021 = vpop.f32.mrb[0].mxu0
  %2022 = vmatprep.mubr.bf16.mxu0 0
  %2023 = vmatmul.mubr.bf16.gmra.mrb[0].mxu0 %v1882
  %v2024 = vpop.f32.mrb[0].mxu0
  %v2025 = vadd.f32 %v1477, %v2024
  %v2026 = vpop.f32.mrb[0].mxu0
  %v2027 = vpop.f32.mrb[0].mxu0
  %v2028 = vadd.f32 %v1480, %v2027
  %v2029 = vpop.f32.mrb[0].mxu0
  %2030 = vmatprep.mubr.bf16.mxu0 0
  %2031 = vmatmul.mubr.bf16.gmra.mrb[0].mxu0 %v1885
  %v2032 = vpop.f32.mrb[0].mxu0
  %v2033 = vadd.f32 %v1485, %v2032
  %v2034 = vpop.f32.mrb[0].mxu0
  %v2035 = vpop.f32.mrb[0].mxu0
  %v2036 = vadd.f32 %v1488, %v2035
  %v2037 = vpop.f32.mrb[0].mxu0
  %2038 = vmatprep.mubr.bf16.mxu0 0
  %2039 = vmatmul.mubr.bf16.gmra.mrb[0].mxu0 %v1888
  %v2040 = vpop.f32.mrb[0].mxu0
  %v2041 = vadd.f32 %v1493, %v2040
  %v2042 = vpop.f32.mrb[0].mxu0
  %v2043 = vpop.f32.mrb[0].mxu0
  %v2044 = vadd.f32 %v1496, %v2043
  %v2045 = vpop.f32.mrb[0].mxu0
  %2046 = vmatprep.mubr.bf16.mxu0 0
  %2047 = vmatmul.mubr.bf16.gmra.mrb[0].mxu0 %v1891
  %v2048 = vpop.f32.mrb[0].mxu0
  %v2049 = vadd.f32 %v1501, %v2048
  %v2050 = vpop.f32.mrb[0].mxu0
  %v2051 = vpop.f32.mrb[0].mxu0
  %v2052 = vadd.f32 %v1504, %v2051
  %v2053 = vpop.f32.mrb[0].mxu0
  %2054 = vmatprep.mubr.bf16.mxu0 0
  %2055 = vmatmul.mubr.bf16.gmra.mrb[0].mxu0 %v1894
  %v2056 = vpop.f32.mrb[0].mxu0
  %v2057 = vadd.f32 %v1509, %v2056
  %v2058 = vpop.f32.mrb[0].mxu0
  %v2059 = vpop.f32.mrb[0].mxu0
  %v2060 = vadd.f32 %v1512, %v2059
  %v2061 = vpop.f32.mrb[0].mxu0
  %2062 = vmatprep.mubr.bf16.mxu0 0
  %2063 = vmatmul.mubr.bf16.gmra.mrb[0].mxu0 %v1897
  %v2064 = vpop.f32.mrb[0].mxu0
  %v2065 = vadd.f32 %v1517, %v2064
  %v2066 = vpop.f32.mrb[0].mxu0
  %v2067 = vpop.f32.mrb[0].mxu0
  %v2068 = vadd.f32 %v1520, %v2067
  %v2069 = vpop.f32.mrb[0].mxu0
  %2070 = vmatprep.mubr.bf16.mxu0 0
  %2071 = vmatmul.mubr.bf16.gmra.mrb[0].mxu0 %v1900
  %v2072 = vpop.f32.mrb[0].mxu0
  %v2073 = vadd.f32 %v1525, %v2072
  %v2074 = vpop.f32.mrb[0].mxu0
  %v2075 = vpop.f32.mrb[0].mxu0
  %v2076 = vadd.f32 %v1528, %v2075
  %v2077 = vpop.f32.mrb[0].mxu0
  %2078 = vmatprep.mubr.bf16.mxu0 0
  %2079 = vmatmul.mubr.bf16.gmra.mrb[0].mxu0 %v1903
  %v2080 = vpop.f32.mrb[0].mxu0
  %v2081 = vadd.f32 %v1533, %v2080
  %v2082 = vpop.f32.mrb[0].mxu0
  %v2083 = vpop.f32.mrb[0].mxu0
  %v2084 = vadd.f32 %v1536, %v2083
  %v2085 = vpop.f32.mrb[0].mxu0
  %2086 = vmatprep.mubr.bf16.mxu0 0
  %2087 = vmatmul.mubr.bf16.gmra.mrb[0].mxu0 %v1906
  %v2088 = vpop.f32.mrb[0].mxu0
  %v2089 = vadd.f32 %v1541, %v2088
  %v2090 = vpop.f32.mrb[0].mxu0
  %v2091 = vpop.f32.mrb[0].mxu0
  %v2092 = vadd.f32 %v1544, %v2091
  %v2093 = vpop.f32.mrb[0].mxu0
  %2094 = vmatprep.mubr.bf16.mxu0 0
  %2095 = vmatmul.mubr.bf16.gmra.mrb[0].mxu0 %v1909
  %v2096 = vpop.f32.mrb[0].mxu0
  %v2097 = vadd.f32 %v1549, %v2096
  %v2098 = vpop.f32.mrb[0].mxu0
  %v2099 = vpop.f32.mrb[0].mxu0
  %v2100 = vadd.f32 %v1552, %v2099
  %v2101 = vpop.f32.mrb[0].mxu0
  %2102 = vmatprep.mubr.bf16.mxu0 0
  %2103 = vmatmul.mubr.bf16.gmra.mrb[0].mxu0 %v1912
  %v2104 = vpop.f32.mrb[0].mxu0
  %v2105 = vadd.f32 %v1557, %v2104
  %v2106 = vpop.f32.mrb[0].mxu0
  %v2107 = vpop.f32.mrb[0].mxu0
  %v2108 = vadd.f32 %v1560, %v2107
  %v2109 = vpop.f32.mrb[0].mxu0
  %2110 = vmatprep.mubr.bf16.mxu0 0
  %2111 = vmatmul.mubr.bf16.gmra.mrb[0].mxu0 %v1915
  %v2112 = vpop.f32.mrb[0].mxu0
  %v2113 = vadd.f32 %v1565, %v2112
  %v2114 = vpop.f32.mrb[0].mxu0
  %v2115 = vpop.f32.mrb[0].mxu0
  %v2116 = vadd.f32 %v1568, %v2115
  %v2117 = vpop.f32.mrb[0].mxu0
  %2118 = vmatprep.mubr.bf16.mxu0 0
  %2119 = vmatmul.mubr.bf16.gmra.mrb[0].mxu0 %v1918
  %v2120 = vpop.f32.mrb[0].mxu0
  %v2121 = vadd.f32 %v1573, %v2120
  %v2122 = vpop.f32.mrb[0].mxu0
  %v2123 = vpop.f32.mrb[0].mxu0
  %v2124 = vadd.f32 %v1576, %v2123
  %v2125 = vpop.f32.mrb[0].mxu0
  %2126 = vmatprep.mubr.bf16.mxu0 0
  %2127 = vmatmul.mubr.bf16.gmra.mrb[0].mxu0 %v1921
  %v2128 = vpop.f32.mrb[0].mxu0
  %v2129 = vadd.f32 %v1581, %v2128
  %v2130 = vpop.f32.mrb[0].mxu0
  %v2131 = vpop.f32.mrb[0].mxu0
  %v2132 = vadd.f32 %v1584, %v2131
  %v2133 = vpop.f32.mrb[0].mxu0
  %2134 = vmatprep.mubr.bf16.mxu0 0
  %2135 = vmatmul.mubr.bf16.gmra.mrb[0].mxu0 %v1924
  %v2136 = vpop.f32.mrb[0].mxu0
  %v2137 = vadd.f32 %v1589, %v2136
  %v2138 = vpop.f32.mrb[0].mxu0
  %v2139 = vpop.f32.mrb[0].mxu0
  %v2140 = vadd.f32 %v1592, %v2139
  %v2141 = vpop.f32.mrb[0].mxu0
  %2142 = vmatprep.mubr.bf16.mxu0 0
  %2143 = vmatmul.mubr.bf16.gmra.mrb[0].mxu0 %v1927
  %v2144 = vpop.f32.mrb[0].mxu0
  %v2145 = vadd.f32 %v1597, %v2144
  %v2146 = vpop.f32.mrb[0].mxu0
  %v2147 = vpop.f32.mrb[0].mxu0
  %v2148 = vadd.f32 %v1600, %v2147
  %v2149 = vpop.f32.mrb[0].mxu0
  %2150 = vmatprep.mubr.bf16.mxu0 0
  %2151 = vmatmul.mubr.bf16.gmra.mrb[0].mxu0 %v1930
  %v2152 = vpop.f32.mrb[0].mxu0
  %v2153 = vadd.f32 %v1605, %v2152
  %v2154 = vpop.f32.mrb[0].mxu0
  %v2155 = vpop.f32.mrb[0].mxu0
  %v2156 = vadd.f32 %v1608, %v2155
  %v2157 = vpop.f32.mrb[0].mxu0
  %2158 = vmatprep.mubr.bf16.mxu0 0
  %2159 = vmatmul.mubr.bf16.gmra.mrb[0].mxu0 %v1933
  %v2160 = vpop.f32.mrb[0].mxu0
  %v2161 = vadd.f32 %v1613, %v2160
  %v2162 = vpop.f32.mrb[0].mxu0
  %v2163 = vpop.f32.mrb[0].mxu0
  %v2164 = vadd.f32 %v1616, %v2163
  %v2165 = vpop.f32.mrb[0].mxu0
  %2166 = vmatprep.mubr.bf16.mxu0 0
  %2167 = vmatmul.mubr.bf16.gmra.mrb[0].mxu0 %v1936
  %v2168 = vpop.f32.mrb[0].mxu0
  %v2169 = vadd.f32 %v1621, %v2168
  %v2170 = vpop.f32.mrb[0].mxu0
  %v2171 = vpop.f32.mrb[0].mxu0
  %v2172 = vadd.f32 %v1624, %v2171
  %v2173 = vpop.f32.mrb[0].mxu0
  %2174 = vmatprep.mubr.bf16.mxu0 0
  %2175 = vmatmul.mubr.bf16.gmra.mrb[0].mxu0 %v1939
  %v2176 = vpop.f32.mrb[0].mxu0
  %v2177 = vadd.f32 %v1629, %v2176
  %v2178 = vpop.f32.mrb[0].mxu0
  %v2179 = vpop.f32.mrb[0].mxu0
  %v2180 = vadd.f32 %v1632, %v2179
  %v2181 = vpop.f32.mrb[0].mxu0
  %2182 = vmatprep.mubr.bf16.mxu0 0
  %2183 = vmatmul.mubr.bf16.gmra.mrb[0].mxu0 %v1942
  %v2184 = vpop.f32.mrb[0].mxu0
  %v2185 = vadd.f32 %v1637, %v2184
  %v2186 = vpop.f32.mrb[0].mxu0
  %v2187 = vpop.f32.mrb[0].mxu0
  %v2188 = vadd.f32 %v1640, %v2187
  %v2189 = vpop.f32.mrb[0].mxu0
  %2190 = vmatprep.mubr.bf16.mxu0 0
  %2191 = vmatmul.mubr.bf16.gmra.mrb[0].mxu0 %v1945
  %v2192 = vpop.f32.mrb[0].mxu0
  %v2193 = vadd.f32 %v1645, %v2192
  %v2194 = vpop.f32.mrb[0].mxu0
  %v2195 = vpop.f32.mrb[0].mxu0
  %v2196 = vadd.f32 %v1648, %v2195
  %v2197 = vpop.f32.mrb[0].mxu0
  %2198 = vmatprep.mubr.bf16.mxu0 0
  %2199 = vmatmul.mubr.bf16.gmra.mrb[0].mxu0 %v1948
  %v2200 = vpop.f32.mrb[0].mxu0
  %v2201 = vadd.f32 %v1653, %v2200
  %v2202 = vpop.f32.mrb[0].mxu0
  %v2203 = vpop.f32.mrb[0].mxu0
  %v2204 = vadd.f32 %v1656, %v2203
  %v2205 = vpop.f32.mrb[0].mxu0
  %2206 = vmatprep.mubr.bf16.mxu0 0
  %2207 = vmatmul.mubr.bf16.gmra.mrb[0].mxu0 %v1951
  %v2208 = vpop.f32.mrb[0].mxu0
  %v2209 = vadd.f32 %v1661, %v2208
  %v2210 = vpop.f32.mrb[0].mxu0
  %v2211 = vpop.f32.mrb[0].mxu0
  %v2212 = vadd.f32 %v1664, %v2211
  %v2213 = vpop.f32.mrb[0].mxu0
  %2214 = vmatprep.mubr.bf16.mxu0 0
  %2215 = vmatmul.mubr.bf16.gmra.mrb[0].mxu0 %v1954
  %v2216 = vpop.f32.mrb[0].mxu0
  %v2217 = vadd.f32 %v1669, %v2216
  %v2218 = vpop.f32.mrb[0].mxu0
  %v2219 = vpop.f32.mrb[0].mxu0
  %v2220 = vadd.f32 %v1672, %v2219
  %v2221 = vpop.f32.mrb[0].mxu0
  %2222 = vmatprep.mubr.bf16.mxu0 0
  %2223 = vmatmul.mubr.bf16.gmra.mrb[0].mxu0 %v1957
  %v2224 = vpop.f32.mrb[0].mxu0
  %v2225 = vadd.f32 %v1677, %v2224
  %v2226 = vpop.f32.mrb[0].mxu0
  %v2227 = vpop.f32.mrb[0].mxu0
  %v2228 = vadd.f32 %v1680, %v2227
  %v2229 = vpop.f32.mrb[0].mxu0
  %2230 = vmatprep.mubr.bf16.mxu0 0
  %2231 = vmatmul.mubr.bf16.gmra.mrb[0].mxu0 %v1960
  %v2232 = vpop.f32.mrb[0].mxu0
  %v2233 = vadd.f32 %v1685, %v2232
  %v2234 = vpop.f32.mrb[0].mxu0
  %v2235 = vpop.f32.mrb[0].mxu0
  %v2236 = vadd.f32 %v1688, %v2235
  %v2237 = vpop.f32.mrb[0].mxu0
  %2238 = vmatprep.mubr.bf16.mxu0 0
  %2239 = vmatmul.mubr.bf16.gmra.mrb[0].mxu0 %v1963
  %v2240 = vpop.f32.mrb[0].mxu0
  %v2241 = vadd.f32 %v1693, %v2240
  %v2242 = vpop.f32.mrb[0].mxu0
  %v2243 = vpop.f32.mrb[0].mxu0
  %v2244 = vadd.f32 %v1696, %v2243
  %v2245 = vpop.f32.mrb[0].mxu0
  %2246 = vmatprep.mubr.bf16.mxu0 0
  %2247 = vmatmul.mubr.bf16.gmra.mrb[0].mxu0 %v1966
  %v2248 = vpop.f32.mrb[0].mxu0
  %v2249 = vadd.f32 %v1701, %v2248
  %v2250 = vpop.f32.mrb[0].mxu0
  %v2251 = vpop.f32.mrb[0].mxu0
  %v2252 = vadd.f32 %v1704, %v2251
  %v2253 = vpop.f32.mrb[0].mxu0
  %2254 = vmatprep.mubr.bf16.mxu0 0
  %2255 = vmatmul.mubr.bf16.gmra.mrb[0].mxu0 %v1969
  %v2256 = vpop.f32.mrb[0].mxu0
  %v2257 = vadd.f32 %v1709, %v2256
  %v2258 = vpop.f32.mrb[0].mxu0
  %v2259 = vpop.f32.mrb[0].mxu0
  %v2260 = vadd.f32 %v1712, %v2259
  %v2261 = vpop.f32.mrb[0].mxu0
  %2262 = vdwg.mxu0
  %s2263 = scalar_lea.vmem %s1, 4
  %v2264 = vld [vmem:[%s2263] sm:$0x3]
  %v2329 = vunpack.c.l.b16 %v710
  %v2330 = vunpack.c.l.b16 %v711
  %v2331 = vunpack.c.l.b16 %v712
  %v2332 = vunpack.c.l.b16 %v713
  %v2333 = vunpack.c.l.b16 %v714
  %v2334 = vunpack.c.l.b16 %v715
  %v2335 = vunpack.c.l.b16 %v716
  %v2336 = vunpack.c.l.b16 %v717
  %v2337 = vunpack.c.l.b16 %v718
  %v2338 = vunpack.c.l.b16 %v719
  %v2339 = vunpack.c.l.b16 %v720
  %v2340 = vunpack.c.l.b16 %v721
  %v2341 = vunpack.c.l.b16 %v722
  %v2342 = vunpack.c.l.b16 %v723
  %v2343 = vunpack.c.l.b16 %v724
  %v2344 = vunpack.c.l.b16 %v725
  %v2345 = vunpack.c.l.b16 %v726
  %v2346 = vunpack.c.l.b16 %v727
  %v2347 = vunpack.c.l.b16 %v728
  %v2348 = vunpack.c.l.b16 %v729
  %v2349 = vunpack.c.l.b16 %v730
  %v2350 = vunpack.c.l.b16 %v731
  %v2351 = vunpack.c.l.b16 %v732
  %v2352 = vunpack.c.l.b16 %v733
  %v2353 = vunpack.c.l.b16 %v734
  %v2354 = vunpack.c.l.b16 %v735
  %v2355 = vunpack.c.l.b16 %v736
  %v2356 = vunpack.c.l.b16 %v737
  %v2357 = vunpack.c.l.b16 %v738
  %v2358 = vunpack.c.l.b16 %v739
  %v2359 = vunpack.c.l.b16 %v740
  %v2360 = vunpack.c.l.b16 %v741
  %v2361 = vunpack.c.l.b16 %v742
  %v2362 = vunpack.c.l.b16 %v743
  %v2363 = vunpack.c.l.b16 %v744
  %v2364 = vunpack.c.l.b16 %v745
  %v2365 = vunpack.c.l.b16 %v746
  %v2366 = vunpack.c.l.b16 %v747
  %v2367 = vunpack.c.l.b16 %v748
  %v2368 = vunpack.c.l.b16 %v749
  %v2369 = vunpack.c.l.b16 %v750
  %v2370 = vunpack.c.l.b16 %v751
  %v2371 = vunpack.c.l.b16 %v752
  %v2372 = vunpack.c.l.b16 %v753
  %v2373 = vunpack.c.l.b16 %v754
  %v2374 = vunpack.c.l.b16 %v755
  %v2375 = vunpack.c.l.b16 %v756
  %v2376 = vunpack.c.l.b16 %v757
  %v2377 = vunpack.c.l.b16 %v758
  %v2378 = vunpack.c.l.b16 %v759
  %v2379 = vunpack.c.l.b16 %v760
  %v2380 = vunpack.c.l.b16 %v761
  %v2381 = vunpack.c.l.b16 %v762
  %v2382 = vunpack.c.l.b16 %v763
  %v2383 = vunpack.c.l.b16 %v764
  %v2384 = vunpack.c.l.b16 %v765
  %v2385 = vunpack.c.l.b16 %v766
  %v2386 = vunpack.c.l.b16 %v767
  %v2387 = vunpack.c.l.b16 %v768
  %v2388 = vunpack.c.l.b16 %v769
  %v2389 = vunpack.c.l.b16 %v770
  %v2390 = vunpack.c.l.b16 %v771
  %v2391 = vunpack.c.l.b16 %v772
  %v2392 = vunpack.c.l.b16 %v773
  %v2393 = vpack.c.b16 %v2330, %v2329
  %v2394 = vpack.c.b16 %v2332, %v2331
  %v2395 = vpack.c.b16 %v2334, %v2333
  %v2396 = vpack.c.b16 %v2336, %v2335
  %v2397 = vpack.c.b16 %v2338, %v2337
  %v2398 = vpack.c.b16 %v2340, %v2339
  %v2399 = vpack.c.b16 %v2342, %v2341
  %v2400 = vpack.c.b16 %v2344, %v2343
  %v2401 = vpack.c.b16 %v2346, %v2345
  %v2402 = vpack.c.b16 %v2348, %v2347
  %v2403 = vpack.c.b16 %v2350, %v2349
  %v2404 = vpack.c.b16 %v2352, %v2351
  %v2405 = vpack.c.b16 %v2354, %v2353
  %v2406 = vpack.c.b16 %v2356, %v2355
  %v2407 = vpack.c.b16 %v2358, %v2357
  %v2408 = vpack.c.b16 %v2360, %v2359
  %v2409 = vpack.c.b16 %v2362, %v2361
  %v2410 = vpack.c.b16 %v2364, %v2363
  %v2411 = vpack.c.b16 %v2366, %v2365
  %v2412 = vpack.c.b16 %v2368, %v2367
  %v2413 = vpack.c.b16 %v2370, %v2369
  %v2414 = vpack.c.b16 %v2372, %v2371
  %v2415 = vpack.c.b16 %v2374, %v2373
  %v2416 = vpack.c.b16 %v2376, %v2375
  %v2417 = vpack.c.b16 %v2378, %v2377
  %v2418 = vpack.c.b16 %v2380, %v2379
  %v2419 = vpack.c.b16 %v2382, %v2381
  %v2420 = vpack.c.b16 %v2384, %v2383
  %v2421 = vpack.c.b16 %v2386, %v2385
  %v2422 = vpack.c.b16 %v2388, %v2387
  %v2423 = vpack.c.b16 %v2390, %v2389
  %v2424 = vpack.c.b16 %v2392, %v2391
  %v2426 = vsel %vm1325, %v2393, 0
  %v2429 = vsel %vm1325, %v2394, 0
  %v2432 = vsel %vm1325, %v2395, 0
  %v2435 = vsel %vm1325, %v2396, 0
  %v2438 = vsel %vm1325, %v2397, 0
  %v2441 = vsel %vm1325, %v2398, 0
  %v2444 = vsel %vm1325, %v2399, 0
  %v2447 = vsel %vm1325, %v2400, 0
  %v2450 = vsel %vm1325, %v2401, 0
  %v2453 = vsel %vm1325, %v2402, 0
  %v2456 = vsel %vm1325, %v2403, 0
  %v2459 = vsel %vm1325, %v2404, 0
  %v2462 = vsel %vm1325, %v2405, 0
  %v2465 = vsel %vm1325, %v2406, 0
  %v2468 = vsel %vm1325, %v2407, 0
  %v2471 = vsel %vm1325, %v2408, 0
  %v2474 = vsel %vm1325, %v2409, 0
  %v2477 = vsel %vm1325, %v2410, 0
  %v2480 = vsel %vm1325, %v2411, 0
  %v2483 = vsel %vm1325, %v2412, 0
  %v2486 = vsel %vm1325, %v2413, 0
  %v2489 = vsel %vm1325, %v2414, 0
  %v2492 = vsel %vm1325, %v2415, 0
  %v2495 = vsel %vm1325, %v2416, 0
  %v2498 = vsel %vm1325, %v2417, 0
  %v2501 = vsel %vm1325, %v2418, 0
  %v2504 = vsel %vm1325, %v2419, 0
  %v2507 = vsel %vm1325, %v2420, 0
  %v2510 = vsel %vm1325, %v2421, 0
  %v2513 = vsel %vm1325, %v2422, 0
  %v2516 = vsel %vm1325, %v2423, 0
  %v2519 = vsel %vm1325, %v2424, 0
  %v2522 = vsel %vm1422, %v2264, 0
  %2524 = vmatprep.subr.bf16.mxu0 0
  %2525 = vmatpush1.bf16.msra.mxu0 %v2522
  %2526 = vmatprep.subr.bf16.mxu0 0
  %2527 = vmatpush1.bf16.msra.mxu0 0
  %2528 = vmatprep.subr.bf16.mxu0 0
  %2529 = vmatpush1.bf16.msra.mxu0 0
  %2530 = vmatprep.subr.bf16.mxu0 0
  %2531 = vmatpush1.bf16.msra.mxu0 0
  %2532 = vmatprep.subr.bf16.mxu0 0
  %2533 = vmatpush1.bf16.msra.mxu0 0
  %2534 = vmatprep.subr.bf16.mxu0 0
  %2535 = vmatpush1.bf16.msra.mxu0 0
  %2536 = vmatprep.subr.bf16.mxu0 0
  %2537 = vmatpush1.bf16.msra.mxu0 0
  %2538 = vmatprep.subr.bf16.mxu0 0
  %2539 = vmatpush1.bf16.msra.mxu0 0
  %2540 = vmatprep.subr.bf16.mxu0 0
  %2541 = vmatpush1.bf16.msra.mxu0 0
  %2542 = vmatprep.subr.bf16.mxu0 0
  %2543 = vmatpush1.bf16.msra.mxu0 0
  %2544 = vmatprep.subr.bf16.mxu0 0
  %2545 = vmatpush1.bf16.msra.mxu0 0
  %2546 = vmatprep.subr.bf16.mxu0 0
  %2547 = vmatpush1.bf16.msra.mxu0 0
  %2548 = vmatprep.subr.bf16.mxu0 0
  %2549 = vmatpush1.bf16.msra.mxu0 0
  %2550 = vmatprep.subr.bf16.mxu0 0
  %2551 = vmatpush1.bf16.msra.mxu0 0
  %2552 = vmatprep.subr.bf16.mxu0 0
  %2553 = vmatpush1.bf16.msra.mxu0 0
  %2554 = vmatprep.subr.bf16.mxu0 0
  %2555 = vmatpush1.bf16.msra.mxu0 0
  %2556 = vmatprep.mubr.bf16.mxu0 0
  %2557 = vmatmul.mubr.bf16.gmra.mrb[0].mxu0 %v2426
  %v2558 = vpop.f32.mrb[0].mxu0
  %v2559 = vadd.f32 0.0, %v2558
  %v2560 = vpop.f32.mrb[0].mxu0
  %v2561 = vpop.f32.mrb[0].mxu0
  %v2562 = vadd.f32 0.0, %v2561
  %v2563 = vpop.f32.mrb[0].mxu0
  %2564 = vmatprep.mubr.bf16.mxu0 0
  %2565 = vmatmul.mubr.bf16.gmra.mrb[0].mxu0 %v2429
  %v2566 = vpop.f32.mrb[0].mxu0
  %v2567 = vadd.f32 0.0, %v2566
  %v2568 = vpop.f32.mrb[0].mxu0
  %v2569 = vpop.f32.mrb[0].mxu0
  %v2570 = vadd.f32 0.0, %v2569
  %v2571 = vpop.f32.mrb[0].mxu0
  %2572 = vmatprep.mubr.bf16.mxu0 0
  %2573 = vmatmul.mubr.bf16.gmra.mrb[0].mxu0 %v2432
  %v2574 = vpop.f32.mrb[0].mxu0
  %v2575 = vadd.f32 0.0, %v2574
  %v2576 = vpop.f32.mrb[0].mxu0
  %v2577 = vpop.f32.mrb[0].mxu0
  %v2578 = vadd.f32 0.0, %v2577
  %v2579 = vpop.f32.mrb[0].mxu0
  %2580 = vmatprep.mubr.bf16.mxu0 0
  %2581 = vmatmul.mubr.bf16.gmra.mrb[0].mxu0 %v2435
  %v2582 = vpop.f32.mrb[0].mxu0
  %v2583 = vadd.f32 0.0, %v2582
  %v2584 = vpop.f32.mrb[0].mxu0
  %v2585 = vpop.f32.mrb[0].mxu0
  %v2586 = vadd.f32 0.0, %v2585
  %v2587 = vpop.f32.mrb[0].mxu0
  %2588 = vmatprep.mubr.bf16.mxu0 0
  %2589 = vmatmul.mubr.bf16.gmra.mrb[0].mxu0 %v2438
  %v2590 = vpop.f32.mrb[0].mxu0
  %v2591 = vadd.f32 0.0, %v2590
  %v2592 = vpop.f32.mrb[0].mxu0
  %v2593 = vpop.f32.mrb[0].mxu0
  %v2594 = vadd.f32 0.0, %v2593
  %v2595 = vpop.f32.mrb[0].mxu0
  %2596 = vmatprep.mubr.bf16.mxu0 0
  %2597 = vmatmul.mubr.bf16.gmra.mrb[0].mxu0 %v2441
  %v2598 = vpop.f32.mrb[0].mxu0
  %v2599 = vadd.f32 0.0, %v2598
  %v2600 = vpop.f32.mrb[0].mxu0
  %v2601 = vpop.f32.mrb[0].mxu0
  %v2602 = vadd.f32 0.0, %v2601
  %v2603 = vpop.f32.mrb[0].mxu0
  %2604 = vmatprep.mubr.bf16.mxu0 0
  %2605 = vmatmul.mubr.bf16.gmra.mrb[0].mxu0 %v2444
  %v2606 = vpop.f32.mrb[0].mxu0
  %v2607 = vadd.f32 0.0, %v2606
  %v2608 = vpop.f32.mrb[0].mxu0
  %v2609 = vpop.f32.mrb[0].mxu0
  %v2610 = vadd.f32 0.0, %v2609
  %v2611 = vpop.f32.mrb[0].mxu0
  %2612 = vmatprep.mubr.bf16.mxu0 0
  %2613 = vmatmul.mubr.bf16.gmra.mrb[0].mxu0 %v2447
  %v2614 = vpop.f32.mrb[0].mxu0
  %v2615 = vadd.f32 0.0, %v2614
  %v2616 = vpop.f32.mrb[0].mxu0
  %v2617 = vpop.f32.mrb[0].mxu0
  %v2618 = vadd.f32 0.0, %v2617
  %v2619 = vpop.f32.mrb[0].mxu0
  %2620 = vmatprep.mubr.bf16.mxu0 0
  %2621 = vmatmul.mubr.bf16.gmra.mrb[0].mxu0 %v2450
  %v2622 = vpop.f32.mrb[0].mxu0
  %v2623 = vadd.f32 0.0, %v2622
  %v2624 = vpop.f32.mrb[0].mxu0
  %v2625 = vpop.f32.mrb[0].mxu0
  %v2626 = vadd.f32 0.0, %v2625
  %v2627 = vpop.f32.mrb[0].mxu0
  %2628 = vmatprep.mubr.bf16.mxu0 0
  %2629 = vmatmul.mubr.bf16.gmra.mrb[0].mxu0 %v2453
  %v2630 = vpop.f32.mrb[0].mxu0
  %v2631 = vadd.f32 0.0, %v2630
  %v2632 = vpop.f32.mrb[0].mxu0
  %v2633 = vpop.f32.mrb[0].mxu0
  %v2634 = vadd.f32 0.0, %v2633
  %v2635 = vpop.f32.mrb[0].mxu0
  %2636 = vmatprep.mubr.bf16.mxu0 0
  %2637 = vmatmul.mubr.bf16.gmra.mrb[0].mxu0 %v2456
  %v2638 = vpop.f32.mrb[0].mxu0
  %v2639 = vadd.f32 0.0, %v2638
  %v2640 = vpop.f32.mrb[0].mxu0
  %v2641 = vpop.f32.mrb[0].mxu0
  %v2642 = vadd.f32 0.0, %v2641
  %v2643 = vpop.f32.mrb[0].mxu0
  %2644 = vmatprep.mubr.bf16.mxu0 0
  %2645 = vmatmul.mubr.bf16.gmra.mrb[0].mxu0 %v2459
  %v2646 = vpop.f32.mrb[0].mxu0
  %v2647 = vadd.f32 0.0, %v2646
  %v2648 = vpop.f32.mrb[0].mxu0
  %v2649 = vpop.f32.mrb[0].mxu0
  %v2650 = vadd.f32 0.0, %v2649
  %v2651 = vpop.f32.mrb[0].mxu0
  %2652 = vmatprep.mubr.bf16.mxu0 0
  %2653 = vmatmul.mubr.bf16.gmra.mrb[0].mxu0 %v2462
  %v2654 = vpop.f32.mrb[0].mxu0
  %v2655 = vadd.f32 0.0, %v2654
  %v2656 = vpop.f32.mrb[0].mxu0
  %v2657 = vpop.f32.mrb[0].mxu0
  %v2658 = vadd.f32 0.0, %v2657
  %v2659 = vpop.f32.mrb[0].mxu0
  %2660 = vmatprep.mubr.bf16.mxu0 0
  %2661 = vmatmul.mubr.bf16.gmra.mrb[0].mxu0 %v2465
  %v2662 = vpop.f32.mrb[0].mxu0
  %v2663 = vadd.f32 0.0, %v2662
  %v2664 = vpop.f32.mrb[0].mxu0
  %v2665 = vpop.f32.mrb[0].mxu0
  %v2666 = vadd.f32 0.0, %v2665
  %v2667 = vpop.f32.mrb[0].mxu0
  %2668 = vmatprep.mubr.bf16.mxu0 0
  %2669 = vmatmul.mubr.bf16.gmra.mrb[0].mxu0 %v2468
  %v2670 = vpop.f32.mrb[0].mxu0
  %v2671 = vadd.f32 0.0, %v2670
  %v2672 = vpop.f32.mrb[0].mxu0
  %v2673 = vpop.f32.mrb[0].mxu0
  %v2674 = vadd.f32 0.0, %v2673
  %v2675 = vpop.f32.mrb[0].mxu0
  %2676 = vmatprep.mubr.bf16.mxu0 0
  %2677 = vmatmul.mubr.bf16.gmra.mrb[0].mxu0 %v2471
  %v2678 = vpop.f32.mrb[0].mxu0
  %v2679 = vadd.f32 0.0, %v2678
  %v2680 = vpop.f32.mrb[0].mxu0
  %v2681 = vpop.f32.mrb[0].mxu0
  %v2682 = vadd.f32 0.0, %v2681
  %v2683 = vpop.f32.mrb[0].mxu0
  %2684 = vmatprep.mubr.bf16.mxu0 0
  %2685 = vmatmul.mubr.bf16.gmra.mrb[0].mxu0 %v2474
  %v2686 = vpop.f32.mrb[0].mxu0
  %v2687 = vadd.f32 0.0, %v2686
  %v2688 = vpop.f32.mrb[0].mxu0
  %v2689 = vpop.f32.mrb[0].mxu0
  %v2690 = vadd.f32 0.0, %v2689
  %v2691 = vpop.f32.mrb[0].mxu0
  %2692 = vmatprep.mubr.bf16.mxu0 0
  %2693 = vmatmul.mubr.bf16.gmra.mrb[0].mxu0 %v2477
  %v2694 = vpop.f32.mrb[0].mxu0
  %v2695 = vadd.f32 0.0, %v2694
  %v2696 = vpop.f32.mrb[0].mxu0
  %v2697 = vpop.f32.mrb[0].mxu0
  %v2698 = vadd.f32 0.0, %v2697
  %v2699 = vpop.f32.mrb[0].mxu0
  %2700 = vmatprep.mubr.bf16.mxu0 0
  %2701 = vmatmul.mubr.bf16.gmra.mrb[0].mxu0 %v2480
  %v2702 = vpop.f32.mrb[0].mxu0
  %v2703 = vadd.f32 0.0, %v2702
  %v2704 = vpop.f32.mrb[0].mxu0
  %v2705 = vpop.f32.mrb[0].mxu0
  %v2706 = vadd.f32 0.0, %v2705
  %v2707 = vpop.f32.mrb[0].mxu0
  %2708 = vmatprep.mubr.bf16.mxu0 0
  %2709 = vmatmul.mubr.bf16.gmra.mrb[0].mxu0 %v2483
  %v2710 = vpop.f32.mrb[0].mxu0
  %v2711 = vadd.f32 0.0, %v2710
  %v2712 = vpop.f32.mrb[0].mxu0
  %v2713 = vpop.f32.mrb[0].mxu0
  %v2714 = vadd.f32 0.0, %v2713
  %v2715 = vpop.f32.mrb[0].mxu0
  %2716 = vmatprep.mubr.bf16.mxu0 0
  %2717 = vmatmul.mubr.bf16.gmra.mrb[0].mxu0 %v2486
  %v2718 = vpop.f32.mrb[0].mxu0
  %v2719 = vadd.f32 0.0, %v2718
  %v2720 = vpop.f32.mrb[0].mxu0
  %v2721 = vpop.f32.mrb[0].mxu0
  %v2722 = vadd.f32 0.0, %v2721
  %v2723 = vpop.f32.mrb[0].mxu0
  %2724 = vmatprep.mubr.bf16.mxu0 0
  %2725 = vmatmul.mubr.bf16.gmra.mrb[0].mxu0 %v2489
  %v2726 = vpop.f32.mrb[0].mxu0
  %v2727 = vadd.f32 0.0, %v2726
  %v2728 = vpop.f32.mrb[0].mxu0
  %v2729 = vpop.f32.mrb[0].mxu0
  %v2730 = vadd.f32 0.0, %v2729
  %v2731 = vpop.f32.mrb[0].mxu0
  %2732 = vmatprep.mubr.bf16.mxu0 0
  %2733 = vmatmul.mubr.bf16.gmra.mrb[0].mxu0 %v2492
  %v2734 = vpop.f32.mrb[0].mxu0
  %v2735 = vadd.f32 0.0, %v2734
  %v2736 = vpop.f32.mrb[0].mxu0
  %v2737 = vpop.f32.mrb[0].mxu0
  %v2738 = vadd.f32 0.0, %v2737
  %v2739 = vpop.f32.mrb[0].mxu0
  %2740 = vmatprep.mubr.bf16.mxu0 0
  %2741 = vmatmul.mubr.bf16.gmra.mrb[0].mxu0 %v2495
  %v2742 = vpop.f32.mrb[0].mxu0
  %v2743 = vadd.f32 0.0, %v2742
  %v2744 = vpop.f32.mrb[0].mxu0
  %v2745 = vpop.f32.mrb[0].mxu0
  %v2746 = vadd.f32 0.0, %v2745
  %v2747 = vpop.f32.mrb[0].mxu0
  %2748 = vmatprep.mubr.bf16.mxu0 0
  %2749 = vmatmul.mubr.bf16.gmra.mrb[0].mxu0 %v2498
  %v2750 = vpop.f32.mrb[0].mxu0
  %v2751 = vadd.f32 0.0, %v2750
  %v2752 = vpop.f32.mrb[0].mxu0
  %v2753 = vpop.f32.mrb[0].mxu0
  %v2754 = vadd.f32 0.0, %v2753
  %v2755 = vpop.f32.mrb[0].mxu0
  %2756 = vmatprep.mubr.bf16.mxu0 0
  %2757 = vmatmul.mubr.bf16.gmra.mrb[0].mxu0 %v2501
  %v2758 = vpop.f32.mrb[0].mxu0
  %v2759 = vadd.f32 0.0, %v2758
  %v2760 = vpop.f32.mrb[0].mxu0
  %v2761 = vpop.f32.mrb[0].mxu0
  %v2762 = vadd.f32 0.0, %v2761
  %v2763 = vpop.f32.mrb[0].mxu0
  %2764 = vmatprep.mubr.bf16.mxu0 0
  %2765 = vmatmul.mubr.bf16.gmra.mrb[0].mxu0 %v2504
  %v2766 = vpop.f32.mrb[0].mxu0
  %v2767 = vadd.f32 0.0, %v2766
  %v2768 = vpop.f32.mrb[0].mxu0
  %v2769 = vpop.f32.mrb[0].mxu0
  %v2770 = vadd.f32 0.0, %v2769
  %v2771 = vpop.f32.mrb[0].mxu0
  %2772 = vmatprep.mubr.bf16.mxu0 0
  %2773 = vmatmul.mubr.bf16.gmra.mrb[0].mxu0 %v2507
  %v2774 = vpop.f32.mrb[0].mxu0
  %v2775 = vadd.f32 0.0, %v2774
  %v2776 = vpop.f32.mrb[0].mxu0
  %v2777 = vpop.f32.mrb[0].mxu0
  %v2778 = vadd.f32 0.0, %v2777
  %v2779 = vpop.f32.mrb[0].mxu0
  %2780 = vmatprep.mubr.bf16.mxu0 0
  %2781 = vmatmul.mubr.bf16.gmra.mrb[0].mxu0 %v2510
  %v2782 = vpop.f32.mrb[0].mxu0
  %v2783 = vadd.f32 0.0, %v2782
  %v2784 = vpop.f32.mrb[0].mxu0
  %v2785 = vpop.f32.mrb[0].mxu0
  %v2786 = vadd.f32 0.0, %v2785
  %v2787 = vpop.f32.mrb[0].mxu0
  %2788 = vmatprep.mubr.bf16.mxu0 0
  %2789 = vmatmul.mubr.bf16.gmra.mrb[0].mxu0 %v2513
  %v2790 = vpop.f32.mrb[0].mxu0
  %v2791 = vadd.f32 0.0, %v2790
  %v2792 = vpop.f32.mrb[0].mxu0
  %v2793 = vpop.f32.mrb[0].mxu0
  %v2794 = vadd.f32 0.0, %v2793
  %v2795 = vpop.f32.mrb[0].mxu0
  %2796 = vmatprep.mubr.bf16.mxu0 0
  %2797 = vmatmul.mubr.bf16.gmra.mrb[0].mxu0 %v2516
  %v2798 = vpop.f32.mrb[0].mxu0
  %v2799 = vadd.f32 0.0, %v2798
  %v2800 = vpop.f32.mrb[0].mxu0
  %v2801 = vpop.f32.mrb[0].mxu0
  %v2802 = vadd.f32 0.0, %v2801
  %v2803 = vpop.f32.mrb[0].mxu0
  %2804 = vmatprep.mubr.bf16.mxu0 0
  %2805 = vmatmul.mubr.bf16.gmra.mrb[0].mxu0 %v2519
  %v2806 = vpop.f32.mrb[0].mxu0
  %v2807 = vadd.f32 0.0, %v2806
  %v2808 = vpop.f32.mrb[0].mxu0
  %v2809 = vpop.f32.mrb[0].mxu0
  %v2810 = vadd.f32 0.0, %v2809
  %v2811 = vpop.f32.mrb[0].mxu0
  %2812 = vdwg.mxu0
  %v2813 = vadd.f32 %v2009, %v2559
  %v2814 = vadd.f32 %v2012, %v2562
  %v2815 = vadd.f32 %v2017, %v2567
  %v2816 = vadd.f32 %v2020, %v2570
  %v2817 = vadd.f32 %v2025, %v2575
  %v2818 = vadd.f32 %v2028, %v2578
  %v2819 = vadd.f32 %v2033, %v2583
  %v2820 = vadd.f32 %v2036, %v2586
  %v2821 = vadd.f32 %v2041, %v2591
  %v2822 = vadd.f32 %v2044, %v2594
  %v2823 = vadd.f32 %v2049, %v2599
  %v2824 = vadd.f32 %v2052, %v2602
  %v2825 = vadd.f32 %v2057, %v2607
  %v2826 = vadd.f32 %v2060, %v2610
  %v2827 = vadd.f32 %v2065, %v2615
  %v2828 = vadd.f32 %v2068, %v2618
  %v2829 = vadd.f32 %v2073, %v2623
  %v2830 = vadd.f32 %v2076, %v2626
  %v2831 = vadd.f32 %v2081, %v2631
  %v2832 = vadd.f32 %v2084, %v2634
  %v2833 = vadd.f32 %v2089, %v2639
  %v2834 = vadd.f32 %v2092, %v2642
  %v2835 = vadd.f32 %v2097, %v2647
  %v2836 = vadd.f32 %v2100, %v2650
  %v2837 = vadd.f32 %v2105, %v2655
  %v2838 = vadd.f32 %v2108, %v2658
  %v2839 = vadd.f32 %v2113, %v2663
  %v2840 = vadd.f32 %v2116, %v2666
  %v2841 = vadd.f32 %v2121, %v2671
  %v2842 = vadd.f32 %v2124, %v2674
  %v2843 = vadd.f32 %v2129, %v2679
  %v2844 = vadd.f32 %v2132, %v2682
  %v2845 = vadd.f32 %v2137, %v2687
  %v2846 = vadd.f32 %v2140, %v2690
  %v2847 = vadd.f32 %v2145, %v2695
  %v2848 = vadd.f32 %v2148, %v2698
  %v2849 = vadd.f32 %v2153, %v2703
  %v2850 = vadd.f32 %v2156, %v2706
  %v2851 = vadd.f32 %v2161, %v2711
  %v2852 = vadd.f32 %v2164, %v2714
  %v2853 = vadd.f32 %v2169, %v2719
  %v2854 = vadd.f32 %v2172, %v2722
  %v2855 = vadd.f32 %v2177, %v2727
  %v2856 = vadd.f32 %v2180, %v2730
  %v2857 = vadd.f32 %v2185, %v2735
  %v2858 = vadd.f32 %v2188, %v2738
  %v2859 = vadd.f32 %v2193, %v2743
  %v2860 = vadd.f32 %v2196, %v2746
  %v2861 = vadd.f32 %v2201, %v2751
  %v2862 = vadd.f32 %v2204, %v2754
  %v2863 = vadd.f32 %v2209, %v2759
  %v2864 = vadd.f32 %v2212, %v2762
  %v2865 = vadd.f32 %v2217, %v2767
  %v2866 = vadd.f32 %v2220, %v2770
  %v2867 = vadd.f32 %v2225, %v2775
  %v2868 = vadd.f32 %v2228, %v2778
  %v2869 = vadd.f32 %v2233, %v2783
  %v2870 = vadd.f32 %v2236, %v2786
  %v2871 = vadd.f32 %v2241, %v2791
  %v2872 = vadd.f32 %v2244, %v2794
  %v2873 = vadd.f32 %v2249, %v2799
  %v2874 = vadd.f32 %v2252, %v2802
  %v2875 = vadd.f32 %v2257, %v2807
  %v2876 = vadd.f32 %v2260, %v2810
  %s2877 = scalar_lea.vmem %s1, 6
  %v2878 = vld [vmem:[%s2877] sm:$0x3]
  %v2943 = vunpack.c.l.b16 %v774
  %v2944 = vunpack.c.l.b16 %v775
  %v2945 = vunpack.c.l.b16 %v776
  %v2946 = vunpack.c.l.b16 %v777
  %v2947 = vunpack.c.l.b16 %v778
  %v2948 = vunpack.c.l.b16 %v779
  %v2949 = vunpack.c.l.b16 %v780
  %v2950 = vunpack.c.l.b16 %v781
  %v2951 = vunpack.c.l.b16 %v782
  %v2952 = vunpack.c.l.b16 %v783
  %v2953 = vunpack.c.l.b16 %v784
  %v2954 = vunpack.c.l.b16 %v785
  %v2955 = vunpack.c.l.b16 %v786
  %v2956 = vunpack.c.l.b16 %v787
  %v2957 = vunpack.c.l.b16 %v788
  %v2958 = vunpack.c.l.b16 %v789
  %v2959 = vunpack.c.l.b16 %v790
  %v2960 = vunpack.c.l.b16 %v791
  %v2961 = vunpack.c.l.b16 %v792
  %v2962 = vunpack.c.l.b16 %v793
  %v2963 = vunpack.c.l.b16 %v794
  %v2964 = vunpack.c.l.b16 %v795
  %v2965 = vunpack.c.l.b16 %v796
  %v2966 = vunpack.c.l.b16 %v797
  %v2967 = vunpack.c.l.b16 %v798
  %v2968 = vunpack.c.l.b16 %v799
  %v2969 = vunpack.c.l.b16 %v800
  %v2970 = vunpack.c.l.b16 %v801
  %v2971 = vunpack.c.l.b16 %v802
  %v2972 = vunpack.c.l.b16 %v803
  %v2973 = vunpack.c.l.b16 %v804
  %v2974 = vunpack.c.l.b16 %v805
  %v2975 = vunpack.c.l.b16 %v806
  %v2976 = vunpack.c.l.b16 %v807
  %v2977 = vunpack.c.l.b16 %v808
  %v2978 = vunpack.c.l.b16 %v809
  %v2979 = vunpack.c.l.b16 %v810
  %v2980 = vunpack.c.l.b16 %v811
  %v2981 = vunpack.c.l.b16 %v812
  %v2982 = vunpack.c.l.b16 %v813
  %v2983 = vunpack.c.l.b16 %v814
  %v2984 = vunpack.c.l.b16 %v815
  %v2985 = vunpack.c.l.b16 %v816
  %v2986 = vunpack.c.l.b16 %v817
  %v2987 = vunpack.c.l.b16 %v818
  %v2988 = vunpack.c.l.b16 %v819
  %v2989 = vunpack.c.l.b16 %v820
  %v2990 = vunpack.c.l.b16 %v821
  %v2991 = vunpack.c.l.b16 %v822
  %v2992 = vunpack.c.l.b16 %v823
  %v2993 = vunpack.c.l.b16 %v824
  %v2994 = vunpack.c.l.b16 %v825
  %v2995 = vunpack.c.l.b16 %v826
  %v2996 = vunpack.c.l.b16 %v827
  %v2997 = vunpack.c.l.b16 %v828
  %v2998 = vunpack.c.l.b16 %v829
  %v2999 = vunpack.c.l.b16 %v830
  %v3000 = vunpack.c.l.b16 %v831
  %v3001 = vunpack.c.l.b16 %v832
  %v3002 = vunpack.c.l.b16 %v833
  %v3003 = vunpack.c.l.b16 %v834
  %v3004 = vunpack.c.l.b16 %v835
  %v3005 = vunpack.c.l.b16 %v836
  %v3006 = vunpack.c.l.b16 %v837
  %v3007 = vpack.c.b16 %v2944, %v2943
  %v3008 = vpack.c.b16 %v2946, %v2945
  %v3009 = vpack.c.b16 %v2948, %v2947
  %v3010 = vpack.c.b16 %v2950, %v2949
  %v3011 = vpack.c.b16 %v2952, %v2951
  %v3012 = vpack.c.b16 %v2954, %v2953
  %v3013 = vpack.c.b16 %v2956, %v2955
  %v3014 = vpack.c.b16 %v2958, %v2957
  %v3015 = vpack.c.b16 %v2960, %v2959
  %v3016 = vpack.c.b16 %v2962, %v2961
  %v3017 = vpack.c.b16 %v2964, %v2963
  %v3018 = vpack.c.b16 %v2966, %v2965
  %v3019 = vpack.c.b16 %v2968, %v2967
  %v3020 = vpack.c.b16 %v2970, %v2969
  %v3021 = vpack.c.b16 %v2972, %v2971
  %v3022 = vpack.c.b16 %v2974, %v2973
  %v3023 = vpack.c.b16 %v2976, %v2975
  %v3024 = vpack.c.b16 %v2978, %v2977
  %v3025 = vpack.c.b16 %v2980, %v2979
  %v3026 = vpack.c.b16 %v2982, %v2981
  %v3027 = vpack.c.b16 %v2984, %v2983
  %v3028 = vpack.c.b16 %v2986, %v2985
  %v3029 = vpack.c.b16 %v2988, %v2987
  %v3030 = vpack.c.b16 %v2990, %v2989
  %v3031 = vpack.c.b16 %v2992, %v2991
  %v3032 = vpack.c.b16 %v2994, %v2993
  %v3033 = vpack.c.b16 %v2996, %v2995
  %v3034 = vpack.c.b16 %v2998, %v2997
  %v3035 = vpack.c.b16 %v3000, %v2999
  %v3036 = vpack.c.b16 %v3002, %v3001
  %v3037 = vpack.c.b16 %v3004, %v3003
  %v3038 = vpack.c.b16 %v3006, %v3005
  %v3040 = vsel %vm1325, %v3007, 0
  %v3043 = vsel %vm1325, %v3008, 0
  %v3046 = vsel %vm1325, %v3009, 0
  %v3049 = vsel %vm1325, %v3010, 0
  %v3052 = vsel %vm1325, %v3011, 0
  %v3055 = vsel %vm1325, %v3012, 0
  %v3058 = vsel %vm1325, %v3013, 0
  %v3061 = vsel %vm1325, %v3014, 0
  %v3064 = vsel %vm1325, %v3015, 0
  %v3067 = vsel %vm1325, %v3016, 0
  %v3070 = vsel %vm1325, %v3017, 0
  %v3073 = vsel %vm1325, %v3018, 0
  %v3076 = vsel %vm1325, %v3019, 0
  %v3079 = vsel %vm1325, %v3020, 0
  %v3082 = vsel %vm1325, %v3021, 0
  %v3085 = vsel %vm1325, %v3022, 0
  %v3088 = vsel %vm1325, %v3023, 0
  %v3091 = vsel %vm1325, %v3024, 0
  %v3094 = vsel %vm1325, %v3025, 0
  %v3097 = vsel %vm1325, %v3026, 0
  %v3100 = vsel %vm1325, %v3027, 0
  %v3103 = vsel %vm1325, %v3028, 0
  %v3106 = vsel %vm1325, %v3029, 0
  %v3109 = vsel %vm1325, %v3030, 0
  %v3112 = vsel %vm1325, %v3031, 0
  %v3115 = vsel %vm1325, %v3032, 0
  %v3118 = vsel %vm1325, %v3033, 0
  %v3121 = vsel %vm1325, %v3034, 0
  %v3124 = vsel %vm1325, %v3035, 0
  %v3127 = vsel %vm1325, %v3036, 0
  %v3130 = vsel %vm1325, %v3037, 0
  %v3133 = vsel %vm1325, %v3038, 0
  %v3136 = vsel %vm1422, %v2878, 0
  %3138 = vmatprep.subr.bf16.mxu0 0
  %3139 = vmatpush1.bf16.msra.mxu0 %v3136
  %3140 = vmatprep.subr.bf16.mxu0 0
  %3141 = vmatpush1.bf16.msra.mxu0 0
  %3142 = vmatprep.subr.bf16.mxu0 0
  %3143 = vmatpush1.bf16.msra.mxu0 0
  %3144 = vmatprep.subr.bf16.mxu0 0
  %3145 = vmatpush1.bf16.msra.mxu0 0
  %3146 = vmatprep.subr.bf16.mxu0 0
  %3147 = vmatpush1.bf16.msra.mxu0 0
  %3148 = vmatprep.subr.bf16.mxu0 0
  %3149 = vmatpush1.bf16.msra.mxu0 0
  %3150 = vmatprep.subr.bf16.mxu0 0
  %3151 = vmatpush1.bf16.msra.mxu0 0
  %3152 = vmatprep.subr.bf16.mxu0 0
  %3153 = vmatpush1.bf16.msra.mxu0 0
  %3154 = vmatprep.subr.bf16.mxu0 0
  %3155 = vmatpush1.bf16.msra.mxu0 0
  %3156 = vmatprep.subr.bf16.mxu0 0
  %3157 = vmatpush1.bf16.msra.mxu0 0
  %3158 = vmatprep.subr.bf16.mxu0 0
  %3159 = vmatpush1.bf16.msra.mxu0 0
  %3160 = vmatprep.subr.bf16.mxu0 0
  %3161 = vmatpush1.bf16.msra.mxu0 0
  %3162 = vmatprep.subr.bf16.mxu0 0
  %3163 = vmatpush1.bf16.msra.mxu0 0
  %3164 = vmatprep.subr.bf16.mxu0 0
  %3165 = vmatpush1.bf16.msra.mxu0 0
  %3166 = vmatprep.subr.bf16.mxu0 0
  %3167 = vmatpush1.bf16.msra.mxu0 0
  %3168 = vmatprep.subr.bf16.mxu0 0
  %3169 = vmatpush1.bf16.msra.mxu0 0
  %3170 = vmatprep.mubr.bf16.mxu0 0
  %3171 = vmatmul.mubr.bf16.gmra.mrb[0].mxu0 %v3040
  %v3172 = vpop.f32.mrb[0].mxu0
  %v3173 = vadd.f32 0.0, %v3172
  %v3174 = vpop.f32.mrb[0].mxu0
  %v3175 = vpop.f32.mrb[0].mxu0
  %v3176 = vadd.f32 0.0, %v3175
  %v3177 = vpop.f32.mrb[0].mxu0
  %3178 = vmatprep.mubr.bf16.mxu0 0
  %3179 = vmatmul.mubr.bf16.gmra.mrb[0].mxu0 %v3043
  %v3180 = vpop.f32.mrb[0].mxu0
  %v3181 = vadd.f32 0.0, %v3180
  %v3182 = vpop.f32.mrb[0].mxu0
  %v3183 = vpop.f32.mrb[0].mxu0
  %v3184 = vadd.f32 0.0, %v3183
  %v3185 = vpop.f32.mrb[0].mxu0
  %3186 = vmatprep.mubr.bf16.mxu0 0
  %3187 = vmatmul.mubr.bf16.gmra.mrb[0].mxu0 %v3046
  %v3188 = vpop.f32.mrb[0].mxu0
  %v3189 = vadd.f32 0.0, %v3188
  %v3190 = vpop.f32.mrb[0].mxu0
  %v3191 = vpop.f32.mrb[0].mxu0
  %v3192 = vadd.f32 0.0, %v3191
  %v3193 = vpop.f32.mrb[0].mxu0
  %3194 = vmatprep.mubr.bf16.mxu0 0
  %3195 = vmatmul.mubr.bf16.gmra.mrb[0].mxu0 %v3049
  %v3196 = vpop.f32.mrb[0].mxu0
  %v3197 = vadd.f32 0.0, %v3196
  %v3198 = vpop.f32.mrb[0].mxu0
  %v3199 = vpop.f32.mrb[0].mxu0
  %v3200 = vadd.f32 0.0, %v3199
  %v3201 = vpop.f32.mrb[0].mxu0
  %3202 = vmatprep.mubr.bf16.mxu0 0
  %3203 = vmatmul.mubr.bf16.gmra.mrb[0].mxu0 %v3052
  %v3204 = vpop.f32.mrb[0].mxu0
  %v3205 = vadd.f32 0.0, %v3204
  %v3206 = vpop.f32.mrb[0].mxu0
  %v3207 = vpop.f32.mrb[0].mxu0
  %v3208 = vadd.f32 0.0, %v3207
  %v3209 = vpop.f32.mrb[0].mxu0
  %3210 = vmatprep.mubr.bf16.mxu0 0
  %3211 = vmatmul.mubr.bf16.gmra.mrb[0].mxu0 %v3055
  %v3212 = vpop.f32.mrb[0].mxu0
  %v3213 = vadd.f32 0.0, %v3212
  %v3214 = vpop.f32.mrb[0].mxu0
  %v3215 = vpop.f32.mrb[0].mxu0
  %v3216 = vadd.f32 0.0, %v3215
  %v3217 = vpop.f32.mrb[0].mxu0
  %3218 = vmatprep.mubr.bf16.mxu0 0
  %3219 = vmatmul.mubr.bf16.gmra.mrb[0].mxu0 %v3058
  %v3220 = vpop.f32.mrb[0].mxu0
  %v3221 = vadd.f32 0.0, %v3220
  %v3222 = vpop.f32.mrb[0].mxu0
  %v3223 = vpop.f32.mrb[0].mxu0
  %v3224 = vadd.f32 0.0, %v3223
  %v3225 = vpop.f32.mrb[0].mxu0
  %3226 = vmatprep.mubr.bf16.mxu0 0
  %3227 = vmatmul.mubr.bf16.gmra.mrb[0].mxu0 %v3061
  %v3228 = vpop.f32.mrb[0].mxu0
  %v3229 = vadd.f32 0.0, %v3228
  %v3230 = vpop.f32.mrb[0].mxu0
  %v3231 = vpop.f32.mrb[0].mxu0
  %v3232 = vadd.f32 0.0, %v3231
  %v3233 = vpop.f32.mrb[0].mxu0
  %3234 = vmatprep.mubr.bf16.mxu0 0
  %3235 = vmatmul.mubr.bf16.gmra.mrb[0].mxu0 %v3064
  %v3236 = vpop.f32.mrb[0].mxu0
  %v3237 = vadd.f32 0.0, %v3236
  %v3238 = vpop.f32.mrb[0].mxu0
  %v3239 = vpop.f32.mrb[0].mxu0
  %v3240 = vadd.f32 0.0, %v3239
  %v3241 = vpop.f32.mrb[0].mxu0
  %3242 = vmatprep.mubr.bf16.mxu0 0
  %3243 = vmatmul.mubr.bf16.gmra.mrb[0].mxu0 %v3067
  %v3244 = vpop.f32.mrb[0].mxu0
  %v3245 = vadd.f32 0.0, %v3244
  %v3246 = vpop.f32.mrb[0].mxu0
  %v3247 = vpop.f32.mrb[0].mxu0
  %v3248 = vadd.f32 0.0, %v3247
  %v3249 = vpop.f32.mrb[0].mxu0
  %3250 = vmatprep.mubr.bf16.mxu0 0
  %3251 = vmatmul.mubr.bf16.gmra.mrb[0].mxu0 %v3070
  %v3252 = vpop.f32.mrb[0].mxu0
  %v3253 = vadd.f32 0.0, %v3252
  %v3254 = vpop.f32.mrb[0].mxu0
  %v3255 = vpop.f32.mrb[0].mxu0
  %v3256 = vadd.f32 0.0, %v3255
  %v3257 = vpop.f32.mrb[0].mxu0
  %3258 = vmatprep.mubr.bf16.mxu0 0
  %3259 = vmatmul.mubr.bf16.gmra.mrb[0].mxu0 %v3073
  %v3260 = vpop.f32.mrb[0].mxu0
  %v3261 = vadd.f32 0.0, %v3260
  %v3262 = vpop.f32.mrb[0].mxu0
  %v3263 = vpop.f32.mrb[0].mxu0
  %v3264 = vadd.f32 0.0, %v3263
  %v3265 = vpop.f32.mrb[0].mxu0
  %3266 = vmatprep.mubr.bf16.mxu0 0
  %3267 = vmatmul.mubr.bf16.gmra.mrb[0].mxu0 %v3076
  %v3268 = vpop.f32.mrb[0].mxu0
  %v3269 = vadd.f32 0.0, %v3268
  %v3270 = vpop.f32.mrb[0].mxu0
  %v3271 = vpop.f32.mrb[0].mxu0
  %v3272 = vadd.f32 0.0, %v3271
  %v3273 = vpop.f32.mrb[0].mxu0
  %3274 = vmatprep.mubr.bf16.mxu0 0
  %3275 = vmatmul.mubr.bf16.gmra.mrb[0].mxu0 %v3079
  %v3276 = vpop.f32.mrb[0].mxu0
  %v3277 = vadd.f32 0.0, %v3276
  %v3278 = vpop.f32.mrb[0].mxu0
  %v3279 = vpop.f32.mrb[0].mxu0
  %v3280 = vadd.f32 0.0, %v3279
  %v3281 = vpop.f32.mrb[0].mxu0
  %3282 = vmatprep.mubr.bf16.mxu0 0
  %3283 = vmatmul.mubr.bf16.gmra.mrb[0].mxu0 %v3082
  %v3284 = vpop.f32.mrb[0].mxu0
  %v3285 = vadd.f32 0.0, %v3284
  %v3286 = vpop.f32.mrb[0].mxu0
  %v3287 = vpop.f32.mrb[0].mxu0
  %v3288 = vadd.f32 0.0, %v3287
  %v3289 = vpop.f32.mrb[0].mxu0
  %3290 = vmatprep.mubr.bf16.mxu0 0
  %3291 = vmatmul.mubr.bf16.gmra.mrb[0].mxu0 %v3085
  %v3292 = vpop.f32.mrb[0].mxu0
  %v3293 = vadd.f32 0.0, %v3292
  %v3294 = vpop.f32.mrb[0].mxu0
  %v3295 = vpop.f32.mrb[0].mxu0
  %v3296 = vadd.f32 0.0, %v3295
  %v3297 = vpop.f32.mrb[0].mxu0
  %3298 = vmatprep.mubr.bf16.mxu0 0
  %3299 = vmatmul.mubr.bf16.gmra.mrb[0].mxu0 %v3088
  %v3300 = vpop.f32.mrb[0].mxu0
  %v3301 = vadd.f32 0.0, %v3300
  %v3302 = vpop.f32.mrb[0].mxu0
  %v3303 = vpop.f32.mrb[0].mxu0
  %v3304 = vadd.f32 0.0, %v3303
  %v3305 = vpop.f32.mrb[0].mxu0
  %3306 = vmatprep.mubr.bf16.mxu0 0
  %3307 = vmatmul.mubr.bf16.gmra.mrb[0].mxu0 %v3091
  %v3308 = vpop.f32.mrb[0].mxu0
  %v3309 = vadd.f32 0.0, %v3308
  %v3310 = vpop.f32.mrb[0].mxu0
  %v3311 = vpop.f32.mrb[0].mxu0
  %v3312 = vadd.f32 0.0, %v3311
  %v3313 = vpop.f32.mrb[0].mxu0
  %3314 = vmatprep.mubr.bf16.mxu0 0
  %3315 = vmatmul.mubr.bf16.gmra.mrb[0].mxu0 %v3094
  %v3316 = vpop.f32.mrb[0].mxu0
  %v3317 = vadd.f32 0.0, %v3316
  %v3318 = vpop.f32.mrb[0].mxu0
  %v3319 = vpop.f32.mrb[0].mxu0
  %v3320 = vadd.f32 0.0, %v3319
  %v3321 = vpop.f32.mrb[0].mxu0
  %3322 = vmatprep.mubr.bf16.mxu0 0
  %3323 = vmatmul.mubr.bf16.gmra.mrb[0].mxu0 %v3097
  %v3324 = vpop.f32.mrb[0].mxu0
  %v3325 = vadd.f32 0.0, %v3324
  %v3326 = vpop.f32.mrb[0].mxu0
  %v3327 = vpop.f32.mrb[0].mxu0
  %v3328 = vadd.f32 0.0, %v3327
  %v3329 = vpop.f32.mrb[0].mxu0
  %3330 = vmatprep.mubr.bf16.mxu0 0
  %3331 = vmatmul.mubr.bf16.gmra.mrb[0].mxu0 %v3100
  %v3332 = vpop.f32.mrb[0].mxu0
  %v3333 = vadd.f32 0.0, %v3332
  %v3334 = vpop.f32.mrb[0].mxu0
  %v3335 = vpop.f32.mrb[0].mxu0
  %v3336 = vadd.f32 0.0, %v3335
  %v3337 = vpop.f32.mrb[0].mxu0
  %3338 = vmatprep.mubr.bf16.mxu0 0
  %3339 = vmatmul.mubr.bf16.gmra.mrb[0].mxu0 %v3103
  %v3340 = vpop.f32.mrb[0].mxu0
  %v3341 = vadd.f32 0.0, %v3340
  %v3342 = vpop.f32.mrb[0].mxu0
  %v3343 = vpop.f32.mrb[0].mxu0
  %v3344 = vadd.f32 0.0, %v3343
  %v3345 = vpop.f32.mrb[0].mxu0
  %3346 = vmatprep.mubr.bf16.mxu0 0
  %3347 = vmatmul.mubr.bf16.gmra.mrb[0].mxu0 %v3106
  %v3348 = vpop.f32.mrb[0].mxu0
  %v3349 = vadd.f32 0.0, %v3348
  %v3350 = vpop.f32.mrb[0].mxu0
  %v3351 = vpop.f32.mrb[0].mxu0
  %v3352 = vadd.f32 0.0, %v3351
  %v3353 = vpop.f32.mrb[0].mxu0
  %3354 = vmatprep.mubr.bf16.mxu0 0
  %3355 = vmatmul.mubr.bf16.gmra.mrb[0].mxu0 %v3109
  %v3356 = vpop.f32.mrb[0].mxu0
  %v3357 = vadd.f32 0.0, %v3356
  %v3358 = vpop.f32.mrb[0].mxu0
  %v3359 = vpop.f32.mrb[0].mxu0
  %v3360 = vadd.f32 0.0, %v3359
  %v3361 = vpop.f32.mrb[0].mxu0
  %3362 = vmatprep.mubr.bf16.mxu0 0
  %3363 = vmatmul.mubr.bf16.gmra.mrb[0].mxu0 %v3112
  %v3364 = vpop.f32.mrb[0].mxu0
  %v3365 = vadd.f32 0.0, %v3364
  %v3366 = vpop.f32.mrb[0].mxu0
  %v3367 = vpop.f32.mrb[0].mxu0
  %v3368 = vadd.f32 0.0, %v3367
  %v3369 = vpop.f32.mrb[0].mxu0
  %3370 = vmatprep.mubr.bf16.mxu0 0
  %3371 = vmatmul.mubr.bf16.gmra.mrb[0].mxu0 %v3115
  %v3372 = vpop.f32.mrb[0].mxu0
  %v3373 = vadd.f32 0.0, %v3372
  %v3374 = vpop.f32.mrb[0].mxu0
  %v3375 = vpop.f32.mrb[0].mxu0
  %v3376 = vadd.f32 0.0, %v3375
  %v3377 = vpop.f32.mrb[0].mxu0
  %3378 = vmatprep.mubr.bf16.mxu0 0
  %3379 = vmatmul.mubr.bf16.gmra.mrb[0].mxu0 %v3118
  %v3380 = vpop.f32.mrb[0].mxu0
  %v3381 = vadd.f32 0.0, %v3380
  %v3382 = vpop.f32.mrb[0].mxu0
  %v3383 = vpop.f32.mrb[0].mxu0
  %v3384 = vadd.f32 0.0, %v3383
  %v3385 = vpop.f32.mrb[0].mxu0
  %3386 = vmatprep.mubr.bf16.mxu0 0
  %3387 = vmatmul.mubr.bf16.gmra.mrb[0].mxu0 %v3121
  %v3388 = vpop.f32.mrb[0].mxu0
  %v3389 = vadd.f32 0.0, %v3388
  %v3390 = vpop.f32.mrb[0].mxu0
  %v3391 = vpop.f32.mrb[0].mxu0
  %v3392 = vadd.f32 0.0, %v3391
  %v3393 = vpop.f32.mrb[0].mxu0
  %3394 = vmatprep.mubr.bf16.mxu0 0
  %3395 = vmatmul.mubr.bf16.gmra.mrb[0].mxu0 %v3124
  %v3396 = vpop.f32.mrb[0].mxu0
  %v3397 = vadd.f32 0.0, %v3396
  %v3398 = vpop.f32.mrb[0].mxu0
  %v3399 = vpop.f32.mrb[0].mxu0
  %v3400 = vadd.f32 0.0, %v3399
  %v3401 = vpop.f32.mrb[0].mxu0
  %3402 = vmatprep.mubr.bf16.mxu0 0
  %3403 = vmatmul.mubr.bf16.gmra.mrb[0].mxu0 %v3127
  %v3404 = vpop.f32.mrb[0].mxu0
  %v3405 = vadd.f32 0.0, %v3404
  %v3406 = vpop.f32.mrb[0].mxu0
  %v3407 = vpop.f32.mrb[0].mxu0
  %v3408 = vadd.f32 0.0, %v3407
  %v3409 = vpop.f32.mrb[0].mxu0
  %3410 = vmatprep.mubr.bf16.mxu0 0
  %3411 = vmatmul.mubr.bf16.gmra.mrb[0].mxu0 %v3130
  %v3412 = vpop.f32.mrb[0].mxu0
  %v3413 = vadd.f32 0.0, %v3412
  %v3414 = vpop.f32.mrb[0].mxu0
  %v3415 = vpop.f32.mrb[0].mxu0
  %v3416 = vadd.f32 0.0, %v3415
  %v3417 = vpop.f32.mrb[0].mxu0
  %3418 = vmatprep.mubr.bf16.mxu0 0
  %3419 = vmatmul.mubr.bf16.gmra.mrb[0].mxu0 %v3133
  %v3420 = vpop.f32.mrb[0].mxu0
  %v3421 = vadd.f32 0.0, %v3420
  %v3422 = vpop.f32.mrb[0].mxu0
  %v3423 = vpop.f32.mrb[0].mxu0
  %v3424 = vadd.f32 0.0, %v3423
  %v3425 = vpop.f32.mrb[0].mxu0
  %3426 = vdwg.mxu0
  %v3427 = vadd.f32 %v2813, %v3173
  %v3428 = vadd.f32 %v2814, %v3176
  %v3429 = vadd.f32 %v2815, %v3181
  %v3430 = vadd.f32 %v2816, %v3184
  %v3431 = vadd.f32 %v2817, %v3189
  %v3432 = vadd.f32 %v2818, %v3192
  %v3433 = vadd.f32 %v2819, %v3197
  %v3434 = vadd.f32 %v2820, %v3200
  %v3435 = vadd.f32 %v2821, %v3205
  %v3436 = vadd.f32 %v2822, %v3208
  %v3437 = vadd.f32 %v2823, %v3213
  %v3438 = vadd.f32 %v2824, %v3216
  %v3439 = vadd.f32 %v2825, %v3221
  %v3440 = vadd.f32 %v2826, %v3224
  %v3441 = vadd.f32 %v2827, %v3229
  %v3442 = vadd.f32 %v2828, %v3232
  %v3443 = vadd.f32 %v2829, %v3237
  %v3444 = vadd.f32 %v2830, %v3240
  %v3445 = vadd.f32 %v2831, %v3245
  %v3446 = vadd.f32 %v2832, %v3248
  %v3447 = vadd.f32 %v2833, %v3253
  %v3448 = vadd.f32 %v2834, %v3256
  %v3449 = vadd.f32 %v2835, %v3261
  %v3450 = vadd.f32 %v2836, %v3264
  %v3451 = vadd.f32 %v2837, %v3269
  %v3452 = vadd.f32 %v2838, %v3272
  %v3453 = vadd.f32 %v2839, %v3277
  %v3454 = vadd.f32 %v2840, %v3280
  %v3455 = vadd.f32 %v2841, %v3285
  %v3456 = vadd.f32 %v2842, %v3288
  %v3457 = vadd.f32 %v2843, %v3293
  %v3458 = vadd.f32 %v2844, %v3296
  %v3459 = vadd.f32 %v2845, %v3301
  %v3460 = vadd.f32 %v2846, %v3304
  %v3461 = vadd.f32 %v2847, %v3309
  %v3462 = vadd.f32 %v2848, %v3312
  %v3463 = vadd.f32 %v2849, %v3317
  %v3464 = vadd.f32 %v2850, %v3320
  %v3465 = vadd.f32 %v2851, %v3325
  %v3466 = vadd.f32 %v2852, %v3328
  %v3467 = vadd.f32 %v2853, %v3333
  %v3468 = vadd.f32 %v2854, %v3336
  %v3469 = vadd.f32 %v2855, %v3341
  %v3470 = vadd.f32 %v2856, %v3344
  %v3471 = vadd.f32 %v2857, %v3349
  %v3472 = vadd.f32 %v2858, %v3352
  %v3473 = vadd.f32 %v2859, %v3357
  %v3474 = vadd.f32 %v2860, %v3360
  %v3475 = vadd.f32 %v2861, %v3365
  %v3476 = vadd.f32 %v2862, %v3368
  %v3477 = vadd.f32 %v2863, %v3373
  %v3478 = vadd.f32 %v2864, %v3376
  %v3479 = vadd.f32 %v2865, %v3381
  %v3480 = vadd.f32 %v2866, %v3384
  %v3481 = vadd.f32 %v2867, %v3389
  %v3482 = vadd.f32 %v2868, %v3392
  %v3483 = vadd.f32 %v2869, %v3397
  %v3484 = vadd.f32 %v2870, %v3400
  %v3485 = vadd.f32 %v2871, %v3405
  %v3486 = vadd.f32 %v2872, %v3408
  %v3487 = vadd.f32 %v2873, %v3413
  %v3488 = vadd.f32 %v2874, %v3416
  %v3489 = vadd.f32 %v2875, %v3421
  %v3490 = vadd.f32 %v2876, %v3424
  %s3491 = scalar_lea.vmem %s1, 8
  %v3492 = vld [vmem:[%s3491] sm:$0x3]
  %v3557 = vunpack.c.l.b16 %v838
  %v3558 = vunpack.c.l.b16 %v839
  %v3559 = vunpack.c.l.b16 %v840
  %v3560 = vunpack.c.l.b16 %v841
  %v3561 = vunpack.c.l.b16 %v842
  %v3562 = vunpack.c.l.b16 %v843
  %v3563 = vunpack.c.l.b16 %v844
  %v3564 = vunpack.c.l.b16 %v845
  %v3565 = vunpack.c.l.b16 %v846
  %v3566 = vunpack.c.l.b16 %v847
  %v3567 = vunpack.c.l.b16 %v848
  %v3568 = vunpack.c.l.b16 %v849
  %v3569 = vunpack.c.l.b16 %v850
  %v3570 = vunpack.c.l.b16 %v851
  %v3571 = vunpack.c.l.b16 %v852
  %v3572 = vunpack.c.l.b16 %v853
  %v3573 = vunpack.c.l.b16 %v854
  %v3574 = vunpack.c.l.b16 %v855
  %v3575 = vunpack.c.l.b16 %v856
  %v3576 = vunpack.c.l.b16 %v857
  %v3577 = vunpack.c.l.b16 %v858
  %v3578 = vunpack.c.l.b16 %v859
  %v3579 = vunpack.c.l.b16 %v860
  %v3580 = vunpack.c.l.b16 %v861
  %v3581 = vunpack.c.l.b16 %v862
  %v3582 = vunpack.c.l.b16 %v863
  %v3583 = vunpack.c.l.b16 %v864
  %v3584 = vunpack.c.l.b16 %v865
  %v3585 = vunpack.c.l.b16 %v866
  %v3586 = vunpack.c.l.b16 %v867
  %v3587 = vunpack.c.l.b16 %v868
  %v3588 = vunpack.c.l.b16 %v869
  %v3589 = vunpack.c.l.b16 %v870
  %v3590 = vunpack.c.l.b16 %v871
  %v3591 = vunpack.c.l.b16 %v872
  %v3592 = vunpack.c.l.b16 %v873
  %v3593 = vunpack.c.l.b16 %v874
  %v3594 = vunpack.c.l.b16 %v875
  %v3595 = vunpack.c.l.b16 %v876
  %v3596 = vunpack.c.l.b16 %v877
  %v3597 = vunpack.c.l.b16 %v878
  %v3598 = vunpack.c.l.b16 %v879
  %v3599 = vunpack.c.l.b16 %v880
  %v3600 = vunpack.c.l.b16 %v881
  %v3601 = vunpack.c.l.b16 %v882
  %v3602 = vunpack.c.l.b16 %v883
  %v3603 = vunpack.c.l.b16 %v884
  %v3604 = vunpack.c.l.b16 %v885
  %v3605 = vunpack.c.l.b16 %v886
  %v3606 = vunpack.c.l.b16 %v887
  %v3607 = vunpack.c.l.b16 %v888
  %v3608 = vunpack.c.l.b16 %v889
  %v3609 = vunpack.c.l.b16 %v890
  %v3610 = vunpack.c.l.b16 %v891
  %v3611 = vunpack.c.l.b16 %v892
  %v3612 = vunpack.c.l.b16 %v893
  %v3613 = vunpack.c.l.b16 %v894
  %v3614 = vunpack.c.l.b16 %v895
  %v3615 = vunpack.c.l.b16 %v896
  %v3616 = vunpack.c.l.b16 %v897
  %v3617 = vunpack.c.l.b16 %v898
  %v3618 = vunpack.c.l.b16 %v899
  %v3619 = vunpack.c.l.b16 %v900
  %v3620 = vunpack.c.l.b16 %v901
  %v3621 = vpack.c.b16 %v3558, %v3557
  %v3622 = vpack.c.b16 %v3560, %v3559
  %v3623 = vpack.c.b16 %v3562, %v3561
  %v3624 = vpack.c.b16 %v3564, %v3563
  %v3625 = vpack.c.b16 %v3566, %v3565
  %v3626 = vpack.c.b16 %v3568, %v3567
  %v3627 = vpack.c.b16 %v3570, %v3569
  %v3628 = vpack.c.b16 %v3572, %v3571
  %v3629 = vpack.c.b16 %v3574, %v3573
  %v3630 = vpack.c.b16 %v3576, %v3575
  %v3631 = vpack.c.b16 %v3578, %v3577
  %v3632 = vpack.c.b16 %v3580, %v3579
  %v3633 = vpack.c.b16 %v3582, %v3581
  %v3634 = vpack.c.b16 %v3584, %v3583
  %v3635 = vpack.c.b16 %v3586, %v3585
  %v3636 = vpack.c.b16 %v3588, %v3587
  %v3637 = vpack.c.b16 %v3590, %v3589
  %v3638 = vpack.c.b16 %v3592, %v3591
  %v3639 = vpack.c.b16 %v3594, %v3593
  %v3640 = vpack.c.b16 %v3596, %v3595
  %v3641 = vpack.c.b16 %v3598, %v3597
  %v3642 = vpack.c.b16 %v3600, %v3599
  %v3643 = vpack.c.b16 %v3602, %v3601
  %v3644 = vpack.c.b16 %v3604, %v3603
  %v3645 = vpack.c.b16 %v3606, %v3605
  %v3646 = vpack.c.b16 %v3608, %v3607
  %v3647 = vpack.c.b16 %v3610, %v3609
  %v3648 = vpack.c.b16 %v3612, %v3611
  %v3649 = vpack.c.b16 %v3614, %v3613
  %v3650 = vpack.c.b16 %v3616, %v3615
  %v3651 = vpack.c.b16 %v3618, %v3617
  %v3652 = vpack.c.b16 %v3620, %v3619
  %v3654 = vsel %vm1325, %v3621, 0
  %v3657 = vsel %vm1325, %v3622, 0
  %v3660 = vsel %vm1325, %v3623, 0
  %v3663 = vsel %vm1325, %v3624, 0
  %v3666 = vsel %vm1325, %v3625, 0
  %v3669 = vsel %vm1325, %v3626, 0
  %v3672 = vsel %vm1325, %v3627, 0
  %v3675 = vsel %vm1325, %v3628, 0
  %v3678 = vsel %vm1325, %v3629, 0
  %v3681 = vsel %vm1325, %v3630, 0
  %v3684 = vsel %vm1325, %v3631, 0
  %v3687 = vsel %vm1325, %v3632, 0
  %v3690 = vsel %vm1325, %v3633, 0
  %v3693 = vsel %vm1325, %v3634, 0
  %v3696 = vsel %vm1325, %v3635, 0
  %v3699 = vsel %vm1325, %v3636, 0
  %v3702 = vsel %vm1325, %v3637, 0
  %v3705 = vsel %vm1325, %v3638, 0
  %v3708 = vsel %vm1325, %v3639, 0
  %v3711 = vsel %vm1325, %v3640, 0
  %v3714 = vsel %vm1325, %v3641, 0
  %v3717 = vsel %vm1325, %v3642, 0
  %v3720 = vsel %vm1325, %v3643, 0
  %v3723 = vsel %vm1325, %v3644, 0
  %v3726 = vsel %vm1325, %v3645, 0
  %v3729 = vsel %vm1325, %v3646, 0
  %v3732 = vsel %vm1325, %v3647, 0
  %v3735 = vsel %vm1325, %v3648, 0
  %v3738 = vsel %vm1325, %v3649, 0
  %v3741 = vsel %vm1325, %v3650, 0
  %v3744 = vsel %vm1325, %v3651, 0
  %v3747 = vsel %vm1325, %v3652, 0
  %v3750 = vsel %vm1422, %v3492, 0
  %3752 = vmatprep.subr.bf16.mxu0 0
  %3753 = vmatpush1.bf16.msra.mxu0 %v3750
  %3754 = vmatprep.subr.bf16.mxu0 0
  %3755 = vmatpush1.bf16.msra.mxu0 0
  %3756 = vmatprep.subr.bf16.mxu0 0
  %3757 = vmatpush1.bf16.msra.mxu0 0
  %3758 = vmatprep.subr.bf16.mxu0 0
  %3759 = vmatpush1.bf16.msra.mxu0 0
  %3760 = vmatprep.subr.bf16.mxu0 0
  %3761 = vmatpush1.bf16.msra.mxu0 0
  %3762 = vmatprep.subr.bf16.mxu0 0
  %3763 = vmatpush1.bf16.msra.mxu0 0
  %3764 = vmatprep.subr.bf16.mxu0 0
  %3765 = vmatpush1.bf16.msra.mxu0 0
  %3766 = vmatprep.subr.bf16.mxu0 0
  %3767 = vmatpush1.bf16.msra.mxu0 0
  %3768 = vmatprep.subr.bf16.mxu0 0
  %3769 = vmatpush1.bf16.msra.mxu0 0
  %3770 = vmatprep.subr.bf16.mxu0 0
  %3771 = vmatpush1.bf16.msra.mxu0 0
  %3772 = vmatprep.subr.bf16.mxu0 0
  %3773 = vmatpush1.bf16.msra.mxu0 0
  %3774 = vmatprep.subr.bf16.mxu0 0
  %3775 = vmatpush1.bf16.msra.mxu0 0
  %3776 = vmatprep.subr.bf16.mxu0 0
  %3777 = vmatpush1.bf16.msra.mxu0 0
  %3778 = vmatprep.subr.bf16.mxu0 0
  %3779 = vmatpush1.bf16.msra.mxu0 0
  %3780 = vmatprep.subr.bf16.mxu0 0
  %3781 = vmatpush1.bf16.msra.mxu0 0
  %3782 = vmatprep.subr.bf16.mxu0 0
  %3783 = vmatpush1.bf16.msra.mxu0 0
  %3784 = vmatprep.mubr.bf16.mxu0 0
  %3785 = vmatmul.mubr.bf16.gmra.mrb[0].mxu0 %v3654
  %v3786 = vpop.f32.mrb[0].mxu0
  %v3787 = vadd.f32 0.0, %v3786
  %v3788 = vpop.f32.mrb[0].mxu0
  %v3789 = vpop.f32.mrb[0].mxu0
  %v3790 = vadd.f32 0.0, %v3789
  %v3791 = vpop.f32.mrb[0].mxu0
  %3792 = vmatprep.mubr.bf16.mxu0 0
  %3793 = vmatmul.mubr.bf16.gmra.mrb[0].mxu0 %v3657
  %v3794 = vpop.f32.mrb[0].mxu0
  %v3795 = vadd.f32 0.0, %v3794
  %v3796 = vpop.f32.mrb[0].mxu0
  %v3797 = vpop.f32.mrb[0].mxu0
  %v3798 = vadd.f32 0.0, %v3797
  %v3799 = vpop.f32.mrb[0].mxu0
  %3800 = vmatprep.mubr.bf16.mxu0 0
  %3801 = vmatmul.mubr.bf16.gmra.mrb[0].mxu0 %v3660
  %v3802 = vpop.f32.mrb[0].mxu0
  %v3803 = vadd.f32 0.0, %v3802
  %v3804 = vpop.f32.mrb[0].mxu0
  %v3805 = vpop.f32.mrb[0].mxu0
  %v3806 = vadd.f32 0.0, %v3805
  %v3807 = vpop.f32.mrb[0].mxu0
  %3808 = vmatprep.mubr.bf16.mxu0 0
  %3809 = vmatmul.mubr.bf16.gmra.mrb[0].mxu0 %v3663
  %v3810 = vpop.f32.mrb[0].mxu0
  %v3811 = vadd.f32 0.0, %v3810
  %v3812 = vpop.f32.mrb[0].mxu0
  %v3813 = vpop.f32.mrb[0].mxu0
  %v3814 = vadd.f32 0.0, %v3813
  %v3815 = vpop.f32.mrb[0].mxu0
  %3816 = vmatprep.mubr.bf16.mxu0 0
  %3817 = vmatmul.mubr.bf16.gmra.mrb[0].mxu0 %v3666
  %v3818 = vpop.f32.mrb[0].mxu0
  %v3819 = vadd.f32 0.0, %v3818
  %v3820 = vpop.f32.mrb[0].mxu0
  %v3821 = vpop.f32.mrb[0].mxu0
  %v3822 = vadd.f32 0.0, %v3821
  %v3823 = vpop.f32.mrb[0].mxu0
  %3824 = vmatprep.mubr.bf16.mxu0 0
  %3825 = vmatmul.mubr.bf16.gmra.mrb[0].mxu0 %v3669
  %v3826 = vpop.f32.mrb[0].mxu0
  %v3827 = vadd.f32 0.0, %v3826
  %v3828 = vpop.f32.mrb[0].mxu0
  %v3829 = vpop.f32.mrb[0].mxu0
  %v3830 = vadd.f32 0.0, %v3829
  %v3831 = vpop.f32.mrb[0].mxu0
  %3832 = vmatprep.mubr.bf16.mxu0 0
  %3833 = vmatmul.mubr.bf16.gmra.mrb[0].mxu0 %v3672
  %v3834 = vpop.f32.mrb[0].mxu0
  %v3835 = vadd.f32 0.0, %v3834
  %v3836 = vpop.f32.mrb[0].mxu0
  %v3837 = vpop.f32.mrb[0].mxu0
  %v3838 = vadd.f32 0.0, %v3837
  %v3839 = vpop.f32.mrb[0].mxu0
  %3840 = vmatprep.mubr.bf16.mxu0 0
  %3841 = vmatmul.mubr.bf16.gmra.mrb[0].mxu0 %v3675
  %v3842 = vpop.f32.mrb[0].mxu0
  %v3843 = vadd.f32 0.0, %v3842
  %v3844 = vpop.f32.mrb[0].mxu0
  %v3845 = vpop.f32.mrb[0].mxu0
  %v3846 = vadd.f32 0.0, %v3845
  %v3847 = vpop.f32.mrb[0].mxu0
  %3848 = vmatprep.mubr.bf16.mxu0 0
  %3849 = vmatmul.mubr.bf16.gmra.mrb[0].mxu0 %v3678
  %v3850 = vpop.f32.mrb[0].mxu0
  %v3851 = vadd.f32 0.0, %v3850
  %v3852 = vpop.f32.mrb[0].mxu0
  %v3853 = vpop.f32.mrb[0].mxu0
  %v3854 = vadd.f32 0.0, %v3853
  %v3855 = vpop.f32.mrb[0].mxu0
  %3856 = vmatprep.mubr.bf16.mxu0 0
  %3857 = vmatmul.mubr.bf16.gmra.mrb[0].mxu0 %v3681
  %v3858 = vpop.f32.mrb[0].mxu0
  %v3859 = vadd.f32 0.0, %v3858
  %v3860 = vpop.f32.mrb[0].mxu0
  %v3861 = vpop.f32.mrb[0].mxu0
  %v3862 = vadd.f32 0.0, %v3861
  %v3863 = vpop.f32.mrb[0].mxu0
  %3864 = vmatprep.mubr.bf16.mxu0 0
  %3865 = vmatmul.mubr.bf16.gmra.mrb[0].mxu0 %v3684
  %v3866 = vpop.f32.mrb[0].mxu0
  %v3867 = vadd.f32 0.0, %v3866
  %v3868 = vpop.f32.mrb[0].mxu0
  %v3869 = vpop.f32.mrb[0].mxu0
  %v3870 = vadd.f32 0.0, %v3869
  %v3871 = vpop.f32.mrb[0].mxu0
  %3872 = vmatprep.mubr.bf16.mxu0 0
  %3873 = vmatmul.mubr.bf16.gmra.mrb[0].mxu0 %v3687
  %v3874 = vpop.f32.mrb[0].mxu0
  %v3875 = vadd.f32 0.0, %v3874
  %v3876 = vpop.f32.mrb[0].mxu0
  %v3877 = vpop.f32.mrb[0].mxu0
  %v3878 = vadd.f32 0.0, %v3877
  %v3879 = vpop.f32.mrb[0].mxu0
  %3880 = vmatprep.mubr.bf16.mxu0 0
  %3881 = vmatmul.mubr.bf16.gmra.mrb[0].mxu0 %v3690
  %v3882 = vpop.f32.mrb[0].mxu0
  %v3883 = vadd.f32 0.0, %v3882
  %v3884 = vpop.f32.mrb[0].mxu0
  %v3885 = vpop.f32.mrb[0].mxu0
  %v3886 = vadd.f32 0.0, %v3885
  %v3887 = vpop.f32.mrb[0].mxu0
  %3888 = vmatprep.mubr.bf16.mxu0 0
  %3889 = vmatmul.mubr.bf16.gmra.mrb[0].mxu0 %v3693
  %v3890 = vpop.f32.mrb[0].mxu0
  %v3891 = vadd.f32 0.0, %v3890
  %v3892 = vpop.f32.mrb[0].mxu0
  %v3893 = vpop.f32.mrb[0].mxu0
  %v3894 = vadd.f32 0.0, %v3893
  %v3895 = vpop.f32.mrb[0].mxu0
  %3896 = vmatprep.mubr.bf16.mxu0 0
  %3897 = vmatmul.mubr.bf16.gmra.mrb[0].mxu0 %v3696
  %v3898 = vpop.f32.mrb[0].mxu0
  %v3899 = vadd.f32 0.0, %v3898
  %v3900 = vpop.f32.mrb[0].mxu0
  %v3901 = vpop.f32.mrb[0].mxu0
  %v3902 = vadd.f32 0.0, %v3901
  %v3903 = vpop.f32.mrb[0].mxu0
  %3904 = vmatprep.mubr.bf16.mxu0 0
  %3905 = vmatmul.mubr.bf16.gmra.mrb[0].mxu0 %v3699
  %v3906 = vpop.f32.mrb[0].mxu0
  %v3907 = vadd.f32 0.0, %v3906
  %v3908 = vpop.f32.mrb[0].mxu0
  %v3909 = vpop.f32.mrb[0].mxu0
  %v3910 = vadd.f32 0.0, %v3909
  %v3911 = vpop.f32.mrb[0].mxu0
  %3912 = vmatprep.mubr.bf16.mxu0 0
  %3913 = vmatmul.mubr.bf16.gmra.mrb[0].mxu0 %v3702
  %v3914 = vpop.f32.mrb[0].mxu0
  %v3915 = vadd.f32 0.0, %v3914
  %v3916 = vpop.f32.mrb[0].mxu0
  %v3917 = vpop.f32.mrb[0].mxu0
  %v3918 = vadd.f32 0.0, %v3917
  %v3919 = vpop.f32.mrb[0].mxu0
  %3920 = vmatprep.mubr.bf16.mxu0 0
  %3921 = vmatmul.mubr.bf16.gmra.mrb[0].mxu0 %v3705
  %v3922 = vpop.f32.mrb[0].mxu0
  %v3923 = vadd.f32 0.0, %v3922
  %v3924 = vpop.f32.mrb[0].mxu0
  %v3925 = vpop.f32.mrb[0].mxu0
  %v3926 = vadd.f32 0.0, %v3925
  %v3927 = vpop.f32.mrb[0].mxu0
  %3928 = vmatprep.mubr.bf16.mxu0 0
  %3929 = vmatmul.mubr.bf16.gmra.mrb[0].mxu0 %v3708
  %v3930 = vpop.f32.mrb[0].mxu0
  %v3931 = vadd.f32 0.0, %v3930
  %v3932 = vpop.f32.mrb[0].mxu0
  %v3933 = vpop.f32.mrb[0].mxu0
  %v3934 = vadd.f32 0.0, %v3933
  %v3935 = vpop.f32.mrb[0].mxu0
  %3936 = vmatprep.mubr.bf16.mxu0 0
  %3937 = vmatmul.mubr.bf16.gmra.mrb[0].mxu0 %v3711
  %v3938 = vpop.f32.mrb[0].mxu0
  %v3939 = vadd.f32 0.0, %v3938
  %v3940 = vpop.f32.mrb[0].mxu0
  %v3941 = vpop.f32.mrb[0].mxu0
  %v3942 = vadd.f32 0.0, %v3941
  %v3943 = vpop.f32.mrb[0].mxu0
  %3944 = vmatprep.mubr.bf16.mxu0 0
  %3945 = vmatmul.mubr.bf16.gmra.mrb[0].mxu0 %v3714
  %v3946 = vpop.f32.mrb[0].mxu0
  %v3947 = vadd.f32 0.0, %v3946
  %v3948 = vpop.f32.mrb[0].mxu0
  %v3949 = vpop.f32.mrb[0].mxu0
  %v3950 = vadd.f32 0.0, %v3949
  %v3951 = vpop.f32.mrb[0].mxu0
  %3952 = vmatprep.mubr.bf16.mxu0 0
  %3953 = vmatmul.mubr.bf16.gmra.mrb[0].mxu0 %v3717
  %v3954 = vpop.f32.mrb[0].mxu0
  %v3955 = vadd.f32 0.0, %v3954
  %v3956 = vpop.f32.mrb[0].mxu0
  %v3957 = vpop.f32.mrb[0].mxu0
  %v3958 = vadd.f32 0.0, %v3957
  %v3959 = vpop.f32.mrb[0].mxu0
  %3960 = vmatprep.mubr.bf16.mxu0 0
  %3961 = vmatmul.mubr.bf16.gmra.mrb[0].mxu0 %v3720
  %v3962 = vpop.f32.mrb[0].mxu0
  %v3963 = vadd.f32 0.0, %v3962
  %v3964 = vpop.f32.mrb[0].mxu0
  %v3965 = vpop.f32.mrb[0].mxu0
  %v3966 = vadd.f32 0.0, %v3965
  %v3967 = vpop.f32.mrb[0].mxu0
  %3968 = vmatprep.mubr.bf16.mxu0 0
  %3969 = vmatmul.mubr.bf16.gmra.mrb[0].mxu0 %v3723
  %v3970 = vpop.f32.mrb[0].mxu0
  %v3971 = vadd.f32 0.0, %v3970
  %v3972 = vpop.f32.mrb[0].mxu0
  %v3973 = vpop.f32.mrb[0].mxu0
  %v3974 = vadd.f32 0.0, %v3973
  %v3975 = vpop.f32.mrb[0].mxu0
  %3976 = vmatprep.mubr.bf16.mxu0 0
  %3977 = vmatmul.mubr.bf16.gmra.mrb[0].mxu0 %v3726
  %v3978 = vpop.f32.mrb[0].mxu0
  %v3979 = vadd.f32 0.0, %v3978
  %v3980 = vpop.f32.mrb[0].mxu0
  %v3981 = vpop.f32.mrb[0].mxu0
  %v3982 = vadd.f32 0.0, %v3981
  %v3983 = vpop.f32.mrb[0].mxu0
  %3984 = vmatprep.mubr.bf16.mxu0 0
  %3985 = vmatmul.mubr.bf16.gmra.mrb[0].mxu0 %v3729
  %v3986 = vpop.f32.mrb[0].mxu0
  %v3987 = vadd.f32 0.0, %v3986
  %v3988 = vpop.f32.mrb[0].mxu0
  %v3989 = vpop.f32.mrb[0].mxu0
  %v3990 = vadd.f32 0.0, %v3989
  %v3991 = vpop.f32.mrb[0].mxu0
  %3992 = vmatprep.mubr.bf16.mxu0 0
  %3993 = vmatmul.mubr.bf16.gmra.mrb[0].mxu0 %v3732
  %v3994 = vpop.f32.mrb[0].mxu0
  %v3995 = vadd.f32 0.0, %v3994
  %v3996 = vpop.f32.mrb[0].mxu0
  %v3997 = vpop.f32.mrb[0].mxu0
  %v3998 = vadd.f32 0.0, %v3997
  %v3999 = vpop.f32.mrb[0].mxu0
  %4000 = vmatprep.mubr.bf16.mxu0 0
  %4001 = vmatmul.mubr.bf16.gmra.mrb[0].mxu0 %v3735
  %v4002 = vpop.f32.mrb[0].mxu0
  %v4003 = vadd.f32 0.0, %v4002
  %v4004 = vpop.f32.mrb[0].mxu0
  %v4005 = vpop.f32.mrb[0].mxu0
  %v4006 = vadd.f32 0.0, %v4005
  %v4007 = vpop.f32.mrb[0].mxu0
  %4008 = vmatprep.mubr.bf16.mxu0 0
  %4009 = vmatmul.mubr.bf16.gmra.mrb[0].mxu0 %v3738
  %v4010 = vpop.f32.mrb[0].mxu0
  %v4011 = vadd.f32 0.0, %v4010
  %v4012 = vpop.f32.mrb[0].mxu0
  %v4013 = vpop.f32.mrb[0].mxu0
  %v4014 = vadd.f32 0.0, %v4013
  %v4015 = vpop.f32.mrb[0].mxu0
  %4016 = vmatprep.mubr.bf16.mxu0 0
  %4017 = vmatmul.mubr.bf16.gmra.mrb[0].mxu0 %v3741
  %v4018 = vpop.f32.mrb[0].mxu0
  %v4019 = vadd.f32 0.0, %v4018
  %v4020 = vpop.f32.mrb[0].mxu0
  %v4021 = vpop.f32.mrb[0].mxu0
  %v4022 = vadd.f32 0.0, %v4021
  %v4023 = vpop.f32.mrb[0].mxu0
  %4024 = vmatprep.mubr.bf16.mxu0 0
  %4025 = vmatmul.mubr.bf16.gmra.mrb[0].mxu0 %v3744
  %v4026 = vpop.f32.mrb[0].mxu0
  %v4027 = vadd.f32 0.0, %v4026
  %v4028 = vpop.f32.mrb[0].mxu0
  %v4029 = vpop.f32.mrb[0].mxu0
  %v4030 = vadd.f32 0.0, %v4029
  %v4031 = vpop.f32.mrb[0].mxu0
  %4032 = vmatprep.mubr.bf16.mxu0 0
  %4033 = vmatmul.mubr.bf16.gmra.mrb[0].mxu0 %v3747
  %v4034 = vpop.f32.mrb[0].mxu0
  %v4035 = vadd.f32 0.0, %v4034
  %v4036 = vpop.f32.mrb[0].mxu0
  %v4037 = vpop.f32.mrb[0].mxu0
  %v4038 = vadd.f32 0.0, %v4037
  %v4039 = vpop.f32.mrb[0].mxu0
  %4040 = vdwg.mxu0
  %v4041 = vadd.f32 %v3427, %v3787
  %v4042 = vadd.f32 %v3428, %v3790
  %v4043 = vadd.f32 %v3429, %v3795
  %v4044 = vadd.f32 %v3430, %v3798
  %v4045 = vadd.f32 %v3431, %v3803
  %v4046 = vadd.f32 %v3432, %v3806
  %v4047 = vadd.f32 %v3433, %v3811
  %v4048 = vadd.f32 %v3434, %v3814
  %v4049 = vadd.f32 %v3435, %v3819
  %v4050 = vadd.f32 %v3436, %v3822
  %v4051 = vadd.f32 %v3437, %v3827
  %v4052 = vadd.f32 %v3438, %v3830
  %v4053 = vadd.f32 %v3439, %v3835
  %v4054 = vadd.f32 %v3440, %v3838
  %v4055 = vadd.f32 %v3441, %v3843
  %v4056 = vadd.f32 %v3442, %v3846
  %v4057 = vadd.f32 %v3443, %v3851
  %v4058 = vadd.f32 %v3444, %v3854
  %v4059 = vadd.f32 %v3445, %v3859
  %v4060 = vadd.f32 %v3446, %v3862
  %v4061 = vadd.f32 %v3447, %v3867
  %v4062 = vadd.f32 %v3448, %v3870
  %v4063 = vadd.f32 %v3449, %v3875
  %v4064 = vadd.f32 %v3450, %v3878
  %v4065 = vadd.f32 %v3451, %v3883
  %v4066 = vadd.f32 %v3452, %v3886
  %v4067 = vadd.f32 %v3453, %v3891
  %v4068 = vadd.f32 %v3454, %v3894
  %v4069 = vadd.f32 %v3455, %v3899
  %v4070 = vadd.f32 %v3456, %v3902
  %v4071 = vadd.f32 %v3457, %v3907
  %v4072 = vadd.f32 %v3458, %v3910
  %v4073 = vadd.f32 %v3459, %v3915
  %v4074 = vadd.f32 %v3460, %v3918
  %v4075 = vadd.f32 %v3461, %v3923
  %v4076 = vadd.f32 %v3462, %v3926
  %v4077 = vadd.f32 %v3463, %v3931
  %v4078 = vadd.f32 %v3464, %v3934
  %v4079 = vadd.f32 %v3465, %v3939
  %v4080 = vadd.f32 %v3466, %v3942
  %v4081 = vadd.f32 %v3467, %v3947
  %v4082 = vadd.f32 %v3468, %v3950
  %v4083 = vadd.f32 %v3469, %v3955
  %v4084 = vadd.f32 %v3470, %v3958
  %v4085 = vadd.f32 %v3471, %v3963
  %v4086 = vadd.f32 %v3472, %v3966
  %v4087 = vadd.f32 %v3473, %v3971
  %v4088 = vadd.f32 %v3474, %v3974
  %v4089 = vadd.f32 %v3475, %v3979
  %v4090 = vadd.f32 %v3476, %v3982
  %v4091 = vadd.f32 %v3477, %v3987
  %v4092 = vadd.f32 %v3478, %v3990
  %v4093 = vadd.f32 %v3479, %v3995
  %v4094 = vadd.f32 %v3480, %v3998
  %v4095 = vadd.f32 %v3481, %v4003
  %v4096 = vadd.f32 %v3482, %v4006
  %v4097 = vadd.f32 %v3483, %v4011
  %v4098 = vadd.f32 %v3484, %v4014
  %v4099 = vadd.f32 %v3485, %v4019
  %v4100 = vadd.f32 %v3486, %v4022
  %v4101 = vadd.f32 %v3487, %v4027
  %v4102 = vadd.f32 %v3488, %v4030
  %v4103 = vadd.f32 %v3489, %v4035
  %v4104 = vadd.f32 %v3490, %v4038
  %s4105 = scalar_lea.vmem %s1, 10
  %v4106 = vld [vmem:[%s4105] sm:$0x3]
  %v4171 = vunpack.c.l.b16 %v903
  %v4172 = vunpack.c.l.b16 %v904
  %v4173 = vunpack.c.l.b16 %v905
  %v4174 = vunpack.c.l.b16 %v906
  %v4175 = vunpack.c.l.b16 %v907
  %v4176 = vunpack.c.l.b16 %v908
  %v4177 = vunpack.c.l.b16 %v909
  %v4178 = vunpack.c.l.b16 %v910
  %v4179 = vunpack.c.l.b16 %v911
  %v4180 = vunpack.c.l.b16 %v912
  %v4181 = vunpack.c.l.b16 %v913
  %v4182 = vunpack.c.l.b16 %v914
  %v4183 = vunpack.c.l.b16 %v915
  %v4184 = vunpack.c.l.b16 %v916
  %v4185 = vunpack.c.l.b16 %v917
  %v4186 = vunpack.c.l.b16 %v918
  %v4187 = vunpack.c.l.b16 %v919
  %v4188 = vunpack.c.l.b16 %v920
  %v4189 = vunpack.c.l.b16 %v921
  %v4190 = vunpack.c.l.b16 %v922
  %v4191 = vunpack.c.l.b16 %v923
  %v4192 = vunpack.c.l.b16 %v924
  %v4193 = vunpack.c.l.b16 %v925
  %v4194 = vunpack.c.l.b16 %v926
  %v4195 = vunpack.c.l.b16 %v927
  %v4196 = vunpack.c.l.b16 %v928
  %v4197 = vunpack.c.l.b16 %v929
  %v4198 = vunpack.c.l.b16 %v930
  %v4199 = vunpack.c.l.b16 %v931
  %v4200 = vunpack.c.l.b16 %v932
  %v4201 = vunpack.c.l.b16 %v933
  %v4202 = vunpack.c.l.b16 %v934
  %v4203 = vunpack.c.l.b16 %v935
  %v4204 = vunpack.c.l.b16 %v936
  %v4205 = vunpack.c.l.b16 %v937
  %v4206 = vunpack.c.l.b16 %v938
  %v4207 = vunpack.c.l.b16 %v939
  %v4208 = vunpack.c.l.b16 %v940
  %v4209 = vunpack.c.l.b16 %v941
  %v4210 = vunpack.c.l.b16 %v942
  %v4211 = vunpack.c.l.b16 %v943
  %v4212 = vunpack.c.l.b16 %v944
  %v4213 = vunpack.c.l.b16 %v945
  %v4214 = vunpack.c.l.b16 %v946
  %v4215 = vunpack.c.l.b16 %v947
  %v4216 = vunpack.c.l.b16 %v948
  %v4217 = vunpack.c.l.b16 %v949
  %v4218 = vunpack.c.l.b16 %v950
  %v4219 = vunpack.c.l.b16 %v951
  %v4220 = vunpack.c.l.b16 %v952
  %v4221 = vunpack.c.l.b16 %v953
  %v4222 = vunpack.c.l.b16 %v954
  %v4223 = vunpack.c.l.b16 %v955
  %v4224 = vunpack.c.l.b16 %v956
  %v4225 = vunpack.c.l.b16 %v957
  %v4226 = vunpack.c.l.b16 %v958
  %v4227 = vunpack.c.l.b16 %v959
  %v4228 = vunpack.c.l.b16 %v960
  %v4229 = vunpack.c.l.b16 %v961
  %v4230 = vunpack.c.l.b16 %v962
  %v4231 = vunpack.c.l.b16 %v963
  %v4232 = vunpack.c.l.b16 %v964
  %v4233 = vunpack.c.l.b16 %v965
  %v4234 = vunpack.c.l.b16 %v966
  %v4235 = vpack.c.b16 %v4172, %v4171
  %v4236 = vpack.c.b16 %v4174, %v4173
  %v4237 = vpack.c.b16 %v4176, %v4175
  %v4238 = vpack.c.b16 %v4178, %v4177
  %v4239 = vpack.c.b16 %v4180, %v4179
  %v4240 = vpack.c.b16 %v4182, %v4181
  %v4241 = vpack.c.b16 %v4184, %v4183
  %v4242 = vpack.c.b16 %v4186, %v4185
  %v4243 = vpack.c.b16 %v4188, %v4187
  %v4244 = vpack.c.b16 %v4190, %v4189
  %v4245 = vpack.c.b16 %v4192, %v4191
  %v4246 = vpack.c.b16 %v4194, %v4193
  %v4247 = vpack.c.b16 %v4196, %v4195
  %v4248 = vpack.c.b16 %v4198, %v4197
  %v4249 = vpack.c.b16 %v4200, %v4199
  %v4250 = vpack.c.b16 %v4202, %v4201
  %v4251 = vpack.c.b16 %v4204, %v4203
  %v4252 = vpack.c.b16 %v4206, %v4205
  %v4253 = vpack.c.b16 %v4208, %v4207
  %v4254 = vpack.c.b16 %v4210, %v4209
  %v4255 = vpack.c.b16 %v4212, %v4211
  %v4256 = vpack.c.b16 %v4214, %v4213
  %v4257 = vpack.c.b16 %v4216, %v4215
  %v4258 = vpack.c.b16 %v4218, %v4217
  %v4259 = vpack.c.b16 %v4220, %v4219
  %v4260 = vpack.c.b16 %v4222, %v4221
  %v4261 = vpack.c.b16 %v4224, %v4223
  %v4262 = vpack.c.b16 %v4226, %v4225
  %v4263 = vpack.c.b16 %v4228, %v4227
  %v4264 = vpack.c.b16 %v4230, %v4229
  %v4265 = vpack.c.b16 %v4232, %v4231
  %v4266 = vpack.c.b16 %v4234, %v4233
  %v4268 = vsel %vm1325, %v4235, 0
  %v4271 = vsel %vm1325, %v4236, 0
  %v4274 = vsel %vm1325, %v4237, 0
  %v4277 = vsel %vm1325, %v4238, 0
  %v4280 = vsel %vm1325, %v4239, 0
  %v4283 = vsel %vm1325, %v4240, 0
  %v4286 = vsel %vm1325, %v4241, 0
  %v4289 = vsel %vm1325, %v4242, 0
  %v4292 = vsel %vm1325, %v4243, 0
  %v4295 = vsel %vm1325, %v4244, 0
  %v4298 = vsel %vm1325, %v4245, 0
  %v4301 = vsel %vm1325, %v4246, 0
  %v4304 = vsel %vm1325, %v4247, 0
  %v4307 = vsel %vm1325, %v4248, 0
  %v4310 = vsel %vm1325, %v4249, 0
  %v4313 = vsel %vm1325, %v4250, 0
  %v4316 = vsel %vm1325, %v4251, 0
  %v4319 = vsel %vm1325, %v4252, 0
  %v4322 = vsel %vm1325, %v4253, 0
  %v4325 = vsel %vm1325, %v4254, 0
  %v4328 = vsel %vm1325, %v4255, 0
  %v4331 = vsel %vm1325, %v4256, 0
  %v4334 = vsel %vm1325, %v4257, 0
  %v4337 = vsel %vm1325, %v4258, 0
  %v4340 = vsel %vm1325, %v4259, 0
  %v4343 = vsel %vm1325, %v4260, 0
  %v4346 = vsel %vm1325, %v4261, 0
  %v4349 = vsel %vm1325, %v4262, 0
  %v4352 = vsel %vm1325, %v4263, 0
  %v4355 = vsel %vm1325, %v4264, 0
  %v4358 = vsel %vm1325, %v4265, 0
  %v4361 = vsel %vm1325, %v4266, 0
  %v4364 = vsel %vm1422, %v4106, 0
  %4366 = vmatprep.subr.bf16.mxu0 0
  %4367 = vmatpush1.bf16.msra.mxu0 %v4364
  %4368 = vmatprep.subr.bf16.mxu0 0
  %4369 = vmatpush1.bf16.msra.mxu0 0
  %4370 = vmatprep.subr.bf16.mxu0 0
  %4371 = vmatpush1.bf16.msra.mxu0 0
  %4372 = vmatprep.subr.bf16.mxu0 0
  %4373 = vmatpush1.bf16.msra.mxu0 0
  %4374 = vmatprep.subr.bf16.mxu0 0
  %4375 = vmatpush1.bf16.msra.mxu0 0
  %4376 = vmatprep.subr.bf16.mxu0 0
  %4377 = vmatpush1.bf16.msra.mxu0 0
  %4378 = vmatprep.subr.bf16.mxu0 0
  %4379 = vmatpush1.bf16.msra.mxu0 0
  %4380 = vmatprep.subr.bf16.mxu0 0
  %4381 = vmatpush1.bf16.msra.mxu0 0
  %4382 = vmatprep.subr.bf16.mxu0 0
  %4383 = vmatpush1.bf16.msra.mxu0 0
  %4384 = vmatprep.subr.bf16.mxu0 0
  %4385 = vmatpush1.bf16.msra.mxu0 0
  %4386 = vmatprep.subr.bf16.mxu0 0
  %4387 = vmatpush1.bf16.msra.mxu0 0
  %4388 = vmatprep.subr.bf16.mxu0 0
  %4389 = vmatpush1.bf16.msra.mxu0 0
  %4390 = vmatprep.subr.bf16.mxu0 0
  %4391 = vmatpush1.bf16.msra.mxu0 0
  %4392 = vmatprep.subr.bf16.mxu0 0
  %4393 = vmatpush1.bf16.msra.mxu0 0
  %4394 = vmatprep.subr.bf16.mxu0 0
  %4395 = vmatpush1.bf16.msra.mxu0 0
  %4396 = vmatprep.subr.bf16.mxu0 0
  %4397 = vmatpush1.bf16.msra.mxu0 0
  %4398 = vmatprep.mubr.bf16.mxu0 0
  %4399 = vmatmul.mubr.bf16.gmra.mrb[0].mxu0 %v4268
  %v4400 = vpop.f32.mrb[0].mxu0
  %v4401 = vadd.f32 0.0, %v4400
  %v4402 = vpop.f32.mrb[0].mxu0
  %v4403 = vpop.f32.mrb[0].mxu0
  %v4404 = vadd.f32 0.0, %v4403
  %v4405 = vpop.f32.mrb[0].mxu0
  %4406 = vmatprep.mubr.bf16.mxu0 0
  %4407 = vmatmul.mubr.bf16.gmra.mrb[0].mxu0 %v4271
  %v4408 = vpop.f32.mrb[0].mxu0
  %v4409 = vadd.f32 0.0, %v4408
  %v4410 = vpop.f32.mrb[0].mxu0
  %v4411 = vpop.f32.mrb[0].mxu0
  %v4412 = vadd.f32 0.0, %v4411
  %v4413 = vpop.f32.mrb[0].mxu0
  %4414 = vmatprep.mubr.bf16.mxu0 0
  %4415 = vmatmul.mubr.bf16.gmra.mrb[0].mxu0 %v4274
  %v4416 = vpop.f32.mrb[0].mxu0
  %v4417 = vadd.f32 0.0, %v4416
  %v4418 = vpop.f32.mrb[0].mxu0
  %v4419 = vpop.f32.mrb[0].mxu0
  %v4420 = vadd.f32 0.0, %v4419
  %v4421 = vpop.f32.mrb[0].mxu0
  %4422 = vmatprep.mubr.bf16.mxu0 0
  %4423 = vmatmul.mubr.bf16.gmra.mrb[0].mxu0 %v4277
  %v4424 = vpop.f32.mrb[0].mxu0
  %v4425 = vadd.f32 0.0, %v4424
  %v4426 = vpop.f32.mrb[0].mxu0
  %v4427 = vpop.f32.mrb[0].mxu0
  %v4428 = vadd.f32 0.0, %v4427
  %v4429 = vpop.f32.mrb[0].mxu0
  %4430 = vmatprep.mubr.bf16.mxu0 0
  %4431 = vmatmul.mubr.bf16.gmra.mrb[0].mxu0 %v4280
  %v4432 = vpop.f32.mrb[0].mxu0
  %v4433 = vadd.f32 0.0, %v4432
  %v4434 = vpop.f32.mrb[0].mxu0
  %v4435 = vpop.f32.mrb[0].mxu0
  %v4436 = vadd.f32 0.0, %v4435
  %v4437 = vpop.f32.mrb[0].mxu0
  %4438 = vmatprep.mubr.bf16.mxu0 0
  %4439 = vmatmul.mubr.bf16.gmra.mrb[0].mxu0 %v4283
  %v4440 = vpop.f32.mrb[0].mxu0
  %v4441 = vadd.f32 0.0, %v4440
  %v4442 = vpop.f32.mrb[0].mxu0
  %v4443 = vpop.f32.mrb[0].mxu0
  %v4444 = vadd.f32 0.0, %v4443
  %v4445 = vpop.f32.mrb[0].mxu0
  %4446 = vmatprep.mubr.bf16.mxu0 0
  %4447 = vmatmul.mubr.bf16.gmra.mrb[0].mxu0 %v4286
  %v4448 = vpop.f32.mrb[0].mxu0
  %v4449 = vadd.f32 0.0, %v4448
  %v4450 = vpop.f32.mrb[0].mxu0
  %v4451 = vpop.f32.mrb[0].mxu0
  %v4452 = vadd.f32 0.0, %v4451
  %v4453 = vpop.f32.mrb[0].mxu0
  %4454 = vmatprep.mubr.bf16.mxu0 0
  %4455 = vmatmul.mubr.bf16.gmra.mrb[0].mxu0 %v4289
  %v4456 = vpop.f32.mrb[0].mxu0
  %v4457 = vadd.f32 0.0, %v4456
  %v4458 = vpop.f32.mrb[0].mxu0
  %v4459 = vpop.f32.mrb[0].mxu0
  %v4460 = vadd.f32 0.0, %v4459
  %v4461 = vpop.f32.mrb[0].mxu0
  %4462 = vmatprep.mubr.bf16.mxu0 0
  %4463 = vmatmul.mubr.bf16.gmra.mrb[0].mxu0 %v4292
  %v4464 = vpop.f32.mrb[0].mxu0
  %v4465 = vadd.f32 0.0, %v4464
  %v4466 = vpop.f32.mrb[0].mxu0
  %v4467 = vpop.f32.mrb[0].mxu0
  %v4468 = vadd.f32 0.0, %v4467
  %v4469 = vpop.f32.mrb[0].mxu0
  %4470 = vmatprep.mubr.bf16.mxu0 0
  %4471 = vmatmul.mubr.bf16.gmra.mrb[0].mxu0 %v4295
  %v4472 = vpop.f32.mrb[0].mxu0
  %v4473 = vadd.f32 0.0, %v4472
  %v4474 = vpop.f32.mrb[0].mxu0
  %v4475 = vpop.f32.mrb[0].mxu0
  %v4476 = vadd.f32 0.0, %v4475
  %v4477 = vpop.f32.mrb[0].mxu0
  %4478 = vmatprep.mubr.bf16.mxu0 0
  %4479 = vmatmul.mubr.bf16.gmra.mrb[0].mxu0 %v4298
  %v4480 = vpop.f32.mrb[0].mxu0
  %v4481 = vadd.f32 0.0, %v4480
  %v4482 = vpop.f32.mrb[0].mxu0
  %v4483 = vpop.f32.mrb[0].mxu0
  %v4484 = vadd.f32 0.0, %v4483
  %v4485 = vpop.f32.mrb[0].mxu0
  %4486 = vmatprep.mubr.bf16.mxu0 0
  %4487 = vmatmul.mubr.bf16.gmra.mrb[0].mxu0 %v4301
  %v4488 = vpop.f32.mrb[0].mxu0
  %v4489 = vadd.f32 0.0, %v4488
  %v4490 = vpop.f32.mrb[0].mxu0
  %v4491 = vpop.f32.mrb[0].mxu0
  %v4492 = vadd.f32 0.0, %v4491
  %v4493 = vpop.f32.mrb[0].mxu0
  %4494 = vmatprep.mubr.bf16.mxu0 0
  %4495 = vmatmul.mubr.bf16.gmra.mrb[0].mxu0 %v4304
  %v4496 = vpop.f32.mrb[0].mxu0
  %v4497 = vadd.f32 0.0, %v4496
  %v4498 = vpop.f32.mrb[0].mxu0
  %v4499 = vpop.f32.mrb[0].mxu0
  %v4500 = vadd.f32 0.0, %v4499
  %v4501 = vpop.f32.mrb[0].mxu0
  %4502 = vmatprep.mubr.bf16.mxu0 0
  %4503 = vmatmul.mubr.bf16.gmra.mrb[0].mxu0 %v4307
  %v4504 = vpop.f32.mrb[0].mxu0
  %v4505 = vadd.f32 0.0, %v4504
  %v4506 = vpop.f32.mrb[0].mxu0
  %v4507 = vpop.f32.mrb[0].mxu0
  %v4508 = vadd.f32 0.0, %v4507
  %v4509 = vpop.f32.mrb[0].mxu0
  %4510 = vmatprep.mubr.bf16.mxu0 0
  %4511 = vmatmul.mubr.bf16.gmra.mrb[0].mxu0 %v4310
  %v4512 = vpop.f32.mrb[0].mxu0
  %v4513 = vadd.f32 0.0, %v4512
  %v4514 = vpop.f32.mrb[0].mxu0
  %v4515 = vpop.f32.mrb[0].mxu0
  %v4516 = vadd.f32 0.0, %v4515
  %v4517 = vpop.f32.mrb[0].mxu0
  %4518 = vmatprep.mubr.bf16.mxu0 0
  %4519 = vmatmul.mubr.bf16.gmra.mrb[0].mxu0 %v4313
  %v4520 = vpop.f32.mrb[0].mxu0
  %v4521 = vadd.f32 0.0, %v4520
  %v4522 = vpop.f32.mrb[0].mxu0
  %v4523 = vpop.f32.mrb[0].mxu0
  %v4524 = vadd.f32 0.0, %v4523
  %v4525 = vpop.f32.mrb[0].mxu0
  %4526 = vmatprep.mubr.bf16.mxu0 0
  %4527 = vmatmul.mubr.bf16.gmra.mrb[0].mxu0 %v4316
  %v4528 = vpop.f32.mrb[0].mxu0
  %v4529 = vadd.f32 0.0, %v4528
  %v4530 = vpop.f32.mrb[0].mxu0
  %v4531 = vpop.f32.mrb[0].mxu0
  %v4532 = vadd.f32 0.0, %v4531
  %v4533 = vpop.f32.mrb[0].mxu0
  %4534 = vmatprep.mubr.bf16.mxu0 0
  %4535 = vmatmul.mubr.bf16.gmra.mrb[0].mxu0 %v4319
  %v4536 = vpop.f32.mrb[0].mxu0
  %v4537 = vadd.f32 0.0, %v4536
  %v4538 = vpop.f32.mrb[0].mxu0
  %v4539 = vpop.f32.mrb[0].mxu0
  %v4540 = vadd.f32 0.0, %v4539
  %v4541 = vpop.f32.mrb[0].mxu0
  %4542 = vmatprep.mubr.bf16.mxu0 0
  %4543 = vmatmul.mubr.bf16.gmra.mrb[0].mxu0 %v4322
  %v4544 = vpop.f32.mrb[0].mxu0
  %v4545 = vadd.f32 0.0, %v4544
  %v4546 = vpop.f32.mrb[0].mxu0
  %v4547 = vpop.f32.mrb[0].mxu0
  %v4548 = vadd.f32 0.0, %v4547
  %v4549 = vpop.f32.mrb[0].mxu0
  %4550 = vmatprep.mubr.bf16.mxu0 0
  %4551 = vmatmul.mubr.bf16.gmra.mrb[0].mxu0 %v4325
  %v4552 = vpop.f32.mrb[0].mxu0
  %v4553 = vadd.f32 0.0, %v4552
  %v4554 = vpop.f32.mrb[0].mxu0
  %v4555 = vpop.f32.mrb[0].mxu0
  %v4556 = vadd.f32 0.0, %v4555
  %v4557 = vpop.f32.mrb[0].mxu0
  %4558 = vmatprep.mubr.bf16.mxu0 0
  %4559 = vmatmul.mubr.bf16.gmra.mrb[0].mxu0 %v4328
  %v4560 = vpop.f32.mrb[0].mxu0
  %v4561 = vadd.f32 0.0, %v4560
  %v4562 = vpop.f32.mrb[0].mxu0
  %v4563 = vpop.f32.mrb[0].mxu0
  %v4564 = vadd.f32 0.0, %v4563
  %v4565 = vpop.f32.mrb[0].mxu0
  %4566 = vmatprep.mubr.bf16.mxu0 0
  %4567 = vmatmul.mubr.bf16.gmra.mrb[0].mxu0 %v4331
  %v4568 = vpop.f32.mrb[0].mxu0
  %v4569 = vadd.f32 0.0, %v4568
  %v4570 = vpop.f32.mrb[0].mxu0
  %v4571 = vpop.f32.mrb[0].mxu0
  %v4572 = vadd.f32 0.0, %v4571
  %v4573 = vpop.f32.mrb[0].mxu0
  %4574 = vmatprep.mubr.bf16.mxu0 0
  %4575 = vmatmul.mubr.bf16.gmra.mrb[0].mxu0 %v4334
  %v4576 = vpop.f32.mrb[0].mxu0
  %v4577 = vadd.f32 0.0, %v4576
  %v4578 = vpop.f32.mrb[0].mxu0
  %v4579 = vpop.f32.mrb[0].mxu0
  %v4580 = vadd.f32 0.0, %v4579
  %v4581 = vpop.f32.mrb[0].mxu0
  %4582 = vmatprep.mubr.bf16.mxu0 0
  %4583 = vmatmul.mubr.bf16.gmra.mrb[0].mxu0 %v4337
  %v4584 = vpop.f32.mrb[0].mxu0
  %v4585 = vadd.f32 0.0, %v4584
  %v4586 = vpop.f32.mrb[0].mxu0
  %v4587 = vpop.f32.mrb[0].mxu0
  %v4588 = vadd.f32 0.0, %v4587
  %v4589 = vpop.f32.mrb[0].mxu0
  %4590 = vmatprep.mubr.bf16.mxu0 0
  %4591 = vmatmul.mubr.bf16.gmra.mrb[0].mxu0 %v4340
  %v4592 = vpop.f32.mrb[0].mxu0
  %v4593 = vadd.f32 0.0, %v4592
  %v4594 = vpop.f32.mrb[0].mxu0
  %v4595 = vpop.f32.mrb[0].mxu0
  %v4596 = vadd.f32 0.0, %v4595
  %v4597 = vpop.f32.mrb[0].mxu0
  %4598 = vmatprep.mubr.bf16.mxu0 0
  %4599 = vmatmul.mubr.bf16.gmra.mrb[0].mxu0 %v4343
  %v4600 = vpop.f32.mrb[0].mxu0
  %v4601 = vadd.f32 0.0, %v4600
  %v4602 = vpop.f32.mrb[0].mxu0
  %v4603 = vpop.f32.mrb[0].mxu0
  %v4604 = vadd.f32 0.0, %v4603
  %v4605 = vpop.f32.mrb[0].mxu0
  %4606 = vmatprep.mubr.bf16.mxu0 0
  %4607 = vmatmul.mubr.bf16.gmra.mrb[0].mxu0 %v4346
  %v4608 = vpop.f32.mrb[0].mxu0
  %v4609 = vadd.f32 0.0, %v4608
  %v4610 = vpop.f32.mrb[0].mxu0
  %v4611 = vpop.f32.mrb[0].mxu0
  %v4612 = vadd.f32 0.0, %v4611
  %v4613 = vpop.f32.mrb[0].mxu0
  %4614 = vmatprep.mubr.bf16.mxu0 0
  %4615 = vmatmul.mubr.bf16.gmra.mrb[0].mxu0 %v4349
  %v4616 = vpop.f32.mrb[0].mxu0
  %v4617 = vadd.f32 0.0, %v4616
  %v4618 = vpop.f32.mrb[0].mxu0
  %v4619 = vpop.f32.mrb[0].mxu0
  %v4620 = vadd.f32 0.0, %v4619
  %v4621 = vpop.f32.mrb[0].mxu0
  %4622 = vmatprep.mubr.bf16.mxu0 0
  %4623 = vmatmul.mubr.bf16.gmra.mrb[0].mxu0 %v4352
  %v4624 = vpop.f32.mrb[0].mxu0
  %v4625 = vadd.f32 0.0, %v4624
  %v4626 = vpop.f32.mrb[0].mxu0
  %v4627 = vpop.f32.mrb[0].mxu0
  %v4628 = vadd.f32 0.0, %v4627
  %v4629 = vpop.f32.mrb[0].mxu0
  %4630 = vmatprep.mubr.bf16.mxu0 0
  %4631 = vmatmul.mubr.bf16.gmra.mrb[0].mxu0 %v4355
  %v4632 = vpop.f32.mrb[0].mxu0
  %v4633 = vadd.f32 0.0, %v4632
  %v4634 = vpop.f32.mrb[0].mxu0
  %v4635 = vpop.f32.mrb[0].mxu0
  %v4636 = vadd.f32 0.0, %v4635
  %v4637 = vpop.f32.mrb[0].mxu0
  %4638 = vmatprep.mubr.bf16.mxu0 0
  %4639 = vmatmul.mubr.bf16.gmra.mrb[0].mxu0 %v4358
  %v4640 = vpop.f32.mrb[0].mxu0
  %v4641 = vadd.f32 0.0, %v4640
  %v4642 = vpop.f32.mrb[0].mxu0
  %v4643 = vpop.f32.mrb[0].mxu0
  %v4644 = vadd.f32 0.0, %v4643
  %v4645 = vpop.f32.mrb[0].mxu0
  %4646 = vmatprep.mubr.bf16.mxu0 0
  %4647 = vmatmul.mubr.bf16.gmra.mrb[0].mxu0 %v4361
  %v4648 = vpop.f32.mrb[0].mxu0
  %v4649 = vadd.f32 0.0, %v4648
  %v4650 = vpop.f32.mrb[0].mxu0
  %v4651 = vpop.f32.mrb[0].mxu0
  %v4652 = vadd.f32 0.0, %v4651
  %v4653 = vpop.f32.mrb[0].mxu0
  %4654 = vdwg.mxu0
  %v4655 = vadd.f32 %v4041, %v4401
  %v4656 = vadd.f32 %v4042, %v4404
  %v4657 = vadd.f32 %v4043, %v4409
  %v4658 = vadd.f32 %v4044, %v4412
  %v4659 = vadd.f32 %v4045, %v4417
  %v4660 = vadd.f32 %v4046, %v4420
  %v4661 = vadd.f32 %v4047, %v4425
  %v4662 = vadd.f32 %v4048, %v4428
  %v4663 = vadd.f32 %v4049, %v4433
  %v4664 = vadd.f32 %v4050, %v4436
  %v4665 = vadd.f32 %v4051, %v4441
  %v4666 = vadd.f32 %v4052, %v4444
  %v4667 = vadd.f32 %v4053, %v4449
  %v4668 = vadd.f32 %v4054, %v4452
  %v4669 = vadd.f32 %v4055, %v4457
  %v4670 = vadd.f32 %v4056, %v4460
  %v4671 = vadd.f32 %v4057, %v4465
  %v4672 = vadd.f32 %v4058, %v4468
  %v4673 = vadd.f32 %v4059, %v4473
  %v4674 = vadd.f32 %v4060, %v4476
  %v4675 = vadd.f32 %v4061, %v4481
  %v4676 = vadd.f32 %v4062, %v4484
  %v4677 = vadd.f32 %v4063, %v4489
  %v4678 = vadd.f32 %v4064, %v4492
  %v4679 = vadd.f32 %v4065, %v4497
  %v4680 = vadd.f32 %v4066, %v4500
  %v4681 = vadd.f32 %v4067, %v4505
  %v4682 = vadd.f32 %v4068, %v4508
  %v4683 = vadd.f32 %v4069, %v4513
  %v4684 = vadd.f32 %v4070, %v4516
  %v4685 = vadd.f32 %v4071, %v4521
  %v4686 = vadd.f32 %v4072, %v4524
  %v4687 = vadd.f32 %v4073, %v4529
  %v4688 = vadd.f32 %v4074, %v4532
  %v4689 = vadd.f32 %v4075, %v4537
  %v4690 = vadd.f32 %v4076, %v4540
  %v4691 = vadd.f32 %v4077, %v4545
  %v4692 = vadd.f32 %v4078, %v4548
  %v4693 = vadd.f32 %v4079, %v4553
  %v4694 = vadd.f32 %v4080, %v4556
  %v4695 = vadd.f32 %v4081, %v4561
  %v4696 = vadd.f32 %v4082, %v4564
  %v4697 = vadd.f32 %v4083, %v4569
  %v4698 = vadd.f32 %v4084, %v4572
  %v4699 = vadd.f32 %v4085, %v4577
  %v4700 = vadd.f32 %v4086, %v4580
  %v4701 = vadd.f32 %v4087, %v4585
  %v4702 = vadd.f32 %v4088, %v4588
  %v4703 = vadd.f32 %v4089, %v4593
  %v4704 = vadd.f32 %v4090, %v4596
  %v4705 = vadd.f32 %v4091, %v4601
  %v4706 = vadd.f32 %v4092, %v4604
  %v4707 = vadd.f32 %v4093, %v4609
  %v4708 = vadd.f32 %v4094, %v4612
  %v4709 = vadd.f32 %v4095, %v4617
  %v4710 = vadd.f32 %v4096, %v4620
  %v4711 = vadd.f32 %v4097, %v4625
  %v4712 = vadd.f32 %v4098, %v4628
  %v4713 = vadd.f32 %v4099, %v4633
  %v4714 = vadd.f32 %v4100, %v4636
  %v4715 = vadd.f32 %v4101, %v4641
  %v4716 = vadd.f32 %v4102, %v4644
  %v4717 = vadd.f32 %v4103, %v4649
  %v4718 = vadd.f32 %v4104, %v4652
  %s4719 = scalar_lea.vmem %s1, 12
  %v4720 = vld [vmem:[%s4719] sm:$0x3]
  %v4785 = vunpack.c.l.b16 %v968
  %v4786 = vunpack.c.l.b16 %v969
  %v4787 = vunpack.c.l.b16 %v970
  %v4788 = vunpack.c.l.b16 %v971
  %v4789 = vunpack.c.l.b16 %v972
  %v4790 = vunpack.c.l.b16 %v973
  %v4791 = vunpack.c.l.b16 %v974
  %v4792 = vunpack.c.l.b16 %v975
  %v4793 = vunpack.c.l.b16 %v976
  %v4794 = vunpack.c.l.b16 %v977
  %v4795 = vunpack.c.l.b16 %v978
  %v4796 = vunpack.c.l.b16 %v979
  %v4797 = vunpack.c.l.b16 %v980
  %v4798 = vunpack.c.l.b16 %v981
  %v4799 = vunpack.c.l.b16 %v982
  %v4800 = vunpack.c.l.b16 %v983
  %v4801 = vunpack.c.l.b16 %v984
  %v4802 = vunpack.c.l.b16 %v985
  %v4803 = vunpack.c.l.b16 %v986
  %v4804 = vunpack.c.l.b16 %v987
  %v4805 = vunpack.c.l.b16 %v988
  %v4806 = vunpack.c.l.b16 %v989
  %v4807 = vunpack.c.l.b16 %v990
  %v4808 = vunpack.c.l.b16 %v991
  %v4809 = vunpack.c.l.b16 %v992
  %v4810 = vunpack.c.l.b16 %v993
  %v4811 = vunpack.c.l.b16 %v994
  %v4812 = vunpack.c.l.b16 %v995
  %v4813 = vunpack.c.l.b16 %v996
  %v4814 = vunpack.c.l.b16 %v997
  %v4815 = vunpack.c.l.b16 %v998
  %v4816 = vunpack.c.l.b16 %v999
  %v4817 = vunpack.c.l.b16 %v1000
  %v4818 = vunpack.c.l.b16 %v1001
  %v4819 = vunpack.c.l.b16 %v1002
  %v4820 = vunpack.c.l.b16 %v1003
  %v4821 = vunpack.c.l.b16 %v1004
  %v4822 = vunpack.c.l.b16 %v1005
  %v4823 = vunpack.c.l.b16 %v1006
  %v4824 = vunpack.c.l.b16 %v1007
  %v4825 = vunpack.c.l.b16 %v1008
  %v4826 = vunpack.c.l.b16 %v1009
  %v4827 = vunpack.c.l.b16 %v1010
  %v4828 = vunpack.c.l.b16 %v1011
  %v4829 = vunpack.c.l.b16 %v1012
  %v4830 = vunpack.c.l.b16 %v1013
  %v4831 = vunpack.c.l.b16 %v1014
  %v4832 = vunpack.c.l.b16 %v1015
  %v4833 = vunpack.c.l.b16 %v1016
  %v4834 = vunpack.c.l.b16 %v1017
  %v4835 = vunpack.c.l.b16 %v1018
  %v4836 = vunpack.c.l.b16 %v1019
  %v4837 = vunpack.c.l.b16 %v1020
  %v4838 = vunpack.c.l.b16 %v1021
  %v4839 = vunpack.c.l.b16 %v1022
  %v4840 = vunpack.c.l.b16 %v1023
  %v4841 = vunpack.c.l.b16 %v1024
  %v4842 = vunpack.c.l.b16 %v1025
  %v4843 = vunpack.c.l.b16 %v1026
  %v4844 = vunpack.c.l.b16 %v1027
  %v4845 = vunpack.c.l.b16 %v1028
  %v4846 = vunpack.c.l.b16 %v1029
  %v4847 = vunpack.c.l.b16 %v1030
  %v4848 = vunpack.c.l.b16 %v1031
  %v4849 = vpack.c.b16 %v4786, %v4785
  %v4850 = vpack.c.b16 %v4788, %v4787
  %v4851 = vpack.c.b16 %v4790, %v4789
  %v4852 = vpack.c.b16 %v4792, %v4791
  %v4853 = vpack.c.b16 %v4794, %v4793
  %v4854 = vpack.c.b16 %v4796, %v4795
  %v4855 = vpack.c.b16 %v4798, %v4797
  %v4856 = vpack.c.b16 %v4800, %v4799
  %v4857 = vpack.c.b16 %v4802, %v4801
  %v4858 = vpack.c.b16 %v4804, %v4803
  %v4859 = vpack.c.b16 %v4806, %v4805
  %v4860 = vpack.c.b16 %v4808, %v4807
  %v4861 = vpack.c.b16 %v4810, %v4809
  %v4862 = vpack.c.b16 %v4812, %v4811
  %v4863 = vpack.c.b16 %v4814, %v4813
  %v4864 = vpack.c.b16 %v4816, %v4815
  %v4865 = vpack.c.b16 %v4818, %v4817
  %v4866 = vpack.c.b16 %v4820, %v4819
  %v4867 = vpack.c.b16 %v4822, %v4821
  %v4868 = vpack.c.b16 %v4824, %v4823
  %v4869 = vpack.c.b16 %v4826, %v4825
  %v4870 = vpack.c.b16 %v4828, %v4827
  %v4871 = vpack.c.b16 %v4830, %v4829
  %v4872 = vpack.c.b16 %v4832, %v4831
  %v4873 = vpack.c.b16 %v4834, %v4833
  %v4874 = vpack.c.b16 %v4836, %v4835
  %v4875 = vpack.c.b16 %v4838, %v4837
  %v4876 = vpack.c.b16 %v4840, %v4839
  %v4877 = vpack.c.b16 %v4842, %v4841
  %v4878 = vpack.c.b16 %v4844, %v4843
  %v4879 = vpack.c.b16 %v4846, %v4845
  %v4880 = vpack.c.b16 %v4848, %v4847
  %v4882 = vsel %vm1325, %v4849, 0
  %v4885 = vsel %vm1325, %v4850, 0
  %v4888 = vsel %vm1325, %v4851, 0
  %v4891 = vsel %vm1325, %v4852, 0
  %v4894 = vsel %vm1325, %v4853, 0
  %v4897 = vsel %vm1325, %v4854, 0
  %v4900 = vsel %vm1325, %v4855, 0
  %v4903 = vsel %vm1325, %v4856, 0
  %v4906 = vsel %vm1325, %v4857, 0
  %v4909 = vsel %vm1325, %v4858, 0
  %v4912 = vsel %vm1325, %v4859, 0
  %v4915 = vsel %vm1325, %v4860, 0
  %v4918 = vsel %vm1325, %v4861, 0
  %v4921 = vsel %vm1325, %v4862, 0
  %v4924 = vsel %vm1325, %v4863, 0
  %v4927 = vsel %vm1325, %v4864, 0
  %v4930 = vsel %vm1325, %v4865, 0
  %v4933 = vsel %vm1325, %v4866, 0
  %v4936 = vsel %vm1325, %v4867, 0
  %v4939 = vsel %vm1325, %v4868, 0
  %v4942 = vsel %vm1325, %v4869, 0
  %v4945 = vsel %vm1325, %v4870, 0
  %v4948 = vsel %vm1325, %v4871, 0
  %v4951 = vsel %vm1325, %v4872, 0
  %v4954 = vsel %vm1325, %v4873, 0
  %v4957 = vsel %vm1325, %v4874, 0
  %v4960 = vsel %vm1325, %v4875, 0
  %v4963 = vsel %vm1325, %v4876, 0
  %v4966 = vsel %vm1325, %v4877, 0
  %v4969 = vsel %vm1325, %v4878, 0
  %v4972 = vsel %vm1325, %v4879, 0
  %v4975 = vsel %vm1325, %v4880, 0
  %v4978 = vsel %vm1422, %v4720, 0
  %4980 = vmatprep.subr.bf16.mxu0 0
  %4981 = vmatpush1.bf16.msra.mxu0 %v4978
  %4982 = vmatprep.subr.bf16.mxu0 0
  %4983 = vmatpush1.bf16.msra.mxu0 0
  %4984 = vmatprep.subr.bf16.mxu0 0
  %4985 = vmatpush1.bf16.msra.mxu0 0
  %4986 = vmatprep.subr.bf16.mxu0 0
  %4987 = vmatpush1.bf16.msra.mxu0 0
  %4988 = vmatprep.subr.bf16.mxu0 0
  %4989 = vmatpush1.bf16.msra.mxu0 0
  %4990 = vmatprep.subr.bf16.mxu0 0
  %4991 = vmatpush1.bf16.msra.mxu0 0
  %4992 = vmatprep.subr.bf16.mxu0 0
  %4993 = vmatpush1.bf16.msra.mxu0 0
  %4994 = vmatprep.subr.bf16.mxu0 0
  %4995 = vmatpush1.bf16.msra.mxu0 0
  %4996 = vmatprep.subr.bf16.mxu0 0
  %4997 = vmatpush1.bf16.msra.mxu0 0
  %4998 = vmatprep.subr.bf16.mxu0 0
  %4999 = vmatpush1.bf16.msra.mxu0 0
  %5000 = vmatprep.subr.bf16.mxu0 0
  %5001 = vmatpush1.bf16.msra.mxu0 0
  %5002 = vmatprep.subr.bf16.mxu0 0
  %5003 = vmatpush1.bf16.msra.mxu0 0
  %5004 = vmatprep.subr.bf16.mxu0 0
  %5005 = vmatpush1.bf16.msra.mxu0 0
  %5006 = vmatprep.subr.bf16.mxu0 0
  %5007 = vmatpush1.bf16.msra.mxu0 0
  %5008 = vmatprep.subr.bf16.mxu0 0
  %5009 = vmatpush1.bf16.msra.mxu0 0
  %5010 = vmatprep.subr.bf16.mxu0 0
  %5011 = vmatpush1.bf16.msra.mxu0 0
  %5012 = vmatprep.mubr.bf16.mxu0 0
  %5013 = vmatmul.mubr.bf16.gmra.mrb[0].mxu0 %v4882
  %v5014 = vpop.f32.mrb[0].mxu0
  %v5015 = vadd.f32 0.0, %v5014
  %v5016 = vpop.f32.mrb[0].mxu0
  %v5017 = vpop.f32.mrb[0].mxu0
  %v5018 = vadd.f32 0.0, %v5017
  %v5019 = vpop.f32.mrb[0].mxu0
  %5020 = vmatprep.mubr.bf16.mxu0 0
  %5021 = vmatmul.mubr.bf16.gmra.mrb[0].mxu0 %v4885
  %v5022 = vpop.f32.mrb[0].mxu0
  %v5023 = vadd.f32 0.0, %v5022
  %v5024 = vpop.f32.mrb[0].mxu0
  %v5025 = vpop.f32.mrb[0].mxu0
  %v5026 = vadd.f32 0.0, %v5025
  %v5027 = vpop.f32.mrb[0].mxu0
  %5028 = vmatprep.mubr.bf16.mxu0 0
  %5029 = vmatmul.mubr.bf16.gmra.mrb[0].mxu0 %v4888
  %v5030 = vpop.f32.mrb[0].mxu0
  %v5031 = vadd.f32 0.0, %v5030
  %v5032 = vpop.f32.mrb[0].mxu0
  %v5033 = vpop.f32.mrb[0].mxu0
  %v5034 = vadd.f32 0.0, %v5033
  %v5035 = vpop.f32.mrb[0].mxu0
  %5036 = vmatprep.mubr.bf16.mxu0 0
  %5037 = vmatmul.mubr.bf16.gmra.mrb[0].mxu0 %v4891
  %v5038 = vpop.f32.mrb[0].mxu0
  %v5039 = vadd.f32 0.0, %v5038
  %v5040 = vpop.f32.mrb[0].mxu0
  %v5041 = vpop.f32.mrb[0].mxu0
  %v5042 = vadd.f32 0.0, %v5041
  %v5043 = vpop.f32.mrb[0].mxu0
  %5044 = vmatprep.mubr.bf16.mxu0 0
  %5045 = vmatmul.mubr.bf16.gmra.mrb[0].mxu0 %v4894
  %v5046 = vpop.f32.mrb[0].mxu0
  %v5047 = vadd.f32 0.0, %v5046
  %v5048 = vpop.f32.mrb[0].mxu0
  %v5049 = vpop.f32.mrb[0].mxu0
  %v5050 = vadd.f32 0.0, %v5049
  %v5051 = vpop.f32.mrb[0].mxu0
  %5052 = vmatprep.mubr.bf16.mxu0 0
  %5053 = vmatmul.mubr.bf16.gmra.mrb[0].mxu0 %v4897
  %v5054 = vpop.f32.mrb[0].mxu0
  %v5055 = vadd.f32 0.0, %v5054
  %v5056 = vpop.f32.mrb[0].mxu0
  %v5057 = vpop.f32.mrb[0].mxu0
  %v5058 = vadd.f32 0.0, %v5057
  %v5059 = vpop.f32.mrb[0].mxu0
  %5060 = vmatprep.mubr.bf16.mxu0 0
  %5061 = vmatmul.mubr.bf16.gmra.mrb[0].mxu0 %v4900
  %v5062 = vpop.f32.mrb[0].mxu0
  %v5063 = vadd.f32 0.0, %v5062
  %v5064 = vpop.f32.mrb[0].mxu0
  %v5065 = vpop.f32.mrb[0].mxu0
  %v5066 = vadd.f32 0.0, %v5065
  %v5067 = vpop.f32.mrb[0].mxu0
  %5068 = vmatprep.mubr.bf16.mxu0 0
  %5069 = vmatmul.mubr.bf16.gmra.mrb[0].mxu0 %v4903
  %v5070 = vpop.f32.mrb[0].mxu0
  %v5071 = vadd.f32 0.0, %v5070
  %v5072 = vpop.f32.mrb[0].mxu0
  %v5073 = vpop.f32.mrb[0].mxu0
  %v5074 = vadd.f32 0.0, %v5073
  %v5075 = vpop.f32.mrb[0].mxu0
  %5076 = vmatprep.mubr.bf16.mxu0 0
  %5077 = vmatmul.mubr.bf16.gmra.mrb[0].mxu0 %v4906
  %v5078 = vpop.f32.mrb[0].mxu0
  %v5079 = vadd.f32 0.0, %v5078
  %v5080 = vpop.f32.mrb[0].mxu0
  %v5081 = vpop.f32.mrb[0].mxu0
  %v5082 = vadd.f32 0.0, %v5081
  %v5083 = vpop.f32.mrb[0].mxu0
  %5084 = vmatprep.mubr.bf16.mxu0 0
  %5085 = vmatmul.mubr.bf16.gmra.mrb[0].mxu0 %v4909
  %v5086 = vpop.f32.mrb[0].mxu0
  %v5087 = vadd.f32 0.0, %v5086
  %v5088 = vpop.f32.mrb[0].mxu0
  %v5089 = vpop.f32.mrb[0].mxu0
  %v5090 = vadd.f32 0.0, %v5089
  %v5091 = vpop.f32.mrb[0].mxu0
  %5092 = vmatprep.mubr.bf16.mxu0 0
  %5093 = vmatmul.mubr.bf16.gmra.mrb[0].mxu0 %v4912
  %v5094 = vpop.f32.mrb[0].mxu0
  %v5095 = vadd.f32 0.0, %v5094
  %v5096 = vpop.f32.mrb[0].mxu0
  %v5097 = vpop.f32.mrb[0].mxu0
  %v5098 = vadd.f32 0.0, %v5097
  %v5099 = vpop.f32.mrb[0].mxu0
  %5100 = vmatprep.mubr.bf16.mxu0 0
  %5101 = vmatmul.mubr.bf16.gmra.mrb[0].mxu0 %v4915
  %v5102 = vpop.f32.mrb[0].mxu0
  %v5103 = vadd.f32 0.0, %v5102
  %v5104 = vpop.f32.mrb[0].mxu0
  %v5105 = vpop.f32.mrb[0].mxu0
  %v5106 = vadd.f32 0.0, %v5105
  %v5107 = vpop.f32.mrb[0].mxu0
  %5108 = vmatprep.mubr.bf16.mxu0 0
  %5109 = vmatmul.mubr.bf16.gmra.mrb[0].mxu0 %v4918
  %v5110 = vpop.f32.mrb[0].mxu0
  %v5111 = vadd.f32 0.0, %v5110
  %v5112 = vpop.f32.mrb[0].mxu0
  %v5113 = vpop.f32.mrb[0].mxu0
  %v5114 = vadd.f32 0.0, %v5113
  %v5115 = vpop.f32.mrb[0].mxu0
  %5116 = vmatprep.mubr.bf16.mxu0 0
  %5117 = vmatmul.mubr.bf16.gmra.mrb[0].mxu0 %v4921
  %v5118 = vpop.f32.mrb[0].mxu0
  %v5119 = vadd.f32 0.0, %v5118
  %v5120 = vpop.f32.mrb[0].mxu0
  %v5121 = vpop.f32.mrb[0].mxu0
  %v5122 = vadd.f32 0.0, %v5121
  %v5123 = vpop.f32.mrb[0].mxu0
  %5124 = vmatprep.mubr.bf16.mxu0 0
  %5125 = vmatmul.mubr.bf16.gmra.mrb[0].mxu0 %v4924
  %v5126 = vpop.f32.mrb[0].mxu0
  %v5127 = vadd.f32 0.0, %v5126
  %v5128 = vpop.f32.mrb[0].mxu0
  %v5129 = vpop.f32.mrb[0].mxu0
  %v5130 = vadd.f32 0.0, %v5129
  %v5131 = vpop.f32.mrb[0].mxu0
  %5132 = vmatprep.mubr.bf16.mxu0 0
  %5133 = vmatmul.mubr.bf16.gmra.mrb[0].mxu0 %v4927
  %v5134 = vpop.f32.mrb[0].mxu0
  %v5135 = vadd.f32 0.0, %v5134
  %v5136 = vpop.f32.mrb[0].mxu0
  %v5137 = vpop.f32.mrb[0].mxu0
  %v5138 = vadd.f32 0.0, %v5137
  %v5139 = vpop.f32.mrb[0].mxu0
  %5140 = vmatprep.mubr.bf16.mxu0 0
  %5141 = vmatmul.mubr.bf16.gmra.mrb[0].mxu0 %v4930
  %v5142 = vpop.f32.mrb[0].mxu0
  %v5143 = vadd.f32 0.0, %v5142
  %v5144 = vpop.f32.mrb[0].mxu0
  %v5145 = vpop.f32.mrb[0].mxu0
  %v5146 = vadd.f32 0.0, %v5145
  %v5147 = vpop.f32.mrb[0].mxu0
  %5148 = vmatprep.mubr.bf16.mxu0 0
  %5149 = vmatmul.mubr.bf16.gmra.mrb[0].mxu0 %v4933
  %v5150 = vpop.f32.mrb[0].mxu0
  %v5151 = vadd.f32 0.0, %v5150
  %v5152 = vpop.f32.mrb[0].mxu0
  %v5153 = vpop.f32.mrb[0].mxu0
  %v5154 = vadd.f32 0.0, %v5153
  %v5155 = vpop.f32.mrb[0].mxu0
  %5156 = vmatprep.mubr.bf16.mxu0 0
  %5157 = vmatmul.mubr.bf16.gmra.mrb[0].mxu0 %v4936
  %v5158 = vpop.f32.mrb[0].mxu0
  %v5159 = vadd.f32 0.0, %v5158
  %v5160 = vpop.f32.mrb[0].mxu0
  %v5161 = vpop.f32.mrb[0].mxu0
  %v5162 = vadd.f32 0.0, %v5161
  %v5163 = vpop.f32.mrb[0].mxu0
  %5164 = vmatprep.mubr.bf16.mxu0 0
  %5165 = vmatmul.mubr.bf16.gmra.mrb[0].mxu0 %v4939
  %v5166 = vpop.f32.mrb[0].mxu0
  %v5167 = vadd.f32 0.0, %v5166
  %v5168 = vpop.f32.mrb[0].mxu0
  %v5169 = vpop.f32.mrb[0].mxu0
  %v5170 = vadd.f32 0.0, %v5169
  %v5171 = vpop.f32.mrb[0].mxu0
  %5172 = vmatprep.mubr.bf16.mxu0 0
  %5173 = vmatmul.mubr.bf16.gmra.mrb[0].mxu0 %v4942
  %v5174 = vpop.f32.mrb[0].mxu0
  %v5175 = vadd.f32 0.0, %v5174
  %v5176 = vpop.f32.mrb[0].mxu0
  %v5177 = vpop.f32.mrb[0].mxu0
  %v5178 = vadd.f32 0.0, %v5177
  %v5179 = vpop.f32.mrb[0].mxu0
  %5180 = vmatprep.mubr.bf16.mxu0 0
  %5181 = vmatmul.mubr.bf16.gmra.mrb[0].mxu0 %v4945
  %v5182 = vpop.f32.mrb[0].mxu0
  %v5183 = vadd.f32 0.0, %v5182
  %v5184 = vpop.f32.mrb[0].mxu0
  %v5185 = vpop.f32.mrb[0].mxu0
  %v5186 = vadd.f32 0.0, %v5185
  %v5187 = vpop.f32.mrb[0].mxu0
  %5188 = vmatprep.mubr.bf16.mxu0 0
  %5189 = vmatmul.mubr.bf16.gmra.mrb[0].mxu0 %v4948
  %v5190 = vpop.f32.mrb[0].mxu0
  %v5191 = vadd.f32 0.0, %v5190
  %v5192 = vpop.f32.mrb[0].mxu0
  %v5193 = vpop.f32.mrb[0].mxu0
  %v5194 = vadd.f32 0.0, %v5193
  %v5195 = vpop.f32.mrb[0].mxu0
  %5196 = vmatprep.mubr.bf16.mxu0 0
  %5197 = vmatmul.mubr.bf16.gmra.mrb[0].mxu0 %v4951
  %v5198 = vpop.f32.mrb[0].mxu0
  %v5199 = vadd.f32 0.0, %v5198
  %v5200 = vpop.f32.mrb[0].mxu0
  %v5201 = vpop.f32.mrb[0].mxu0
  %v5202 = vadd.f32 0.0, %v5201
  %v5203 = vpop.f32.mrb[0].mxu0
  %5204 = vmatprep.mubr.bf16.mxu0 0
  %5205 = vmatmul.mubr.bf16.gmra.mrb[0].mxu0 %v4954
  %v5206 = vpop.f32.mrb[0].mxu0
  %v5207 = vadd.f32 0.0, %v5206
  %v5208 = vpop.f32.mrb[0].mxu0
  %v5209 = vpop.f32.mrb[0].mxu0
  %v5210 = vadd.f32 0.0, %v5209
  %v5211 = vpop.f32.mrb[0].mxu0
  %5212 = vmatprep.mubr.bf16.mxu0 0
  %5213 = vmatmul.mubr.bf16.gmra.mrb[0].mxu0 %v4957
  %v5214 = vpop.f32.mrb[0].mxu0
  %v5215 = vadd.f32 0.0, %v5214
  %v5216 = vpop.f32.mrb[0].mxu0
  %v5217 = vpop.f32.mrb[0].mxu0
  %v5218 = vadd.f32 0.0, %v5217
  %v5219 = vpop.f32.mrb[0].mxu0
  %5220 = vmatprep.mubr.bf16.mxu0 0
  %5221 = vmatmul.mubr.bf16.gmra.mrb[0].mxu0 %v4960
  %v5222 = vpop.f32.mrb[0].mxu0
  %v5223 = vadd.f32 0.0, %v5222
  %v5224 = vpop.f32.mrb[0].mxu0
  %v5225 = vpop.f32.mrb[0].mxu0
  %v5226 = vadd.f32 0.0, %v5225
  %v5227 = vpop.f32.mrb[0].mxu0
  %5228 = vmatprep.mubr.bf16.mxu0 0
  %5229 = vmatmul.mubr.bf16.gmra.mrb[0].mxu0 %v4963
  %v5230 = vpop.f32.mrb[0].mxu0
  %v5231 = vadd.f32 0.0, %v5230
  %v5232 = vpop.f32.mrb[0].mxu0
  %v5233 = vpop.f32.mrb[0].mxu0
  %v5234 = vadd.f32 0.0, %v5233
  %v5235 = vpop.f32.mrb[0].mxu0
  %5236 = vmatprep.mubr.bf16.mxu0 0
  %5237 = vmatmul.mubr.bf16.gmra.mrb[0].mxu0 %v4966
  %v5238 = vpop.f32.mrb[0].mxu0
  %v5239 = vadd.f32 0.0, %v5238
  %v5240 = vpop.f32.mrb[0].mxu0
  %v5241 = vpop.f32.mrb[0].mxu0
  %v5242 = vadd.f32 0.0, %v5241
  %v5243 = vpop.f32.mrb[0].mxu0
  %5244 = vmatprep.mubr.bf16.mxu0 0
  %5245 = vmatmul.mubr.bf16.gmra.mrb[0].mxu0 %v4969
  %v5246 = vpop.f32.mrb[0].mxu0
  %v5247 = vadd.f32 0.0, %v5246
  %v5248 = vpop.f32.mrb[0].mxu0
  %v5249 = vpop.f32.mrb[0].mxu0
  %v5250 = vadd.f32 0.0, %v5249
  %v5251 = vpop.f32.mrb[0].mxu0
  %5252 = vmatprep.mubr.bf16.mxu0 0
  %5253 = vmatmul.mubr.bf16.gmra.mrb[0].mxu0 %v4972
  %v5254 = vpop.f32.mrb[0].mxu0
  %v5255 = vadd.f32 0.0, %v5254
  %v5256 = vpop.f32.mrb[0].mxu0
  %v5257 = vpop.f32.mrb[0].mxu0
  %v5258 = vadd.f32 0.0, %v5257
  %v5259 = vpop.f32.mrb[0].mxu0
  %5260 = vmatprep.mubr.bf16.mxu0 0
  %5261 = vmatmul.mubr.bf16.gmra.mrb[0].mxu0 %v4975
  %v5262 = vpop.f32.mrb[0].mxu0
  %v5263 = vadd.f32 0.0, %v5262
  %v5264 = vpop.f32.mrb[0].mxu0
  %v5265 = vpop.f32.mrb[0].mxu0
  %v5266 = vadd.f32 0.0, %v5265
  %v5267 = vpop.f32.mrb[0].mxu0
  %5268 = vdwg.mxu0
  %v5269 = vadd.f32 %v4655, %v5015
  %v5270 = vadd.f32 %v4656, %v5018
  %v5271 = vadd.f32 %v4657, %v5023
  %v5272 = vadd.f32 %v4658, %v5026
  %v5273 = vadd.f32 %v4659, %v5031
  %v5274 = vadd.f32 %v4660, %v5034
  %v5275 = vadd.f32 %v4661, %v5039
  %v5276 = vadd.f32 %v4662, %v5042
  %v5277 = vadd.f32 %v4663, %v5047
  %v5278 = vadd.f32 %v4664, %v5050
  %v5279 = vadd.f32 %v4665, %v5055
  %v5280 = vadd.f32 %v4666, %v5058
  %v5281 = vadd.f32 %v4667, %v5063
  %v5282 = vadd.f32 %v4668, %v5066
  %v5283 = vadd.f32 %v4669, %v5071
  %v5284 = vadd.f32 %v4670, %v5074
  %v5285 = vadd.f32 %v4671, %v5079
  %v5286 = vadd.f32 %v4672, %v5082
  %v5287 = vadd.f32 %v4673, %v5087
  %v5288 = vadd.f32 %v4674, %v5090
  %v5289 = vadd.f32 %v4675, %v5095
  %v5290 = vadd.f32 %v4676, %v5098
  %v5291 = vadd.f32 %v4677, %v5103
  %v5292 = vadd.f32 %v4678, %v5106
  %v5293 = vadd.f32 %v4679, %v5111
  %v5294 = vadd.f32 %v4680, %v5114
  %v5295 = vadd.f32 %v4681, %v5119
  %v5296 = vadd.f32 %v4682, %v5122
  %v5297 = vadd.f32 %v4683, %v5127
  %v5298 = vadd.f32 %v4684, %v5130
  %v5299 = vadd.f32 %v4685, %v5135
  %v5300 = vadd.f32 %v4686, %v5138
  %v5301 = vadd.f32 %v4687, %v5143
  %v5302 = vadd.f32 %v4688, %v5146
  %v5303 = vadd.f32 %v4689, %v5151
  %v5304 = vadd.f32 %v4690, %v5154
  %v5305 = vadd.f32 %v4691, %v5159
  %v5306 = vadd.f32 %v4692, %v5162
  %v5307 = vadd.f32 %v4693, %v5167
  %v5308 = vadd.f32 %v4694, %v5170
  %v5309 = vadd.f32 %v4695, %v5175
  %v5310 = vadd.f32 %v4696, %v5178
  %v5311 = vadd.f32 %v4697, %v5183
  %v5312 = vadd.f32 %v4698, %v5186
  %v5313 = vadd.f32 %v4699, %v5191
  %v5314 = vadd.f32 %v4700, %v5194
  %v5315 = vadd.f32 %v4701, %v5199
  %v5316 = vadd.f32 %v4702, %v5202
  %v5317 = vadd.f32 %v4703, %v5207
  %v5318 = vadd.f32 %v4704, %v5210
  %v5319 = vadd.f32 %v4705, %v5215
  %v5320 = vadd.f32 %v4706, %v5218
  %v5321 = vadd.f32 %v4707, %v5223
  %v5322 = vadd.f32 %v4708, %v5226
  %v5323 = vadd.f32 %v4709, %v5231
  %v5324 = vadd.f32 %v4710, %v5234
  %v5325 = vadd.f32 %v4711, %v5239
  %v5326 = vadd.f32 %v4712, %v5242
  %v5327 = vadd.f32 %v4713, %v5247
  %v5328 = vadd.f32 %v4714, %v5250
  %v5329 = vadd.f32 %v4715, %v5255
  %v5330 = vadd.f32 %v4716, %v5258
  %v5331 = vadd.f32 %v4717, %v5263
  %v5332 = vadd.f32 %v4718, %v5266
  %s5333 = scalar_lea.vmem %s1, 14
  %v5334 = vld [vmem:[%s5333] sm:$0x3]
  %v5399 = vunpack.c.l.b16 %v1033
  %v5400 = vunpack.c.l.b16 %v1034
  %v5401 = vunpack.c.l.b16 %v1035
  %v5402 = vunpack.c.l.b16 %v1036
  %v5403 = vunpack.c.l.b16 %v1037
  %v5404 = vunpack.c.l.b16 %v1038
  %v5405 = vunpack.c.l.b16 %v1039
  %v5406 = vunpack.c.l.b16 %v1040
  %v5407 = vunpack.c.l.b16 %v1041
  %v5408 = vunpack.c.l.b16 %v1042
  %v5409 = vunpack.c.l.b16 %v1043
  %v5410 = vunpack.c.l.b16 %v1044
  %v5411 = vunpack.c.l.b16 %v1045
  %v5412 = vunpack.c.l.b16 %v1046
  %v5413 = vunpack.c.l.b16 %v1047
  %v5414 = vunpack.c.l.b16 %v1048
  %v5415 = vunpack.c.l.b16 %v1049
  %v5416 = vunpack.c.l.b16 %v1050
  %v5417 = vunpack.c.l.b16 %v1051
  %v5418 = vunpack.c.l.b16 %v1052
  %v5419 = vunpack.c.l.b16 %v1053
  %v5420 = vunpack.c.l.b16 %v1054
  %v5421 = vunpack.c.l.b16 %v1055
  %v5422 = vunpack.c.l.b16 %v1056
  %v5423 = vunpack.c.l.b16 %v1057
  %v5424 = vunpack.c.l.b16 %v1058
  %v5425 = vunpack.c.l.b16 %v1059
  %v5426 = vunpack.c.l.b16 %v1060
  %v5427 = vunpack.c.l.b16 %v1061
  %v5428 = vunpack.c.l.b16 %v1062
  %v5429 = vunpack.c.l.b16 %v1063
  %v5430 = vunpack.c.l.b16 %v1064
  %v5431 = vunpack.c.l.b16 %v1065
  %v5432 = vunpack.c.l.b16 %v1066
  %v5433 = vunpack.c.l.b16 %v1067
  %v5434 = vunpack.c.l.b16 %v1068
  %v5435 = vunpack.c.l.b16 %v1069
  %v5436 = vunpack.c.l.b16 %v1070
  %v5437 = vunpack.c.l.b16 %v1071
  %v5438 = vunpack.c.l.b16 %v1072
  %v5439 = vunpack.c.l.b16 %v1073
  %v5440 = vunpack.c.l.b16 %v1074
  %v5441 = vunpack.c.l.b16 %v1075
  %v5442 = vunpack.c.l.b16 %v1076
  %v5443 = vunpack.c.l.b16 %v1077
  %v5444 = vunpack.c.l.b16 %v1078
  %v5445 = vunpack.c.l.b16 %v1079
  %v5446 = vunpack.c.l.b16 %v1080
  %v5447 = vunpack.c.l.b16 %v1081
  %v5448 = vunpack.c.l.b16 %v1082
  %v5449 = vunpack.c.l.b16 %v1083
  %v5450 = vunpack.c.l.b16 %v1084
  %v5451 = vunpack.c.l.b16 %v1085
  %v5452 = vunpack.c.l.b16 %v1086
  %v5453 = vunpack.c.l.b16 %v1087
  %v5454 = vunpack.c.l.b16 %v1088
  %v5455 = vunpack.c.l.b16 %v1089
  %v5456 = vunpack.c.l.b16 %v1090
  %v5457 = vunpack.c.l.b16 %v1091
  %v5458 = vunpack.c.l.b16 %v1092
  %v5459 = vunpack.c.l.b16 %v1093
  %v5460 = vunpack.c.l.b16 %v1094
  %v5461 = vunpack.c.l.b16 %v1095
  %v5462 = vunpack.c.l.b16 %v1096
  %v5463 = vpack.c.b16 %v5400, %v5399
  %v5464 = vpack.c.b16 %v5402, %v5401
  %v5465 = vpack.c.b16 %v5404, %v5403
  %v5466 = vpack.c.b16 %v5406, %v5405
  %v5467 = vpack.c.b16 %v5408, %v5407
  %v5468 = vpack.c.b16 %v5410, %v5409
  %v5469 = vpack.c.b16 %v5412, %v5411
  %v5470 = vpack.c.b16 %v5414, %v5413
  %v5471 = vpack.c.b16 %v5416, %v5415
  %v5472 = vpack.c.b16 %v5418, %v5417
  %v5473 = vpack.c.b16 %v5420, %v5419
  %v5474 = vpack.c.b16 %v5422, %v5421
  %v5475 = vpack.c.b16 %v5424, %v5423
  %v5476 = vpack.c.b16 %v5426, %v5425
  %v5477 = vpack.c.b16 %v5428, %v5427
  %v5478 = vpack.c.b16 %v5430, %v5429
  %v5479 = vpack.c.b16 %v5432, %v5431
  %v5480 = vpack.c.b16 %v5434, %v5433
  %v5481 = vpack.c.b16 %v5436, %v5435
  %v5482 = vpack.c.b16 %v5438, %v5437
  %v5483 = vpack.c.b16 %v5440, %v5439
  %v5484 = vpack.c.b16 %v5442, %v5441
  %v5485 = vpack.c.b16 %v5444, %v5443
  %v5486 = vpack.c.b16 %v5446, %v5445
  %v5487 = vpack.c.b16 %v5448, %v5447
  %v5488 = vpack.c.b16 %v5450, %v5449
  %v5489 = vpack.c.b16 %v5452, %v5451
  %v5490 = vpack.c.b16 %v5454, %v5453
  %v5491 = vpack.c.b16 %v5456, %v5455
  %v5492 = vpack.c.b16 %v5458, %v5457
  %v5493 = vpack.c.b16 %v5460, %v5459
  %v5494 = vpack.c.b16 %v5462, %v5461
  %v5496 = vsel %vm1325, %v5463, 0
  %v5499 = vsel %vm1325, %v5464, 0
  %v5502 = vsel %vm1325, %v5465, 0
  %v5505 = vsel %vm1325, %v5466, 0
  %v5508 = vsel %vm1325, %v5467, 0
  %v5511 = vsel %vm1325, %v5468, 0
  %v5514 = vsel %vm1325, %v5469, 0
  %v5517 = vsel %vm1325, %v5470, 0
  %v5520 = vsel %vm1325, %v5471, 0
  %v5523 = vsel %vm1325, %v5472, 0
  %v5526 = vsel %vm1325, %v5473, 0
  %v5529 = vsel %vm1325, %v5474, 0
  %v5532 = vsel %vm1325, %v5475, 0
  %v5535 = vsel %vm1325, %v5476, 0
  %v5538 = vsel %vm1325, %v5477, 0
  %v5541 = vsel %vm1325, %v5478, 0
  %v5544 = vsel %vm1325, %v5479, 0
  %v5547 = vsel %vm1325, %v5480, 0
  %v5550 = vsel %vm1325, %v5481, 0
  %v5553 = vsel %vm1325, %v5482, 0
  %v5556 = vsel %vm1325, %v5483, 0
  %v5559 = vsel %vm1325, %v5484, 0
  %v5562 = vsel %vm1325, %v5485, 0
  %v5565 = vsel %vm1325, %v5486, 0
  %v5568 = vsel %vm1325, %v5487, 0
  %v5571 = vsel %vm1325, %v5488, 0
  %v5574 = vsel %vm1325, %v5489, 0
  %v5577 = vsel %vm1325, %v5490, 0
  %v5580 = vsel %vm1325, %v5491, 0
  %v5583 = vsel %vm1325, %v5492, 0
  %v5586 = vsel %vm1325, %v5493, 0
  %v5589 = vsel %vm1325, %v5494, 0
  %v5592 = vsel %vm1422, %v5334, 0
  %5594 = vmatprep.subr.bf16.mxu0 0
  %5595 = vmatpush1.bf16.msra.mxu0 %v5592
  %5596 = vmatprep.subr.bf16.mxu0 0
  %5597 = vmatpush1.bf16.msra.mxu0 0
  %5598 = vmatprep.subr.bf16.mxu0 0
  %5599 = vmatpush1.bf16.msra.mxu0 0
  %5600 = vmatprep.subr.bf16.mxu0 0
  %5601 = vmatpush1.bf16.msra.mxu0 0
  %5602 = vmatprep.subr.bf16.mxu0 0
  %5603 = vmatpush1.bf16.msra.mxu0 0
  %5604 = vmatprep.subr.bf16.mxu0 0
  %5605 = vmatpush1.bf16.msra.mxu0 0
  %5606 = vmatprep.subr.bf16.mxu0 0
  %5607 = vmatpush1.bf16.msra.mxu0 0
  %5608 = vmatprep.subr.bf16.mxu0 0
  %5609 = vmatpush1.bf16.msra.mxu0 0
  %5610 = vmatprep.subr.bf16.mxu0 0
  %5611 = vmatpush1.bf16.msra.mxu0 0
  %5612 = vmatprep.subr.bf16.mxu0 0
  %5613 = vmatpush1.bf16.msra.mxu0 0
  %5614 = vmatprep.subr.bf16.mxu0 0
  %5615 = vmatpush1.bf16.msra.mxu0 0
  %5616 = vmatprep.subr.bf16.mxu0 0
  %5617 = vmatpush1.bf16.msra.mxu0 0
  %5618 = vmatprep.subr.bf16.mxu0 0
  %5619 = vmatpush1.bf16.msra.mxu0 0
  %5620 = vmatprep.subr.bf16.mxu0 0
  %5621 = vmatpush1.bf16.msra.mxu0 0
  %5622 = vmatprep.subr.bf16.mxu0 0
  %5623 = vmatpush1.bf16.msra.mxu0 0
  %5624 = vmatprep.subr.bf16.mxu0 0
  %5625 = vmatpush1.bf16.msra.mxu0 0
  %5626 = vmatprep.mubr.bf16.mxu0 0
  %5627 = vmatmul.mubr.bf16.gmra.mrb[0].mxu0 %v5496
  %v5628 = vpop.f32.mrb[0].mxu0
  %v5629 = vadd.f32 0.0, %v5628
  %v5630 = vpop.f32.mrb[0].mxu0
  %v5631 = vpop.f32.mrb[0].mxu0
  %v5632 = vadd.f32 0.0, %v5631
  %v5633 = vpop.f32.mrb[0].mxu0
  %5634 = vmatprep.mubr.bf16.mxu0 0
  %5635 = vmatmul.mubr.bf16.gmra.mrb[0].mxu0 %v5499
  %v5636 = vpop.f32.mrb[0].mxu0
  %v5637 = vadd.f32 0.0, %v5636
  %v5638 = vpop.f32.mrb[0].mxu0
  %v5639 = vpop.f32.mrb[0].mxu0
  %v5640 = vadd.f32 0.0, %v5639
  %v5641 = vpop.f32.mrb[0].mxu0
  %5642 = vmatprep.mubr.bf16.mxu0 0
  %5643 = vmatmul.mubr.bf16.gmra.mrb[0].mxu0 %v5502
  %v5644 = vpop.f32.mrb[0].mxu0
  %v5645 = vadd.f32 0.0, %v5644
  %v5646 = vpop.f32.mrb[0].mxu0
  %v5647 = vpop.f32.mrb[0].mxu0
  %v5648 = vadd.f32 0.0, %v5647
  %v5649 = vpop.f32.mrb[0].mxu0
  %5650 = vmatprep.mubr.bf16.mxu0 0
  %5651 = vmatmul.mubr.bf16.gmra.mrb[0].mxu0 %v5505
  %v5652 = vpop.f32.mrb[0].mxu0
  %v5653 = vadd.f32 0.0, %v5652
  %v5654 = vpop.f32.mrb[0].mxu0
  %v5655 = vpop.f32.mrb[0].mxu0
  %v5656 = vadd.f32 0.0, %v5655
  %v5657 = vpop.f32.mrb[0].mxu0
  %5658 = vmatprep.mubr.bf16.mxu0 0
  %5659 = vmatmul.mubr.bf16.gmra.mrb[0].mxu0 %v5508
  %v5660 = vpop.f32.mrb[0].mxu0
  %v5661 = vadd.f32 0.0, %v5660
  %v5662 = vpop.f32.mrb[0].mxu0
  %v5663 = vpop.f32.mrb[0].mxu0
  %v5664 = vadd.f32 0.0, %v5663
  %v5665 = vpop.f32.mrb[0].mxu0
  %5666 = vmatprep.mubr.bf16.mxu0 0
  %5667 = vmatmul.mubr.bf16.gmra.mrb[0].mxu0 %v5511
  %v5668 = vpop.f32.mrb[0].mxu0
  %v5669 = vadd.f32 0.0, %v5668
  %v5670 = vpop.f32.mrb[0].mxu0
  %v5671 = vpop.f32.mrb[0].mxu0
  %v5672 = vadd.f32 0.0, %v5671
  %v5673 = vpop.f32.mrb[0].mxu0
  %5674 = vmatprep.mubr.bf16.mxu0 0
  %5675 = vmatmul.mubr.bf16.gmra.mrb[0].mxu0 %v5514
  %v5676 = vpop.f32.mrb[0].mxu0
  %v5677 = vadd.f32 0.0, %v5676
  %v5678 = vpop.f32.mrb[0].mxu0
  %v5679 = vpop.f32.mrb[0].mxu0
  %v5680 = vadd.f32 0.0, %v5679
  %v5681 = vpop.f32.mrb[0].mxu0
  %5682 = vmatprep.mubr.bf16.mxu0 0
  %5683 = vmatmul.mubr.bf16.gmra.mrb[0].mxu0 %v5517
  %v5684 = vpop.f32.mrb[0].mxu0
  %v5685 = vadd.f32 0.0, %v5684
  %v5686 = vpop.f32.mrb[0].mxu0
  %v5687 = vpop.f32.mrb[0].mxu0
  %v5688 = vadd.f32 0.0, %v5687
  %v5689 = vpop.f32.mrb[0].mxu0
  %5690 = vmatprep.mubr.bf16.mxu0 0
  %5691 = vmatmul.mubr.bf16.gmra.mrb[0].mxu0 %v5520
  %v5692 = vpop.f32.mrb[0].mxu0
  %v5693 = vadd.f32 0.0, %v5692
  %v5694 = vpop.f32.mrb[0].mxu0
  %v5695 = vpop.f32.mrb[0].mxu0
  %v5696 = vadd.f32 0.0, %v5695
  %v5697 = vpop.f32.mrb[0].mxu0
  %5698 = vmatprep.mubr.bf16.mxu0 0
  %5699 = vmatmul.mubr.bf16.gmra.mrb[0].mxu0 %v5523
  %v5700 = vpop.f32.mrb[0].mxu0
  %v5701 = vadd.f32 0.0, %v5700
  %v5702 = vpop.f32.mrb[0].mxu0
  %v5703 = vpop.f32.mrb[0].mxu0
  %v5704 = vadd.f32 0.0, %v5703
  %v5705 = vpop.f32.mrb[0].mxu0
  %5706 = vmatprep.mubr.bf16.mxu0 0
  %5707 = vmatmul.mubr.bf16.gmra.mrb[0].mxu0 %v5526
  %v5708 = vpop.f32.mrb[0].mxu0
  %v5709 = vadd.f32 0.0, %v5708
  %v5710 = vpop.f32.mrb[0].mxu0
  %v5711 = vpop.f32.mrb[0].mxu0
  %v5712 = vadd.f32 0.0, %v5711
  %v5713 = vpop.f32.mrb[0].mxu0
  %5714 = vmatprep.mubr.bf16.mxu0 0
  %5715 = vmatmul.mubr.bf16.gmra.mrb[0].mxu0 %v5529
  %v5716 = vpop.f32.mrb[0].mxu0
  %v5717 = vadd.f32 0.0, %v5716
  %v5718 = vpop.f32.mrb[0].mxu0
  %v5719 = vpop.f32.mrb[0].mxu0
  %v5720 = vadd.f32 0.0, %v5719
  %v5721 = vpop.f32.mrb[0].mxu0
  %5722 = vmatprep.mubr.bf16.mxu0 0
  %5723 = vmatmul.mubr.bf16.gmra.mrb[0].mxu0 %v5532
  %v5724 = vpop.f32.mrb[0].mxu0
  %v5725 = vadd.f32 0.0, %v5724
  %v5726 = vpop.f32.mrb[0].mxu0
  %v5727 = vpop.f32.mrb[0].mxu0
  %v5728 = vadd.f32 0.0, %v5727
  %v5729 = vpop.f32.mrb[0].mxu0
  %5730 = vmatprep.mubr.bf16.mxu0 0
  %5731 = vmatmul.mubr.bf16.gmra.mrb[0].mxu0 %v5535
  %v5732 = vpop.f32.mrb[0].mxu0
  %v5733 = vadd.f32 0.0, %v5732
  %v5734 = vpop.f32.mrb[0].mxu0
  %v5735 = vpop.f32.mrb[0].mxu0
  %v5736 = vadd.f32 0.0, %v5735
  %v5737 = vpop.f32.mrb[0].mxu0
  %5738 = vmatprep.mubr.bf16.mxu0 0
  %5739 = vmatmul.mubr.bf16.gmra.mrb[0].mxu0 %v5538
  %v5740 = vpop.f32.mrb[0].mxu0
  %v5741 = vadd.f32 0.0, %v5740
  %v5742 = vpop.f32.mrb[0].mxu0
  %v5743 = vpop.f32.mrb[0].mxu0
  %v5744 = vadd.f32 0.0, %v5743
  %v5745 = vpop.f32.mrb[0].mxu0
  %5746 = vmatprep.mubr.bf16.mxu0 0
  %5747 = vmatmul.mubr.bf16.gmra.mrb[0].mxu0 %v5541
  %v5748 = vpop.f32.mrb[0].mxu0
  %v5749 = vadd.f32 0.0, %v5748
  %v5750 = vpop.f32.mrb[0].mxu0
  %v5751 = vpop.f32.mrb[0].mxu0
  %v5752 = vadd.f32 0.0, %v5751
  %v5753 = vpop.f32.mrb[0].mxu0
  %5754 = vmatprep.mubr.bf16.mxu0 0
  %5755 = vmatmul.mubr.bf16.gmra.mrb[0].mxu0 %v5544
  %v5756 = vpop.f32.mrb[0].mxu0
  %v5757 = vadd.f32 0.0, %v5756
  %v5758 = vpop.f32.mrb[0].mxu0
  %v5759 = vpop.f32.mrb[0].mxu0
  %v5760 = vadd.f32 0.0, %v5759
  %v5761 = vpop.f32.mrb[0].mxu0
  %5762 = vmatprep.mubr.bf16.mxu0 0
  %5763 = vmatmul.mubr.bf16.gmra.mrb[0].mxu0 %v5547
  %v5764 = vpop.f32.mrb[0].mxu0
  %v5765 = vadd.f32 0.0, %v5764
  %v5766 = vpop.f32.mrb[0].mxu0
  %v5767 = vpop.f32.mrb[0].mxu0
  %v5768 = vadd.f32 0.0, %v5767
  %v5769 = vpop.f32.mrb[0].mxu0
  %5770 = vmatprep.mubr.bf16.mxu0 0
  %5771 = vmatmul.mubr.bf16.gmra.mrb[0].mxu0 %v5550
  %v5772 = vpop.f32.mrb[0].mxu0
  %v5773 = vadd.f32 0.0, %v5772
  %v5774 = vpop.f32.mrb[0].mxu0
  %v5775 = vpop.f32.mrb[0].mxu0
  %v5776 = vadd.f32 0.0, %v5775
  %v5777 = vpop.f32.mrb[0].mxu0
  %5778 = vmatprep.mubr.bf16.mxu0 0
  %5779 = vmatmul.mubr.bf16.gmra.mrb[0].mxu0 %v5553
  %v5780 = vpop.f32.mrb[0].mxu0
  %v5781 = vadd.f32 0.0, %v5780
  %v5782 = vpop.f32.mrb[0].mxu0
  %v5783 = vpop.f32.mrb[0].mxu0
  %v5784 = vadd.f32 0.0, %v5783
  %v5785 = vpop.f32.mrb[0].mxu0
  %5786 = vmatprep.mubr.bf16.mxu0 0
  %5787 = vmatmul.mubr.bf16.gmra.mrb[0].mxu0 %v5556
  %v5788 = vpop.f32.mrb[0].mxu0
  %v5789 = vadd.f32 0.0, %v5788
  %v5790 = vpop.f32.mrb[0].mxu0
  %v5791 = vpop.f32.mrb[0].mxu0
  %v5792 = vadd.f32 0.0, %v5791
  %v5793 = vpop.f32.mrb[0].mxu0
  %5794 = vmatprep.mubr.bf16.mxu0 0
  %5795 = vmatmul.mubr.bf16.gmra.mrb[0].mxu0 %v5559
  %v5796 = vpop.f32.mrb[0].mxu0
  %v5797 = vadd.f32 0.0, %v5796
  %v5798 = vpop.f32.mrb[0].mxu0
  %v5799 = vpop.f32.mrb[0].mxu0
  %v5800 = vadd.f32 0.0, %v5799
  %v5801 = vpop.f32.mrb[0].mxu0
  %5802 = vmatprep.mubr.bf16.mxu0 0
  %5803 = vmatmul.mubr.bf16.gmra.mrb[0].mxu0 %v5562
  %v5804 = vpop.f32.mrb[0].mxu0
  %v5805 = vadd.f32 0.0, %v5804
  %v5806 = vpop.f32.mrb[0].mxu0
  %v5807 = vpop.f32.mrb[0].mxu0
  %v5808 = vadd.f32 0.0, %v5807
  %v5809 = vpop.f32.mrb[0].mxu0
  %5810 = vmatprep.mubr.bf16.mxu0 0
  %5811 = vmatmul.mubr.bf16.gmra.mrb[0].mxu0 %v5565
  %v5812 = vpop.f32.mrb[0].mxu0
  %v5813 = vadd.f32 0.0, %v5812
  %v5814 = vpop.f32.mrb[0].mxu0
  %v5815 = vpop.f32.mrb[0].mxu0
  %v5816 = vadd.f32 0.0, %v5815
  %v5817 = vpop.f32.mrb[0].mxu0
  %5818 = vmatprep.mubr.bf16.mxu0 0
  %5819 = vmatmul.mubr.bf16.gmra.mrb[0].mxu0 %v5568
  %v5820 = vpop.f32.mrb[0].mxu0
  %v5821 = vadd.f32 0.0, %v5820
  %v5822 = vpop.f32.mrb[0].mxu0
  %v5823 = vpop.f32.mrb[0].mxu0
  %v5824 = vadd.f32 0.0, %v5823
  %v5825 = vpop.f32.mrb[0].mxu0
  %5826 = vmatprep.mubr.bf16.mxu0 0
  %5827 = vmatmul.mubr.bf16.gmra.mrb[0].mxu0 %v5571
  %v5828 = vpop.f32.mrb[0].mxu0
  %v5829 = vadd.f32 0.0, %v5828
  %v5830 = vpop.f32.mrb[0].mxu0
  %v5831 = vpop.f32.mrb[0].mxu0
  %v5832 = vadd.f32 0.0, %v5831
  %v5833 = vpop.f32.mrb[0].mxu0
  %5834 = vmatprep.mubr.bf16.mxu0 0
  %5835 = vmatmul.mubr.bf16.gmra.mrb[0].mxu0 %v5574
  %v5836 = vpop.f32.mrb[0].mxu0
  %v5837 = vadd.f32 0.0, %v5836
  %v5838 = vpop.f32.mrb[0].mxu0
  %v5839 = vpop.f32.mrb[0].mxu0
  %v5840 = vadd.f32 0.0, %v5839
  %v5841 = vpop.f32.mrb[0].mxu0
  %5842 = vmatprep.mubr.bf16.mxu0 0
  %5843 = vmatmul.mubr.bf16.gmra.mrb[0].mxu0 %v5577
  %v5844 = vpop.f32.mrb[0].mxu0
  %v5845 = vadd.f32 0.0, %v5844
  %v5846 = vpop.f32.mrb[0].mxu0
  %v5847 = vpop.f32.mrb[0].mxu0
  %v5848 = vadd.f32 0.0, %v5847
  %v5849 = vpop.f32.mrb[0].mxu0
  %5850 = vmatprep.mubr.bf16.mxu0 0
  %5851 = vmatmul.mubr.bf16.gmra.mrb[0].mxu0 %v5580
  %v5852 = vpop.f32.mrb[0].mxu0
  %v5853 = vadd.f32 0.0, %v5852
  %v5854 = vpop.f32.mrb[0].mxu0
  %v5855 = vpop.f32.mrb[0].mxu0
  %v5856 = vadd.f32 0.0, %v5855
  %v5857 = vpop.f32.mrb[0].mxu0
  %5858 = vmatprep.mubr.bf16.mxu0 0
  %5859 = vmatmul.mubr.bf16.gmra.mrb[0].mxu0 %v5583
  %v5860 = vpop.f32.mrb[0].mxu0
  %v5861 = vadd.f32 0.0, %v5860
  %v5862 = vpop.f32.mrb[0].mxu0
  %v5863 = vpop.f32.mrb[0].mxu0
  %v5864 = vadd.f32 0.0, %v5863
  %v5865 = vpop.f32.mrb[0].mxu0
  %5866 = vmatprep.mubr.bf16.mxu0 0
  %5867 = vmatmul.mubr.bf16.gmra.mrb[0].mxu0 %v5586
  %v5868 = vpop.f32.mrb[0].mxu0
  %v5869 = vadd.f32 0.0, %v5868
  %v5870 = vpop.f32.mrb[0].mxu0
  %v5871 = vpop.f32.mrb[0].mxu0
  %v5872 = vadd.f32 0.0, %v5871
  %v5873 = vpop.f32.mrb[0].mxu0
  %5874 = vmatprep.mubr.bf16.mxu0 0
  %5875 = vmatmul.mubr.bf16.gmra.mrb[0].mxu0 %v5589
  %v5876 = vpop.f32.mrb[0].mxu0
  %v5877 = vadd.f32 0.0, %v5876
  %v5878 = vpop.f32.mrb[0].mxu0
  %v5879 = vpop.f32.mrb[0].mxu0
  %v5880 = vadd.f32 0.0, %v5879
  %v5881 = vpop.f32.mrb[0].mxu0
  %5882 = vdwg.mxu0
  %v5883 = vadd.f32 %v5269, %v5629
  %v5884 = vadd.f32 %v5270, %v5632
  %v5885 = vadd.f32 %v5271, %v5637
  %v5886 = vadd.f32 %v5272, %v5640
  %v5887 = vadd.f32 %v5273, %v5645
  %v5888 = vadd.f32 %v5274, %v5648
  %v5889 = vadd.f32 %v5275, %v5653
  %v5890 = vadd.f32 %v5276, %v5656
  %v5891 = vadd.f32 %v5277, %v5661
  %v5892 = vadd.f32 %v5278, %v5664
  %v5893 = vadd.f32 %v5279, %v5669
  %v5894 = vadd.f32 %v5280, %v5672
  %v5895 = vadd.f32 %v5281, %v5677
  %v5896 = vadd.f32 %v5282, %v5680
  %v5897 = vadd.f32 %v5283, %v5685
  %v5898 = vadd.f32 %v5284, %v5688
  %v5899 = vadd.f32 %v5285, %v5693
  %v5900 = vadd.f32 %v5286, %v5696
  %v5901 = vadd.f32 %v5287, %v5701
  %v5902 = vadd.f32 %v5288, %v5704
  %v5903 = vadd.f32 %v5289, %v5709
  %v5904 = vadd.f32 %v5290, %v5712
  %v5905 = vadd.f32 %v5291, %v5717
  %v5906 = vadd.f32 %v5292, %v5720
  %v5907 = vadd.f32 %v5293, %v5725
  %v5908 = vadd.f32 %v5294, %v5728
  %v5909 = vadd.f32 %v5295, %v5733
  %v5910 = vadd.f32 %v5296, %v5736
  %v5911 = vadd.f32 %v5297, %v5741
  %v5912 = vadd.f32 %v5298, %v5744
  %v5913 = vadd.f32 %v5299, %v5749
  %v5914 = vadd.f32 %v5300, %v5752
  %v5915 = vadd.f32 %v5301, %v5757
  %v5916 = vadd.f32 %v5302, %v5760
  %v5917 = vadd.f32 %v5303, %v5765
  %v5918 = vadd.f32 %v5304, %v5768
  %v5919 = vadd.f32 %v5305, %v5773
  %v5920 = vadd.f32 %v5306, %v5776
  %v5921 = vadd.f32 %v5307, %v5781
  %v5922 = vadd.f32 %v5308, %v5784
  %v5923 = vadd.f32 %v5309, %v5789
  %v5924 = vadd.f32 %v5310, %v5792
  %v5925 = vadd.f32 %v5311, %v5797
  %v5926 = vadd.f32 %v5312, %v5800
  %v5927 = vadd.f32 %v5313, %v5805
  %v5928 = vadd.f32 %v5314, %v5808
  %v5929 = vadd.f32 %v5315, %v5813
  %v5930 = vadd.f32 %v5316, %v5816
  %v5931 = vadd.f32 %v5317, %v5821
  %v5932 = vadd.f32 %v5318, %v5824
  %v5933 = vadd.f32 %v5319, %v5829
  %v5934 = vadd.f32 %v5320, %v5832
  %v5935 = vadd.f32 %v5321, %v5837
  %v5936 = vadd.f32 %v5322, %v5840
  %v5937 = vadd.f32 %v5323, %v5845
  %v5938 = vadd.f32 %v5324, %v5848
  %v5939 = vadd.f32 %v5325, %v5853
  %v5940 = vadd.f32 %v5326, %v5856
  %v5941 = vadd.f32 %v5327, %v5861
  %v5942 = vadd.f32 %v5328, %v5864
  %v5943 = vadd.f32 %v5329, %v5869
  %v5944 = vadd.f32 %v5330, %v5872
  %v5945 = vadd.f32 %v5331, %v5877
  %v5946 = vadd.f32 %v5332, %v5880
  %s5947 = scalar_lea.vmem %s1, 16
  %v5948 = vld [vmem:[%s5947] sm:$0x3]
  %v6013 = vunpack.c.l.b16 %v1098
  %v6014 = vunpack.c.l.b16 %v1099
  %v6015 = vunpack.c.l.b16 %v1100
  %v6016 = vunpack.c.l.b16 %v1101
  %v6017 = vunpack.c.l.b16 %v1102
  %v6018 = vunpack.c.l.b16 %v1103
  %v6019 = vunpack.c.l.b16 %v1104
  %v6020 = vunpack.c.l.b16 %v1105
  %v6021 = vunpack.c.l.b16 %v1106
  %v6022 = vunpack.c.l.b16 %v1107
  %v6023 = vunpack.c.l.b16 %v1108
  %v6024 = vunpack.c.l.b16 %v1109
  %v6025 = vunpack.c.l.b16 %v1110
  %v6026 = vunpack.c.l.b16 %v1111
  %v6027 = vunpack.c.l.b16 %v1112
  %v6028 = vunpack.c.l.b16 %v1113
  %v6029 = vunpack.c.l.b16 %v1114
  %v6030 = vunpack.c.l.b16 %v1115
  %v6031 = vunpack.c.l.b16 %v1116
  %v6032 = vunpack.c.l.b16 %v1117
  %v6033 = vunpack.c.l.b16 %v1118
  %v6034 = vunpack.c.l.b16 %v1119
  %v6035 = vunpack.c.l.b16 %v1120
  %v6036 = vunpack.c.l.b16 %v1121
  %v6037 = vunpack.c.l.b16 %v1122
  %v6038 = vunpack.c.l.b16 %v1123
  %v6039 = vunpack.c.l.b16 %v1124
  %v6040 = vunpack.c.l.b16 %v1125
  %v6041 = vunpack.c.l.b16 %v1126
  %v6042 = vunpack.c.l.b16 %v1127
  %v6043 = vunpack.c.l.b16 %v1128
  %v6044 = vunpack.c.l.b16 %v1129
  %v6045 = vunpack.c.l.b16 %v1130
  %v6046 = vunpack.c.l.b16 %v1131
  %v6047 = vunpack.c.l.b16 %v1132
  %v6048 = vunpack.c.l.b16 %v1133
  %v6049 = vunpack.c.l.b16 %v1134
  %v6050 = vunpack.c.l.b16 %v1135
  %v6051 = vunpack.c.l.b16 %v1136
  %v6052 = vunpack.c.l.b16 %v1137
  %v6053 = vunpack.c.l.b16 %v1138
  %v6054 = vunpack.c.l.b16 %v1139
  %v6055 = vunpack.c.l.b16 %v1140
  %v6056 = vunpack.c.l.b16 %v1141
  %v6057 = vunpack.c.l.b16 %v1142
  %v6058 = vunpack.c.l.b16 %v1143
  %v6059 = vunpack.c.l.b16 %v1144
  %v6060 = vunpack.c.l.b16 %v1145
  %v6061 = vunpack.c.l.b16 %v1146
  %v6062 = vunpack.c.l.b16 %v1147
  %v6063 = vunpack.c.l.b16 %v1148
  %v6064 = vunpack.c.l.b16 %v1149
  %v6065 = vunpack.c.l.b16 %v1150
  %v6066 = vunpack.c.l.b16 %v1151
  %v6067 = vunpack.c.l.b16 %v1152
  %v6068 = vunpack.c.l.b16 %v1153
  %v6069 = vunpack.c.l.b16 %v1154
  %v6070 = vunpack.c.l.b16 %v1155
  %v6071 = vunpack.c.l.b16 %v1156
  %v6072 = vunpack.c.l.b16 %v1157
  %v6073 = vunpack.c.l.b16 %v1158
  %v6074 = vunpack.c.l.b16 %v1159
  %v6075 = vunpack.c.l.b16 %v1160
  %v6076 = vunpack.c.l.b16 %v1161
  %v6077 = vpack.c.b16 %v6014, %v6013
  %v6078 = vpack.c.b16 %v6016, %v6015
  %v6079 = vpack.c.b16 %v6018, %v6017
  %v6080 = vpack.c.b16 %v6020, %v6019
  %v6081 = vpack.c.b16 %v6022, %v6021
  %v6082 = vpack.c.b16 %v6024, %v6023
  %v6083 = vpack.c.b16 %v6026, %v6025
  %v6084 = vpack.c.b16 %v6028, %v6027
  %v6085 = vpack.c.b16 %v6030, %v6029
  %v6086 = vpack.c.b16 %v6032, %v6031
  %v6087 = vpack.c.b16 %v6034, %v6033
  %v6088 = vpack.c.b16 %v6036, %v6035
  %v6089 = vpack.c.b16 %v6038, %v6037
  %v6090 = vpack.c.b16 %v6040, %v6039
  %v6091 = vpack.c.b16 %v6042, %v6041
  %v6092 = vpack.c.b16 %v6044, %v6043
  %v6093 = vpack.c.b16 %v6046, %v6045
  %v6094 = vpack.c.b16 %v6048, %v6047
  %v6095 = vpack.c.b16 %v6050, %v6049
  %v6096 = vpack.c.b16 %v6052, %v6051
  %v6097 = vpack.c.b16 %v6054, %v6053
  %v6098 = vpack.c.b16 %v6056, %v6055
  %v6099 = vpack.c.b16 %v6058, %v6057
  %v6100 = vpack.c.b16 %v6060, %v6059
  %v6101 = vpack.c.b16 %v6062, %v6061
  %v6102 = vpack.c.b16 %v6064, %v6063
  %v6103 = vpack.c.b16 %v6066, %v6065
  %v6104 = vpack.c.b16 %v6068, %v6067
  %v6105 = vpack.c.b16 %v6070, %v6069
  %v6106 = vpack.c.b16 %v6072, %v6071
  %v6107 = vpack.c.b16 %v6074, %v6073
  %v6108 = vpack.c.b16 %v6076, %v6075
  %v6110 = vsel %vm1325, %v6077, 0
  %v6113 = vsel %vm1325, %v6078, 0
  %v6116 = vsel %vm1325, %v6079, 0
  %v6119 = vsel %vm1325, %v6080, 0
  %v6122 = vsel %vm1325, %v6081, 0
  %v6125 = vsel %vm1325, %v6082, 0
  %v6128 = vsel %vm1325, %v6083, 0
  %v6131 = vsel %vm1325, %v6084, 0
  %v6134 = vsel %vm1325, %v6085, 0
  %v6137 = vsel %vm1325, %v6086, 0
  %v6140 = vsel %vm1325, %v6087, 0
  %v6143 = vsel %vm1325, %v6088, 0
  %v6146 = vsel %vm1325, %v6089, 0
  %v6149 = vsel %vm1325, %v6090, 0
  %v6152 = vsel %vm1325, %v6091, 0
  %v6155 = vsel %vm1325, %v6092, 0
  %v6158 = vsel %vm1325, %v6093, 0
  %v6161 = vsel %vm1325, %v6094, 0
  %v6164 = vsel %vm1325, %v6095, 0
  %v6167 = vsel %vm1325, %v6096, 0
  %v6170 = vsel %vm1325, %v6097, 0
  %v6173 = vsel %vm1325, %v6098, 0
  %v6176 = vsel %vm1325, %v6099, 0
  %v6179 = vsel %vm1325, %v6100, 0
  %v6182 = vsel %vm1325, %v6101, 0
  %v6185 = vsel %vm1325, %v6102, 0
  %v6188 = vsel %vm1325, %v6103, 0
  %v6191 = vsel %vm1325, %v6104, 0
  %v6194 = vsel %vm1325, %v6105, 0
  %v6197 = vsel %vm1325, %v6106, 0
  %v6200 = vsel %vm1325, %v6107, 0
  %v6203 = vsel %vm1325, %v6108, 0
  %v6206 = vsel %vm1422, %v5948, 0
  %6208 = vmatprep.subr.bf16.mxu0 0
  %6209 = vmatpush1.bf16.msra.mxu0 %v6206
  %6210 = vmatprep.subr.bf16.mxu0 0
  %6211 = vmatpush1.bf16.msra.mxu0 0
  %6212 = vmatprep.subr.bf16.mxu0 0
  %6213 = vmatpush1.bf16.msra.mxu0 0
  %6214 = vmatprep.subr.bf16.mxu0 0
  %6215 = vmatpush1.bf16.msra.mxu0 0
  %6216 = vmatprep.subr.bf16.mxu0 0
  %6217 = vmatpush1.bf16.msra.mxu0 0
  %6218 = vmatprep.subr.bf16.mxu0 0
  %6219 = vmatpush1.bf16.msra.mxu0 0
  %6220 = vmatprep.subr.bf16.mxu0 0
  %6221 = vmatpush1.bf16.msra.mxu0 0
  %6222 = vmatprep.subr.bf16.mxu0 0
  %6223 = vmatpush1.bf16.msra.mxu0 0
  %6224 = vmatprep.subr.bf16.mxu0 0
  %6225 = vmatpush1.bf16.msra.mxu0 0
  %6226 = vmatprep.subr.bf16.mxu0 0
  %6227 = vmatpush1.bf16.msra.mxu0 0
  %6228 = vmatprep.subr.bf16.mxu0 0
  %6229 = vmatpush1.bf16.msra.mxu0 0
  %6230 = vmatprep.subr.bf16.mxu0 0
  %6231 = vmatpush1.bf16.msra.mxu0 0
  %6232 = vmatprep.subr.bf16.mxu0 0
  %6233 = vmatpush1.bf16.msra.mxu0 0
  %6234 = vmatprep.subr.bf16.mxu0 0
  %6235 = vmatpush1.bf16.msra.mxu0 0
  %6236 = vmatprep.subr.bf16.mxu0 0
  %6237 = vmatpush1.bf16.msra.mxu0 0
  %6238 = vmatprep.subr.bf16.mxu0 0
  %6239 = vmatpush1.bf16.msra.mxu0 0
  %6240 = vmatprep.mubr.bf16.mxu0 0
  %6241 = vmatmul.mubr.bf16.gmra.mrb[0].mxu0 %v6110
  %v6242 = vpop.f32.mrb[0].mxu0
  %v6243 = vadd.f32 0.0, %v6242
  %v6244 = vpop.f32.mrb[0].mxu0
  %v6245 = vpop.f32.mrb[0].mxu0
  %v6246 = vadd.f32 0.0, %v6245
  %v6247 = vpop.f32.mrb[0].mxu0
  %6248 = vmatprep.mubr.bf16.mxu0 0
  %6249 = vmatmul.mubr.bf16.gmra.mrb[0].mxu0 %v6113
  %v6250 = vpop.f32.mrb[0].mxu0
  %v6251 = vadd.f32 0.0, %v6250
  %v6252 = vpop.f32.mrb[0].mxu0
  %v6253 = vpop.f32.mrb[0].mxu0
  %v6254 = vadd.f32 0.0, %v6253
  %v6255 = vpop.f32.mrb[0].mxu0
  %6256 = vmatprep.mubr.bf16.mxu0 0
  %6257 = vmatmul.mubr.bf16.gmra.mrb[0].mxu0 %v6116
  %v6258 = vpop.f32.mrb[0].mxu0
  %v6259 = vadd.f32 0.0, %v6258
  %v6260 = vpop.f32.mrb[0].mxu0
  %v6261 = vpop.f32.mrb[0].mxu0
  %v6262 = vadd.f32 0.0, %v6261
  %v6263 = vpop.f32.mrb[0].mxu0
  %6264 = vmatprep.mubr.bf16.mxu0 0
  %6265 = vmatmul.mubr.bf16.gmra.mrb[0].mxu0 %v6119
  %v6266 = vpop.f32.mrb[0].mxu0
  %v6267 = vadd.f32 0.0, %v6266
  %v6268 = vpop.f32.mrb[0].mxu0
  %v6269 = vpop.f32.mrb[0].mxu0
  %v6270 = vadd.f32 0.0, %v6269
  %v6271 = vpop.f32.mrb[0].mxu0
  %6272 = vmatprep.mubr.bf16.mxu0 0
  %6273 = vmatmul.mubr.bf16.gmra.mrb[0].mxu0 %v6122
  %v6274 = vpop.f32.mrb[0].mxu0
  %v6275 = vadd.f32 0.0, %v6274
  %v6276 = vpop.f32.mrb[0].mxu0
  %v6277 = vpop.f32.mrb[0].mxu0
  %v6278 = vadd.f32 0.0, %v6277
  %v6279 = vpop.f32.mrb[0].mxu0
  %6280 = vmatprep.mubr.bf16.mxu0 0
  %6281 = vmatmul.mubr.bf16.gmra.mrb[0].mxu0 %v6125
  %v6282 = vpop.f32.mrb[0].mxu0
  %v6283 = vadd.f32 0.0, %v6282
  %v6284 = vpop.f32.mrb[0].mxu0
  %v6285 = vpop.f32.mrb[0].mxu0
  %v6286 = vadd.f32 0.0, %v6285
  %v6287 = vpop.f32.mrb[0].mxu0
  %6288 = vmatprep.mubr.bf16.mxu0 0
  %6289 = vmatmul.mubr.bf16.gmra.mrb[0].mxu0 %v6128
  %v6290 = vpop.f32.mrb[0].mxu0
  %v6291 = vadd.f32 0.0, %v6290
  %v6292 = vpop.f32.mrb[0].mxu0
  %v6293 = vpop.f32.mrb[0].mxu0
  %v6294 = vadd.f32 0.0, %v6293
  %v6295 = vpop.f32.mrb[0].mxu0
  %6296 = vmatprep.mubr.bf16.mxu0 0
  %6297 = vmatmul.mubr.bf16.gmra.mrb[0].mxu0 %v6131
  %v6298 = vpop.f32.mrb[0].mxu0
  %v6299 = vadd.f32 0.0, %v6298
  %v6300 = vpop.f32.mrb[0].mxu0
  %v6301 = vpop.f32.mrb[0].mxu0
  %v6302 = vadd.f32 0.0, %v6301
  %v6303 = vpop.f32.mrb[0].mxu0
  %6304 = vmatprep.mubr.bf16.mxu0 0
  %6305 = vmatmul.mubr.bf16.gmra.mrb[0].mxu0 %v6134
  %v6306 = vpop.f32.mrb[0].mxu0
  %v6307 = vadd.f32 0.0, %v6306
  %v6308 = vpop.f32.mrb[0].mxu0
  %v6309 = vpop.f32.mrb[0].mxu0
  %v6310 = vadd.f32 0.0, %v6309
  %v6311 = vpop.f32.mrb[0].mxu0
  %6312 = vmatprep.mubr.bf16.mxu0 0
  %6313 = vmatmul.mubr.bf16.gmra.mrb[0].mxu0 %v6137
  %v6314 = vpop.f32.mrb[0].mxu0
  %v6315 = vadd.f32 0.0, %v6314
  %v6316 = vpop.f32.mrb[0].mxu0
  %v6317 = vpop.f32.mrb[0].mxu0
  %v6318 = vadd.f32 0.0, %v6317
  %v6319 = vpop.f32.mrb[0].mxu0
  %6320 = vmatprep.mubr.bf16.mxu0 0
  %6321 = vmatmul.mubr.bf16.gmra.mrb[0].mxu0 %v6140
  %v6322 = vpop.f32.mrb[0].mxu0
  %v6323 = vadd.f32 0.0, %v6322
  %v6324 = vpop.f32.mrb[0].mxu0
  %v6325 = vpop.f32.mrb[0].mxu0
  %v6326 = vadd.f32 0.0, %v6325
  %v6327 = vpop.f32.mrb[0].mxu0
  %6328 = vmatprep.mubr.bf16.mxu0 0
  %6329 = vmatmul.mubr.bf16.gmra.mrb[0].mxu0 %v6143
  %v6330 = vpop.f32.mrb[0].mxu0
  %v6331 = vadd.f32 0.0, %v6330
  %v6332 = vpop.f32.mrb[0].mxu0
  %v6333 = vpop.f32.mrb[0].mxu0
  %v6334 = vadd.f32 0.0, %v6333
  %v6335 = vpop.f32.mrb[0].mxu0
  %6336 = vmatprep.mubr.bf16.mxu0 0
  %6337 = vmatmul.mubr.bf16.gmra.mrb[0].mxu0 %v6146
  %v6338 = vpop.f32.mrb[0].mxu0
  %v6339 = vadd.f32 0.0, %v6338
  %v6340 = vpop.f32.mrb[0].mxu0
  %v6341 = vpop.f32.mrb[0].mxu0
  %v6342 = vadd.f32 0.0, %v6341
  %v6343 = vpop.f32.mrb[0].mxu0
  %6344 = vmatprep.mubr.bf16.mxu0 0
  %6345 = vmatmul.mubr.bf16.gmra.mrb[0].mxu0 %v6149
  %v6346 = vpop.f32.mrb[0].mxu0
  %v6347 = vadd.f32 0.0, %v6346
  %v6348 = vpop.f32.mrb[0].mxu0
  %v6349 = vpop.f32.mrb[0].mxu0
  %v6350 = vadd.f32 0.0, %v6349
  %v6351 = vpop.f32.mrb[0].mxu0
  %6352 = vmatprep.mubr.bf16.mxu0 0
  %6353 = vmatmul.mubr.bf16.gmra.mrb[0].mxu0 %v6152
  %v6354 = vpop.f32.mrb[0].mxu0
  %v6355 = vadd.f32 0.0, %v6354
  %v6356 = vpop.f32.mrb[0].mxu0
  %v6357 = vpop.f32.mrb[0].mxu0
  %v6358 = vadd.f32 0.0, %v6357
  %v6359 = vpop.f32.mrb[0].mxu0
  %6360 = vmatprep.mubr.bf16.mxu0 0
  %6361 = vmatmul.mubr.bf16.gmra.mrb[0].mxu0 %v6155
  %v6362 = vpop.f32.mrb[0].mxu0
  %v6363 = vadd.f32 0.0, %v6362
  %v6364 = vpop.f32.mrb[0].mxu0
  %v6365 = vpop.f32.mrb[0].mxu0
  %v6366 = vadd.f32 0.0, %v6365
  %v6367 = vpop.f32.mrb[0].mxu0
  %6368 = vmatprep.mubr.bf16.mxu0 0
  %6369 = vmatmul.mubr.bf16.gmra.mrb[0].mxu0 %v6158
  %v6370 = vpop.f32.mrb[0].mxu0
  %v6371 = vadd.f32 0.0, %v6370
  %v6372 = vpop.f32.mrb[0].mxu0
  %v6373 = vpop.f32.mrb[0].mxu0
  %v6374 = vadd.f32 0.0, %v6373
  %v6375 = vpop.f32.mrb[0].mxu0
  %6376 = vmatprep.mubr.bf16.mxu0 0
  %6377 = vmatmul.mubr.bf16.gmra.mrb[0].mxu0 %v6161
  %v6378 = vpop.f32.mrb[0].mxu0
  %v6379 = vadd.f32 0.0, %v6378
  %v6380 = vpop.f32.mrb[0].mxu0
  %v6381 = vpop.f32.mrb[0].mxu0
  %v6382 = vadd.f32 0.0, %v6381
  %v6383 = vpop.f32.mrb[0].mxu0
  %6384 = vmatprep.mubr.bf16.mxu0 0
  %6385 = vmatmul.mubr.bf16.gmra.mrb[0].mxu0 %v6164
  %v6386 = vpop.f32.mrb[0].mxu0
  %v6387 = vadd.f32 0.0, %v6386
  %v6388 = vpop.f32.mrb[0].mxu0
  %v6389 = vpop.f32.mrb[0].mxu0
  %v6390 = vadd.f32 0.0, %v6389
  %v6391 = vpop.f32.mrb[0].mxu0
  %6392 = vmatprep.mubr.bf16.mxu0 0
  %6393 = vmatmul.mubr.bf16.gmra.mrb[0].mxu0 %v6167
  %v6394 = vpop.f32.mrb[0].mxu0
  %v6395 = vadd.f32 0.0, %v6394
  %v6396 = vpop.f32.mrb[0].mxu0
  %v6397 = vpop.f32.mrb[0].mxu0
  %v6398 = vadd.f32 0.0, %v6397
  %v6399 = vpop.f32.mrb[0].mxu0
  %6400 = vmatprep.mubr.bf16.mxu0 0
  %6401 = vmatmul.mubr.bf16.gmra.mrb[0].mxu0 %v6170
  %v6402 = vpop.f32.mrb[0].mxu0
  %v6403 = vadd.f32 0.0, %v6402
  %v6404 = vpop.f32.mrb[0].mxu0
  %v6405 = vpop.f32.mrb[0].mxu0
  %v6406 = vadd.f32 0.0, %v6405
  %v6407 = vpop.f32.mrb[0].mxu0
  %6408 = vmatprep.mubr.bf16.mxu0 0
  %6409 = vmatmul.mubr.bf16.gmra.mrb[0].mxu0 %v6173
  %v6410 = vpop.f32.mrb[0].mxu0
  %v6411 = vadd.f32 0.0, %v6410
  %v6412 = vpop.f32.mrb[0].mxu0
  %v6413 = vpop.f32.mrb[0].mxu0
  %v6414 = vadd.f32 0.0, %v6413
  %v6415 = vpop.f32.mrb[0].mxu0
  %6416 = vmatprep.mubr.bf16.mxu0 0
  %6417 = vmatmul.mubr.bf16.gmra.mrb[0].mxu0 %v6176
  %v6418 = vpop.f32.mrb[0].mxu0
  %v6419 = vadd.f32 0.0, %v6418
  %v6420 = vpop.f32.mrb[0].mxu0
  %v6421 = vpop.f32.mrb[0].mxu0
  %v6422 = vadd.f32 0.0, %v6421
  %v6423 = vpop.f32.mrb[0].mxu0
  %6424 = vmatprep.mubr.bf16.mxu0 0
  %6425 = vmatmul.mubr.bf16.gmra.mrb[0].mxu0 %v6179
  %v6426 = vpop.f32.mrb[0].mxu0
  %v6427 = vadd.f32 0.0, %v6426
  %v6428 = vpop.f32.mrb[0].mxu0
  %v6429 = vpop.f32.mrb[0].mxu0
  %v6430 = vadd.f32 0.0, %v6429
  %v6431 = vpop.f32.mrb[0].mxu0
  %6432 = vmatprep.mubr.bf16.mxu0 0
  %6433 = vmatmul.mubr.bf16.gmra.mrb[0].mxu0 %v6182
  %v6434 = vpop.f32.mrb[0].mxu0
  %v6435 = vadd.f32 0.0, %v6434
  %v6436 = vpop.f32.mrb[0].mxu0
  %v6437 = vpop.f32.mrb[0].mxu0
  %v6438 = vadd.f32 0.0, %v6437
  %v6439 = vpop.f32.mrb[0].mxu0
  %6440 = vmatprep.mubr.bf16.mxu0 0
  %6441 = vmatmul.mubr.bf16.gmra.mrb[0].mxu0 %v6185
  %v6442 = vpop.f32.mrb[0].mxu0
  %v6443 = vadd.f32 0.0, %v6442
  %v6444 = vpop.f32.mrb[0].mxu0
  %v6445 = vpop.f32.mrb[0].mxu0
  %v6446 = vadd.f32 0.0, %v6445
  %v6447 = vpop.f32.mrb[0].mxu0
  %6448 = vmatprep.mubr.bf16.mxu0 0
  %6449 = vmatmul.mubr.bf16.gmra.mrb[0].mxu0 %v6188
  %v6450 = vpop.f32.mrb[0].mxu0
  %v6451 = vadd.f32 0.0, %v6450
  %v6452 = vpop.f32.mrb[0].mxu0
  %v6453 = vpop.f32.mrb[0].mxu0
  %v6454 = vadd.f32 0.0, %v6453
  %v6455 = vpop.f32.mrb[0].mxu0
  %6456 = vmatprep.mubr.bf16.mxu0 0
  %6457 = vmatmul.mubr.bf16.gmra.mrb[0].mxu0 %v6191
  %v6458 = vpop.f32.mrb[0].mxu0
  %v6459 = vadd.f32 0.0, %v6458
  %v6460 = vpop.f32.mrb[0].mxu0
  %v6461 = vpop.f32.mrb[0].mxu0
  %v6462 = vadd.f32 0.0, %v6461
  %v6463 = vpop.f32.mrb[0].mxu0
  %6464 = vmatprep.mubr.bf16.mxu0 0
  %6465 = vmatmul.mubr.bf16.gmra.mrb[0].mxu0 %v6194
  %v6466 = vpop.f32.mrb[0].mxu0
  %v6467 = vadd.f32 0.0, %v6466
  %v6468 = vpop.f32.mrb[0].mxu0
  %v6469 = vpop.f32.mrb[0].mxu0
  %v6470 = vadd.f32 0.0, %v6469
  %v6471 = vpop.f32.mrb[0].mxu0
  %6472 = vmatprep.mubr.bf16.mxu0 0
  %6473 = vmatmul.mubr.bf16.gmra.mrb[0].mxu0 %v6197
  %v6474 = vpop.f32.mrb[0].mxu0
  %v6475 = vadd.f32 0.0, %v6474
  %v6476 = vpop.f32.mrb[0].mxu0
  %v6477 = vpop.f32.mrb[0].mxu0
  %v6478 = vadd.f32 0.0, %v6477
  %v6479 = vpop.f32.mrb[0].mxu0
  %6480 = vmatprep.mubr.bf16.mxu0 0
  %6481 = vmatmul.mubr.bf16.gmra.mrb[0].mxu0 %v6200
  %v6482 = vpop.f32.mrb[0].mxu0
  %v6483 = vadd.f32 0.0, %v6482
  %v6484 = vpop.f32.mrb[0].mxu0
  %v6485 = vpop.f32.mrb[0].mxu0
  %v6486 = vadd.f32 0.0, %v6485
  %v6487 = vpop.f32.mrb[0].mxu0
  %6488 = vmatprep.mubr.bf16.mxu0 0
  %6489 = vmatmul.mubr.bf16.gmra.mrb[0].mxu0 %v6203
  %v6490 = vpop.f32.mrb[0].mxu0
  %v6491 = vadd.f32 0.0, %v6490
  %v6492 = vpop.f32.mrb[0].mxu0
  %v6493 = vpop.f32.mrb[0].mxu0
  %v6494 = vadd.f32 0.0, %v6493
  %v6495 = vpop.f32.mrb[0].mxu0
  %6496 = vdwg.mxu0
  %v6497 = vadd.f32 %v5883, %v6243
  %v6498 = vadd.f32 %v5884, %v6246
  %v6499 = vadd.f32 %v5885, %v6251
  %v6500 = vadd.f32 %v5886, %v6254
  %v6501 = vadd.f32 %v5887, %v6259
  %v6502 = vadd.f32 %v5888, %v6262
  %v6503 = vadd.f32 %v5889, %v6267
  %v6504 = vadd.f32 %v5890, %v6270
  %v6505 = vadd.f32 %v5891, %v6275
  %v6506 = vadd.f32 %v5892, %v6278
  %v6507 = vadd.f32 %v5893, %v6283
  %v6508 = vadd.f32 %v5894, %v6286
  %v6509 = vadd.f32 %v5895, %v6291
  %v6510 = vadd.f32 %v5896, %v6294
  %v6511 = vadd.f32 %v5897, %v6299
  %v6512 = vadd.f32 %v5898, %v6302
  %v6513 = vadd.f32 %v5899, %v6307
  %v6514 = vadd.f32 %v5900, %v6310
  %v6515 = vadd.f32 %v5901, %v6315
  %v6516 = vadd.f32 %v5902, %v6318
  %v6517 = vadd.f32 %v5903, %v6323
  %v6518 = vadd.f32 %v5904, %v6326
  %v6519 = vadd.f32 %v5905, %v6331
  %v6520 = vadd.f32 %v5906, %v6334
  %v6521 = vadd.f32 %v5907, %v6339
  %v6522 = vadd.f32 %v5908, %v6342
  %v6523 = vadd.f32 %v5909, %v6347
  %v6524 = vadd.f32 %v5910, %v6350
  %v6525 = vadd.f32 %v5911, %v6355
  %v6526 = vadd.f32 %v5912, %v6358
  %v6527 = vadd.f32 %v5913, %v6363
  %v6528 = vadd.f32 %v5914, %v6366
  %v6529 = vadd.f32 %v5915, %v6371
  %v6530 = vadd.f32 %v5916, %v6374
  %v6531 = vadd.f32 %v5917, %v6379
  %v6532 = vadd.f32 %v5918, %v6382
  %v6533 = vadd.f32 %v5919, %v6387
  %v6534 = vadd.f32 %v5920, %v6390
  %v6535 = vadd.f32 %v5921, %v6395
  %v6536 = vadd.f32 %v5922, %v6398
  %v6537 = vadd.f32 %v5923, %v6403
  %v6538 = vadd.f32 %v5924, %v6406
  %v6539 = vadd.f32 %v5925, %v6411
  %v6540 = vadd.f32 %v5926, %v6414
  %v6541 = vadd.f32 %v5927, %v6419
  %v6542 = vadd.f32 %v5928, %v6422
  %v6543 = vadd.f32 %v5929, %v6427
  %v6544 = vadd.f32 %v5930, %v6430
  %v6545 = vadd.f32 %v5931, %v6435
  %v6546 = vadd.f32 %v5932, %v6438
  %v6547 = vadd.f32 %v5933, %v6443
  %v6548 = vadd.f32 %v5934, %v6446
  %v6549 = vadd.f32 %v5935, %v6451
  %v6550 = vadd.f32 %v5936, %v6454
  %v6551 = vadd.f32 %v5937, %v6459
  %v6552 = vadd.f32 %v5938, %v6462
  %v6553 = vadd.f32 %v5939, %v6467
  %v6554 = vadd.f32 %v5940, %v6470
  %v6555 = vadd.f32 %v5941, %v6475
  %v6556 = vadd.f32 %v5942, %v6478
  %v6557 = vadd.f32 %v5943, %v6483
  %v6558 = vadd.f32 %v5944, %v6486
  %v6559 = vadd.f32 %v5945, %v6491
  %v6560 = vadd.f32 %v5946, %v6494
  %vm6561 = vcmask 64512
  %v6562 = vsel %vm6561, %v6497, 0.0
  %v6563 = vsel %vm6561, %v6498, 0.0
  %v6564 = vadd.f32 %v6562, %v6563
  %v6565 = vsel %vm6561, %v6499, 0.0
  %v6566 = vadd.f32 %v6564, %v6565
  %v6567 = vsel %vm6561, %v6500, 0.0
  %v6568 = vadd.f32 %v6566, %v6567
  %v6569 = vsel %vm6561, %v6501, 0.0
  %v6570 = vadd.f32 %v6568, %v6569
  %v6571 = vsel %vm6561, %v6502, 0.0
  %v6572 = vadd.f32 %v6570, %v6571
  %v6573 = vsel %vm6561, %v6503, 0.0
  %v6574 = vadd.f32 %v6572, %v6573
  %v6575 = vsel %vm6561, %v6504, 0.0
  %v6576 = vadd.f32 %v6574, %v6575
  %v6577 = vsel %vm6561, %v6505, 0.0
  %v6578 = vadd.f32 %v6576, %v6577
  %v6579 = vsel %vm6561, %v6506, 0.0
  %v6580 = vadd.f32 %v6578, %v6579
  %v6581 = vsel %vm6561, %v6507, 0.0
  %v6582 = vadd.f32 %v6580, %v6581
  %v6583 = vsel %vm6561, %v6508, 0.0
  %v6584 = vadd.f32 %v6582, %v6583
  %v6585 = vsel %vm6561, %v6509, 0.0
  %v6586 = vadd.f32 %v6584, %v6585
  %v6587 = vsel %vm6561, %v6510, 0.0
  %v6588 = vadd.f32 %v6586, %v6587
  %v6589 = vsel %vm6561, %v6511, 0.0
  %v6590 = vadd.f32 %v6588, %v6589
  %v6591 = vsel %vm6561, %v6512, 0.0
  %v6592 = vadd.f32 %v6590, %v6591
  %v6593 = vsel %vm6561, %v6513, 0.0
  %v6594 = vadd.f32 %v6592, %v6593
  %v6595 = vsel %vm6561, %v6514, 0.0
  %v6596 = vadd.f32 %v6594, %v6595
  %v6597 = vsel %vm6561, %v6515, 0.0
  %v6598 = vadd.f32 %v6596, %v6597
  %v6599 = vsel %vm6561, %v6516, 0.0
  %v6600 = vadd.f32 %v6598, %v6599
  %v6601 = vsel %vm6561, %v6517, 0.0
  %v6602 = vadd.f32 %v6600, %v6601
  %v6603 = vsel %vm6561, %v6518, 0.0
  %v6604 = vadd.f32 %v6602, %v6603
  %v6605 = vsel %vm6561, %v6519, 0.0
  %v6606 = vadd.f32 %v6604, %v6605
  %v6607 = vsel %vm6561, %v6520, 0.0
  %v6608 = vadd.f32 %v6606, %v6607
  %v6609 = vsel %vm6561, %v6521, 0.0
  %v6610 = vadd.f32 %v6608, %v6609
  %v6611 = vsel %vm6561, %v6522, 0.0
  %v6612 = vadd.f32 %v6610, %v6611
  %v6613 = vsel %vm6561, %v6523, 0.0
  %v6614 = vadd.f32 %v6612, %v6613
  %v6615 = vsel %vm6561, %v6524, 0.0
  %v6616 = vadd.f32 %v6614, %v6615
  %v6617 = vsel %vm6561, %v6525, 0.0
  %v6618 = vadd.f32 %v6616, %v6617
  %v6619 = vsel %vm6561, %v6526, 0.0
  %v6620 = vadd.f32 %v6618, %v6619
  %v6621 = vsel %vm6561, %v6527, 0.0
  %v6622 = vadd.f32 %v6620, %v6621
  %v6623 = vsel %vm6561, %v6528, 0.0
  %v6624 = vadd.f32 %v6622, %v6623
  %v6625 = vsel %vm6561, %v6529, 0.0
  %v6626 = vadd.f32 %v6624, %v6625
  %v6627 = vsel %vm6561, %v6530, 0.0
  %v6628 = vadd.f32 %v6626, %v6627
  %v6629 = vsel %vm6561, %v6531, 0.0
  %v6630 = vadd.f32 %v6628, %v6629
  %v6631 = vsel %vm6561, %v6532, 0.0
  %v6632 = vadd.f32 %v6630, %v6631
  %v6633 = vsel %vm6561, %v6533, 0.0
  %v6634 = vadd.f32 %v6632, %v6633
  %v6635 = vsel %vm6561, %v6534, 0.0
  %v6636 = vadd.f32 %v6634, %v6635
  %v6637 = vsel %vm6561, %v6535, 0.0
  %v6638 = vadd.f32 %v6636, %v6637
  %v6639 = vsel %vm6561, %v6536, 0.0
  %v6640 = vadd.f32 %v6638, %v6639
  %v6641 = vsel %vm6561, %v6537, 0.0
  %v6642 = vadd.f32 %v6640, %v6641
  %v6643 = vsel %vm6561, %v6538, 0.0
  %v6644 = vadd.f32 %v6642, %v6643
  %v6645 = vsel %vm6561, %v6539, 0.0
  %v6646 = vadd.f32 %v6644, %v6645
  %v6647 = vsel %vm6561, %v6540, 0.0
  %v6648 = vadd.f32 %v6646, %v6647
  %v6649 = vsel %vm6561, %v6541, 0.0
  %v6650 = vadd.f32 %v6648, %v6649
  %v6651 = vsel %vm6561, %v6542, 0.0
  %v6652 = vadd.f32 %v6650, %v6651
  %v6653 = vsel %vm6561, %v6543, 0.0
  %v6654 = vadd.f32 %v6652, %v6653
  %v6655 = vsel %vm6561, %v6544, 0.0
  %v6656 = vadd.f32 %v6654, %v6655
  %v6657 = vsel %vm6561, %v6545, 0.0
  %v6658 = vadd.f32 %v6656, %v6657
  %v6659 = vsel %vm6561, %v6546, 0.0
  %v6660 = vadd.f32 %v6658, %v6659
  %v6661 = vsel %vm6561, %v6547, 0.0
  %v6662 = vadd.f32 %v6660, %v6661
  %v6663 = vsel %vm6561, %v6548, 0.0
  %v6664 = vadd.f32 %v6662, %v6663
  %v6665 = vsel %vm6561, %v6549, 0.0
  %v6666 = vadd.f32 %v6664, %v6665
  %v6667 = vsel %vm6561, %v6550, 0.0
  %v6668 = vadd.f32 %v6666, %v6667
  %v6669 = vsel %vm6561, %v6551, 0.0
  %v6670 = vadd.f32 %v6668, %v6669
  %v6671 = vsel %vm6561, %v6552, 0.0
  %v6672 = vadd.f32 %v6670, %v6671
  %v6673 = vsel %vm6561, %v6553, 0.0
  %v6674 = vadd.f32 %v6672, %v6673
  %v6675 = vsel %vm6561, %v6554, 0.0
  %v6676 = vadd.f32 %v6674, %v6675
  %v6677 = vsel %vm6561, %v6555, 0.0
  %v6678 = vadd.f32 %v6676, %v6677
  %v6679 = vsel %vm6561, %v6556, 0.0
  %v6680 = vadd.f32 %v6678, %v6679
  %v6681 = vsel %vm6561, %v6557, 0.0
  %v6682 = vadd.f32 %v6680, %v6681
  %v6683 = vsel %vm6561, %v6558, 0.0
  %v6684 = vadd.f32 %v6682, %v6683
  %v6685 = vsel %vm6561, %v6559, 0.0
  %v6686 = vadd.f32 %v6684, %v6685
  %v6687 = vsel %vm6561, %v6560, 0.0
  %v6688 = vadd.f32 %v6686, %v6687
  %v6689 = vrot.slane %v6688, 4
  %v6690 = vadd.f32 %v6688, %v6689
  %v6691 = vrot.slane %v6690, 2
  %v6692 = vadd.f32 %v6690, %v6691
  %v6693 = vrot.slane %v6692, 1
  %v6694 = vadd.f32 %v6692, %v6693
  %v6695 = vrcp.pop 512.0
  %v6696 = vmul.f32 %v6694, %v6695
  %v6697 = vsub.f32 %v6497, %v6696
  %v6698 = vsub.f32 %v6498, %v6696
  %v6699 = vsub.f32 %v6499, %v6696
  %v6700 = vsub.f32 %v6500, %v6696
  %v6701 = vsub.f32 %v6501, %v6696
  %v6702 = vsub.f32 %v6502, %v6696
  %v6703 = vsub.f32 %v6503, %v6696
  %v6704 = vsub.f32 %v6504, %v6696
  %v6705 = vsub.f32 %v6505, %v6696
  %v6706 = vsub.f32 %v6506, %v6696
  %v6707 = vsub.f32 %v6507, %v6696
  %v6708 = vsub.f32 %v6508, %v6696
  %v6709 = vsub.f32 %v6509, %v6696
  %v6710 = vsub.f32 %v6510, %v6696
  %v6711 = vsub.f32 %v6511, %v6696
  %v6712 = vsub.f32 %v6512, %v6696
  %v6713 = vsub.f32 %v6513, %v6696
  %v6714 = vsub.f32 %v6514, %v6696
  %v6715 = vsub.f32 %v6515, %v6696
  %v6716 = vsub.f32 %v6516, %v6696
  %v6717 = vsub.f32 %v6517, %v6696
  %v6718 = vsub.f32 %v6518, %v6696
  %v6719 = vsub.f32 %v6519, %v6696
  %v6720 = vsub.f32 %v6520, %v6696
  %v6721 = vsub.f32 %v6521, %v6696
  %v6722 = vsub.f32 %v6522, %v6696
  %v6723 = vsub.f32 %v6523, %v6696
  %v6724 = vsub.f32 %v6524, %v6696
  %v6725 = vsub.f32 %v6525, %v6696
  %v6726 = vsub.f32 %v6526, %v6696
  %v6727 = vsub.f32 %v6527, %v6696
  %v6728 = vsub.f32 %v6528, %v6696
  %v6729 = vsub.f32 %v6529, %v6696
  %v6730 = vsub.f32 %v6530, %v6696
  %v6731 = vsub.f32 %v6531, %v6696
  %v6732 = vsub.f32 %v6532, %v6696
  %v6733 = vsub.f32 %v6533, %v6696
  %v6734 = vsub.f32 %v6534, %v6696
  %v6735 = vsub.f32 %v6535, %v6696
  %v6736 = vsub.f32 %v6536, %v6696
  %v6737 = vsub.f32 %v6537, %v6696
  %v6738 = vsub.f32 %v6538, %v6696
  %v6739 = vsub.f32 %v6539, %v6696
  %v6740 = vsub.f32 %v6540, %v6696
  %v6741 = vsub.f32 %v6541, %v6696
  %v6742 = vsub.f32 %v6542, %v6696
  %v6743 = vsub.f32 %v6543, %v6696
  %v6744 = vsub.f32 %v6544, %v6696
  %v6745 = vsub.f32 %v6545, %v6696
  %v6746 = vsub.f32 %v6546, %v6696
  %v6747 = vsub.f32 %v6547, %v6696
  %v6748 = vsub.f32 %v6548, %v6696
  %v6749 = vsub.f32 %v6549, %v6696
  %v6750 = vsub.f32 %v6550, %v6696
  %v6751 = vsub.f32 %v6551, %v6696
  %v6752 = vsub.f32 %v6552, %v6696
  %v6753 = vsub.f32 %v6553, %v6696
  %v6754 = vsub.f32 %v6554, %v6696
  %v6755 = vsub.f32 %v6555, %v6696
  %v6756 = vsub.f32 %v6556, %v6696
  %v6757 = vsub.f32 %v6557, %v6696
  %v6758 = vsub.f32 %v6558, %v6696
  %v6759 = vsub.f32 %v6559, %v6696
  %v6760 = vsub.f32 %v6560, %v6696
  %v6761 = vmul.f32 %v6697, %v6697
  %v6762 = vmul.f32 %v6698, %v6698
  %v6763 = vmul.f32 %v6699, %v6699
  %v6764 = vmul.f32 %v6700, %v6700
  %v6765 = vmul.f32 %v6701, %v6701
  %v6766 = vmul.f32 %v6702, %v6702
  %v6767 = vmul.f32 %v6703, %v6703
  %v6768 = vmul.f32 %v6704, %v6704
  %v6769 = vmul.f32 %v6705, %v6705
  %v6770 = vmul.f32 %v6706, %v6706
  %v6771 = vmul.f32 %v6707, %v6707
  %v6772 = vmul.f32 %v6708, %v6708
  %v6773 = vmul.f32 %v6709, %v6709
  %v6774 = vmul.f32 %v6710, %v6710
  %v6775 = vmul.f32 %v6711, %v6711
  %v6776 = vmul.f32 %v6712, %v6712
  %v6777 = vmul.f32 %v6713, %v6713
  %v6778 = vmul.f32 %v6714, %v6714
  %v6779 = vmul.f32 %v6715, %v6715
  %v6780 = vmul.f32 %v6716, %v6716
  %v6781 = vmul.f32 %v6717, %v6717
  %v6782 = vmul.f32 %v6718, %v6718
  %v6783 = vmul.f32 %v6719, %v6719
  %v6784 = vmul.f32 %v6720, %v6720
  %v6785 = vmul.f32 %v6721, %v6721
  %v6786 = vmul.f32 %v6722, %v6722
  %v6787 = vmul.f32 %v6723, %v6723
  %v6788 = vmul.f32 %v6724, %v6724
  %v6789 = vmul.f32 %v6725, %v6725
  %v6790 = vmul.f32 %v6726, %v6726
  %v6791 = vmul.f32 %v6727, %v6727
  %v6792 = vmul.f32 %v6728, %v6728
  %v6793 = vmul.f32 %v6729, %v6729
  %v6794 = vmul.f32 %v6730, %v6730
  %v6795 = vmul.f32 %v6731, %v6731
  %v6796 = vmul.f32 %v6732, %v6732
  %v6797 = vmul.f32 %v6733, %v6733
  %v6798 = vmul.f32 %v6734, %v6734
  %v6799 = vmul.f32 %v6735, %v6735
  %v6800 = vmul.f32 %v6736, %v6736
  %v6801 = vmul.f32 %v6737, %v6737
  %v6802 = vmul.f32 %v6738, %v6738
  %v6803 = vmul.f32 %v6739, %v6739
  %v6804 = vmul.f32 %v6740, %v6740
  %v6805 = vmul.f32 %v6741, %v6741
  %v6806 = vmul.f32 %v6742, %v6742
  %v6807 = vmul.f32 %v6743, %v6743
  %v6808 = vmul.f32 %v6744, %v6744
  %v6809 = vmul.f32 %v6745, %v6745
  %v6810 = vmul.f32 %v6746, %v6746
  %v6811 = vmul.f32 %v6747, %v6747
  %v6812 = vmul.f32 %v6748, %v6748
  %v6813 = vmul.f32 %v6749, %v6749
  %v6814 = vmul.f32 %v6750, %v6750
  %v6815 = vmul.f32 %v6751, %v6751
  %v6816 = vmul.f32 %v6752, %v6752
  %v6817 = vmul.f32 %v6753, %v6753
  %v6818 = vmul.f32 %v6754, %v6754
  %v6819 = vmul.f32 %v6755, %v6755
  %v6820 = vmul.f32 %v6756, %v6756
  %v6821 = vmul.f32 %v6757, %v6757
  %v6822 = vmul.f32 %v6758, %v6758
  %v6823 = vmul.f32 %v6759, %v6759
  %v6824 = vmul.f32 %v6760, %v6760
  %v6825 = vsel %vm6561, %v6761, 0.0
  %v6826 = vsel %vm6561, %v6762, 0.0
  %v6827 = vadd.f32 %v6825, %v6826
  %v6828 = vsel %vm6561, %v6763, 0.0
  %v6829 = vadd.f32 %v6827, %v6828
  %v6830 = vsel %vm6561, %v6764, 0.0
  %v6831 = vadd.f32 %v6829, %v6830
  %v6832 = vsel %vm6561, %v6765, 0.0
  %v6833 = vadd.f32 %v6831, %v6832
  %v6834 = vsel %vm6561, %v6766, 0.0
  %v6835 = vadd.f32 %v6833, %v6834
  %v6836 = vsel %vm6561, %v6767, 0.0
  %v6837 = vadd.f32 %v6835, %v6836
  %v6838 = vsel %vm6561, %v6768, 0.0
  %v6839 = vadd.f32 %v6837, %v6838
  %v6840 = vsel %vm6561, %v6769, 0.0
  %v6841 = vadd.f32 %v6839, %v6840
  %v6842 = vsel %vm6561, %v6770, 0.0
  %v6843 = vadd.f32 %v6841, %v6842
  %v6844 = vsel %vm6561, %v6771, 0.0
  %v6845 = vadd.f32 %v6843, %v6844
  %v6846 = vsel %vm6561, %v6772, 0.0
  %v6847 = vadd.f32 %v6845, %v6846
  %v6848 = vsel %vm6561, %v6773, 0.0
  %v6849 = vadd.f32 %v6847, %v6848
  %v6850 = vsel %vm6561, %v6774, 0.0
  %v6851 = vadd.f32 %v6849, %v6850
  %v6852 = vsel %vm6561, %v6775, 0.0
  %v6853 = vadd.f32 %v6851, %v6852
  %v6854 = vsel %vm6561, %v6776, 0.0
  %v6855 = vadd.f32 %v6853, %v6854
  %v6856 = vsel %vm6561, %v6777, 0.0
  %v6857 = vadd.f32 %v6855, %v6856
  %v6858 = vsel %vm6561, %v6778, 0.0
  %v6859 = vadd.f32 %v6857, %v6858
  %v6860 = vsel %vm6561, %v6779, 0.0
  %v6861 = vadd.f32 %v6859, %v6860
  %v6862 = vsel %vm6561, %v6780, 0.0
  %v6863 = vadd.f32 %v6861, %v6862
  %v6864 = vsel %vm6561, %v6781, 0.0
  %v6865 = vadd.f32 %v6863, %v6864
  %v6866 = vsel %vm6561, %v6782, 0.0
  %v6867 = vadd.f32 %v6865, %v6866
  %v6868 = vsel %vm6561, %v6783, 0.0
  %v6869 = vadd.f32 %v6867, %v6868
  %v6870 = vsel %vm6561, %v6784, 0.0
  %v6871 = vadd.f32 %v6869, %v6870
  %v6872 = vsel %vm6561, %v6785, 0.0
  %v6873 = vadd.f32 %v6871, %v6872
  %v6874 = vsel %vm6561, %v6786, 0.0
  %v6875 = vadd.f32 %v6873, %v6874
  %v6876 = vsel %vm6561, %v6787, 0.0
  %v6877 = vadd.f32 %v6875, %v6876
  %v6878 = vsel %vm6561, %v6788, 0.0
  %v6879 = vadd.f32 %v6877, %v6878
  %v6880 = vsel %vm6561, %v6789, 0.0
  %v6881 = vadd.f32 %v6879, %v6880
  %v6882 = vsel %vm6561, %v6790, 0.0
  %v6883 = vadd.f32 %v6881, %v6882
  %v6884 = vsel %vm6561, %v6791, 0.0
  %v6885 = vadd.f32 %v6883, %v6884
  %v6886 = vsel %vm6561, %v6792, 0.0
  %v6887 = vadd.f32 %v6885, %v6886
  %v6888 = vsel %vm6561, %v6793, 0.0
  %v6889 = vadd.f32 %v6887, %v6888
  %v6890 = vsel %vm6561, %v6794, 0.0
  %v6891 = vadd.f32 %v6889, %v6890
  %v6892 = vsel %vm6561, %v6795, 0.0
  %v6893 = vadd.f32 %v6891, %v6892
  %v6894 = vsel %vm6561, %v6796, 0.0
  %v6895 = vadd.f32 %v6893, %v6894
  %v6896 = vsel %vm6561, %v6797, 0.0
  %v6897 = vadd.f32 %v6895, %v6896
  %v6898 = vsel %vm6561, %v6798, 0.0
  %v6899 = vadd.f32 %v6897, %v6898
  %v6900 = vsel %vm6561, %v6799, 0.0
  %v6901 = vadd.f32 %v6899, %v6900
  %v6902 = vsel %vm6561, %v6800, 0.0
  %v6903 = vadd.f32 %v6901, %v6902
  %v6904 = vsel %vm6561, %v6801, 0.0
  %v6905 = vadd.f32 %v6903, %v6904
  %v6906 = vsel %vm6561, %v6802, 0.0
  %v6907 = vadd.f32 %v6905, %v6906
  %v6908 = vsel %vm6561, %v6803, 0.0
  %v6909 = vadd.f32 %v6907, %v6908
  %v6910 = vsel %vm6561, %v6804, 0.0
  %v6911 = vadd.f32 %v6909, %v6910
  %v6912 = vsel %vm6561, %v6805, 0.0
  %v6913 = vadd.f32 %v6911, %v6912
  %v6914 = vsel %vm6561, %v6806, 0.0
  %v6915 = vadd.f32 %v6913, %v6914
  %v6916 = vsel %vm6561, %v6807, 0.0
  %v6917 = vadd.f32 %v6915, %v6916
  %v6918 = vsel %vm6561, %v6808, 0.0
  %v6919 = vadd.f32 %v6917, %v6918
  %v6920 = vsel %vm6561, %v6809, 0.0
  %v6921 = vadd.f32 %v6919, %v6920
  %v6922 = vsel %vm6561, %v6810, 0.0
  %v6923 = vadd.f32 %v6921, %v6922
  %v6924 = vsel %vm6561, %v6811, 0.0
  %v6925 = vadd.f32 %v6923, %v6924
  %v6926 = vsel %vm6561, %v6812, 0.0
  %v6927 = vadd.f32 %v6925, %v6926
  %v6928 = vsel %vm6561, %v6813, 0.0
  %v6929 = vadd.f32 %v6927, %v6928
  %v6930 = vsel %vm6561, %v6814, 0.0
  %v6931 = vadd.f32 %v6929, %v6930
  %v6932 = vsel %vm6561, %v6815, 0.0
  %v6933 = vadd.f32 %v6931, %v6932
  %v6934 = vsel %vm6561, %v6816, 0.0
  %v6935 = vadd.f32 %v6933, %v6934
  %v6936 = vsel %vm6561, %v6817, 0.0
  %v6937 = vadd.f32 %v6935, %v6936
  %v6938 = vsel %vm6561, %v6818, 0.0
  %v6939 = vadd.f32 %v6937, %v6938
  %v6940 = vsel %vm6561, %v6819, 0.0
  %v6941 = vadd.f32 %v6939, %v6940
  %v6942 = vsel %vm6561, %v6820, 0.0
  %v6943 = vadd.f32 %v6941, %v6942
  %v6944 = vsel %vm6561, %v6821, 0.0
  %v6945 = vadd.f32 %v6943, %v6944
  %v6946 = vsel %vm6561, %v6822, 0.0
  %v6947 = vadd.f32 %v6945, %v6946
  %v6948 = vsel %vm6561, %v6823, 0.0
  %v6949 = vadd.f32 %v6947, %v6948
  %v6950 = vsel %vm6561, %v6824, 0.0
  %v6951 = vadd.f32 %v6949, %v6950
  %v6952 = vrot.slane %v6951, 4
  %v6953 = vadd.f32 %v6951, %v6952
  %v6954 = vrot.slane %v6953, 2
  %v6955 = vadd.f32 %v6953, %v6954
  %v6956 = vrot.slane %v6955, 1
  %v6957 = vadd.f32 %v6955, %v6956
  %v6958 = vmul.f32 %v6957, %v6695
  %v6959 = vadd.f32 %v6958, 1e-05
  %v6960 = vrsqrt.pop %v6959
  %v6961 = vld [vmem:[%s2] sm:$0x1]
  %v6962 = vmul.f32 %v6960, %v6961
  %v6963 = vlaneseq
  %v6964 = vshrl.u32 %v6963, 7
  %v6965 = vsub.s32 0, %v6964
  %v6966 = vrot.slane %v6962, %v6965
  %v6967 = vmul.f32 %v6697, %v6966
  %v6968 = vmul.f32 %v6698, %v6966
  %v6969 = vmul.f32 %v6699, %v6966
  %v6970 = vmul.f32 %v6700, %v6966
  %v6971 = vmul.f32 %v6701, %v6966
  %v6972 = vmul.f32 %v6702, %v6966
  %v6973 = vmul.f32 %v6703, %v6966
  %v6974 = vmul.f32 %v6704, %v6966
  %v6975 = vmul.f32 %v6705, %v6966
  %v6976 = vmul.f32 %v6706, %v6966
  %v6977 = vmul.f32 %v6707, %v6966
  %v6978 = vmul.f32 %v6708, %v6966
  %v6979 = vmul.f32 %v6709, %v6966
  %v6980 = vmul.f32 %v6710, %v6966
  %v6981 = vmul.f32 %v6711, %v6966
  %v6982 = vmul.f32 %v6712, %v6966
  %v6983 = vmul.f32 %v6713, %v6966
  %v6984 = vmul.f32 %v6714, %v6966
  %v6985 = vmul.f32 %v6715, %v6966
  %v6986 = vmul.f32 %v6716, %v6966
  %v6987 = vmul.f32 %v6717, %v6966
  %v6988 = vmul.f32 %v6718, %v6966
  %v6989 = vmul.f32 %v6719, %v6966
  %v6990 = vmul.f32 %v6720, %v6966
  %v6991 = vmul.f32 %v6721, %v6966
  %v6992 = vmul.f32 %v6722, %v6966
  %v6993 = vmul.f32 %v6723, %v6966
  %v6994 = vmul.f32 %v6724, %v6966
  %v6995 = vmul.f32 %v6725, %v6966
  %v6996 = vmul.f32 %v6726, %v6966
  %v6997 = vmul.f32 %v6727, %v6966
  %v6998 = vmul.f32 %v6728, %v6966
  %v6999 = vmul.f32 %v6729, %v6966
  %v7000 = vmul.f32 %v6730, %v6966
  %v7001 = vmul.f32 %v6731, %v6966
  %v7002 = vmul.f32 %v6732, %v6966
  %v7003 = vmul.f32 %v6733, %v6966
  %v7004 = vmul.f32 %v6734, %v6966
  %v7005 = vmul.f32 %v6735, %v6966
  %v7006 = vmul.f32 %v6736, %v6966
  %v7007 = vmul.f32 %v6737, %v6966
  %v7008 = vmul.f32 %v6738, %v6966
  %v7009 = vmul.f32 %v6739, %v6966
  %v7010 = vmul.f32 %v6740, %v6966
  %v7011 = vmul.f32 %v6741, %v6966
  %v7012 = vmul.f32 %v6742, %v6966
  %v7013 = vmul.f32 %v6743, %v6966
  %v7014 = vmul.f32 %v6744, %v6966
  %v7015 = vmul.f32 %v6745, %v6966
  %v7016 = vmul.f32 %v6746, %v6966
  %v7017 = vmul.f32 %v6747, %v6966
  %v7018 = vmul.f32 %v6748, %v6966
  %v7019 = vmul.f32 %v6749, %v6966
  %v7020 = vmul.f32 %v6750, %v6966
  %v7021 = vmul.f32 %v6751, %v6966
  %v7022 = vmul.f32 %v6752, %v6966
  %v7023 = vmul.f32 %v6753, %v6966
  %v7024 = vmul.f32 %v6754, %v6966
  %v7025 = vmul.f32 %v6755, %v6966
  %v7026 = vmul.f32 %v6756, %v6966
  %v7027 = vmul.f32 %v6757, %v6966
  %v7028 = vmul.f32 %v6758, %v6966
  %v7029 = vmul.f32 %v6759, %v6966
  %v7030 = vmul.f32 %v6760, %v6966
  %v7031 = vld [vmem:[%s3] sm:$0x1]
  %v7033 = vlaneseq
  %v7034 = vshrl.u32 %v7033, 7
  %v7035 = vsub.s32 0, %v7034
  %v7036 = vrot.slane %v7031, %v7035
  %v7038 = vadd.f32 %v6967, %v7036
  %v7039 = vadd.f32 %v6968, %v7036
  %v7040 = vadd.f32 %v6969, %v7036
  %v7041 = vadd.f32 %v6970, %v7036
  %v7042 = vadd.f32 %v6971, %v7036
  %v7043 = vadd.f32 %v6972, %v7036
  %v7044 = vadd.f32 %v6973, %v7036
  %v7045 = vadd.f32 %v6974, %v7036
  %v7046 = vadd.f32 %v6975, %v7036
  %v7047 = vadd.f32 %v6976, %v7036
  %v7048 = vadd.f32 %v6977, %v7036
  %v7049 = vadd.f32 %v6978, %v7036
  %v7050 = vadd.f32 %v6979, %v7036
  %v7051 = vadd.f32 %v6980, %v7036
  %v7052 = vadd.f32 %v6981, %v7036
  %v7053 = vadd.f32 %v6982, %v7036
  %v7054 = vadd.f32 %v6983, %v7036
  %v7055 = vadd.f32 %v6984, %v7036
  %v7056 = vadd.f32 %v6985, %v7036
  %v7057 = vadd.f32 %v6986, %v7036
  %v7058 = vadd.f32 %v6987, %v7036
  %v7059 = vadd.f32 %v6988, %v7036
  %v7060 = vadd.f32 %v6989, %v7036
  %v7061 = vadd.f32 %v6990, %v7036
  %v7062 = vadd.f32 %v6991, %v7036
  %v7063 = vadd.f32 %v6992, %v7036
  %v7064 = vadd.f32 %v6993, %v7036
  %v7065 = vadd.f32 %v6994, %v7036
  %v7066 = vadd.f32 %v6995, %v7036
  %v7067 = vadd.f32 %v6996, %v7036
  %v7068 = vadd.f32 %v6997, %v7036
  %v7069 = vadd.f32 %v6998, %v7036
  %v7070 = vadd.f32 %v6999, %v7036
  %v7071 = vadd.f32 %v7000, %v7036
  %v7072 = vadd.f32 %v7001, %v7036
  %v7073 = vadd.f32 %v7002, %v7036
  %v7074 = vadd.f32 %v7003, %v7036
  %v7075 = vadd.f32 %v7004, %v7036
  %v7076 = vadd.f32 %v7005, %v7036
  %v7077 = vadd.f32 %v7006, %v7036
  %v7078 = vadd.f32 %v7007, %v7036
  %v7079 = vadd.f32 %v7008, %v7036
  %v7080 = vadd.f32 %v7009, %v7036
  %v7081 = vadd.f32 %v7010, %v7036
  %v7082 = vadd.f32 %v7011, %v7036
  %v7083 = vadd.f32 %v7012, %v7036
  %v7084 = vadd.f32 %v7013, %v7036
  %v7085 = vadd.f32 %v7014, %v7036
  %v7086 = vadd.f32 %v7015, %v7036
  %v7087 = vadd.f32 %v7016, %v7036
  %v7088 = vadd.f32 %v7017, %v7036
  %v7089 = vadd.f32 %v7018, %v7036
  %v7090 = vadd.f32 %v7019, %v7036
  %v7091 = vadd.f32 %v7020, %v7036
  %v7092 = vadd.f32 %v7021, %v7036
  %v7093 = vadd.f32 %v7022, %v7036
  %v7094 = vadd.f32 %v7023, %v7036
  %v7095 = vadd.f32 %v7024, %v7036
  %v7096 = vadd.f32 %v7025, %v7036
  %v7097 = vadd.f32 %v7026, %v7036
  %v7098 = vadd.f32 %v7027, %v7036
  %v7099 = vadd.f32 %v7028, %v7036
  %v7100 = vadd.f32 %v7029, %v7036
  %v7101 = vadd.f32 %v7030, %v7036
  %v7102 = vmax.f32 %v7038, 0.0
  %v7103 = vmax.f32 %v7039, 0.0
  %v7104 = vmax.f32 %v7040, 0.0
  %v7105 = vmax.f32 %v7041, 0.0
  %v7106 = vmax.f32 %v7042, 0.0
  %v7107 = vmax.f32 %v7043, 0.0
  %v7108 = vmax.f32 %v7044, 0.0
  %v7109 = vmax.f32 %v7045, 0.0
  %v7110 = vmax.f32 %v7046, 0.0
  %v7111 = vmax.f32 %v7047, 0.0
  %v7112 = vmax.f32 %v7048, 0.0
  %v7113 = vmax.f32 %v7049, 0.0
  %v7114 = vmax.f32 %v7050, 0.0
  %v7115 = vmax.f32 %v7051, 0.0
  %v7116 = vmax.f32 %v7052, 0.0
  %v7117 = vmax.f32 %v7053, 0.0
  %v7118 = vmax.f32 %v7054, 0.0
  %v7119 = vmax.f32 %v7055, 0.0
  %v7120 = vmax.f32 %v7056, 0.0
  %v7121 = vmax.f32 %v7057, 0.0
  %v7122 = vmax.f32 %v7058, 0.0
  %v7123 = vmax.f32 %v7059, 0.0
  %v7124 = vmax.f32 %v7060, 0.0
  %v7125 = vmax.f32 %v7061, 0.0
  %v7126 = vmax.f32 %v7062, 0.0
  %v7127 = vmax.f32 %v7063, 0.0
  %v7128 = vmax.f32 %v7064, 0.0
  %v7129 = vmax.f32 %v7065, 0.0
  %v7130 = vmax.f32 %v7066, 0.0
  %v7131 = vmax.f32 %v7067, 0.0
  %v7132 = vmax.f32 %v7068, 0.0
  %v7133 = vmax.f32 %v7069, 0.0
  %v7134 = vmax.f32 %v7070, 0.0
  %v7135 = vmax.f32 %v7071, 0.0
  %v7136 = vmax.f32 %v7072, 0.0
  %v7137 = vmax.f32 %v7073, 0.0
  %v7138 = vmax.f32 %v7074, 0.0
  %v7139 = vmax.f32 %v7075, 0.0
  %v7140 = vmax.f32 %v7076, 0.0
  %v7141 = vmax.f32 %v7077, 0.0
  %v7142 = vmax.f32 %v7078, 0.0
  %v7143 = vmax.f32 %v7079, 0.0
  %v7144 = vmax.f32 %v7080, 0.0
  %v7145 = vmax.f32 %v7081, 0.0
  %v7146 = vmax.f32 %v7082, 0.0
  %v7147 = vmax.f32 %v7083, 0.0
  %v7148 = vmax.f32 %v7084, 0.0
  %v7149 = vmax.f32 %v7085, 0.0
  %v7150 = vmax.f32 %v7086, 0.0
  %v7151 = vmax.f32 %v7087, 0.0
  %v7152 = vmax.f32 %v7088, 0.0
  %v7153 = vmax.f32 %v7089, 0.0
  %v7154 = vmax.f32 %v7090, 0.0
  %v7155 = vmax.f32 %v7091, 0.0
  %v7156 = vmax.f32 %v7092, 0.0
  %v7157 = vmax.f32 %v7093, 0.0
  %v7158 = vmax.f32 %v7094, 0.0
  %v7159 = vmax.f32 %v7095, 0.0
  %v7160 = vmax.f32 %v7096, 0.0
  %v7161 = vmax.f32 %v7097, 0.0
  %v7162 = vmax.f32 %v7098, 0.0
  %v7163 = vmax.f32 %v7099, 0.0
  %v7164 = vmax.f32 %v7100, 0.0
  %v7165 = vmax.f32 %v7101, 0.0
  %v7166 = vpack.c.bf16 %v7102, %v7102
  %v7167 = vpack.c.bf16 %v7103, %v7103
  %v7168 = vpack.c.bf16 %v7104, %v7104
  %v7169 = vpack.c.bf16 %v7105, %v7105
  %v7170 = vpack.c.bf16 %v7106, %v7106
  %v7171 = vpack.c.bf16 %v7107, %v7107
  %v7172 = vpack.c.bf16 %v7108, %v7108
  %v7173 = vpack.c.bf16 %v7109, %v7109
  %v7174 = vpack.c.bf16 %v7110, %v7110
  %v7175 = vpack.c.bf16 %v7111, %v7111
  %v7176 = vpack.c.bf16 %v7112, %v7112
  %v7177 = vpack.c.bf16 %v7113, %v7113
  %v7178 = vpack.c.bf16 %v7114, %v7114
  %v7179 = vpack.c.bf16 %v7115, %v7115
  %v7180 = vpack.c.bf16 %v7116, %v7116
  %v7181 = vpack.c.bf16 %v7117, %v7117
  %v7182 = vpack.c.bf16 %v7118, %v7118
  %v7183 = vpack.c.bf16 %v7119, %v7119
  %v7184 = vpack.c.bf16 %v7120, %v7120
  %v7185 = vpack.c.bf16 %v7121, %v7121
  %v7186 = vpack.c.bf16 %v7122, %v7122
  %v7187 = vpack.c.bf16 %v7123, %v7123
  %v7188 = vpack.c.bf16 %v7124, %v7124
  %v7189 = vpack.c.bf16 %v7125, %v7125
  %v7190 = vpack.c.bf16 %v7126, %v7126
  %v7191 = vpack.c.bf16 %v7127, %v7127
  %v7192 = vpack.c.bf16 %v7128, %v7128
  %v7193 = vpack.c.bf16 %v7129, %v7129
  %v7194 = vpack.c.bf16 %v7130, %v7130
  %v7195 = vpack.c.bf16 %v7131, %v7131
  %v7196 = vpack.c.bf16 %v7132, %v7132
  %v7197 = vpack.c.bf16 %v7133, %v7133
  %v7198 = vpack.c.bf16 %v7134, %v7134
  %v7199 = vpack.c.bf16 %v7135, %v7135
  %v7200 = vpack.c.bf16 %v7136, %v7136
  %v7201 = vpack.c.bf16 %v7137, %v7137
  %v7202 = vpack.c.bf16 %v7138, %v7138
  %v7203 = vpack.c.bf16 %v7139, %v7139
  %v7204 = vpack.c.bf16 %v7140, %v7140
  %v7205 = vpack.c.bf16 %v7141, %v7141
  %v7206 = vpack.c.bf16 %v7142, %v7142
  %v7207 = vpack.c.bf16 %v7143, %v7143
  %v7208 = vpack.c.bf16 %v7144, %v7144
  %v7209 = vpack.c.bf16 %v7145, %v7145
  %v7210 = vpack.c.bf16 %v7146, %v7146
  %v7211 = vpack.c.bf16 %v7147, %v7147
  %v7212 = vpack.c.bf16 %v7148, %v7148
  %v7213 = vpack.c.bf16 %v7149, %v7149
  %v7214 = vpack.c.bf16 %v7150, %v7150
  %v7215 = vpack.c.bf16 %v7151, %v7151
  %v7216 = vpack.c.bf16 %v7152, %v7152
  %v7217 = vpack.c.bf16 %v7153, %v7153
  %v7218 = vpack.c.bf16 %v7154, %v7154
  %v7219 = vpack.c.bf16 %v7155, %v7155
  %v7220 = vpack.c.bf16 %v7156, %v7156
  %v7221 = vpack.c.bf16 %v7157, %v7157
  %v7222 = vpack.c.bf16 %v7158, %v7158
  %v7223 = vpack.c.bf16 %v7159, %v7159
  %v7224 = vpack.c.bf16 %v7160, %v7160
  %v7225 = vpack.c.bf16 %v7161, %v7161
  %v7226 = vpack.c.bf16 %v7162, %v7162
  %v7227 = vpack.c.bf16 %v7163, %v7163
  %v7228 = vpack.c.bf16 %v7164, %v7164
  %v7229 = vpack.c.bf16 %v7165, %v7165
  %vm7230 = vcmask 60416
  %7231 = vst.msk [vmem:[#allocation3] sm:$0xf] %vm7230, 0
  %7232 = vst.msk [vmem:[#allocation3 + $0x4] sm:$0xf] %vm7230, 0
  %7233 = vst.msk [vmem:[#allocation3 + $0x8] sm:$0xf] %vm7230, 0
  %7234 = vst.msk [vmem:[#allocation3 + $0xc] sm:$0xf] %vm7230, 0
  %7235 = vst.msk [vmem:[#allocation3 + $0x10] sm:$0xf] %vm7230, 0
  %7236 = vst.msk [vmem:[#allocation3 + $0x14] sm:$0xf] %vm7230, 0
  %7237 = vst.msk [vmem:[#allocation3 + $0x18] sm:$0xf] %vm7230, 0
  %7238 = vst.msk [vmem:[#allocation3 + $0x1c] sm:$0xf] %vm7230, 0
  %7239 = vst.msk [vmem:[#allocation3 + $0x20] sm:$0xf] %vm7230, 0
  %7240 = vst.msk [vmem:[#allocation3 + $0x24] sm:$0xf] %vm7230, 0
  %s7241 = scalar_lea.vmem [#allocation3], 360
  %7242 = vst.msk [vmem:[%s7241] sm:$0xf] %vm7230, 0
  %7243 = vst.msk [vmem:[%s7241 + $0x4] sm:$0xf] %vm7230, 0
  %7244 = vst.msk [vmem:[%s7241 + $0x8] sm:$0xf] %vm7230, 0
  %7245 = vst.msk [vmem:[%s7241 + $0xc] sm:$0xf] %vm7230, 0
  %7246 = vst.msk [vmem:[%s7241 + $0x10] sm:$0xf] %vm7230, 0
  %7247 = vst.msk [vmem:[%s7241 + $0x14] sm:$0xf] %vm7230, 0
  %7248 = vst.msk [vmem:[%s7241 + $0x18] sm:$0xf] %vm7230, 0
  %7249 = vst.msk [vmem:[%s7241 + $0x1c] sm:$0xf] %vm7230, 0
  %7250 = vst.msk [vmem:[%s7241 + $0x20] sm:$0xf] %vm7230, 0
  %7251 = vst.msk [vmem:[%s7241 + $0x24] sm:$0xf] %vm7230, 0
  %s7252 = scalar_lea.vmem [#allocation3], 40
  %7253 = vst.msk [vmem:[%s7252] sm:$0xf] %vm7230, 0
  %7254 = vst.msk [vmem:[%s7252 + $0x28] sm:$0xf] %vm7230, 0
  %7255 = vst.msk [vmem:[%s7252 + $0x50] sm:$0xf] %vm7230, 0
  %7256 = vst.msk [vmem:[%s7252 + $0x78] sm:$0xf] %vm7230, 0
  %7257 = vst.msk [vmem:[%s7252 + $0xa0] sm:$0xf] %vm7230, 0
  %7258 = vst.msk [vmem:[%s7252 + $0xc8] sm:$0xf] %vm7230, 0
  %7259 = vst.msk [vmem:[%s7252 + $0xf0] sm:$0xf] %vm7230, 0
  %7260 = vst.msk [vmem:[%s7252 + $0x118] sm:$0xf] %vm7230, 0
  %s7261 = scalar_lea.vmem [#allocation3], 76
  %7262 = vst.msk [vmem:[%s7261] sm:$0xf] %vm7230, 0
  %7263 = vst.msk [vmem:[%s7261 + $0x28] sm:$0xf] %vm7230, 0
  %7264 = vst.msk [vmem:[%s7261 + $0x50] sm:$0xf] %vm7230, 0
  %7265 = vst.msk [vmem:[%s7261 + $0x78] sm:$0xf] %vm7230, 0
  %7266 = vst.msk [vmem:[%s7261 + $0xa0] sm:$0xf] %vm7230, 0
  %7267 = vst.msk [vmem:[%s7261 + $0xc8] sm:$0xf] %vm7230, 0
  %7268 = vst.msk [vmem:[%s7261 + $0xf0] sm:$0xf] %vm7230, 0
  %7269 = vst.msk [vmem:[%s7261 + $0x118] sm:$0xf] %vm7230, 0
  %s7270 = scalar_lea.vmem [#allocation3], 44
  %7271 = vst.msk [vmem:[%s7270] sm:$0xf] %vm7230, %v7166
  %7272 = vst.msk [vmem:[%s7270 + $0x4] sm:$0xf] %vm7230, %v7167
  %7273 = vst.msk [vmem:[%s7270 + $0x8] sm:$0xf] %vm7230, %v7168
  %7274 = vst.msk [vmem:[%s7270 + $0xc] sm:$0xf] %vm7230, %v7169
  %7275 = vst.msk [vmem:[%s7270 + $0x10] sm:$0xf] %vm7230, %v7170
  %7276 = vst.msk [vmem:[%s7270 + $0x14] sm:$0xf] %vm7230, %v7171
  %7277 = vst.msk [vmem:[%s7270 + $0x18] sm:$0xf] %vm7230, %v7172
  %7278 = vst.msk [vmem:[%s7270 + $0x1c] sm:$0xf] %vm7230, %v7173
  %7279 = vst.msk [vmem:[%s7270 + $0x28] sm:$0xf] %vm7230, %v7174
  %7280 = vst.msk [vmem:[%s7270 + $0x2c] sm:$0xf] %vm7230, %v7175
  %7281 = vst.msk [vmem:[%s7270 + $0x30] sm:$0xf] %vm7230, %v7176
  %7282 = vst.msk [vmem:[%s7270 + $0x34] sm:$0xf] %vm7230, %v7177
  %7283 = vst.msk [vmem:[%s7270 + $0x38] sm:$0xf] %vm7230, %v7178
  %7284 = vst.msk [vmem:[%s7270 + $0x3c] sm:$0xf] %vm7230, %v7179
  %7285 = vst.msk [vmem:[%s7270 + $0x40] sm:$0xf] %vm7230, %v7180
  %7286 = vst.msk [vmem:[%s7270 + $0x44] sm:$0xf] %vm7230, %v7181
  %7287 = vst.msk [vmem:[%s7270 + $0x50] sm:$0xf] %vm7230, %v7182
  %7288 = vst.msk [vmem:[%s7270 + $0x54] sm:$0xf] %vm7230, %v7183
  %7289 = vst.msk [vmem:[%s7270 + $0x58] sm:$0xf] %vm7230, %v7184
  %7290 = vst.msk [vmem:[%s7270 + $0x5c] sm:$0xf] %vm7230, %v7185
  %7291 = vst.msk [vmem:[%s7270 + $0x60] sm:$0xf] %vm7230, %v7186
  %7292 = vst.msk [vmem:[%s7270 + $0x64] sm:$0xf] %vm7230, %v7187
  %7293 = vst.msk [vmem:[%s7270 + $0x68] sm:$0xf] %vm7230, %v7188
  %7294 = vst.msk [vmem:[%s7270 + $0x6c] sm:$0xf] %vm7230, %v7189
  %7295 = vst.msk [vmem:[%s7270 + $0x78] sm:$0xf] %vm7230, %v7190
  %7296 = vst.msk [vmem:[%s7270 + $0x7c] sm:$0xf] %vm7230, %v7191
  %7297 = vst.msk [vmem:[%s7270 + $0x80] sm:$0xf] %vm7230, %v7192
  %7298 = vst.msk [vmem:[%s7270 + $0x84] sm:$0xf] %vm7230, %v7193
  %7299 = vst.msk [vmem:[%s7270 + $0x88] sm:$0xf] %vm7230, %v7194
  %7300 = vst.msk [vmem:[%s7270 + $0x8c] sm:$0xf] %vm7230, %v7195
  %7301 = vst.msk [vmem:[%s7270 + $0x90] sm:$0xf] %vm7230, %v7196
  %7302 = vst.msk [vmem:[%s7270 + $0x94] sm:$0xf] %vm7230, %v7197
  %7303 = vst.msk [vmem:[%s7270 + $0xa0] sm:$0xf] %vm7230, %v7198
  %7304 = vst.msk [vmem:[%s7270 + $0xa4] sm:$0xf] %vm7230, %v7199
  %7305 = vst.msk [vmem:[%s7270 + $0xa8] sm:$0xf] %vm7230, %v7200
  %7306 = vst.msk [vmem:[%s7270 + $0xac] sm:$0xf] %vm7230, %v7201
  %7307 = vst.msk [vmem:[%s7270 + $0xb0] sm:$0xf] %vm7230, %v7202
  %7308 = vst.msk [vmem:[%s7270 + $0xb4] sm:$0xf] %vm7230, %v7203
  %7309 = vst.msk [vmem:[%s7270 + $0xb8] sm:$0xf] %vm7230, %v7204
  %7310 = vst.msk [vmem:[%s7270 + $0xbc] sm:$0xf] %vm7230, %v7205
  %7311 = vst.msk [vmem:[%s7270 + $0xc8] sm:$0xf] %vm7230, %v7206
  %7312 = vst.msk [vmem:[%s7270 + $0xcc] sm:$0xf] %vm7230, %v7207
  %7313 = vst.msk [vmem:[%s7270 + $0xd0] sm:$0xf] %vm7230, %v7208
  %7314 = vst.msk [vmem:[%s7270 + $0xd4] sm:$0xf] %vm7230, %v7209
  %7315 = vst.msk [vmem:[%s7270 + $0xd8] sm:$0xf] %vm7230, %v7210
  %7316 = vst.msk [vmem:[%s7270 + $0xdc] sm:$0xf] %vm7230, %v7211
  %7317 = vst.msk [vmem:[%s7270 + $0xe0] sm:$0xf] %vm7230, %v7212
  %7318 = vst.msk [vmem:[%s7270 + $0xe4] sm:$0xf] %vm7230, %v7213
  %7319 = vst.msk [vmem:[%s7270 + $0xf0] sm:$0xf] %vm7230, %v7214
  %7320 = vst.msk [vmem:[%s7270 + $0xf4] sm:$0xf] %vm7230, %v7215
  %7321 = vst.msk [vmem:[%s7270 + $0xf8] sm:$0xf] %vm7230, %v7216
  %7322 = vst.msk [vmem:[%s7270 + $0xfc] sm:$0xf] %vm7230, %v7217
  %7323 = vst.msk [vmem:[%s7270 + $0x100] sm:$0xf] %vm7230, %v7218
  %7324 = vst.msk [vmem:[%s7270 + $0x104] sm:$0xf] %vm7230, %v7219
  %7325 = vst.msk [vmem:[%s7270 + $0x108] sm:$0xf] %vm7230, %v7220
  %7326 = vst.msk [vmem:[%s7270 + $0x10c] sm:$0xf] %vm7230, %v7221
  %7327 = vst.msk [vmem:[%s7270 + $0x118] sm:$0xf] %vm7230, %v7222
  %7328 = vst.msk [vmem:[%s7270 + $0x11c] sm:$0xf] %vm7230, %v7223
  %7329 = vst.msk [vmem:[%s7270 + $0x120] sm:$0xf] %vm7230, %v7224
  %7330 = vst.msk [vmem:[%s7270 + $0x124] sm:$0xf] %vm7230, %v7225
  %7331 = vst.msk [vmem:[%s7270 + $0x128] sm:$0xf] %vm7230, %v7226
  %7332 = vst.msk [vmem:[%s7270 + $0x12c] sm:$0xf] %vm7230, %v7227
  %7333 = vst.msk [vmem:[%s7270 + $0x130] sm:$0xf] %vm7230, %v7228
  %7334 = vst.msk [vmem:[%s7270 + $0x134] sm:$0xf] %vm7230, %v7229
  %v7335 = vld [vmem:[#allocation3] sm:$0xf]
  %v7336 = vld [vmem:[#allocation3 + $0x4] sm:$0xf]
  %v7337 = vld [vmem:[#allocation3 + $0x8] sm:$0xf]
  %v7338 = vld [vmem:[#allocation3 + $0xc] sm:$0xf]
  %v7339 = vld [vmem:[#allocation3 + $0x10] sm:$0xf]
  %v7340 = vld [vmem:[#allocation3 + $0x14] sm:$0xf]
  %v7341 = vld [vmem:[#allocation3 + $0x18] sm:$0xf]
  %v7342 = vld [vmem:[#allocation3 + $0x1c] sm:$0xf]
  %v7343 = vld [vmem:[#allocation3 + $0x28] sm:$0xf]
  %v7344 = vld [vmem:[#allocation3 + $0x2c] sm:$0xf]
  %v7345 = vld [vmem:[#allocation3 + $0x30] sm:$0xf]
  %v7346 = vld [vmem:[#allocation3 + $0x34] sm:$0xf]
  %v7347 = vld [vmem:[#allocation3 + $0x38] sm:$0xf]
  %v7348 = vld [vmem:[#allocation3 + $0x3c] sm:$0xf]
  %v7349 = vld [vmem:[#allocation3 + $0x40] sm:$0xf]
  %v7350 = vld [vmem:[#allocation3 + $0x44] sm:$0xf]
  %v7351 = vld [vmem:[#allocation3 + $0x50] sm:$0xf]
  %v7352 = vld [vmem:[#allocation3 + $0x54] sm:$0xf]
  %v7353 = vld [vmem:[#allocation3 + $0x58] sm:$0xf]
  %v7354 = vld [vmem:[#allocation3 + $0x5c] sm:$0xf]
  %v7355 = vld [vmem:[#allocation3 + $0x60] sm:$0xf]
  %v7356 = vld [vmem:[#allocation3 + $0x64] sm:$0xf]
  %v7357 = vld [vmem:[#allocation3 + $0x68] sm:$0xf]
  %v7358 = vld [vmem:[#allocation3 + $0x6c] sm:$0xf]
  %v7359 = vld [vmem:[#allocation3 + $0x78] sm:$0xf]
  %v7360 = vld [vmem:[#allocation3 + $0x7c] sm:$0xf]
  %v7361 = vld [vmem:[#allocation3 + $0x80] sm:$0xf]
  %v7362 = vld [vmem:[#allocation3 + $0x84] sm:$0xf]
  %v7363 = vld [vmem:[#allocation3 + $0x88] sm:$0xf]
  %v7364 = vld [vmem:[#allocation3 + $0x8c] sm:$0xf]
  %v7365 = vld [vmem:[#allocation3 + $0x90] sm:$0xf]
  %v7366 = vld [vmem:[#allocation3 + $0x94] sm:$0xf]
  %v7367 = vld [vmem:[#allocation3 + $0xa0] sm:$0xf]
  %v7368 = vld [vmem:[#allocation3 + $0xa4] sm:$0xf]
  %v7369 = vld [vmem:[#allocation3 + $0xa8] sm:$0xf]
  %v7370 = vld [vmem:[#allocation3 + $0xac] sm:$0xf]
  %v7371 = vld [vmem:[#allocation3 + $0xb0] sm:$0xf]
  %v7372 = vld [vmem:[#allocation3 + $0xb4] sm:$0xf]
  %v7373 = vld [vmem:[#allocation3 + $0xb8] sm:$0xf]
  %v7374 = vld [vmem:[#allocation3 + $0xbc] sm:$0xf]
  %v7375 = vld [vmem:[#allocation3 + $0xc8] sm:$0xf]
  %v7376 = vld [vmem:[#allocation3 + $0xcc] sm:$0xf]
  %v7377 = vld [vmem:[#allocation3 + $0xd0] sm:$0xf]
  %v7378 = vld [vmem:[#allocation3 + $0xd4] sm:$0xf]
  %v7379 = vld [vmem:[#allocation3 + $0xd8] sm:$0xf]
  %v7380 = vld [vmem:[#allocation3 + $0xdc] sm:$0xf]
  %v7381 = vld [vmem:[#allocation3 + $0xe0] sm:$0xf]
  %v7382 = vld [vmem:[#allocation3 + $0xe4] sm:$0xf]
  %v7383 = vld [vmem:[#allocation3 + $0xf0] sm:$0xf]
  %v7384 = vld [vmem:[#allocation3 + $0xf4] sm:$0xf]
  %v7385 = vld [vmem:[#allocation3 + $0xf8] sm:$0xf]
  %v7386 = vld [vmem:[#allocation3 + $0xfc] sm:$0xf]
  %v7387 = vld [vmem:[#allocation3 + $0x100] sm:$0xf]
  %v7388 = vld [vmem:[#allocation3 + $0x104] sm:$0xf]
  %v7389 = vld [vmem:[#allocation3 + $0x108] sm:$0xf]
  %v7390 = vld [vmem:[#allocation3 + $0x10c] sm:$0xf]
  %v7391 = vld [vmem:[#allocation3 + $0x118] sm:$0xf]
  %v7392 = vld [vmem:[#allocation3 + $0x11c] sm:$0xf]
  %v7393 = vld [vmem:[#allocation3 + $0x120] sm:$0xf]
  %v7394 = vld [vmem:[#allocation3 + $0x124] sm:$0xf]
  %v7395 = vld [vmem:[#allocation3 + $0x128] sm:$0xf]
  %v7396 = vld [vmem:[#allocation3 + $0x12c] sm:$0xf]
  %v7397 = vld [vmem:[#allocation3 + $0x130] sm:$0xf]
  %v7398 = vld [vmem:[#allocation3 + $0x134] sm:$0xf]
  %s7399 = scalar_lea.vmem [#allocation3], 4
  %v7400 = vld [vmem:[%s7399] sm:$0xf]
  %v7401 = vld [vmem:[%s7399 + $0x4] sm:$0xf]
  %v7402 = vld [vmem:[%s7399 + $0x8] sm:$0xf]
  %v7403 = vld [vmem:[%s7399 + $0xc] sm:$0xf]
  %v7404 = vld [vmem:[%s7399 + $0x10] sm:$0xf]
  %v7405 = vld [vmem:[%s7399 + $0x14] sm:$0xf]
  %v7406 = vld [vmem:[%s7399 + $0x18] sm:$0xf]
  %v7407 = vld [vmem:[%s7399 + $0x1c] sm:$0xf]
  %v7408 = vld [vmem:[%s7399 + $0x28] sm:$0xf]
  %v7409 = vld [vmem:[%s7399 + $0x2c] sm:$0xf]
  %v7410 = vld [vmem:[%s7399 + $0x30] sm:$0xf]
  %v7411 = vld [vmem:[%s7399 + $0x34] sm:$0xf]
  %v7412 = vld [vmem:[%s7399 + $0x38] sm:$0xf]
  %v7413 = vld [vmem:[%s7399 + $0x3c] sm:$0xf]
  %v7414 = vld [vmem:[%s7399 + $0x40] sm:$0xf]
  %v7415 = vld [vmem:[%s7399 + $0x44] sm:$0xf]
  %v7416 = vld [vmem:[%s7399 + $0x50] sm:$0xf]
  %v7417 = vld [vmem:[%s7399 + $0x54] sm:$0xf]
  %v7418 = vld [vmem:[%s7399 + $0x58] sm:$0xf]
  %v7419 = vld [vmem:[%s7399 + $0x5c] sm:$0xf]
  %v7420 = vld [vmem:[%s7399 + $0x60] sm:$0xf]
  %v7421 = vld [vmem:[%s7399 + $0x64] sm:$0xf]
  %v7422 = vld [vmem:[%s7399 + $0x68] sm:$0xf]
  %v7423 = vld [vmem:[%s7399 + $0x6c] sm:$0xf]
  %v7424 = vld [vmem:[%s7399 + $0x78] sm:$0xf]
  %v7425 = vld [vmem:[%s7399 + $0x7c] sm:$0xf]
  %v7426 = vld [vmem:[%s7399 + $0x80] sm:$0xf]
  %v7427 = vld [vmem:[%s7399 + $0x84] sm:$0xf]
  %v7428 = vld [vmem:[%s7399 + $0x88] sm:$0xf]
  %v7429 = vld [vmem:[%s7399 + $0x8c] sm:$0xf]
  %v7430 = vld [vmem:[%s7399 + $0x90] sm:$0xf]
  %v7431 = vld [vmem:[%s7399 + $0x94] sm:$0xf]
  %v7432 = vld [vmem:[%s7399 + $0xa0] sm:$0xf]
  %v7433 = vld [vmem:[%s7399 + $0xa4] sm:$0xf]
  %v7434 = vld [vmem:[%s7399 + $0xa8] sm:$0xf]
  %v7435 = vld [vmem:[%s7399 + $0xac] sm:$0xf]
  %v7436 = vld [vmem:[%s7399 + $0xb0] sm:$0xf]
  %v7437 = vld [vmem:[%s7399 + $0xb4] sm:$0xf]
  %v7438 = vld [vmem:[%s7399 + $0xb8] sm:$0xf]
  %v7439 = vld [vmem:[%s7399 + $0xbc] sm:$0xf]
  %v7440 = vld [vmem:[%s7399 + $0xc8] sm:$0xf]
  %v7441 = vld [vmem:[%s7399 + $0xcc] sm:$0xf]
  %v7442 = vld [vmem:[%s7399 + $0xd0] sm:$0xf]
  %v7443 = vld [vmem:[%s7399 + $0xd4] sm:$0xf]
  %v7444 = vld [vmem:[%s7399 + $0xd8] sm:$0xf]
  %v7445 = vld [vmem:[%s7399 + $0xdc] sm:$0xf]
  %v7446 = vld [vmem:[%s7399 + $0xe0] sm:$0xf]
  %v7447 = vld [vmem:[%s7399 + $0xe4] sm:$0xf]
  %v7448 = vld [vmem:[%s7399 + $0xf0] sm:$0xf]
  %v7449 = vld [vmem:[%s7399 + $0xf4] sm:$0xf]
  %v7450 = vld [vmem:[%s7399 + $0xf8] sm:$0xf]
  %v7451 = vld [vmem:[%s7399 + $0xfc] sm:$0xf]
  %v7452 = vld [vmem:[%s7399 + $0x100] sm:$0xf]
  %v7453 = vld [vmem:[%s7399 + $0x104] sm:$0xf]
  %v7454 = vld [vmem:[%s7399 + $0x108] sm:$0xf]
  %v7455 = vld [vmem:[%s7399 + $0x10c] sm:$0xf]
  %v7456 = vld [vmem:[%s7399 + $0x118] sm:$0xf]
  %v7457 = vld [vmem:[%s7399 + $0x11c] sm:$0xf]
  %v7458 = vld [vmem:[%s7399 + $0x120] sm:$0xf]
  %v7459 = vld [vmem:[%s7399 + $0x124] sm:$0xf]
  %v7460 = vld [vmem:[%s7399 + $0x128] sm:$0xf]
  %v7461 = vld [vmem:[%s7399 + $0x12c] sm:$0xf]
  %v7462 = vld [vmem:[%s7399 + $0x130] sm:$0xf]
  %v7463 = vld [vmem:[%s7399 + $0x134] sm:$0xf]
  %s7464 = scalar_lea.vmem [#allocation3], 8
  %v7465 = vld [vmem:[%s7464] sm:$0xf]
  %v7466 = vld [vmem:[%s7464 + $0x4] sm:$0xf]
  %v7467 = vld [vmem:[%s7464 + $0x8] sm:$0xf]
  %v7468 = vld [vmem:[%s7464 + $0xc] sm:$0xf]
  %v7469 = vld [vmem:[%s7464 + $0x10] sm:$0xf]
  %v7470 = vld [vmem:[%s7464 + $0x14] sm:$0xf]
  %v7471 = vld [vmem:[%s7464 + $0x18] sm:$0xf]
  %v7472 = vld [vmem:[%s7464 + $0x1c] sm:$0xf]
  %v7473 = vld [vmem:[%s7464 + $0x28] sm:$0xf]
  %v7474 = vld [vmem:[%s7464 + $0x2c] sm:$0xf]
  %v7475 = vld [vmem:[%s7464 + $0x30] sm:$0xf]
  %v7476 = vld [vmem:[%s7464 + $0x34] sm:$0xf]
  %v7477 = vld [vmem:[%s7464 + $0x38] sm:$0xf]
  %v7478 = vld [vmem:[%s7464 + $0x3c] sm:$0xf]
  %v7479 = vld [vmem:[%s7464 + $0x40] sm:$0xf]
  %v7480 = vld [vmem:[%s7464 + $0x44] sm:$0xf]
  %v7481 = vld [vmem:[%s7464 + $0x50] sm:$0xf]
  %v7482 = vld [vmem:[%s7464 + $0x54] sm:$0xf]
  %v7483 = vld [vmem:[%s7464 + $0x58] sm:$0xf]
  %v7484 = vld [vmem:[%s7464 + $0x5c] sm:$0xf]
  %v7485 = vld [vmem:[%s7464 + $0x60] sm:$0xf]
  %v7486 = vld [vmem:[%s7464 + $0x64] sm:$0xf]
  %v7487 = vld [vmem:[%s7464 + $0x68] sm:$0xf]
  %v7488 = vld [vmem:[%s7464 + $0x6c] sm:$0xf]
  %v7489 = vld [vmem:[%s7464 + $0x78] sm:$0xf]
  %v7490 = vld [vmem:[%s7464 + $0x7c] sm:$0xf]
  %v7491 = vld [vmem:[%s7464 + $0x80] sm:$0xf]
  %v7492 = vld [vmem:[%s7464 + $0x84] sm:$0xf]
  %v7493 = vld [vmem:[%s7464 + $0x88] sm:$0xf]
  %v7494 = vld [vmem:[%s7464 + $0x8c] sm:$0xf]
  %v7495 = vld [vmem:[%s7464 + $0x90] sm:$0xf]
  %v7496 = vld [vmem:[%s7464 + $0x94] sm:$0xf]
  %v7497 = vld [vmem:[%s7464 + $0xa0] sm:$0xf]
  %v7498 = vld [vmem:[%s7464 + $0xa4] sm:$0xf]
  %v7499 = vld [vmem:[%s7464 + $0xa8] sm:$0xf]
  %v7500 = vld [vmem:[%s7464 + $0xac] sm:$0xf]
  %v7501 = vld [vmem:[%s7464 + $0xb0] sm:$0xf]
  %v7502 = vld [vmem:[%s7464 + $0xb4] sm:$0xf]
  %v7503 = vld [vmem:[%s7464 + $0xb8] sm:$0xf]
  %v7504 = vld [vmem:[%s7464 + $0xbc] sm:$0xf]
  %v7505 = vld [vmem:[%s7464 + $0xc8] sm:$0xf]
  %v7506 = vld [vmem:[%s7464 + $0xcc] sm:$0xf]
  %v7507 = vld [vmem:[%s7464 + $0xd0] sm:$0xf]
  %v7508 = vld [vmem:[%s7464 + $0xd4] sm:$0xf]
  %v7509 = vld [vmem:[%s7464 + $0xd8] sm:$0xf]
  %v7510 = vld [vmem:[%s7464 + $0xdc] sm:$0xf]
  %v7511 = vld [vmem:[%s7464 + $0xe0] sm:$0xf]
  %v7512 = vld [vmem:[%s7464 + $0xe4] sm:$0xf]
  %v7513 = vld [vmem:[%s7464 + $0xf0] sm:$0xf]
  %v7514 = vld [vmem:[%s7464 + $0xf4] sm:$0xf]
  %v7515 = vld [vmem:[%s7464 + $0xf8] sm:$0xf]
  %v7516 = vld [vmem:[%s7464 + $0xfc] sm:$0xf]
  %v7517 = vld [vmem:[%s7464 + $0x100] sm:$0xf]
  %v7518 = vld [vmem:[%s7464 + $0x104] sm:$0xf]
  %v7519 = vld [vmem:[%s7464 + $0x108] sm:$0xf]
  %v7520 = vld [vmem:[%s7464 + $0x10c] sm:$0xf]
  %v7521 = vld [vmem:[%s7464 + $0x118] sm:$0xf]
  %v7522 = vld [vmem:[%s7464 + $0x11c] sm:$0xf]
  %v7523 = vld [vmem:[%s7464 + $0x120] sm:$0xf]
  %v7524 = vld [vmem:[%s7464 + $0x124] sm:$0xf]
  %v7525 = vld [vmem:[%s7464 + $0x128] sm:$0xf]
  %v7526 = vld [vmem:[%s7464 + $0x12c] sm:$0xf]
  %v7527 = vld [vmem:[%s7464 + $0x130] sm:$0xf]
  %v7528 = vld [vmem:[%s7464 + $0x134] sm:$0xf]
  %v7529 = vld [vmem:[%s7252] sm:$0xf]
  %v7530 = vld [vmem:[%s7252 + $0x4] sm:$0xf]
  %v7531 = vld [vmem:[%s7252 + $0x8] sm:$0xf]
  %v7532 = vld [vmem:[%s7252 + $0xc] sm:$0xf]
  %v7533 = vld [vmem:[%s7252 + $0x10] sm:$0xf]
  %v7534 = vld [vmem:[%s7252 + $0x14] sm:$0xf]
  %v7535 = vld [vmem:[%s7252 + $0x18] sm:$0xf]
  %v7536 = vld [vmem:[%s7252 + $0x1c] sm:$0xf]
  %v7537 = vld [vmem:[%s7252 + $0x28] sm:$0xf]
  %v7538 = vld [vmem:[%s7252 + $0x2c] sm:$0xf]
  %v7539 = vld [vmem:[%s7252 + $0x30] sm:$0xf]
  %v7540 = vld [vmem:[%s7252 + $0x34] sm:$0xf]
  %v7541 = vld [vmem:[%s7252 + $0x38] sm:$0xf]
  %v7542 = vld [vmem:[%s7252 + $0x3c] sm:$0xf]
  %v7543 = vld [vmem:[%s7252 + $0x40] sm:$0xf]
  %v7544 = vld [vmem:[%s7252 + $0x44] sm:$0xf]
  %v7545 = vld [vmem:[%s7252 + $0x50] sm:$0xf]
  %v7546 = vld [vmem:[%s7252 + $0x54] sm:$0xf]
  %v7547 = vld [vmem:[%s7252 + $0x58] sm:$0xf]
  %v7548 = vld [vmem:[%s7252 + $0x5c] sm:$0xf]
  %v7549 = vld [vmem:[%s7252 + $0x60] sm:$0xf]
  %v7550 = vld [vmem:[%s7252 + $0x64] sm:$0xf]
  %v7551 = vld [vmem:[%s7252 + $0x68] sm:$0xf]
  %v7552 = vld [vmem:[%s7252 + $0x6c] sm:$0xf]
  %v7553 = vld [vmem:[%s7252 + $0x78] sm:$0xf]
  %v7554 = vld [vmem:[%s7252 + $0x7c] sm:$0xf]
  %v7555 = vld [vmem:[%s7252 + $0x80] sm:$0xf]
  %v7556 = vld [vmem:[%s7252 + $0x84] sm:$0xf]
  %v7557 = vld [vmem:[%s7252 + $0x88] sm:$0xf]
  %v7558 = vld [vmem:[%s7252 + $0x8c] sm:$0xf]
  %v7559 = vld [vmem:[%s7252 + $0x90] sm:$0xf]
  %v7560 = vld [vmem:[%s7252 + $0x94] sm:$0xf]
  %v7561 = vld [vmem:[%s7252 + $0xa0] sm:$0xf]
  %v7562 = vld [vmem:[%s7252 + $0xa4] sm:$0xf]
  %v7563 = vld [vmem:[%s7252 + $0xa8] sm:$0xf]
  %v7564 = vld [vmem:[%s7252 + $0xac] sm:$0xf]
  %v7565 = vld [vmem:[%s7252 + $0xb0] sm:$0xf]
  %v7566 = vld [vmem:[%s7252 + $0xb4] sm:$0xf]
  %v7567 = vld [vmem:[%s7252 + $0xb8] sm:$0xf]
  %v7568 = vld [vmem:[%s7252 + $0xbc] sm:$0xf]
  %v7569 = vld [vmem:[%s7252 + $0xc8] sm:$0xf]
  %v7570 = vld [vmem:[%s7252 + $0xcc] sm:$0xf]
  %v7571 = vld [vmem:[%s7252 + $0xd0] sm:$0xf]
  %v7572 = vld [vmem:[%s7252 + $0xd4] sm:$0xf]
  %v7573 = vld [vmem:[%s7252 + $0xd8] sm:$0xf]
  %v7574 = vld [vmem:[%s7252 + $0xdc] sm:$0xf]
  %v7575 = vld [vmem:[%s7252 + $0xe0] sm:$0xf]
  %v7576 = vld [vmem:[%s7252 + $0xe4] sm:$0xf]
  %v7577 = vld [vmem:[%s7252 + $0xf0] sm:$0xf]
  %v7578 = vld [vmem:[%s7252 + $0xf4] sm:$0xf]
  %v7579 = vld [vmem:[%s7252 + $0xf8] sm:$0xf]
  %v7580 = vld [vmem:[%s7252 + $0xfc] sm:$0xf]
  %v7581 = vld [vmem:[%s7252 + $0x100] sm:$0xf]
  %v7582 = vld [vmem:[%s7252 + $0x104] sm:$0xf]
  %v7583 = vld [vmem:[%s7252 + $0x108] sm:$0xf]
  %v7584 = vld [vmem:[%s7252 + $0x10c] sm:$0xf]
  %v7585 = vld [vmem:[%s7252 + $0x118] sm:$0xf]
  %v7586 = vld [vmem:[%s7252 + $0x11c] sm:$0xf]
  %v7587 = vld [vmem:[%s7252 + $0x120] sm:$0xf]
  %v7588 = vld [vmem:[%s7252 + $0x124] sm:$0xf]
  %v7589 = vld [vmem:[%s7252 + $0x128] sm:$0xf]
  %v7590 = vld [vmem:[%s7252 + $0x12c] sm:$0xf]
  %v7591 = vld [vmem:[%s7252 + $0x130] sm:$0xf]
  %v7592 = vld [vmem:[%s7252 + $0x134] sm:$0xf]
  %v7593 = vld [vmem:[%s7270] sm:$0xf]
  %v7594 = vld [vmem:[%s7270 + $0x4] sm:$0xf]
  %v7595 = vld [vmem:[%s7270 + $0x8] sm:$0xf]
  %v7596 = vld [vmem:[%s7270 + $0xc] sm:$0xf]
  %v7597 = vld [vmem:[%s7270 + $0x10] sm:$0xf]
  %v7598 = vld [vmem:[%s7270 + $0x14] sm:$0xf]
  %v7599 = vld [vmem:[%s7270 + $0x18] sm:$0xf]
  %v7600 = vld [vmem:[%s7270 + $0x1c] sm:$0xf]
  %v7601 = vld [vmem:[%s7270 + $0x28] sm:$0xf]
  %v7602 = vld [vmem:[%s7270 + $0x2c] sm:$0xf]
  %v7603 = vld [vmem:[%s7270 + $0x30] sm:$0xf]
  %v7604 = vld [vmem:[%s7270 + $0x34] sm:$0xf]
  %v7605 = vld [vmem:[%s7270 + $0x38] sm:$0xf]
  %v7606 = vld [vmem:[%s7270 + $0x3c] sm:$0xf]
  %v7607 = vld [vmem:[%s7270 + $0x40] sm:$0xf]
  %v7608 = vld [vmem:[%s7270 + $0x44] sm:$0xf]
  %v7609 = vld [vmem:[%s7270 + $0x50] sm:$0xf]
  %v7610 = vld [vmem:[%s7270 + $0x54] sm:$0xf]
  %v7611 = vld [vmem:[%s7270 + $0x58] sm:$0xf]
  %v7612 = vld [vmem:[%s7270 + $0x5c] sm:$0xf]
  %v7613 = vld [vmem:[%s7270 + $0x60] sm:$0xf]
  %v7614 = vld [vmem:[%s7270 + $0x64] sm:$0xf]
  %v7615 = vld [vmem:[%s7270 + $0x68] sm:$0xf]
  %v7616 = vld [vmem:[%s7270 + $0x6c] sm:$0xf]
  %v7617 = vld [vmem:[%s7270 + $0x78] sm:$0xf]
  %v7618 = vld [vmem:[%s7270 + $0x7c] sm:$0xf]
  %v7619 = vld [vmem:[%s7270 + $0x80] sm:$0xf]
  %v7620 = vld [vmem:[%s7270 + $0x84] sm:$0xf]
  %v7621 = vld [vmem:[%s7270 + $0x88] sm:$0xf]
  %v7622 = vld [vmem:[%s7270 + $0x8c] sm:$0xf]
  %v7623 = vld [vmem:[%s7270 + $0x90] sm:$0xf]
  %v7624 = vld [vmem:[%s7270 + $0x94] sm:$0xf]
  %v7625 = vld [vmem:[%s7270 + $0xa0] sm:$0xf]
  %v7626 = vld [vmem:[%s7270 + $0xa4] sm:$0xf]
  %v7627 = vld [vmem:[%s7270 + $0xa8] sm:$0xf]
  %v7628 = vld [vmem:[%s7270 + $0xac] sm:$0xf]
  %v7629 = vld [vmem:[%s7270 + $0xb0] sm:$0xf]
  %v7630 = vld [vmem:[%s7270 + $0xb4] sm:$0xf]
  %v7631 = vld [vmem:[%s7270 + $0xb8] sm:$0xf]
  %v7632 = vld [vmem:[%s7270 + $0xbc] sm:$0xf]
  %v7633 = vld [vmem:[%s7270 + $0xc8] sm:$0xf]
  %v7634 = vld [vmem:[%s7270 + $0xcc] sm:$0xf]
  %v7635 = vld [vmem:[%s7270 + $0xd0] sm:$0xf]
  %v7636 = vld [vmem:[%s7270 + $0xd4] sm:$0xf]
  %v7637 = vld [vmem:[%s7270 + $0xd8] sm:$0xf]
  %v7638 = vld [vmem:[%s7270 + $0xdc] sm:$0xf]
  %v7639 = vld [vmem:[%s7270 + $0xe0] sm:$0xf]
  %v7640 = vld [vmem:[%s7270 + $0xe4] sm:$0xf]
  %v7641 = vld [vmem:[%s7270 + $0xf0] sm:$0xf]
  %v7642 = vld [vmem:[%s7270 + $0xf4] sm:$0xf]
  %v7643 = vld [vmem:[%s7270 + $0xf8] sm:$0xf]
  %v7644 = vld [vmem:[%s7270 + $0xfc] sm:$0xf]
  %v7645 = vld [vmem:[%s7270 + $0x100] sm:$0xf]
  %v7646 = vld [vmem:[%s7270 + $0x104] sm:$0xf]
  %v7647 = vld [vmem:[%s7270 + $0x108] sm:$0xf]
  %v7648 = vld [vmem:[%s7270 + $0x10c] sm:$0xf]
  %v7649 = vld [vmem:[%s7270 + $0x118] sm:$0xf]
  %v7650 = vld [vmem:[%s7270 + $0x11c] sm:$0xf]
  %v7651 = vld [vmem:[%s7270 + $0x120] sm:$0xf]
  %v7652 = vld [vmem:[%s7270 + $0x124] sm:$0xf]
  %v7653 = vld [vmem:[%s7270 + $0x128] sm:$0xf]
  %v7654 = vld [vmem:[%s7270 + $0x12c] sm:$0xf]
  %v7655 = vld [vmem:[%s7270 + $0x130] sm:$0xf]
  %v7656 = vld [vmem:[%s7270 + $0x134] sm:$0xf]
  %s7657 = scalar_lea.vmem [#allocation3], 48
  %v7658 = vld [vmem:[%s7657] sm:$0xf]
  %v7659 = vld [vmem:[%s7657 + $0x4] sm:$0xf]
  %v7660 = vld [vmem:[%s7657 + $0x8] sm:$0xf]
  %v7661 = vld [vmem:[%s7657 + $0xc] sm:$0xf]
  %v7662 = vld [vmem:[%s7657 + $0x10] sm:$0xf]
  %v7663 = vld [vmem:[%s7657 + $0x14] sm:$0xf]
  %v7664 = vld [vmem:[%s7657 + $0x18] sm:$0xf]
  %v7665 = vld [vmem:[%s7657 + $0x1c] sm:$0xf]
  %v7666 = vld [vmem:[%s7657 + $0x28] sm:$0xf]
  %v7667 = vld [vmem:[%s7657 + $0x2c] sm:$0xf]
  %v7668 = vld [vmem:[%s7657 + $0x30] sm:$0xf]
  %v7669 = vld [vmem:[%s7657 + $0x34] sm:$0xf]
  %v7670 = vld [vmem:[%s7657 + $0x38] sm:$0xf]
  %v7671 = vld [vmem:[%s7657 + $0x3c] sm:$0xf]
  %v7672 = vld [vmem:[%s7657 + $0x40] sm:$0xf]
  %v7673 = vld [vmem:[%s7657 + $0x44] sm:$0xf]
  %v7674 = vld [vmem:[%s7657 + $0x50] sm:$0xf]
  %v7675 = vld [vmem:[%s7657 + $0x54] sm:$0xf]
  %v7676 = vld [vmem:[%s7657 + $0x58] sm:$0xf]
  %v7677 = vld [vmem:[%s7657 + $0x5c] sm:$0xf]
  %v7678 = vld [vmem:[%s7657 + $0x60] sm:$0xf]
  %v7679 = vld [vmem:[%s7657 + $0x64] sm:$0xf]
  %v7680 = vld [vmem:[%s7657 + $0x68] sm:$0xf]
  %v7681 = vld [vmem:[%s7657 + $0x6c] sm:$0xf]
  %v7682 = vld [vmem:[%s7657 + $0x78] sm:$0xf]
  %v7683 = vld [vmem:[%s7657 + $0x7c] sm:$0xf]
  %v7684 = vld [vmem:[%s7657 + $0x80] sm:$0xf]
  %v7685 = vld [vmem:[%s7657 + $0x84] sm:$0xf]
  %v7686 = vld [vmem:[%s7657 + $0x88] sm:$0xf]
  %v7687 = vld [vmem:[%s7657 + $0x8c] sm:$0xf]
  %v7688 = vld [vmem:[%s7657 + $0x90] sm:$0xf]
  %v7689 = vld [vmem:[%s7657 + $0x94] sm:$0xf]
  %v7690 = vld [vmem:[%s7657 + $0xa0] sm:$0xf]
  %v7691 = vld [vmem:[%s7657 + $0xa4] sm:$0xf]
  %v7692 = vld [vmem:[%s7657 + $0xa8] sm:$0xf]
  %v7693 = vld [vmem:[%s7657 + $0xac] sm:$0xf]
  %v7694 = vld [vmem:[%s7657 + $0xb0] sm:$0xf]
  %v7695 = vld [vmem:[%s7657 + $0xb4] sm:$0xf]
  %v7696 = vld [vmem:[%s7657 + $0xb8] sm:$0xf]
  %v7697 = vld [vmem:[%s7657 + $0xbc] sm:$0xf]
  %v7698 = vld [vmem:[%s7657 + $0xc8] sm:$0xf]
  %v7699 = vld [vmem:[%s7657 + $0xcc] sm:$0xf]
  %v7700 = vld [vmem:[%s7657 + $0xd0] sm:$0xf]
  %v7701 = vld [vmem:[%s7657 + $0xd4] sm:$0xf]
  %v7702 = vld [vmem:[%s7657 + $0xd8] sm:$0xf]
  %v7703 = vld [vmem:[%s7657 + $0xdc] sm:$0xf]
  %v7704 = vld [vmem:[%s7657 + $0xe0] sm:$0xf]
  %v7705 = vld [vmem:[%s7657 + $0xe4] sm:$0xf]
  %v7706 = vld [vmem:[%s7657 + $0xf0] sm:$0xf]
  %v7707 = vld [vmem:[%s7657 + $0xf4] sm:$0xf]
  %v7708 = vld [vmem:[%s7657 + $0xf8] sm:$0xf]
  %v7709 = vld [vmem:[%s7657 + $0xfc] sm:$0xf]
  %v7710 = vld [vmem:[%s7657 + $0x100] sm:$0xf]
  %v7711 = vld [vmem:[%s7657 + $0x104] sm:$0xf]
  %v7712 = vld [vmem:[%s7657 + $0x108] sm:$0xf]
  %v7713 = vld [vmem:[%s7657 + $0x10c] sm:$0xf]
  %v7714 = vld [vmem:[%s7657 + $0x118] sm:$0xf]
  %v7715 = vld [vmem:[%s7657 + $0x11c] sm:$0xf]
  %v7716 = vld [vmem:[%s7657 + $0x120] sm:$0xf]
  %v7717 = vld [vmem:[%s7657 + $0x124] sm:$0xf]
  %v7718 = vld [vmem:[%s7657 + $0x128] sm:$0xf]
  %v7719 = vld [vmem:[%s7657 + $0x12c] sm:$0xf]
  %v7720 = vld [vmem:[%s7657 + $0x130] sm:$0xf]
  %v7721 = vld [vmem:[%s7657 + $0x134] sm:$0xf]
  %s7722 = scalar_lea.vmem [#allocation3], 80
  %v7723 = vld [vmem:[%s7722] sm:$0xf]
  %v7724 = vld [vmem:[%s7722 + $0x4] sm:$0xf]
  %v7725 = vld [vmem:[%s7722 + $0x8] sm:$0xf]
  %v7726 = vld [vmem:[%s7722 + $0xc] sm:$0xf]
  %v7727 = vld [vmem:[%s7722 + $0x10] sm:$0xf]
  %v7728 = vld [vmem:[%s7722 + $0x14] sm:$0xf]
  %v7729 = vld [vmem:[%s7722 + $0x18] sm:$0xf]
  %v7730 = vld [vmem:[%s7722 + $0x1c] sm:$0xf]
  %v7731 = vld [vmem:[%s7722 + $0x28] sm:$0xf]
  %v7732 = vld [vmem:[%s7722 + $0x2c] sm:$0xf]
  %v7733 = vld [vmem:[%s7722 + $0x30] sm:$0xf]
  %v7734 = vld [vmem:[%s7722 + $0x34] sm:$0xf]
  %v7735 = vld [vmem:[%s7722 + $0x38] sm:$0xf]
  %v7736 = vld [vmem:[%s7722 + $0x3c] sm:$0xf]
  %v7737 = vld [vmem:[%s7722 + $0x40] sm:$0xf]
  %v7738 = vld [vmem:[%s7722 + $0x44] sm:$0xf]
  %v7739 = vld [vmem:[%s7722 + $0x50] sm:$0xf]
  %v7740 = vld [vmem:[%s7722 + $0x54] sm:$0xf]
  %v7741 = vld [vmem:[%s7722 + $0x58] sm:$0xf]
  %v7742 = vld [vmem:[%s7722 + $0x5c] sm:$0xf]
  %v7743 = vld [vmem:[%s7722 + $0x60] sm:$0xf]
  %v7744 = vld [vmem:[%s7722 + $0x64] sm:$0xf]
  %v7745 = vld [vmem:[%s7722 + $0x68] sm:$0xf]
  %v7746 = vld [vmem:[%s7722 + $0x6c] sm:$0xf]
  %v7747 = vld [vmem:[%s7722 + $0x78] sm:$0xf]
  %v7748 = vld [vmem:[%s7722 + $0x7c] sm:$0xf]
  %v7749 = vld [vmem:[%s7722 + $0x80] sm:$0xf]
  %v7750 = vld [vmem:[%s7722 + $0x84] sm:$0xf]
  %v7751 = vld [vmem:[%s7722 + $0x88] sm:$0xf]
  %v7752 = vld [vmem:[%s7722 + $0x8c] sm:$0xf]
  %v7753 = vld [vmem:[%s7722 + $0x90] sm:$0xf]
  %v7754 = vld [vmem:[%s7722 + $0x94] sm:$0xf]
  %v7755 = vld [vmem:[%s7722 + $0xa0] sm:$0xf]
  %v7756 = vld [vmem:[%s7722 + $0xa4] sm:$0xf]
  %v7757 = vld [vmem:[%s7722 + $0xa8] sm:$0xf]
  %v7758 = vld [vmem:[%s7722 + $0xac] sm:$0xf]
  %v7759 = vld [vmem:[%s7722 + $0xb0] sm:$0xf]
  %v7760 = vld [vmem:[%s7722 + $0xb4] sm:$0xf]
  %v7761 = vld [vmem:[%s7722 + $0xb8] sm:$0xf]
  %v7762 = vld [vmem:[%s7722 + $0xbc] sm:$0xf]
  %v7763 = vld [vmem:[%s7722 + $0xc8] sm:$0xf]
  %v7764 = vld [vmem:[%s7722 + $0xcc] sm:$0xf]
  %v7765 = vld [vmem:[%s7722 + $0xd0] sm:$0xf]
  %v7766 = vld [vmem:[%s7722 + $0xd4] sm:$0xf]
  %v7767 = vld [vmem:[%s7722 + $0xd8] sm:$0xf]
  %v7768 = vld [vmem:[%s7722 + $0xdc] sm:$0xf]
  %v7769 = vld [vmem:[%s7722 + $0xe0] sm:$0xf]
  %v7770 = vld [vmem:[%s7722 + $0xe4] sm:$0xf]
  %v7771 = vld [vmem:[%s7722 + $0xf0] sm:$0xf]
  %v7772 = vld [vmem:[%s7722 + $0xf4] sm:$0xf]
  %v7773 = vld [vmem:[%s7722 + $0xf8] sm:$0xf]
  %v7774 = vld [vmem:[%s7722 + $0xfc] sm:$0xf]
  %v7775 = vld [vmem:[%s7722 + $0x100] sm:$0xf]
  %v7776 = vld [vmem:[%s7722 + $0x104] sm:$0xf]
  %v7777 = vld [vmem:[%s7722 + $0x108] sm:$0xf]
  %v7778 = vld [vmem:[%s7722 + $0x10c] sm:$0xf]
  %v7779 = vld [vmem:[%s7722 + $0x118] sm:$0xf]
  %v7780 = vld [vmem:[%s7722 + $0x11c] sm:$0xf]
  %v7781 = vld [vmem:[%s7722 + $0x120] sm:$0xf]
  %v7782 = vld [vmem:[%s7722 + $0x124] sm:$0xf]
  %v7783 = vld [vmem:[%s7722 + $0x128] sm:$0xf]
  %v7784 = vld [vmem:[%s7722 + $0x12c] sm:$0xf]
  %v7785 = vld [vmem:[%s7722 + $0x130] sm:$0xf]
  %v7786 = vld [vmem:[%s7722 + $0x134] sm:$0xf]
  %s7787 = scalar_lea.vmem [#allocation3], 84
  %v7788 = vld [vmem:[%s7787] sm:$0xf]
  %v7789 = vld [vmem:[%s7787 + $0x4] sm:$0xf]
  %v7790 = vld [vmem:[%s7787 + $0x8] sm:$0xf]
  %v7791 = vld [vmem:[%s7787 + $0xc] sm:$0xf]
  %v7792 = vld [vmem:[%s7787 + $0x10] sm:$0xf]
  %v7793 = vld [vmem:[%s7787 + $0x14] sm:$0xf]
  %v7794 = vld [vmem:[%s7787 + $0x18] sm:$0xf]
  %v7795 = vld [vmem:[%s7787 + $0x1c] sm:$0xf]
  %v7796 = vld [vmem:[%s7787 + $0x28] sm:$0xf]
  %v7797 = vld [vmem:[%s7787 + $0x2c] sm:$0xf]
  %v7798 = vld [vmem:[%s7787 + $0x30] sm:$0xf]
  %v7799 = vld [vmem:[%s7787 + $0x34] sm:$0xf]
  %v7800 = vld [vmem:[%s7787 + $0x38] sm:$0xf]
  %v7801 = vld [vmem:[%s7787 + $0x3c] sm:$0xf]
  %v7802 = vld [vmem:[%s7787 + $0x40] sm:$0xf]
  %v7803 = vld [vmem:[%s7787 + $0x44] sm:$0xf]
  %v7804 = vld [vmem:[%s7787 + $0x50] sm:$0xf]
  %v7805 = vld [vmem:[%s7787 + $0x54] sm:$0xf]
  %v7806 = vld [vmem:[%s7787 + $0x58] sm:$0xf]
  %v7807 = vld [vmem:[%s7787 + $0x5c] sm:$0xf]
  %v7808 = vld [vmem:[%s7787 + $0x60] sm:$0xf]
  %v7809 = vld [vmem:[%s7787 + $0x64] sm:$0xf]
  %v7810 = vld [vmem:[%s7787 + $0x68] sm:$0xf]
  %v7811 = vld [vmem:[%s7787 + $0x6c] sm:$0xf]
  %v7812 = vld [vmem:[%s7787 + $0x78] sm:$0xf]
  %v7813 = vld [vmem:[%s7787 + $0x7c] sm:$0xf]
  %v7814 = vld [vmem:[%s7787 + $0x80] sm:$0xf]
  %v7815 = vld [vmem:[%s7787 + $0x84] sm:$0xf]
  %v7816 = vld [vmem:[%s7787 + $0x88] sm:$0xf]
  %v7817 = vld [vmem:[%s7787 + $0x8c] sm:$0xf]
  %v7818 = vld [vmem:[%s7787 + $0x90] sm:$0xf]
  %v7819 = vld [vmem:[%s7787 + $0x94] sm:$0xf]
  %v7820 = vld [vmem:[%s7787 + $0xa0] sm:$0xf]
  %v7821 = vld [vmem:[%s7787 + $0xa4] sm:$0xf]
  %v7822 = vld [vmem:[%s7787 + $0xa8] sm:$0xf]
  %v7823 = vld [vmem:[%s7787 + $0xac] sm:$0xf]
  %v7824 = vld [vmem:[%s7787 + $0xb0] sm:$0xf]
  %v7825 = vld [vmem:[%s7787 + $0xb4] sm:$0xf]
  %v7826 = vld [vmem:[%s7787 + $0xb8] sm:$0xf]
  %v7827 = vld [vmem:[%s7787 + $0xbc] sm:$0xf]
  %v7828 = vld [vmem:[%s7787 + $0xc8] sm:$0xf]
  %v7829 = vld [vmem:[%s7787 + $0xcc] sm:$0xf]
  %v7830 = vld [vmem:[%s7787 + $0xd0] sm:$0xf]
  %v7831 = vld [vmem:[%s7787 + $0xd4] sm:$0xf]
  %v7832 = vld [vmem:[%s7787 + $0xd8] sm:$0xf]
  %v7833 = vld [vmem:[%s7787 + $0xdc] sm:$0xf]
  %v7834 = vld [vmem:[%s7787 + $0xe0] sm:$0xf]
  %v7835 = vld [vmem:[%s7787 + $0xe4] sm:$0xf]
  %v7836 = vld [vmem:[%s7787 + $0xf0] sm:$0xf]
  %v7837 = vld [vmem:[%s7787 + $0xf4] sm:$0xf]
  %v7838 = vld [vmem:[%s7787 + $0xf8] sm:$0xf]
  %v7839 = vld [vmem:[%s7787 + $0xfc] sm:$0xf]
  %v7840 = vld [vmem:[%s7787 + $0x100] sm:$0xf]
  %v7841 = vld [vmem:[%s7787 + $0x104] sm:$0xf]
  %v7842 = vld [vmem:[%s7787 + $0x108] sm:$0xf]
  %v7843 = vld [vmem:[%s7787 + $0x10c] sm:$0xf]
  %v7844 = vld [vmem:[%s7787 + $0x118] sm:$0xf]
  %v7845 = vld [vmem:[%s7787 + $0x11c] sm:$0xf]
  %v7846 = vld [vmem:[%s7787 + $0x120] sm:$0xf]
  %v7847 = vld [vmem:[%s7787 + $0x124] sm:$0xf]
  %v7848 = vld [vmem:[%s7787 + $0x128] sm:$0xf]
  %v7849 = vld [vmem:[%s7787 + $0x12c] sm:$0xf]
  %v7850 = vld [vmem:[%s7787 + $0x130] sm:$0xf]
  %v7851 = vld [vmem:[%s7787 + $0x134] sm:$0xf]
  %s7852 = scalar_lea.vmem [#allocation3], 88
  %v7853 = vld [vmem:[%s7852] sm:$0xf]
  %v7854 = vld [vmem:[%s7852 + $0x4] sm:$0xf]
  %v7855 = vld [vmem:[%s7852 + $0x8] sm:$0xf]
  %v7856 = vld [vmem:[%s7852 + $0xc] sm:$0xf]
  %v7857 = vld [vmem:[%s7852 + $0x10] sm:$0xf]
  %v7858 = vld [vmem:[%s7852 + $0x14] sm:$0xf]
  %v7859 = vld [vmem:[%s7852 + $0x18] sm:$0xf]
  %v7860 = vld [vmem:[%s7852 + $0x1c] sm:$0xf]
  %v7861 = vld [vmem:[%s7852 + $0x28] sm:$0xf]
  %v7862 = vld [vmem:[%s7852 + $0x2c] sm:$0xf]
  %v7863 = vld [vmem:[%s7852 + $0x30] sm:$0xf]
  %v7864 = vld [vmem:[%s7852 + $0x34] sm:$0xf]
  %v7865 = vld [vmem:[%s7852 + $0x38] sm:$0xf]
  %v7866 = vld [vmem:[%s7852 + $0x3c] sm:$0xf]
  %v7867 = vld [vmem:[%s7852 + $0x40] sm:$0xf]
  %v7868 = vld [vmem:[%s7852 + $0x44] sm:$0xf]
  %v7869 = vld [vmem:[%s7852 + $0x50] sm:$0xf]
  %v7870 = vld [vmem:[%s7852 + $0x54] sm:$0xf]
  %v7871 = vld [vmem:[%s7852 + $0x58] sm:$0xf]
  %v7872 = vld [vmem:[%s7852 + $0x5c] sm:$0xf]
  %v7873 = vld [vmem:[%s7852 + $0x60] sm:$0xf]
  %v7874 = vld [vmem:[%s7852 + $0x64] sm:$0xf]
  %v7875 = vld [vmem:[%s7852 + $0x68] sm:$0xf]
  %v7876 = vld [vmem:[%s7852 + $0x6c] sm:$0xf]
  %v7877 = vld [vmem:[%s7852 + $0x78] sm:$0xf]
  %v7878 = vld [vmem:[%s7852 + $0x7c] sm:$0xf]
  %v7879 = vld [vmem:[%s7852 + $0x80] sm:$0xf]
  %v7880 = vld [vmem:[%s7852 + $0x84] sm:$0xf]
  %v7881 = vld [vmem:[%s7852 + $0x88] sm:$0xf]
  %v7882 = vld [vmem:[%s7852 + $0x8c] sm:$0xf]
  %v7883 = vld [vmem:[%s7852 + $0x90] sm:$0xf]
  %v7884 = vld [vmem:[%s7852 + $0x94] sm:$0xf]
  %v7885 = vld [vmem:[%s7852 + $0xa0] sm:$0xf]
  %v7886 = vld [vmem:[%s7852 + $0xa4] sm:$0xf]
  %v7887 = vld [vmem:[%s7852 + $0xa8] sm:$0xf]
  %v7888 = vld [vmem:[%s7852 + $0xac] sm:$0xf]
  %v7889 = vld [vmem:[%s7852 + $0xb0] sm:$0xf]
  %v7890 = vld [vmem:[%s7852 + $0xb4] sm:$0xf]
  %v7891 = vld [vmem:[%s7852 + $0xb8] sm:$0xf]
  %v7892 = vld [vmem:[%s7852 + $0xbc] sm:$0xf]
  %v7893 = vld [vmem:[%s7852 + $0xc8] sm:$0xf]
  %v7894 = vld [vmem:[%s7852 + $0xcc] sm:$0xf]
  %v7895 = vld [vmem:[%s7852 + $0xd0] sm:$0xf]
  %v7896 = vld [vmem:[%s7852 + $0xd4] sm:$0xf]
  %v7897 = vld [vmem:[%s7852 + $0xd8] sm:$0xf]
  %v7898 = vld [vmem:[%s7852 + $0xdc] sm:$0xf]
  %v7899 = vld [vmem:[%s7852 + $0xe0] sm:$0xf]
  %v7900 = vld [vmem:[%s7852 + $0xe4] sm:$0xf]
  %v7901 = vld [vmem:[%s7852 + $0xf0] sm:$0xf]
  %v7902 = vld [vmem:[%s7852 + $0xf4] sm:$0xf]
  %v7903 = vld [vmem:[%s7852 + $0xf8] sm:$0xf]
  %v7904 = vld [vmem:[%s7852 + $0xfc] sm:$0xf]
  %v7905 = vld [vmem:[%s7852 + $0x100] sm:$0xf]
  %v7906 = vld [vmem:[%s7852 + $0x104] sm:$0xf]
  %v7907 = vld [vmem:[%s7852 + $0x108] sm:$0xf]
  %v7908 = vld [vmem:[%s7852 + $0x10c] sm:$0xf]
  %v7909 = vld [vmem:[%s7852 + $0x118] sm:$0xf]
  %v7910 = vld [vmem:[%s7852 + $0x11c] sm:$0xf]
  %v7911 = vld [vmem:[%s7852 + $0x120] sm:$0xf]
  %v7912 = vld [vmem:[%s7852 + $0x124] sm:$0xf]
  %v7913 = vld [vmem:[%s7852 + $0x128] sm:$0xf]
  %v7914 = vld [vmem:[%s7852 + $0x12c] sm:$0xf]
  %v7915 = vld [vmem:[%s7852 + $0x130] sm:$0xf]
  %v7916 = vld [vmem:[%s7852 + $0x134] sm:$0xf]
  %v7917 = vld [vmem:[%s4] sm:$0xf]
  %s7918 = scalar_lea.vmem %s4, 4
  %v7919 = vld [vmem:[%s7918] sm:$0xf]
  %v7984 = vunpack.c.l.b16 %v7400
  %v7985 = vunpack.c.l.b16 %v7401
  %v7986 = vunpack.c.l.b16 %v7402
  %v7987 = vunpack.c.l.b16 %v7403
  %v7988 = vunpack.c.l.b16 %v7404
  %v7989 = vunpack.c.l.b16 %v7405
  %v7990 = vunpack.c.l.b16 %v7406
  %v7991 = vunpack.c.l.b16 %v7407
  %v7992 = vunpack.c.l.b16 %v7408
  %v7993 = vunpack.c.l.b16 %v7409
  %v7994 = vunpack.c.l.b16 %v7410
  %v7995 = vunpack.c.l.b16 %v7411
  %v7996 = vunpack.c.l.b16 %v7412
  %v7997 = vunpack.c.l.b16 %v7413
  %v7998 = vunpack.c.l.b16 %v7414
  %v7999 = vunpack.c.l.b16 %v7415
  %v8000 = vunpack.c.l.b16 %v7416
  %v8001 = vunpack.c.l.b16 %v7417
  %v8002 = vunpack.c.l.b16 %v7418
  %v8003 = vunpack.c.l.b16 %v7419
  %v8004 = vunpack.c.l.b16 %v7420
  %v8005 = vunpack.c.l.b16 %v7421
  %v8006 = vunpack.c.l.b16 %v7422
  %v8007 = vunpack.c.l.b16 %v7423
  %v8008 = vunpack.c.l.b16 %v7424
  %v8009 = vunpack.c.l.b16 %v7425
  %v8010 = vunpack.c.l.b16 %v7426
  %v8011 = vunpack.c.l.b16 %v7427
  %v8012 = vunpack.c.l.b16 %v7428
  %v8013 = vunpack.c.l.b16 %v7429
  %v8014 = vunpack.c.l.b16 %v7430
  %v8015 = vunpack.c.l.b16 %v7431
  %v8016 = vunpack.c.l.b16 %v7432
  %v8017 = vunpack.c.l.b16 %v7433
  %v8018 = vunpack.c.l.b16 %v7434
  %v8019 = vunpack.c.l.b16 %v7435
  %v8020 = vunpack.c.l.b16 %v7436
  %v8021 = vunpack.c.l.b16 %v7437
  %v8022 = vunpack.c.l.b16 %v7438
  %v8023 = vunpack.c.l.b16 %v7439
  %v8024 = vunpack.c.l.b16 %v7440
  %v8025 = vunpack.c.l.b16 %v7441
  %v8026 = vunpack.c.l.b16 %v7442
  %v8027 = vunpack.c.l.b16 %v7443
  %v8028 = vunpack.c.l.b16 %v7444
  %v8029 = vunpack.c.l.b16 %v7445
  %v8030 = vunpack.c.l.b16 %v7446
  %v8031 = vunpack.c.l.b16 %v7447
  %v8032 = vunpack.c.l.b16 %v7448
  %v8033 = vunpack.c.l.b16 %v7449
  %v8034 = vunpack.c.l.b16 %v7450
  %v8035 = vunpack.c.l.b16 %v7451
  %v8036 = vunpack.c.l.b16 %v7452
  %v8037 = vunpack.c.l.b16 %v7453
  %v8038 = vunpack.c.l.b16 %v7454
  %v8039 = vunpack.c.l.b16 %v7455
  %v8040 = vunpack.c.l.b16 %v7456
  %v8041 = vunpack.c.l.b16 %v7457
  %v8042 = vunpack.c.l.b16 %v7458
  %v8043 = vunpack.c.l.b16 %v7459
  %v8044 = vunpack.c.l.b16 %v7460
  %v8045 = vunpack.c.l.b16 %v7461
  %v8046 = vunpack.c.l.b16 %v7462
  %v8047 = vunpack.c.l.b16 %v7463
  %v8048 = vpack.c.b16 %v7985, %v7984
  %v8049 = vpack.c.b16 %v7987, %v7986
  %v8050 = vpack.c.b16 %v7989, %v7988
  %v8051 = vpack.c.b16 %v7991, %v7990
  %v8052 = vpack.c.b16 %v7993, %v7992
  %v8053 = vpack.c.b16 %v7995, %v7994
  %v8054 = vpack.c.b16 %v7997, %v7996
  %v8055 = vpack.c.b16 %v7999, %v7998
  %v8056 = vpack.c.b16 %v8001, %v8000
  %v8057 = vpack.c.b16 %v8003, %v8002
  %v8058 = vpack.c.b16 %v8005, %v8004
  %v8059 = vpack.c.b16 %v8007, %v8006
  %v8060 = vpack.c.b16 %v8009, %v8008
  %v8061 = vpack.c.b16 %v8011, %v8010
  %v8062 = vpack.c.b16 %v8013, %v8012
  %v8063 = vpack.c.b16 %v8015, %v8014
  %v8064 = vpack.c.b16 %v8017, %v8016
  %v8065 = vpack.c.b16 %v8019, %v8018
  %v8066 = vpack.c.b16 %v8021, %v8020
  %v8067 = vpack.c.b16 %v8023, %v8022
  %v8068 = vpack.c.b16 %v8025, %v8024
  %v8069 = vpack.c.b16 %v8027, %v8026
  %v8070 = vpack.c.b16 %v8029, %v8028
  %v8071 = vpack.c.b16 %v8031, %v8030
  %v8072 = vpack.c.b16 %v8033, %v8032
  %v8073 = vpack.c.b16 %v8035, %v8034
  %v8074 = vpack.c.b16 %v8037, %v8036
  %v8075 = vpack.c.b16 %v8039, %v8038
  %v8076 = vpack.c.b16 %v8041, %v8040
  %v8077 = vpack.c.b16 %v8043, %v8042
  %v8078 = vpack.c.b16 %v8045, %v8044
  %v8079 = vpack.c.b16 %v8047, %v8046
  %v8081 = vsel %vm6561, %v8048, 0
  %v8084 = vsel %vm6561, %v8049, 0
  %v8087 = vsel %vm6561, %v8050, 0
  %v8090 = vsel %vm6561, %v8051, 0
  %v8093 = vsel %vm6561, %v8052, 0
  %v8096 = vsel %vm6561, %v8053, 0
  %v8099 = vsel %vm6561, %v8054, 0
  %v8102 = vsel %vm6561, %v8055, 0
  %v8105 = vsel %vm6561, %v8056, 0
  %v8108 = vsel %vm6561, %v8057, 0
  %v8111 = vsel %vm6561, %v8058, 0
  %v8114 = vsel %vm6561, %v8059, 0
  %v8117 = vsel %vm6561, %v8060, 0
  %v8120 = vsel %vm6561, %v8061, 0
  %v8123 = vsel %vm6561, %v8062, 0
  %v8126 = vsel %vm6561, %v8063, 0
  %v8129 = vsel %vm6561, %v8064, 0
  %v8132 = vsel %vm6561, %v8065, 0
  %v8135 = vsel %vm6561, %v8066, 0
  %v8138 = vsel %vm6561, %v8067, 0
  %v8141 = vsel %vm6561, %v8068, 0
  %v8144 = vsel %vm6561, %v8069, 0
  %v8147 = vsel %vm6561, %v8070, 0
  %v8150 = vsel %vm6561, %v8071, 0
  %v8153 = vsel %vm6561, %v8072, 0
  %v8156 = vsel %vm6561, %v8073, 0
  %v8159 = vsel %vm6561, %v8074, 0
  %v8162 = vsel %vm6561, %v8075, 0
  %v8165 = vsel %vm6561, %v8076, 0
  %v8168 = vsel %vm6561, %v8077, 0
  %v8171 = vsel %vm6561, %v8078, 0
  %v8174 = vsel %vm6561, %v8079, 0
  %vm8176 = vcmask 1043456
  %v8178 = vsel %vm8176, %v7919, 0
  %8180 = vmatprep.subr.bf16.mxu0 0
  %8181 = vmatpush1.bf16.msra.mxu0 %v8178
  %8182 = vmatprep.subr.bf16.mxu0 0
  %8183 = vmatpush1.bf16.msra.mxu0 0
  %8184 = vmatprep.subr.bf16.mxu0 0
  %8185 = vmatpush1.bf16.msra.mxu0 0
  %8186 = vmatprep.subr.bf16.mxu0 0
  %8187 = vmatpush1.bf16.msra.mxu0 0
  %8188 = vmatprep.subr.bf16.mxu0 0
  %8189 = vmatpush1.bf16.msra.mxu0 0
  %8190 = vmatprep.subr.bf16.mxu0 0
  %8191 = vmatpush1.bf16.msra.mxu0 0
  %8192 = vmatprep.subr.bf16.mxu0 0
  %8193 = vmatpush1.bf16.msra.mxu0 0
  %8194 = vmatprep.subr.bf16.mxu0 0
  %8195 = vmatpush1.bf16.msra.mxu0 0
  %8196 = vmatprep.subr.bf16.mxu0 0
  %8197 = vmatpush1.bf16.msra.mxu0 0
  %8198 = vmatprep.subr.bf16.mxu0 0
  %8199 = vmatpush1.bf16.msra.mxu0 0
  %8200 = vmatprep.subr.bf16.mxu0 0
  %8201 = vmatpush1.bf16.msra.mxu0 0
  %8202 = vmatprep.subr.bf16.mxu0 0
  %8203 = vmatpush1.bf16.msra.mxu0 0
  %8204 = vmatprep.subr.bf16.mxu0 0
  %8205 = vmatpush1.bf16.msra.mxu0 0
  %8206 = vmatprep.subr.bf16.mxu0 0
  %8207 = vmatpush1.bf16.msra.mxu0 0
  %8208 = vmatprep.subr.bf16.mxu0 0
  %8209 = vmatpush1.bf16.msra.mxu0 0
  %8210 = vmatprep.subr.bf16.mxu0 0
  %8211 = vmatpush1.bf16.msra.mxu0 0
  %8212 = vmatprep.mubr.bf16.mxu0 0
  %8213 = vmatmul.mubr.bf16.gmra.mrb[0].mxu0 %v8081
  %v8214 = vpop.f32.mrb[0].mxu0
  %v8215 = vadd.f32 0.0, %v8214
  %v8216 = vpop.f32.mrb[0].mxu0
  %v8217 = vpop.f32.mrb[0].mxu0
  %v8218 = vadd.f32 0.0, %v8217
  %v8219 = vpop.f32.mrb[0].mxu0
  %8220 = vmatprep.mubr.bf16.mxu0 0
  %8221 = vmatmul.mubr.bf16.gmra.mrb[0].mxu0 %v8084
  %v8222 = vpop.f32.mrb[0].mxu0
  %v8223 = vadd.f32 0.0, %v8222
  %v8224 = vpop.f32.mrb[0].mxu0
  %v8225 = vpop.f32.mrb[0].mxu0
  %v8226 = vadd.f32 0.0, %v8225
  %v8227 = vpop.f32.mrb[0].mxu0
  %8228 = vmatprep.mubr.bf16.mxu0 0
  %8229 = vmatmul.mubr.bf16.gmra.mrb[0].mxu0 %v8087
  %v8230 = vpop.f32.mrb[0].mxu0
  %v8231 = vadd.f32 0.0, %v8230
  %v8232 = vpop.f32.mrb[0].mxu0
  %v8233 = vpop.f32.mrb[0].mxu0
  %v8234 = vadd.f32 0.0, %v8233
  %v8235 = vpop.f32.mrb[0].mxu0
  %8236 = vmatprep.mubr.bf16.mxu0 0
  %8237 = vmatmul.mubr.bf16.gmra.mrb[0].mxu0 %v8090
  %v8238 = vpop.f32.mrb[0].mxu0
  %v8239 = vadd.f32 0.0, %v8238
  %v8240 = vpop.f32.mrb[0].mxu0
  %v8241 = vpop.f32.mrb[0].mxu0
  %v8242 = vadd.f32 0.0, %v8241
  %v8243 = vpop.f32.mrb[0].mxu0
  %8244 = vmatprep.mubr.bf16.mxu0 0
  %8245 = vmatmul.mubr.bf16.gmra.mrb[0].mxu0 %v8093
  %v8246 = vpop.f32.mrb[0].mxu0
  %v8247 = vadd.f32 0.0, %v8246
  %v8248 = vpop.f32.mrb[0].mxu0
  %v8249 = vpop.f32.mrb[0].mxu0
  %v8250 = vadd.f32 0.0, %v8249
  %v8251 = vpop.f32.mrb[0].mxu0
  %8252 = vmatprep.mubr.bf16.mxu0 0
  %8253 = vmatmul.mubr.bf16.gmra.mrb[0].mxu0 %v8096
  %v8254 = vpop.f32.mrb[0].mxu0
  %v8255 = vadd.f32 0.0, %v8254
  %v8256 = vpop.f32.mrb[0].mxu0
  %v8257 = vpop.f32.mrb[0].mxu0
  %v8258 = vadd.f32 0.0, %v8257
  %v8259 = vpop.f32.mrb[0].mxu0
  %8260 = vmatprep.mubr.bf16.mxu0 0
  %8261 = vmatmul.mubr.bf16.gmra.mrb[0].mxu0 %v8099
  %v8262 = vpop.f32.mrb[0].mxu0
  %v8263 = vadd.f32 0.0, %v8262
  %v8264 = vpop.f32.mrb[0].mxu0
  %v8265 = vpop.f32.mrb[0].mxu0
  %v8266 = vadd.f32 0.0, %v8265
  %v8267 = vpop.f32.mrb[0].mxu0
  %8268 = vmatprep.mubr.bf16.mxu0 0
  %8269 = vmatmul.mubr.bf16.gmra.mrb[0].mxu0 %v8102
  %v8270 = vpop.f32.mrb[0].mxu0
  %v8271 = vadd.f32 0.0, %v8270
  %v8272 = vpop.f32.mrb[0].mxu0
  %v8273 = vpop.f32.mrb[0].mxu0
  %v8274 = vadd.f32 0.0, %v8273
  %v8275 = vpop.f32.mrb[0].mxu0
  %8276 = vmatprep.mubr.bf16.mxu0 0
  %8277 = vmatmul.mubr.bf16.gmra.mrb[0].mxu0 %v8105
  %v8278 = vpop.f32.mrb[0].mxu0
  %v8279 = vadd.f32 0.0, %v8278
  %v8280 = vpop.f32.mrb[0].mxu0
  %v8281 = vpop.f32.mrb[0].mxu0
  %v8282 = vadd.f32 0.0, %v8281
  %v8283 = vpop.f32.mrb[0].mxu0
  %8284 = vmatprep.mubr.bf16.mxu0 0
  %8285 = vmatmul.mubr.bf16.gmra.mrb[0].mxu0 %v8108
  %v8286 = vpop.f32.mrb[0].mxu0
  %v8287 = vadd.f32 0.0, %v8286
  %v8288 = vpop.f32.mrb[0].mxu0
  %v8289 = vpop.f32.mrb[0].mxu0
  %v8290 = vadd.f32 0.0, %v8289
  %v8291 = vpop.f32.mrb[0].mxu0
  %8292 = vmatprep.mubr.bf16.mxu0 0
  %8293 = vmatmul.mubr.bf16.gmra.mrb[0].mxu0 %v8111
  %v8294 = vpop.f32.mrb[0].mxu0
  %v8295 = vadd.f32 0.0, %v8294
  %v8296 = vpop.f32.mrb[0].mxu0
  %v8297 = vpop.f32.mrb[0].mxu0
  %v8298 = vadd.f32 0.0, %v8297
  %v8299 = vpop.f32.mrb[0].mxu0
  %8300 = vmatprep.mubr.bf16.mxu0 0
  %8301 = vmatmul.mubr.bf16.gmra.mrb[0].mxu0 %v8114
  %v8302 = vpop.f32.mrb[0].mxu0
  %v8303 = vadd.f32 0.0, %v8302
  %v8304 = vpop.f32.mrb[0].mxu0
  %v8305 = vpop.f32.mrb[0].mxu0
  %v8306 = vadd.f32 0.0, %v8305
  %v8307 = vpop.f32.mrb[0].mxu0
  %8308 = vmatprep.mubr.bf16.mxu0 0
  %8309 = vmatmul.mubr.bf16.gmra.mrb[0].mxu0 %v8117
  %v8310 = vpop.f32.mrb[0].mxu0
  %v8311 = vadd.f32 0.0, %v8310
  %v8312 = vpop.f32.mrb[0].mxu0
  %v8313 = vpop.f32.mrb[0].mxu0
  %v8314 = vadd.f32 0.0, %v8313
  %v8315 = vpop.f32.mrb[0].mxu0
  %8316 = vmatprep.mubr.bf16.mxu0 0
  %8317 = vmatmul.mubr.bf16.gmra.mrb[0].mxu0 %v8120
  %v8318 = vpop.f32.mrb[0].mxu0
  %v8319 = vadd.f32 0.0, %v8318
  %v8320 = vpop.f32.mrb[0].mxu0
  %v8321 = vpop.f32.mrb[0].mxu0
  %v8322 = vadd.f32 0.0, %v8321
  %v8323 = vpop.f32.mrb[0].mxu0
  %8324 = vmatprep.mubr.bf16.mxu0 0
  %8325 = vmatmul.mubr.bf16.gmra.mrb[0].mxu0 %v8123
  %v8326 = vpop.f32.mrb[0].mxu0
  %v8327 = vadd.f32 0.0, %v8326
  %v8328 = vpop.f32.mrb[0].mxu0
  %v8329 = vpop.f32.mrb[0].mxu0
  %v8330 = vadd.f32 0.0, %v8329
  %v8331 = vpop.f32.mrb[0].mxu0
  %8332 = vmatprep.mubr.bf16.mxu0 0
  %8333 = vmatmul.mubr.bf16.gmra.mrb[0].mxu0 %v8126
  %v8334 = vpop.f32.mrb[0].mxu0
  %v8335 = vadd.f32 0.0, %v8334
  %v8336 = vpop.f32.mrb[0].mxu0
  %v8337 = vpop.f32.mrb[0].mxu0
  %v8338 = vadd.f32 0.0, %v8337
  %v8339 = vpop.f32.mrb[0].mxu0
  %8340 = vmatprep.mubr.bf16.mxu0 0
  %8341 = vmatmul.mubr.bf16.gmra.mrb[0].mxu0 %v8129
  %v8342 = vpop.f32.mrb[0].mxu0
  %v8343 = vadd.f32 0.0, %v8342
  %v8344 = vpop.f32.mrb[0].mxu0
  %v8345 = vpop.f32.mrb[0].mxu0
  %v8346 = vadd.f32 0.0, %v8345
  %v8347 = vpop.f32.mrb[0].mxu0
  %8348 = vmatprep.mubr.bf16.mxu0 0
  %8349 = vmatmul.mubr.bf16.gmra.mrb[0].mxu0 %v8132
  %v8350 = vpop.f32.mrb[0].mxu0
  %v8351 = vadd.f32 0.0, %v8350
  %v8352 = vpop.f32.mrb[0].mxu0
  %v8353 = vpop.f32.mrb[0].mxu0
  %v8354 = vadd.f32 0.0, %v8353
  %v8355 = vpop.f32.mrb[0].mxu0
  %8356 = vmatprep.mubr.bf16.mxu0 0
  %8357 = vmatmul.mubr.bf16.gmra.mrb[0].mxu0 %v8135
  %v8358 = vpop.f32.mrb[0].mxu0
  %v8359 = vadd.f32 0.0, %v8358
  %v8360 = vpop.f32.mrb[0].mxu0
  %v8361 = vpop.f32.mrb[0].mxu0
  %v8362 = vadd.f32 0.0, %v8361
  %v8363 = vpop.f32.mrb[0].mxu0
  %8364 = vmatprep.mubr.bf16.mxu0 0
  %8365 = vmatmul.mubr.bf16.gmra.mrb[0].mxu0 %v8138
  %v8366 = vpop.f32.mrb[0].mxu0
  %v8367 = vadd.f32 0.0, %v8366
  %v8368 = vpop.f32.mrb[0].mxu0
  %v8369 = vpop.f32.mrb[0].mxu0
  %v8370 = vadd.f32 0.0, %v8369
  %v8371 = vpop.f32.mrb[0].mxu0
  %8372 = vmatprep.mubr.bf16.mxu0 0
  %8373 = vmatmul.mubr.bf16.gmra.mrb[0].mxu0 %v8141
  %v8374 = vpop.f32.mrb[0].mxu0
  %v8375 = vadd.f32 0.0, %v8374
  %v8376 = vpop.f32.mrb[0].mxu0
  %v8377 = vpop.f32.mrb[0].mxu0
  %v8378 = vadd.f32 0.0, %v8377
  %v8379 = vpop.f32.mrb[0].mxu0
  %8380 = vmatprep.mubr.bf16.mxu0 0
  %8381 = vmatmul.mubr.bf16.gmra.mrb[0].mxu0 %v8144
  %v8382 = vpop.f32.mrb[0].mxu0
  %v8383 = vadd.f32 0.0, %v8382
  %v8384 = vpop.f32.mrb[0].mxu0
  %v8385 = vpop.f32.mrb[0].mxu0
  %v8386 = vadd.f32 0.0, %v8385
  %v8387 = vpop.f32.mrb[0].mxu0
  %8388 = vmatprep.mubr.bf16.mxu0 0
  %8389 = vmatmul.mubr.bf16.gmra.mrb[0].mxu0 %v8147
  %v8390 = vpop.f32.mrb[0].mxu0
  %v8391 = vadd.f32 0.0, %v8390
  %v8392 = vpop.f32.mrb[0].mxu0
  %v8393 = vpop.f32.mrb[0].mxu0
  %v8394 = vadd.f32 0.0, %v8393
  %v8395 = vpop.f32.mrb[0].mxu0
  %8396 = vmatprep.mubr.bf16.mxu0 0
  %8397 = vmatmul.mubr.bf16.gmra.mrb[0].mxu0 %v8150
  %v8398 = vpop.f32.mrb[0].mxu0
  %v8399 = vadd.f32 0.0, %v8398
  %v8400 = vpop.f32.mrb[0].mxu0
  %v8401 = vpop.f32.mrb[0].mxu0
  %v8402 = vadd.f32 0.0, %v8401
  %v8403 = vpop.f32.mrb[0].mxu0
  %8404 = vmatprep.mubr.bf16.mxu0 0
  %8405 = vmatmul.mubr.bf16.gmra.mrb[0].mxu0 %v8153
  %v8406 = vpop.f32.mrb[0].mxu0
  %v8407 = vadd.f32 0.0, %v8406
  %v8408 = vpop.f32.mrb[0].mxu0
  %v8409 = vpop.f32.mrb[0].mxu0
  %v8410 = vadd.f32 0.0, %v8409
  %v8411 = vpop.f32.mrb[0].mxu0
  %8412 = vmatprep.mubr.bf16.mxu0 0
  %8413 = vmatmul.mubr.bf16.gmra.mrb[0].mxu0 %v8156
  %v8414 = vpop.f32.mrb[0].mxu0
  %v8415 = vadd.f32 0.0, %v8414
  %v8416 = vpop.f32.mrb[0].mxu0
  %v8417 = vpop.f32.mrb[0].mxu0
  %v8418 = vadd.f32 0.0, %v8417
  %v8419 = vpop.f32.mrb[0].mxu0
  %8420 = vmatprep.mubr.bf16.mxu0 0
  %8421 = vmatmul.mubr.bf16.gmra.mrb[0].mxu0 %v8159
  %v8422 = vpop.f32.mrb[0].mxu0
  %v8423 = vadd.f32 0.0, %v8422
  %v8424 = vpop.f32.mrb[0].mxu0
  %v8425 = vpop.f32.mrb[0].mxu0
  %v8426 = vadd.f32 0.0, %v8425
  %v8427 = vpop.f32.mrb[0].mxu0
  %8428 = vmatprep.mubr.bf16.mxu0 0
  %8429 = vmatmul.mubr.bf16.gmra.mrb[0].mxu0 %v8162
  %v8430 = vpop.f32.mrb[0].mxu0
  %v8431 = vadd.f32 0.0, %v8430
  %v8432 = vpop.f32.mrb[0].mxu0
  %v8433 = vpop.f32.mrb[0].mxu0
  %v8434 = vadd.f32 0.0, %v8433
  %v8435 = vpop.f32.mrb[0].mxu0
  %8436 = vmatprep.mubr.bf16.mxu0 0
  %8437 = vmatmul.mubr.bf16.gmra.mrb[0].mxu0 %v8165
  %v8438 = vpop.f32.mrb[0].mxu0
  %v8439 = vadd.f32 0.0, %v8438
  %v8440 = vpop.f32.mrb[0].mxu0
  %v8441 = vpop.f32.mrb[0].mxu0
  %v8442 = vadd.f32 0.0, %v8441
  %v8443 = vpop.f32.mrb[0].mxu0
  %8444 = vmatprep.mubr.bf16.mxu0 0
  %8445 = vmatmul.mubr.bf16.gmra.mrb[0].mxu0 %v8168
  %v8446 = vpop.f32.mrb[0].mxu0
  %v8447 = vadd.f32 0.0, %v8446
  %v8448 = vpop.f32.mrb[0].mxu0
  %v8449 = vpop.f32.mrb[0].mxu0
  %v8450 = vadd.f32 0.0, %v8449
  %v8451 = vpop.f32.mrb[0].mxu0
  %8452 = vmatprep.mubr.bf16.mxu0 0
  %8453 = vmatmul.mubr.bf16.gmra.mrb[0].mxu0 %v8171
  %v8454 = vpop.f32.mrb[0].mxu0
  %v8455 = vadd.f32 0.0, %v8454
  %v8456 = vpop.f32.mrb[0].mxu0
  %v8457 = vpop.f32.mrb[0].mxu0
  %v8458 = vadd.f32 0.0, %v8457
  %v8459 = vpop.f32.mrb[0].mxu0
  %8460 = vmatprep.mubr.bf16.mxu0 0
  %8461 = vmatmul.mubr.bf16.gmra.mrb[0].mxu0 %v8174
  %v8462 = vpop.f32.mrb[0].mxu0
  %v8463 = vadd.f32 0.0, %v8462
  %v8464 = vpop.f32.mrb[0].mxu0
  %v8465 = vpop.f32.mrb[0].mxu0
  %v8466 = vadd.f32 0.0, %v8465
  %v8467 = vpop.f32.mrb[0].mxu0
  %8468 = vdwg.mxu0
  %v8533 = vunpack.c.l.b16 %v7335
  %v8534 = vunpack.c.l.b16 %v7336
  %v8535 = vunpack.c.l.b16 %v7337
  %v8536 = vunpack.c.l.b16 %v7338
  %v8537 = vunpack.c.l.b16 %v7339
  %v8538 = vunpack.c.l.b16 %v7340
  %v8539 = vunpack.c.l.b16 %v7341
  %v8540 = vunpack.c.l.b16 %v7342
  %v8541 = vunpack.c.l.b16 %v7343
  %v8542 = vunpack.c.l.b16 %v7344
  %v8543 = vunpack.c.l.b16 %v7345
  %v8544 = vunpack.c.l.b16 %v7346
  %v8545 = vunpack.c.l.b16 %v7347
  %v8546 = vunpack.c.l.b16 %v7348
  %v8547 = vunpack.c.l.b16 %v7349
  %v8548 = vunpack.c.l.b16 %v7350
  %v8549 = vunpack.c.l.b16 %v7351
  %v8550 = vunpack.c.l.b16 %v7352
  %v8551 = vunpack.c.l.b16 %v7353
  %v8552 = vunpack.c.l.b16 %v7354
  %v8553 = vunpack.c.l.b16 %v7355
  %v8554 = vunpack.c.l.b16 %v7356
  %v8555 = vunpack.c.l.b16 %v7357
  %v8556 = vunpack.c.l.b16 %v7358
  %v8557 = vunpack.c.l.b16 %v7359
  %v8558 = vunpack.c.l.b16 %v7360
  %v8559 = vunpack.c.l.b16 %v7361
  %v8560 = vunpack.c.l.b16 %v7362
  %v8561 = vunpack.c.l.b16 %v7363
  %v8562 = vunpack.c.l.b16 %v7364
  %v8563 = vunpack.c.l.b16 %v7365
  %v8564 = vunpack.c.l.b16 %v7366
  %v8565 = vunpack.c.l.b16 %v7367
  %v8566 = vunpack.c.l.b16 %v7368
  %v8567 = vunpack.c.l.b16 %v7369
  %v8568 = vunpack.c.l.b16 %v7370
  %v8569 = vunpack.c.l.b16 %v7371
  %v8570 = vunpack.c.l.b16 %v7372
  %v8571 = vunpack.c.l.b16 %v7373
  %v8572 = vunpack.c.l.b16 %v7374
  %v8573 = vunpack.c.l.b16 %v7375
  %v8574 = vunpack.c.l.b16 %v7376
  %v8575 = vunpack.c.l.b16 %v7377
  %v8576 = vunpack.c.l.b16 %v7378
  %v8577 = vunpack.c.l.b16 %v7379
  %v8578 = vunpack.c.l.b16 %v7380
  %v8579 = vunpack.c.l.b16 %v7381
  %v8580 = vunpack.c.l.b16 %v7382
  %v8581 = vunpack.c.l.b16 %v7383
  %v8582 = vunpack.c.l.b16 %v7384
  %v8583 = vunpack.c.l.b16 %v7385
  %v8584 = vunpack.c.l.b16 %v7386
  %v8585 = vunpack.c.l.b16 %v7387
  %v8586 = vunpack.c.l.b16 %v7388
  %v8587 = vunpack.c.l.b16 %v7389
  %v8588 = vunpack.c.l.b16 %v7390
  %v8589 = vunpack.c.l.b16 %v7391
  %v8590 = vunpack.c.l.b16 %v7392
  %v8591 = vunpack.c.l.b16 %v7393
  %v8592 = vunpack.c.l.b16 %v7394
  %v8593 = vunpack.c.l.b16 %v7395
  %v8594 = vunpack.c.l.b16 %v7396
  %v8595 = vunpack.c.l.b16 %v7397
  %v8596 = vunpack.c.l.b16 %v7398
  %v8597 = vpack.c.b16 %v8534, %v8533
  %v8598 = vpack.c.b16 %v8536, %v8535
  %v8599 = vpack.c.b16 %v8538, %v8537
  %v8600 = vpack.c.b16 %v8540, %v8539
  %v8601 = vpack.c.b16 %v8542, %v8541
  %v8602 = vpack.c.b16 %v8544, %v8543
  %v8603 = vpack.c.b16 %v8546, %v8545
  %v8604 = vpack.c.b16 %v8548, %v8547
  %v8605 = vpack.c.b16 %v8550, %v8549
  %v8606 = vpack.c.b16 %v8552, %v8551
  %v8607 = vpack.c.b16 %v8554, %v8553
  %v8608 = vpack.c.b16 %v8556, %v8555
  %v8609 = vpack.c.b16 %v8558, %v8557
  %v8610 = vpack.c.b16 %v8560, %v8559
  %v8611 = vpack.c.b16 %v8562, %v8561
  %v8612 = vpack.c.b16 %v8564, %v8563
  %v8613 = vpack.c.b16 %v8566, %v8565
  %v8614 = vpack.c.b16 %v8568, %v8567
  %v8615 = vpack.c.b16 %v8570, %v8569
  %v8616 = vpack.c.b16 %v8572, %v8571
  %v8617 = vpack.c.b16 %v8574, %v8573
  %v8618 = vpack.c.b16 %v8576, %v8575
  %v8619 = vpack.c.b16 %v8578, %v8577
  %v8620 = vpack.c.b16 %v8580, %v8579
  %v8621 = vpack.c.b16 %v8582, %v8581
  %v8622 = vpack.c.b16 %v8584, %v8583
  %v8623 = vpack.c.b16 %v8586, %v8585
  %v8624 = vpack.c.b16 %v8588, %v8587
  %v8625 = vpack.c.b16 %v8590, %v8589
  %v8626 = vpack.c.b16 %v8592, %v8591
  %v8627 = vpack.c.b16 %v8594, %v8593
  %v8628 = vpack.c.b16 %v8596, %v8595
  %v8630 = vsel %vm6561, %v8597, 0
  %v8633 = vsel %vm6561, %v8598, 0
  %v8636 = vsel %vm6561, %v8599, 0
  %v8639 = vsel %vm6561, %v8600, 0
  %v8642 = vsel %vm6561, %v8601, 0
  %v8645 = vsel %vm6561, %v8602, 0
  %v8648 = vsel %vm6561, %v8603, 0
  %v8651 = vsel %vm6561, %v8604, 0
  %v8654 = vsel %vm6561, %v8605, 0
  %v8657 = vsel %vm6561, %v8606, 0
  %v8660 = vsel %vm6561, %v8607, 0
  %v8663 = vsel %vm6561, %v8608, 0
  %v8666 = vsel %vm6561, %v8609, 0
  %v8669 = vsel %vm6561, %v8610, 0
  %v8672 = vsel %vm6561, %v8611, 0
  %v8675 = vsel %vm6561, %v8612, 0
  %v8678 = vsel %vm6561, %v8613, 0
  %v8681 = vsel %vm6561, %v8614, 0
  %v8684 = vsel %vm6561, %v8615, 0
  %v8687 = vsel %vm6561, %v8616, 0
  %v8690 = vsel %vm6561, %v8617, 0
  %v8693 = vsel %vm6561, %v8618, 0
  %v8696 = vsel %vm6561, %v8619, 0
  %v8699 = vsel %vm6561, %v8620, 0
  %v8702 = vsel %vm6561, %v8621, 0
  %v8705 = vsel %vm6561, %v8622, 0
  %v8708 = vsel %vm6561, %v8623, 0
  %v8711 = vsel %vm6561, %v8624, 0
  %v8714 = vsel %vm6561, %v8625, 0
  %v8717 = vsel %vm6561, %v8626, 0
  %v8720 = vsel %vm6561, %v8627, 0
  %v8723 = vsel %vm6561, %v8628, 0
  %v8726 = vsel %vm8176, %v7917, 0
  %8728 = vmatprep.subr.bf16.mxu0 0
  %8729 = vmatpush1.bf16.msra.mxu0 %v8726
  %8730 = vmatprep.subr.bf16.mxu0 0
  %8731 = vmatpush1.bf16.msra.mxu0 0
  %8732 = vmatprep.subr.bf16.mxu0 0
  %8733 = vmatpush1.bf16.msra.mxu0 0
  %8734 = vmatprep.subr.bf16.mxu0 0
  %8735 = vmatpush1.bf16.msra.mxu0 0
  %8736 = vmatprep.subr.bf16.mxu0 0
  %8737 = vmatpush1.bf16.msra.mxu0 0
  %8738 = vmatprep.subr.bf16.mxu0 0
  %8739 = vmatpush1.bf16.msra.mxu0 0
  %8740 = vmatprep.subr.bf16.mxu0 0
  %8741 = vmatpush1.bf16.msra.mxu0 0
  %8742 = vmatprep.subr.bf16.mxu0 0
  %8743 = vmatpush1.bf16.msra.mxu0 0
  %8744 = vmatprep.subr.bf16.mxu0 0
  %8745 = vmatpush1.bf16.msra.mxu0 0
  %8746 = vmatprep.subr.bf16.mxu0 0
  %8747 = vmatpush1.bf16.msra.mxu0 0
  %8748 = vmatprep.subr.bf16.mxu0 0
  %8749 = vmatpush1.bf16.msra.mxu0 0
  %8750 = vmatprep.subr.bf16.mxu0 0
  %8751 = vmatpush1.bf16.msra.mxu0 0
  %8752 = vmatprep.subr.bf16.mxu0 0
  %8753 = vmatpush1.bf16.msra.mxu0 0
  %8754 = vmatprep.subr.bf16.mxu0 0
  %8755 = vmatpush1.bf16.msra.mxu0 0
  %8756 = vmatprep.subr.bf16.mxu0 0
  %8757 = vmatpush1.bf16.msra.mxu0 0
  %8758 = vmatprep.subr.bf16.mxu0 0
  %8759 = vmatpush1.bf16.msra.mxu0 0
  %8760 = vmatprep.mubr.bf16.mxu0 0
  %8761 = vmatmul.mubr.bf16.gmra.mrb[0].mxu0 %v8630
  %v8762 = vpop.f32.mrb[0].mxu0
  %v8763 = vadd.f32 %v8215, %v8762
  %v8764 = vpop.f32.mrb[0].mxu0
  %v8765 = vpop.f32.mrb[0].mxu0
  %v8766 = vadd.f32 %v8218, %v8765
  %v8767 = vpop.f32.mrb[0].mxu0
  %8768 = vmatprep.mubr.bf16.mxu0 0
  %8769 = vmatmul.mubr.bf16.gmra.mrb[0].mxu0 %v8633
  %v8770 = vpop.f32.mrb[0].mxu0
  %v8771 = vadd.f32 %v8223, %v8770
  %v8772 = vpop.f32.mrb[0].mxu0
  %v8773 = vpop.f32.mrb[0].mxu0
  %v8774 = vadd.f32 %v8226, %v8773
  %v8775 = vpop.f32.mrb[0].mxu0
  %8776 = vmatprep.mubr.bf16.mxu0 0
  %8777 = vmatmul.mubr.bf16.gmra.mrb[0].mxu0 %v8636
  %v8778 = vpop.f32.mrb[0].mxu0
  %v8779 = vadd.f32 %v8231, %v8778
  %v8780 = vpop.f32.mrb[0].mxu0
  %v8781 = vpop.f32.mrb[0].mxu0
  %v8782 = vadd.f32 %v8234, %v8781
  %v8783 = vpop.f32.mrb[0].mxu0
  %8784 = vmatprep.mubr.bf16.mxu0 0
  %8785 = vmatmul.mubr.bf16.gmra.mrb[0].mxu0 %v8639
  %v8786 = vpop.f32.mrb[0].mxu0
  %v8787 = vadd.f32 %v8239, %v8786
  %v8788 = vpop.f32.mrb[0].mxu0
  %v8789 = vpop.f32.mrb[0].mxu0
  %v8790 = vadd.f32 %v8242, %v8789
  %v8791 = vpop.f32.mrb[0].mxu0
  %8792 = vmatprep.mubr.bf16.mxu0 0
  %8793 = vmatmul.mubr.bf16.gmra.mrb[0].mxu0 %v8642
  %v8794 = vpop.f32.mrb[0].mxu0
  %v8795 = vadd.f32 %v8247, %v8794
  %v8796 = vpop.f32.mrb[0].mxu0
  %v8797 = vpop.f32.mrb[0].mxu0
  %v8798 = vadd.f32 %v8250, %v8797
  %v8799 = vpop.f32.mrb[0].mxu0
  %8800 = vmatprep.mubr.bf16.mxu0 0
  %8801 = vmatmul.mubr.bf16.gmra.mrb[0].mxu0 %v8645
  %v8802 = vpop.f32.mrb[0].mxu0
  %v8803 = vadd.f32 %v8255, %v8802
  %v8804 = vpop.f32.mrb[0].mxu0
  %v8805 = vpop.f32.mrb[0].mxu0
  %v8806 = vadd.f32 %v8258, %v8805
  %v8807 = vpop.f32.mrb[0].mxu0
  %8808 = vmatprep.mubr.bf16.mxu0 0
  %8809 = vmatmul.mubr.bf16.gmra.mrb[0].mxu0 %v8648
  %v8810 = vpop.f32.mrb[0].mxu0
  %v8811 = vadd.f32 %v8263, %v8810
  %v8812 = vpop.f32.mrb[0].mxu0
  %v8813 = vpop.f32.mrb[0].mxu0
  %v8814 = vadd.f32 %v8266, %v8813
  %v8815 = vpop.f32.mrb[0].mxu0
  %8816 = vmatprep.mubr.bf16.mxu0 0
  %8817 = vmatmul.mubr.bf16.gmra.mrb[0].mxu0 %v8651
  %v8818 = vpop.f32.mrb[0].mxu0
  %v8819 = vadd.f32 %v8271, %v8818
  %v8820 = vpop.f32.mrb[0].mxu0
  %v8821 = vpop.f32.mrb[0].mxu0
  %v8822 = vadd.f32 %v8274, %v8821
  %v8823 = vpop.f32.mrb[0].mxu0
  %8824 = vmatprep.mubr.bf16.mxu0 0
  %8825 = vmatmul.mubr.bf16.gmra.mrb[0].mxu0 %v8654
  %v8826 = vpop.f32.mrb[0].mxu0
  %v8827 = vadd.f32 %v8279, %v8826
  %v8828 = vpop.f32.mrb[0].mxu0
  %v8829 = vpop.f32.mrb[0].mxu0
  %v8830 = vadd.f32 %v8282, %v8829
  %v8831 = vpop.f32.mrb[0].mxu0
  %8832 = vmatprep.mubr.bf16.mxu0 0
  %8833 = vmatmul.mubr.bf16.gmra.mrb[0].mxu0 %v8657
  %v8834 = vpop.f32.mrb[0].mxu0
  %v8835 = vadd.f32 %v8287, %v8834
  %v8836 = vpop.f32.mrb[0].mxu0
  %v8837 = vpop.f32.mrb[0].mxu0
  %v8838 = vadd.f32 %v8290, %v8837
  %v8839 = vpop.f32.mrb[0].mxu0
  %8840 = vmatprep.mubr.bf16.mxu0 0
  %8841 = vmatmul.mubr.bf16.gmra.mrb[0].mxu0 %v8660
  %v8842 = vpop.f32.mrb[0].mxu0
  %v8843 = vadd.f32 %v8295, %v8842
  %v8844 = vpop.f32.mrb[0].mxu0
  %v8845 = vpop.f32.mrb[0].mxu0
  %v8846 = vadd.f32 %v8298, %v8845
  %v8847 = vpop.f32.mrb[0].mxu0
  %8848 = vmatprep.mubr.bf16.mxu0 0
  %8849 = vmatmul.mubr.bf16.gmra.mrb[0].mxu0 %v8663
  %v8850 = vpop.f32.mrb[0].mxu0
  %v8851 = vadd.f32 %v8303, %v8850
  %v8852 = vpop.f32.mrb[0].mxu0
  %v8853 = vpop.f32.mrb[0].mxu0
  %v8854 = vadd.f32 %v8306, %v8853
  %v8855 = vpop.f32.mrb[0].mxu0
  %8856 = vmatprep.mubr.bf16.mxu0 0
  %8857 = vmatmul.mubr.bf16.gmra.mrb[0].mxu0 %v8666
  %v8858 = vpop.f32.mrb[0].mxu0
  %v8859 = vadd.f32 %v8311, %v8858
  %v8860 = vpop.f32.mrb[0].mxu0
  %v8861 = vpop.f32.mrb[0].mxu0
  %v8862 = vadd.f32 %v8314, %v8861
  %v8863 = vpop.f32.mrb[0].mxu0
  %8864 = vmatprep.mubr.bf16.mxu0 0
  %8865 = vmatmul.mubr.bf16.gmra.mrb[0].mxu0 %v8669
  %v8866 = vpop.f32.mrb[0].mxu0
  %v8867 = vadd.f32 %v8319, %v8866
  %v8868 = vpop.f32.mrb[0].mxu0
  %v8869 = vpop.f32.mrb[0].mxu0
  %v8870 = vadd.f32 %v8322, %v8869
  %v8871 = vpop.f32.mrb[0].mxu0
  %8872 = vmatprep.mubr.bf16.mxu0 0
  %8873 = vmatmul.mubr.bf16.gmra.mrb[0].mxu0 %v8672
  %v8874 = vpop.f32.mrb[0].mxu0
  %v8875 = vadd.f32 %v8327, %v8874
  %v8876 = vpop.f32.mrb[0].mxu0
  %v8877 = vpop.f32.mrb[0].mxu0
  %v8878 = vadd.f32 %v8330, %v8877
  %v8879 = vpop.f32.mrb[0].mxu0
  %8880 = vmatprep.mubr.bf16.mxu0 0
  %8881 = vmatmul.mubr.bf16.gmra.mrb[0].mxu0 %v8675
  %v8882 = vpop.f32.mrb[0].mxu0
  %v8883 = vadd.f32 %v8335, %v8882
  %v8884 = vpop.f32.mrb[0].mxu0
  %v8885 = vpop.f32.mrb[0].mxu0
  %v8886 = vadd.f32 %v8338, %v8885
  %v8887 = vpop.f32.mrb[0].mxu0
  %8888 = vmatprep.mubr.bf16.mxu0 0
  %8889 = vmatmul.mubr.bf16.gmra.mrb[0].mxu0 %v8678
  %v8890 = vpop.f32.mrb[0].mxu0
  %v8891 = vadd.f32 %v8343, %v8890
  %v8892 = vpop.f32.mrb[0].mxu0
  %v8893 = vpop.f32.mrb[0].mxu0
  %v8894 = vadd.f32 %v8346, %v8893
  %v8895 = vpop.f32.mrb[0].mxu0
  %8896 = vmatprep.mubr.bf16.mxu0 0
  %8897 = vmatmul.mubr.bf16.gmra.mrb[0].mxu0 %v8681
  %v8898 = vpop.f32.mrb[0].mxu0
  %v8899 = vadd.f32 %v8351, %v8898
  %v8900 = vpop.f32.mrb[0].mxu0
  %v8901 = vpop.f32.mrb[0].mxu0
  %v8902 = vadd.f32 %v8354, %v8901
  %v8903 = vpop.f32.mrb[0].mxu0
  %8904 = vmatprep.mubr.bf16.mxu0 0
  %8905 = vmatmul.mubr.bf16.gmra.mrb[0].mxu0 %v8684
  %v8906 = vpop.f32.mrb[0].mxu0
  %v8907 = vadd.f32 %v8359, %v8906
  %v8908 = vpop.f32.mrb[0].mxu0
  %v8909 = vpop.f32.mrb[0].mxu0
  %v8910 = vadd.f32 %v8362, %v8909
  %v8911 = vpop.f32.mrb[0].mxu0
  %8912 = vmatprep.mubr.bf16.mxu0 0
  %8913 = vmatmul.mubr.bf16.gmra.mrb[0].mxu0 %v8687
  %v8914 = vpop.f32.mrb[0].mxu0
  %v8915 = vadd.f32 %v8367, %v8914
  %v8916 = vpop.f32.mrb[0].mxu0
  %v8917 = vpop.f32.mrb[0].mxu0
  %v8918 = vadd.f32 %v8370, %v8917
  %v8919 = vpop.f32.mrb[0].mxu0
  %8920 = vmatprep.mubr.bf16.mxu0 0
  %8921 = vmatmul.mubr.bf16.gmra.mrb[0].mxu0 %v8690
  %v8922 = vpop.f32.mrb[0].mxu0
  %v8923 = vadd.f32 %v8375, %v8922
  %v8924 = vpop.f32.mrb[0].mxu0
  %v8925 = vpop.f32.mrb[0].mxu0
  %v8926 = vadd.f32 %v8378, %v8925
  %v8927 = vpop.f32.mrb[0].mxu0
  %8928 = vmatprep.mubr.bf16.mxu0 0
  %8929 = vmatmul.mubr.bf16.gmra.mrb[0].mxu0 %v8693
  %v8930 = vpop.f32.mrb[0].mxu0
  %v8931 = vadd.f32 %v8383, %v8930
  %v8932 = vpop.f32.mrb[0].mxu0
  %v8933 = vpop.f32.mrb[0].mxu0
  %v8934 = vadd.f32 %v8386, %v8933
  %v8935 = vpop.f32.mrb[0].mxu0
  %8936 = vmatprep.mubr.bf16.mxu0 0
  %8937 = vmatmul.mubr.bf16.gmra.mrb[0].mxu0 %v8696
  %v8938 = vpop.f32.mrb[0].mxu0
  %v8939 = vadd.f32 %v8391, %v8938
  %v8940 = vpop.f32.mrb[0].mxu0
  %v8941 = vpop.f32.mrb[0].mxu0
  %v8942 = vadd.f32 %v8394, %v8941
  %v8943 = vpop.f32.mrb[0].mxu0
  %8944 = vmatprep.mubr.bf16.mxu0 0
  %8945 = vmatmul.mubr.bf16.gmra.mrb[0].mxu0 %v8699
  %v8946 = vpop.f32.mrb[0].mxu0
  %v8947 = vadd.f32 %v8399, %v8946
  %v8948 = vpop.f32.mrb[0].mxu0
  %v8949 = vpop.f32.mrb[0].mxu0
  %v8950 = vadd.f32 %v8402, %v8949
  %v8951 = vpop.f32.mrb[0].mxu0
  %8952 = vmatprep.mubr.bf16.mxu0 0
  %8953 = vmatmul.mubr.bf16.gmra.mrb[0].mxu0 %v8702
  %v8954 = vpop.f32.mrb[0].mxu0
  %v8955 = vadd.f32 %v8407, %v8954
  %v8956 = vpop.f32.mrb[0].mxu0
  %v8957 = vpop.f32.mrb[0].mxu0
  %v8958 = vadd.f32 %v8410, %v8957
  %v8959 = vpop.f32.mrb[0].mxu0
  %8960 = vmatprep.mubr.bf16.mxu0 0
  %8961 = vmatmul.mubr.bf16.gmra.mrb[0].mxu0 %v8705
  %v8962 = vpop.f32.mrb[0].mxu0
  %v8963 = vadd.f32 %v8415, %v8962
  %v8964 = vpop.f32.mrb[0].mxu0
  %v8965 = vpop.f32.mrb[0].mxu0
  %v8966 = vadd.f32 %v8418, %v8965
  %v8967 = vpop.f32.mrb[0].mxu0
  %8968 = vmatprep.mubr.bf16.mxu0 0
  %8969 = vmatmul.mubr.bf16.gmra.mrb[0].mxu0 %v8708
  %v8970 = vpop.f32.mrb[0].mxu0
  %v8971 = vadd.f32 %v8423, %v8970
  %v8972 = vpop.f32.mrb[0].mxu0
  %v8973 = vpop.f32.mrb[0].mxu0
  %v8974 = vadd.f32 %v8426, %v8973
  %v8975 = vpop.f32.mrb[0].mxu0
  %8976 = vmatprep.mubr.bf16.mxu0 0
  %8977 = vmatmul.mubr.bf16.gmra.mrb[0].mxu0 %v8711
  %v8978 = vpop.f32.mrb[0].mxu0
  %v8979 = vadd.f32 %v8431, %v8978
  %v8980 = vpop.f32.mrb[0].mxu0
  %v8981 = vpop.f32.mrb[0].mxu0
  %v8982 = vadd.f32 %v8434, %v8981
  %v8983 = vpop.f32.mrb[0].mxu0
  %8984 = vmatprep.mubr.bf16.mxu0 0
  %8985 = vmatmul.mubr.bf16.gmra.mrb[0].mxu0 %v8714
  %v8986 = vpop.f32.mrb[0].mxu0
  %v8987 = vadd.f32 %v8439, %v8986
  %v8988 = vpop.f32.mrb[0].mxu0
  %v8989 = vpop.f32.mrb[0].mxu0
  %v8990 = vadd.f32 %v8442, %v8989
  %v8991 = vpop.f32.mrb[0].mxu0
  %8992 = vmatprep.mubr.bf16.mxu0 0
  %8993 = vmatmul.mubr.bf16.gmra.mrb[0].mxu0 %v8717
  %v8994 = vpop.f32.mrb[0].mxu0
  %v8995 = vadd.f32 %v8447, %v8994
  %v8996 = vpop.f32.mrb[0].mxu0
  %v8997 = vpop.f32.mrb[0].mxu0
  %v8998 = vadd.f32 %v8450, %v8997
  %v8999 = vpop.f32.mrb[0].mxu0
  %9000 = vmatprep.mubr.bf16.mxu0 0
  %9001 = vmatmul.mubr.bf16.gmra.mrb[0].mxu0 %v8720
  %v9002 = vpop.f32.mrb[0].mxu0
  %v9003 = vadd.f32 %v8455, %v9002
  %v9004 = vpop.f32.mrb[0].mxu0
  %v9005 = vpop.f32.mrb[0].mxu0
  %v9006 = vadd.f32 %v8458, %v9005
  %v9007 = vpop.f32.mrb[0].mxu0
  %9008 = vmatprep.mubr.bf16.mxu0 0
  %9009 = vmatmul.mubr.bf16.gmra.mrb[0].mxu0 %v8723
  %v9010 = vpop.f32.mrb[0].mxu0
  %v9011 = vadd.f32 %v8463, %v9010
  %v9012 = vpop.f32.mrb[0].mxu0
  %v9013 = vpop.f32.mrb[0].mxu0
  %v9014 = vadd.f32 %v8466, %v9013
  %v9015 = vpop.f32.mrb[0].mxu0
  %9016 = vdwg.mxu0
  %s9017 = scalar_lea.vmem %s4, 8
  %v9018 = vld [vmem:[%s9017] sm:$0xf]
  %v9083 = vunpack.c.l.b16 %v7465
  %v9084 = vunpack.c.l.b16 %v7466
  %v9085 = vunpack.c.l.b16 %v7467
  %v9086 = vunpack.c.l.b16 %v7468
  %v9087 = vunpack.c.l.b16 %v7469
  %v9088 = vunpack.c.l.b16 %v7470
  %v9089 = vunpack.c.l.b16 %v7471
  %v9090 = vunpack.c.l.b16 %v7472
  %v9091 = vunpack.c.l.b16 %v7473
  %v9092 = vunpack.c.l.b16 %v7474
  %v9093 = vunpack.c.l.b16 %v7475
  %v9094 = vunpack.c.l.b16 %v7476
  %v9095 = vunpack.c.l.b16 %v7477
  %v9096 = vunpack.c.l.b16 %v7478
  %v9097 = vunpack.c.l.b16 %v7479
  %v9098 = vunpack.c.l.b16 %v7480
  %v9099 = vunpack.c.l.b16 %v7481
  %v9100 = vunpack.c.l.b16 %v7482
  %v9101 = vunpack.c.l.b16 %v7483
  %v9102 = vunpack.c.l.b16 %v7484
  %v9103 = vunpack.c.l.b16 %v7485
  %v9104 = vunpack.c.l.b16 %v7486
  %v9105 = vunpack.c.l.b16 %v7487
  %v9106 = vunpack.c.l.b16 %v7488
  %v9107 = vunpack.c.l.b16 %v7489
  %v9108 = vunpack.c.l.b16 %v7490
  %v9109 = vunpack.c.l.b16 %v7491
  %v9110 = vunpack.c.l.b16 %v7492
  %v9111 = vunpack.c.l.b16 %v7493
  %v9112 = vunpack.c.l.b16 %v7494
  %v9113 = vunpack.c.l.b16 %v7495
  %v9114 = vunpack.c.l.b16 %v7496
  %v9115 = vunpack.c.l.b16 %v7497
  %v9116 = vunpack.c.l.b16 %v7498
  %v9117 = vunpack.c.l.b16 %v7499
  %v9118 = vunpack.c.l.b16 %v7500
  %v9119 = vunpack.c.l.b16 %v7501
  %v9120 = vunpack.c.l.b16 %v7502
  %v9121 = vunpack.c.l.b16 %v7503
  %v9122 = vunpack.c.l.b16 %v7504
  %v9123 = vunpack.c.l.b16 %v7505
  %v9124 = vunpack.c.l.b16 %v7506
  %v9125 = vunpack.c.l.b16 %v7507
  %v9126 = vunpack.c.l.b16 %v7508
  %v9127 = vunpack.c.l.b16 %v7509
  %v9128 = vunpack.c.l.b16 %v7510
  %v9129 = vunpack.c.l.b16 %v7511
  %v9130 = vunpack.c.l.b16 %v7512
  %v9131 = vunpack.c.l.b16 %v7513
  %v9132 = vunpack.c.l.b16 %v7514
  %v9133 = vunpack.c.l.b16 %v7515
  %v9134 = vunpack.c.l.b16 %v7516
  %v9135 = vunpack.c.l.b16 %v7517
  %v9136 = vunpack.c.l.b16 %v7518
  %v9137 = vunpack.c.l.b16 %v7519
  %v9138 = vunpack.c.l.b16 %v7520
  %v9139 = vunpack.c.l.b16 %v7521
  %v9140 = vunpack.c.l.b16 %v7522
  %v9141 = vunpack.c.l.b16 %v7523
  %v9142 = vunpack.c.l.b16 %v7524
  %v9143 = vunpack.c.l.b16 %v7525
  %v9144 = vunpack.c.l.b16 %v7526
  %v9145 = vunpack.c.l.b16 %v7527
  %v9146 = vunpack.c.l.b16 %v7528
  %v9147 = vpack.c.b16 %v9084, %v9083
  %v9148 = vpack.c.b16 %v9086, %v9085
  %v9149 = vpack.c.b16 %v9088, %v9087
  %v9150 = vpack.c.b16 %v9090, %v9089
  %v9151 = vpack.c.b16 %v9092, %v9091
  %v9152 = vpack.c.b16 %v9094, %v9093
  %v9153 = vpack.c.b16 %v9096, %v9095
  %v9154 = vpack.c.b16 %v9098, %v9097
  %v9155 = vpack.c.b16 %v9100, %v9099
  %v9156 = vpack.c.b16 %v9102, %v9101
  %v9157 = vpack.c.b16 %v9104, %v9103
  %v9158 = vpack.c.b16 %v9106, %v9105
  %v9159 = vpack.c.b16 %v9108, %v9107
  %v9160 = vpack.c.b16 %v9110, %v9109
  %v9161 = vpack.c.b16 %v9112, %v9111
  %v9162 = vpack.c.b16 %v9114, %v9113
  %v9163 = vpack.c.b16 %v9116, %v9115
  %v9164 = vpack.c.b16 %v9118, %v9117
  %v9165 = vpack.c.b16 %v9120, %v9119
  %v9166 = vpack.c.b16 %v9122, %v9121
  %v9167 = vpack.c.b16 %v9124, %v9123
  %v9168 = vpack.c.b16 %v9126, %v9125
  %v9169 = vpack.c.b16 %v9128, %v9127
  %v9170 = vpack.c.b16 %v9130, %v9129
  %v9171 = vpack.c.b16 %v9132, %v9131
  %v9172 = vpack.c.b16 %v9134, %v9133
  %v9173 = vpack.c.b16 %v9136, %v9135
  %v9174 = vpack.c.b16 %v9138, %v9137
  %v9175 = vpack.c.b16 %v9140, %v9139
  %v9176 = vpack.c.b16 %v9142, %v9141
  %v9177 = vpack.c.b16 %v9144, %v9143
  %v9178 = vpack.c.b16 %v9146, %v9145
  %v9180 = vsel %vm6561, %v9147, 0
  %v9183 = vsel %vm6561, %v9148, 0
  %v9186 = vsel %vm6561, %v9149, 0
  %v9189 = vsel %vm6561, %v9150, 0
  %v9192 = vsel %vm6561, %v9151, 0
  %v9195 = vsel %vm6561, %v9152, 0
  %v9198 = vsel %vm6561, %v9153, 0
  %v9201 = vsel %vm6561, %v9154, 0
  %v9204 = vsel %vm6561, %v9155, 0
  %v9207 = vsel %vm6561, %v9156, 0
  %v9210 = vsel %vm6561, %v9157, 0
  %v9213 = vsel %vm6561, %v9158, 0
  %v9216 = vsel %vm6561, %v9159, 0
  %v9219 = vsel %vm6561, %v9160, 0
  %v9222 = vsel %vm6561, %v9161, 0
  %v9225 = vsel %vm6561, %v9162, 0
  %v9228 = vsel %vm6561, %v9163, 0
  %v9231 = vsel %vm6561, %v9164, 0
  %v9234 = vsel %vm6561, %v9165, 0
  %v9237 = vsel %vm6561, %v9166, 0
  %v9240 = vsel %vm6561, %v9167, 0
  %v9243 = vsel %vm6561, %v9168, 0
  %v9246 = vsel %vm6561, %v9169, 0
  %v9249 = vsel %vm6561, %v9170, 0
  %v9252 = vsel %vm6561, %v9171, 0
  %v9255 = vsel %vm6561, %v9172, 0
  %v9258 = vsel %vm6561, %v9173, 0
  %v9261 = vsel %vm6561, %v9174, 0
  %v9264 = vsel %vm6561, %v9175, 0
  %v9267 = vsel %vm6561, %v9176, 0
  %v9270 = vsel %vm6561, %v9177, 0
  %v9273 = vsel %vm6561, %v9178, 0
  %v9276 = vsel %vm8176, %v9018, 0
  %9278 = vmatprep.subr.bf16.mxu0 0
  %9279 = vmatpush1.bf16.msra.mxu0 %v9276
  %9280 = vmatprep.subr.bf16.mxu0 0
  %9281 = vmatpush1.bf16.msra.mxu0 0
  %9282 = vmatprep.subr.bf16.mxu0 0
  %9283 = vmatpush1.bf16.msra.mxu0 0
  %9284 = vmatprep.subr.bf16.mxu0 0
  %9285 = vmatpush1.bf16.msra.mxu0 0
  %9286 = vmatprep.subr.bf16.mxu0 0
  %9287 = vmatpush1.bf16.msra.mxu0 0
  %9288 = vmatprep.subr.bf16.mxu0 0
  %9289 = vmatpush1.bf16.msra.mxu0 0
  %9290 = vmatprep.subr.bf16.mxu0 0
  %9291 = vmatpush1.bf16.msra.mxu0 0
  %9292 = vmatprep.subr.bf16.mxu0 0
  %9293 = vmatpush1.bf16.msra.mxu0 0
  %9294 = vmatprep.subr.bf16.mxu0 0
  %9295 = vmatpush1.bf16.msra.mxu0 0
  %9296 = vmatprep.subr.bf16.mxu0 0
  %9297 = vmatpush1.bf16.msra.mxu0 0
  %9298 = vmatprep.subr.bf16.mxu0 0
  %9299 = vmatpush1.bf16.msra.mxu0 0
  %9300 = vmatprep.subr.bf16.mxu0 0
  %9301 = vmatpush1.bf16.msra.mxu0 0
  %9302 = vmatprep.subr.bf16.mxu0 0
  %9303 = vmatpush1.bf16.msra.mxu0 0
  %9304 = vmatprep.subr.bf16.mxu0 0
  %9305 = vmatpush1.bf16.msra.mxu0 0
  %9306 = vmatprep.subr.bf16.mxu0 0
  %9307 = vmatpush1.bf16.msra.mxu0 0
  %9308 = vmatprep.subr.bf16.mxu0 0
  %9309 = vmatpush1.bf16.msra.mxu0 0
  %9310 = vmatprep.mubr.bf16.mxu0 0
  %9311 = vmatmul.mubr.bf16.gmra.mrb[0].mxu0 %v9180
  %v9312 = vpop.f32.mrb[0].mxu0
  %v9313 = vadd.f32 0.0, %v9312
  %v9314 = vpop.f32.mrb[0].mxu0
  %v9315 = vpop.f32.mrb[0].mxu0
  %v9316 = vadd.f32 0.0, %v9315
  %v9317 = vpop.f32.mrb[0].mxu0
  %9318 = vmatprep.mubr.bf16.mxu0 0
  %9319 = vmatmul.mubr.bf16.gmra.mrb[0].mxu0 %v9183
  %v9320 = vpop.f32.mrb[0].mxu0
  %v9321 = vadd.f32 0.0, %v9320
  %v9322 = vpop.f32.mrb[0].mxu0
  %v9323 = vpop.f32.mrb[0].mxu0
  %v9324 = vadd.f32 0.0, %v9323
  %v9325 = vpop.f32.mrb[0].mxu0
  %9326 = vmatprep.mubr.bf16.mxu0 0
  %9327 = vmatmul.mubr.bf16.gmra.mrb[0].mxu0 %v9186
  %v9328 = vpop.f32.mrb[0].mxu0
  %v9329 = vadd.f32 0.0, %v9328
  %v9330 = vpop.f32.mrb[0].mxu0
  %v9331 = vpop.f32.mrb[0].mxu0
  %v9332 = vadd.f32 0.0, %v9331
  %v9333 = vpop.f32.mrb[0].mxu0
  %9334 = vmatprep.mubr.bf16.mxu0 0
  %9335 = vmatmul.mubr.bf16.gmra.mrb[0].mxu0 %v9189
  %v9336 = vpop.f32.mrb[0].mxu0
  %v9337 = vadd.f32 0.0, %v9336
  %v9338 = vpop.f32.mrb[0].mxu0
  %v9339 = vpop.f32.mrb[0].mxu0
  %v9340 = vadd.f32 0.0, %v9339
  %v9341 = vpop.f32.mrb[0].mxu0
  %9342 = vmatprep.mubr.bf16.mxu0 0
  %9343 = vmatmul.mubr.bf16.gmra.mrb[0].mxu0 %v9192
  %v9344 = vpop.f32.mrb[0].mxu0
  %v9345 = vadd.f32 0.0, %v9344
  %v9346 = vpop.f32.mrb[0].mxu0
  %v9347 = vpop.f32.mrb[0].mxu0
  %v9348 = vadd.f32 0.0, %v9347
  %v9349 = vpop.f32.mrb[0].mxu0
  %9350 = vmatprep.mubr.bf16.mxu0 0
  %9351 = vmatmul.mubr.bf16.gmra.mrb[0].mxu0 %v9195
  %v9352 = vpop.f32.mrb[0].mxu0
  %v9353 = vadd.f32 0.0, %v9352
  %v9354 = vpop.f32.mrb[0].mxu0
  %v9355 = vpop.f32.mrb[0].mxu0
  %v9356 = vadd.f32 0.0, %v9355
  %v9357 = vpop.f32.mrb[0].mxu0
  %9358 = vmatprep.mubr.bf16.mxu0 0
  %9359 = vmatmul.mubr.bf16.gmra.mrb[0].mxu0 %v9198
  %v9360 = vpop.f32.mrb[0].mxu0
  %v9361 = vadd.f32 0.0, %v9360
  %v9362 = vpop.f32.mrb[0].mxu0
  %v9363 = vpop.f32.mrb[0].mxu0
  %v9364 = vadd.f32 0.0, %v9363
  %v9365 = vpop.f32.mrb[0].mxu0
  %9366 = vmatprep.mubr.bf16.mxu0 0
  %9367 = vmatmul.mubr.bf16.gmra.mrb[0].mxu0 %v9201
  %v9368 = vpop.f32.mrb[0].mxu0
  %v9369 = vadd.f32 0.0, %v9368
  %v9370 = vpop.f32.mrb[0].mxu0
  %v9371 = vpop.f32.mrb[0].mxu0
  %v9372 = vadd.f32 0.0, %v9371
  %v9373 = vpop.f32.mrb[0].mxu0
  %9374 = vmatprep.mubr.bf16.mxu0 0
  %9375 = vmatmul.mubr.bf16.gmra.mrb[0].mxu0 %v9204
  %v9376 = vpop.f32.mrb[0].mxu0
  %v9377 = vadd.f32 0.0, %v9376
  %v9378 = vpop.f32.mrb[0].mxu0
  %v9379 = vpop.f32.mrb[0].mxu0
  %v9380 = vadd.f32 0.0, %v9379
  %v9381 = vpop.f32.mrb[0].mxu0
  %9382 = vmatprep.mubr.bf16.mxu0 0
  %9383 = vmatmul.mubr.bf16.gmra.mrb[0].mxu0 %v9207
  %v9384 = vpop.f32.mrb[0].mxu0
  %v9385 = vadd.f32 0.0, %v9384
  %v9386 = vpop.f32.mrb[0].mxu0
  %v9387 = vpop.f32.mrb[0].mxu0
  %v9388 = vadd.f32 0.0, %v9387
  %v9389 = vpop.f32.mrb[0].mxu0
  %9390 = vmatprep.mubr.bf16.mxu0 0
  %9391 = vmatmul.mubr.bf16.gmra.mrb[0].mxu0 %v9210
  %v9392 = vpop.f32.mrb[0].mxu0
  %v9393 = vadd.f32 0.0, %v9392
  %v9394 = vpop.f32.mrb[0].mxu0
  %v9395 = vpop.f32.mrb[0].mxu0
  %v9396 = vadd.f32 0.0, %v9395
  %v9397 = vpop.f32.mrb[0].mxu0
  %9398 = vmatprep.mubr.bf16.mxu0 0
  %9399 = vmatmul.mubr.bf16.gmra.mrb[0].mxu0 %v9213
  %v9400 = vpop.f32.mrb[0].mxu0
  %v9401 = vadd.f32 0.0, %v9400
  %v9402 = vpop.f32.mrb[0].mxu0
  %v9403 = vpop.f32.mrb[0].mxu0
  %v9404 = vadd.f32 0.0, %v9403
  %v9405 = vpop.f32.mrb[0].mxu0
  %9406 = vmatprep.mubr.bf16.mxu0 0
  %9407 = vmatmul.mubr.bf16.gmra.mrb[0].mxu0 %v9216
  %v9408 = vpop.f32.mrb[0].mxu0
  %v9409 = vadd.f32 0.0, %v9408
  %v9410 = vpop.f32.mrb[0].mxu0
  %v9411 = vpop.f32.mrb[0].mxu0
  %v9412 = vadd.f32 0.0, %v9411
  %v9413 = vpop.f32.mrb[0].mxu0
  %9414 = vmatprep.mubr.bf16.mxu0 0
  %9415 = vmatmul.mubr.bf16.gmra.mrb[0].mxu0 %v9219
  %v9416 = vpop.f32.mrb[0].mxu0
  %v9417 = vadd.f32 0.0, %v9416
  %v9418 = vpop.f32.mrb[0].mxu0
  %v9419 = vpop.f32.mrb[0].mxu0
  %v9420 = vadd.f32 0.0, %v9419
  %v9421 = vpop.f32.mrb[0].mxu0
  %9422 = vmatprep.mubr.bf16.mxu0 0
  %9423 = vmatmul.mubr.bf16.gmra.mrb[0].mxu0 %v9222
  %v9424 = vpop.f32.mrb[0].mxu0
  %v9425 = vadd.f32 0.0, %v9424
  %v9426 = vpop.f32.mrb[0].mxu0
  %v9427 = vpop.f32.mrb[0].mxu0
  %v9428 = vadd.f32 0.0, %v9427
  %v9429 = vpop.f32.mrb[0].mxu0
  %9430 = vmatprep.mubr.bf16.mxu0 0
  %9431 = vmatmul.mubr.bf16.gmra.mrb[0].mxu0 %v9225
  %v9432 = vpop.f32.mrb[0].mxu0
  %v9433 = vadd.f32 0.0, %v9432
  %v9434 = vpop.f32.mrb[0].mxu0
  %v9435 = vpop.f32.mrb[0].mxu0
  %v9436 = vadd.f32 0.0, %v9435
  %v9437 = vpop.f32.mrb[0].mxu0
  %9438 = vmatprep.mubr.bf16.mxu0 0
  %9439 = vmatmul.mubr.bf16.gmra.mrb[0].mxu0 %v9228
  %v9440 = vpop.f32.mrb[0].mxu0
  %v9441 = vadd.f32 0.0, %v9440
  %v9442 = vpop.f32.mrb[0].mxu0
  %v9443 = vpop.f32.mrb[0].mxu0
  %v9444 = vadd.f32 0.0, %v9443
  %v9445 = vpop.f32.mrb[0].mxu0
  %9446 = vmatprep.mubr.bf16.mxu0 0
  %9447 = vmatmul.mubr.bf16.gmra.mrb[0].mxu0 %v9231
  %v9448 = vpop.f32.mrb[0].mxu0
  %v9449 = vadd.f32 0.0, %v9448
  %v9450 = vpop.f32.mrb[0].mxu0
  %v9451 = vpop.f32.mrb[0].mxu0
  %v9452 = vadd.f32 0.0, %v9451
  %v9453 = vpop.f32.mrb[0].mxu0
  %9454 = vmatprep.mubr.bf16.mxu0 0
  %9455 = vmatmul.mubr.bf16.gmra.mrb[0].mxu0 %v9234
  %v9456 = vpop.f32.mrb[0].mxu0
  %v9457 = vadd.f32 0.0, %v9456
  %v9458 = vpop.f32.mrb[0].mxu0
  %v9459 = vpop.f32.mrb[0].mxu0
  %v9460 = vadd.f32 0.0, %v9459
  %v9461 = vpop.f32.mrb[0].mxu0
  %9462 = vmatprep.mubr.bf16.mxu0 0
  %9463 = vmatmul.mubr.bf16.gmra.mrb[0].mxu0 %v9237
  %v9464 = vpop.f32.mrb[0].mxu0
  %v9465 = vadd.f32 0.0, %v9464
  %v9466 = vpop.f32.mrb[0].mxu0
  %v9467 = vpop.f32.mrb[0].mxu0
  %v9468 = vadd.f32 0.0, %v9467
  %v9469 = vpop.f32.mrb[0].mxu0
  %9470 = vmatprep.mubr.bf16.mxu0 0
  %9471 = vmatmul.mubr.bf16.gmra.mrb[0].mxu0 %v9240
  %v9472 = vpop.f32.mrb[0].mxu0
  %v9473 = vadd.f32 0.0, %v9472
  %v9474 = vpop.f32.mrb[0].mxu0
  %v9475 = vpop.f32.mrb[0].mxu0
  %v9476 = vadd.f32 0.0, %v9475
  %v9477 = vpop.f32.mrb[0].mxu0
  %9478 = vmatprep.mubr.bf16.mxu0 0
  %9479 = vmatmul.mubr.bf16.gmra.mrb[0].mxu0 %v9243
  %v9480 = vpop.f32.mrb[0].mxu0
  %v9481 = vadd.f32 0.0, %v9480
  %v9482 = vpop.f32.mrb[0].mxu0
  %v9483 = vpop.f32.mrb[0].mxu0
  %v9484 = vadd.f32 0.0, %v9483
  %v9485 = vpop.f32.mrb[0].mxu0
  %9486 = vmatprep.mubr.bf16.mxu0 0
  %9487 = vmatmul.mubr.bf16.gmra.mrb[0].mxu0 %v9246
  %v9488 = vpop.f32.mrb[0].mxu0
  %v9489 = vadd.f32 0.0, %v9488
  %v9490 = vpop.f32.mrb[0].mxu0
  %v9491 = vpop.f32.mrb[0].mxu0
  %v9492 = vadd.f32 0.0, %v9491
  %v9493 = vpop.f32.mrb[0].mxu0
  %9494 = vmatprep.mubr.bf16.mxu0 0
  %9495 = vmatmul.mubr.bf16.gmra.mrb[0].mxu0 %v9249
  %v9496 = vpop.f32.mrb[0].mxu0
  %v9497 = vadd.f32 0.0, %v9496
  %v9498 = vpop.f32.mrb[0].mxu0
  %v9499 = vpop.f32.mrb[0].mxu0
  %v9500 = vadd.f32 0.0, %v9499
  %v9501 = vpop.f32.mrb[0].mxu0
  %9502 = vmatprep.mubr.bf16.mxu0 0
  %9503 = vmatmul.mubr.bf16.gmra.mrb[0].mxu0 %v9252
  %v9504 = vpop.f32.mrb[0].mxu0
  %v9505 = vadd.f32 0.0, %v9504
  %v9506 = vpop.f32.mrb[0].mxu0
  %v9507 = vpop.f32.mrb[0].mxu0
  %v9508 = vadd.f32 0.0, %v9507
  %v9509 = vpop.f32.mrb[0].mxu0
  %9510 = vmatprep.mubr.bf16.mxu0 0
  %9511 = vmatmul.mubr.bf16.gmra.mrb[0].mxu0 %v9255
  %v9512 = vpop.f32.mrb[0].mxu0
  %v9513 = vadd.f32 0.0, %v9512
  %v9514 = vpop.f32.mrb[0].mxu0
  %v9515 = vpop.f32.mrb[0].mxu0
  %v9516 = vadd.f32 0.0, %v9515
  %v9517 = vpop.f32.mrb[0].mxu0
  %9518 = vmatprep.mubr.bf16.mxu0 0
  %9519 = vmatmul.mubr.bf16.gmra.mrb[0].mxu0 %v9258
  %v9520 = vpop.f32.mrb[0].mxu0
  %v9521 = vadd.f32 0.0, %v9520
  %v9522 = vpop.f32.mrb[0].mxu0
  %v9523 = vpop.f32.mrb[0].mxu0
  %v9524 = vadd.f32 0.0, %v9523
  %v9525 = vpop.f32.mrb[0].mxu0
  %9526 = vmatprep.mubr.bf16.mxu0 0
  %9527 = vmatmul.mubr.bf16.gmra.mrb[0].mxu0 %v9261
  %v9528 = vpop.f32.mrb[0].mxu0
  %v9529 = vadd.f32 0.0, %v9528
  %v9530 = vpop.f32.mrb[0].mxu0
  %v9531 = vpop.f32.mrb[0].mxu0
  %v9532 = vadd.f32 0.0, %v9531
  %v9533 = vpop.f32.mrb[0].mxu0
  %9534 = vmatprep.mubr.bf16.mxu0 0
  %9535 = vmatmul.mubr.bf16.gmra.mrb[0].mxu0 %v9264
  %v9536 = vpop.f32.mrb[0].mxu0
  %v9537 = vadd.f32 0.0, %v9536
  %v9538 = vpop.f32.mrb[0].mxu0
  %v9539 = vpop.f32.mrb[0].mxu0
  %v9540 = vadd.f32 0.0, %v9539
  %v9541 = vpop.f32.mrb[0].mxu0
  %9542 = vmatprep.mubr.bf16.mxu0 0
  %9543 = vmatmul.mubr.bf16.gmra.mrb[0].mxu0 %v9267
  %v9544 = vpop.f32.mrb[0].mxu0
  %v9545 = vadd.f32 0.0, %v9544
  %v9546 = vpop.f32.mrb[0].mxu0
  %v9547 = vpop.f32.mrb[0].mxu0
  %v9548 = vadd.f32 0.0, %v9547
  %v9549 = vpop.f32.mrb[0].mxu0
  %9550 = vmatprep.mubr.bf16.mxu0 0
  %9551 = vmatmul.mubr.bf16.gmra.mrb[0].mxu0 %v9270
  %v9552 = vpop.f32.mrb[0].mxu0
  %v9553 = vadd.f32 0.0, %v9552
  %v9554 = vpop.f32.mrb[0].mxu0
  %v9555 = vpop.f32.mrb[0].mxu0
  %v9556 = vadd.f32 0.0, %v9555
  %v9557 = vpop.f32.mrb[0].mxu0
  %9558 = vmatprep.mubr.bf16.mxu0 0
  %9559 = vmatmul.mubr.bf16.gmra.mrb[0].mxu0 %v9273
  %v9560 = vpop.f32.mrb[0].mxu0
  %v9561 = vadd.f32 0.0, %v9560
  %v9562 = vpop.f32.mrb[0].mxu0
  %v9563 = vpop.f32.mrb[0].mxu0
  %v9564 = vadd.f32 0.0, %v9563
  %v9565 = vpop.f32.mrb[0].mxu0
  %9566 = vdwg.mxu0
  %v9567 = vadd.f32 %v8763, %v9313
  %v9568 = vadd.f32 %v8766, %v9316
  %v9569 = vadd.f32 %v8771, %v9321
  %v9570 = vadd.f32 %v8774, %v9324
  %v9571 = vadd.f32 %v8779, %v9329
  %v9572 = vadd.f32 %v8782, %v9332
  %v9573 = vadd.f32 %v8787, %v9337
  %v9574 = vadd.f32 %v8790, %v9340
  %v9575 = vadd.f32 %v8795, %v9345
  %v9576 = vadd.f32 %v8798, %v9348
  %v9577 = vadd.f32 %v8803, %v9353
  %v9578 = vadd.f32 %v8806, %v9356
  %v9579 = vadd.f32 %v8811, %v9361
  %v9580 = vadd.f32 %v8814, %v9364
  %v9581 = vadd.f32 %v8819, %v9369
  %v9582 = vadd.f32 %v8822, %v9372
  %v9583 = vadd.f32 %v8827, %v9377
  %v9584 = vadd.f32 %v8830, %v9380
  %v9585 = vadd.f32 %v8835, %v9385
  %v9586 = vadd.f32 %v8838, %v9388
  %v9587 = vadd.f32 %v8843, %v9393
  %v9588 = vadd.f32 %v8846, %v9396
  %v9589 = vadd.f32 %v8851, %v9401
  %v9590 = vadd.f32 %v8854, %v9404
  %v9591 = vadd.f32 %v8859, %v9409
  %v9592 = vadd.f32 %v8862, %v9412
  %v9593 = vadd.f32 %v8867, %v9417
  %v9594 = vadd.f32 %v8870, %v9420
  %v9595 = vadd.f32 %v8875, %v9425
  %v9596 = vadd.f32 %v8878, %v9428
  %v9597 = vadd.f32 %v8883, %v9433
  %v9598 = vadd.f32 %v8886, %v9436
  %v9599 = vadd.f32 %v8891, %v9441
  %v9600 = vadd.f32 %v8894, %v9444
  %v9601 = vadd.f32 %v8899, %v9449
  %v9602 = vadd.f32 %v8902, %v9452
  %v9603 = vadd.f32 %v8907, %v9457
  %v9604 = vadd.f32 %v8910, %v9460
  %v9605 = vadd.f32 %v8915, %v9465
  %v9606 = vadd.f32 %v8918, %v9468
  %v9607 = vadd.f32 %v8923, %v9473
  %v9608 = vadd.f32 %v8926, %v9476
  %v9609 = vadd.f32 %v8931, %v9481
  %v9610 = vadd.f32 %v8934, %v9484
  %v9611 = vadd.f32 %v8939, %v9489
  %v9612 = vadd.f32 %v8942, %v9492
  %v9613 = vadd.f32 %v8947, %v9497
  %v9614 = vadd.f32 %v8950, %v9500
  %v9615 = vadd.f32 %v8955, %v9505
  %v9616 = vadd.f32 %v8958, %v9508
  %v9617 = vadd.f32 %v8963, %v9513
  %v9618 = vadd.f32 %v8966, %v9516
  %v9619 = vadd.f32 %v8971, %v9521
  %v9620 = vadd.f32 %v8974, %v9524
  %v9621 = vadd.f32 %v8979, %v9529
  %v9622 = vadd.f32 %v8982, %v9532
  %v9623 = vadd.f32 %v8987, %v9537
  %v9624 = vadd.f32 %v8990, %v9540
  %v9625 = vadd.f32 %v8995, %v9545
  %v9626 = vadd.f32 %v8998, %v9548
  %v9627 = vadd.f32 %v9003, %v9553
  %v9628 = vadd.f32 %v9006, %v9556
  %v9629 = vadd.f32 %v9011, %v9561
  %v9630 = vadd.f32 %v9014, %v9564
  %s9631 = scalar_lea.vmem %s4, 12
  %v9632 = vld [vmem:[%s9631] sm:$0xf]
  %v9697 = vunpack.c.l.b16 %v7529
  %v9698 = vunpack.c.l.b16 %v7530
  %v9699 = vunpack.c.l.b16 %v7531
  %v9700 = vunpack.c.l.b16 %v7532
  %v9701 = vunpack.c.l.b16 %v7533
  %v9702 = vunpack.c.l.b16 %v7534
  %v9703 = vunpack.c.l.b16 %v7535
  %v9704 = vunpack.c.l.b16 %v7536
  %v9705 = vunpack.c.l.b16 %v7537
  %v9706 = vunpack.c.l.b16 %v7538
  %v9707 = vunpack.c.l.b16 %v7539
  %v9708 = vunpack.c.l.b16 %v7540
  %v9709 = vunpack.c.l.b16 %v7541
  %v9710 = vunpack.c.l.b16 %v7542
  %v9711 = vunpack.c.l.b16 %v7543
  %v9712 = vunpack.c.l.b16 %v7544
  %v9713 = vunpack.c.l.b16 %v7545
  %v9714 = vunpack.c.l.b16 %v7546
  %v9715 = vunpack.c.l.b16 %v7547
  %v9716 = vunpack.c.l.b16 %v7548
  %v9717 = vunpack.c.l.b16 %v7549
  %v9718 = vunpack.c.l.b16 %v7550
  %v9719 = vunpack.c.l.b16 %v7551
  %v9720 = vunpack.c.l.b16 %v7552
  %v9721 = vunpack.c.l.b16 %v7553
  %v9722 = vunpack.c.l.b16 %v7554
  %v9723 = vunpack.c.l.b16 %v7555
  %v9724 = vunpack.c.l.b16 %v7556
  %v9725 = vunpack.c.l.b16 %v7557
  %v9726 = vunpack.c.l.b16 %v7558
  %v9727 = vunpack.c.l.b16 %v7559
  %v9728 = vunpack.c.l.b16 %v7560
  %v9729 = vunpack.c.l.b16 %v7561
  %v9730 = vunpack.c.l.b16 %v7562
  %v9731 = vunpack.c.l.b16 %v7563
  %v9732 = vunpack.c.l.b16 %v7564
  %v9733 = vunpack.c.l.b16 %v7565
  %v9734 = vunpack.c.l.b16 %v7566
  %v9735 = vunpack.c.l.b16 %v7567
  %v9736 = vunpack.c.l.b16 %v7568
  %v9737 = vunpack.c.l.b16 %v7569
  %v9738 = vunpack.c.l.b16 %v7570
  %v9739 = vunpack.c.l.b16 %v7571
  %v9740 = vunpack.c.l.b16 %v7572
  %v9741 = vunpack.c.l.b16 %v7573
  %v9742 = vunpack.c.l.b16 %v7574
  %v9743 = vunpack.c.l.b16 %v7575
  %v9744 = vunpack.c.l.b16 %v7576
  %v9745 = vunpack.c.l.b16 %v7577
  %v9746 = vunpack.c.l.b16 %v7578
  %v9747 = vunpack.c.l.b16 %v7579
  %v9748 = vunpack.c.l.b16 %v7580
  %v9749 = vunpack.c.l.b16 %v7581
  %v9750 = vunpack.c.l.b16 %v7582
  %v9751 = vunpack.c.l.b16 %v7583
  %v9752 = vunpack.c.l.b16 %v7584
  %v9753 = vunpack.c.l.b16 %v7585
  %v9754 = vunpack.c.l.b16 %v7586
  %v9755 = vunpack.c.l.b16 %v7587
  %v9756 = vunpack.c.l.b16 %v7588
  %v9757 = vunpack.c.l.b16 %v7589
  %v9758 = vunpack.c.l.b16 %v7590
  %v9759 = vunpack.c.l.b16 %v7591
  %v9760 = vunpack.c.l.b16 %v7592
  %v9761 = vpack.c.b16 %v9698, %v9697
  %v9762 = vpack.c.b16 %v9700, %v9699
  %v9763 = vpack.c.b16 %v9702, %v9701
  %v9764 = vpack.c.b16 %v9704, %v9703
  %v9765 = vpack.c.b16 %v9706, %v9705
  %v9766 = vpack.c.b16 %v9708, %v9707
  %v9767 = vpack.c.b16 %v9710, %v9709
  %v9768 = vpack.c.b16 %v9712, %v9711
  %v9769 = vpack.c.b16 %v9714, %v9713
  %v9770 = vpack.c.b16 %v9716, %v9715
  %v9771 = vpack.c.b16 %v9718, %v9717
  %v9772 = vpack.c.b16 %v9720, %v9719
  %v9773 = vpack.c.b16 %v9722, %v9721
  %v9774 = vpack.c.b16 %v9724, %v9723
  %v9775 = vpack.c.b16 %v9726, %v9725
  %v9776 = vpack.c.b16 %v9728, %v9727
  %v9777 = vpack.c.b16 %v9730, %v9729
  %v9778 = vpack.c.b16 %v9732, %v9731
  %v9779 = vpack.c.b16 %v9734, %v9733
  %v9780 = vpack.c.b16 %v9736, %v9735
  %v9781 = vpack.c.b16 %v9738, %v9737
  %v9782 = vpack.c.b16 %v9740, %v9739
  %v9783 = vpack.c.b16 %v9742, %v9741
  %v9784 = vpack.c.b16 %v9744, %v9743
  %v9785 = vpack.c.b16 %v9746, %v9745
  %v9786 = vpack.c.b16 %v9748, %v9747
  %v9787 = vpack.c.b16 %v9750, %v9749
  %v9788 = vpack.c.b16 %v9752, %v9751
  %v9789 = vpack.c.b16 %v9754, %v9753
  %v9790 = vpack.c.b16 %v9756, %v9755
  %v9791 = vpack.c.b16 %v9758, %v9757
  %v9792 = vpack.c.b16 %v9760, %v9759
  %v9794 = vsel %vm6561, %v9761, 0
  %v9797 = vsel %vm6561, %v9762, 0
  %v9800 = vsel %vm6561, %v9763, 0
  %v9803 = vsel %vm6561, %v9764, 0
  %v9806 = vsel %vm6561, %v9765, 0
  %v9809 = vsel %vm6561, %v9766, 0
  %v9812 = vsel %vm6561, %v9767, 0
  %v9815 = vsel %vm6561, %v9768, 0
  %v9818 = vsel %vm6561, %v9769, 0
  %v9821 = vsel %vm6561, %v9770, 0
  %v9824 = vsel %vm6561, %v9771, 0
  %v9827 = vsel %vm6561, %v9772, 0
  %v9830 = vsel %vm6561, %v9773, 0
  %v9833 = vsel %vm6561, %v9774, 0
  %v9836 = vsel %vm6561, %v9775, 0
  %v9839 = vsel %vm6561, %v9776, 0
  %v9842 = vsel %vm6561, %v9777, 0
  %v9845 = vsel %vm6561, %v9778, 0
  %v9848 = vsel %vm6561, %v9779, 0
  %v9851 = vsel %vm6561, %v9780, 0
  %v9854 = vsel %vm6561, %v9781, 0
  %v9857 = vsel %vm6561, %v9782, 0
  %v9860 = vsel %vm6561, %v9783, 0
  %v9863 = vsel %vm6561, %v9784, 0
  %v9866 = vsel %vm6561, %v9785, 0
  %v9869 = vsel %vm6561, %v9786, 0
  %v9872 = vsel %vm6561, %v9787, 0
  %v9875 = vsel %vm6561, %v9788, 0
  %v9878 = vsel %vm6561, %v9789, 0
  %v9881 = vsel %vm6561, %v9790, 0
  %v9884 = vsel %vm6561, %v9791, 0
  %v9887 = vsel %vm6561, %v9792, 0
  %v9890 = vsel %vm8176, %v9632, 0
  %9892 = vmatprep.subr.bf16.mxu0 0
  %9893 = vmatpush1.bf16.msra.mxu0 %v9890
  %9894 = vmatprep.subr.bf16.mxu0 0
  %9895 = vmatpush1.bf16.msra.mxu0 0
  %9896 = vmatprep.subr.bf16.mxu0 0
  %9897 = vmatpush1.bf16.msra.mxu0 0
  %9898 = vmatprep.subr.bf16.mxu0 0
  %9899 = vmatpush1.bf16.msra.mxu0 0
  %9900 = vmatprep.subr.bf16.mxu0 0
  %9901 = vmatpush1.bf16.msra.mxu0 0
  %9902 = vmatprep.subr.bf16.mxu0 0
  %9903 = vmatpush1.bf16.msra.mxu0 0
  %9904 = vmatprep.subr.bf16.mxu0 0
  %9905 = vmatpush1.bf16.msra.mxu0 0
  %9906 = vmatprep.subr.bf16.mxu0 0
  %9907 = vmatpush1.bf16.msra.mxu0 0
  %9908 = vmatprep.subr.bf16.mxu0 0
  %9909 = vmatpush1.bf16.msra.mxu0 0
  %9910 = vmatprep.subr.bf16.mxu0 0
  %9911 = vmatpush1.bf16.msra.mxu0 0
  %9912 = vmatprep.subr.bf16.mxu0 0
  %9913 = vmatpush1.bf16.msra.mxu0 0
  %9914 = vmatprep.subr.bf16.mxu0 0
  %9915 = vmatpush1.bf16.msra.mxu0 0
  %9916 = vmatprep.subr.bf16.mxu0 0
  %9917 = vmatpush1.bf16.msra.mxu0 0
  %9918 = vmatprep.subr.bf16.mxu0 0
  %9919 = vmatpush1.bf16.msra.mxu0 0
  %9920 = vmatprep.subr.bf16.mxu0 0
  %9921 = vmatpush1.bf16.msra.mxu0 0
  %9922 = vmatprep.subr.bf16.mxu0 0
  %9923 = vmatpush1.bf16.msra.mxu0 0
  %9924 = vmatprep.mubr.bf16.mxu0 0
  %9925 = vmatmul.mubr.bf16.gmra.mrb[0].mxu0 %v9794
  %v9926 = vpop.f32.mrb[0].mxu0
  %v9927 = vadd.f32 0.0, %v9926
  %v9928 = vpop.f32.mrb[0].mxu0
  %v9929 = vpop.f32.mrb[0].mxu0
  %v9930 = vadd.f32 0.0, %v9929
  %v9931 = vpop.f32.mrb[0].mxu0
  %9932 = vmatprep.mubr.bf16.mxu0 0
  %9933 = vmatmul.mubr.bf16.gmra.mrb[0].mxu0 %v9797
  %v9934 = vpop.f32.mrb[0].mxu0
  %v9935 = vadd.f32 0.0, %v9934
  %v9936 = vpop.f32.mrb[0].mxu0
  %v9937 = vpop.f32.mrb[0].mxu0
  %v9938 = vadd.f32 0.0, %v9937
  %v9939 = vpop.f32.mrb[0].mxu0
  %9940 = vmatprep.mubr.bf16.mxu0 0
  %9941 = vmatmul.mubr.bf16.gmra.mrb[0].mxu0 %v9800
  %v9942 = vpop.f32.mrb[0].mxu0
  %v9943 = vadd.f32 0.0, %v9942
  %v9944 = vpop.f32.mrb[0].mxu0
  %v9945 = vpop.f32.mrb[0].mxu0
  %v9946 = vadd.f32 0.0, %v9945
  %v9947 = vpop.f32.mrb[0].mxu0
  %9948 = vmatprep.mubr.bf16.mxu0 0
  %9949 = vmatmul.mubr.bf16.gmra.mrb[0].mxu0 %v9803
  %v9950 = vpop.f32.mrb[0].mxu0
  %v9951 = vadd.f32 0.0, %v9950
  %v9952 = vpop.f32.mrb[0].mxu0
  %v9953 = vpop.f32.mrb[0].mxu0
  %v9954 = vadd.f32 0.0, %v9953
  %v9955 = vpop.f32.mrb[0].mxu0
  %9956 = vmatprep.mubr.bf16.mxu0 0
  %9957 = vmatmul.mubr.bf16.gmra.mrb[0].mxu0 %v9806
  %v9958 = vpop.f32.mrb[0].mxu0
  %v9959 = vadd.f32 0.0, %v9958
  %v9960 = vpop.f32.mrb[0].mxu0
  %v9961 = vpop.f32.mrb[0].mxu0
  %v9962 = vadd.f32 0.0, %v9961
  %v9963 = vpop.f32.mrb[0].mxu0
  %9964 = vmatprep.mubr.bf16.mxu0 0
  %9965 = vmatmul.mubr.bf16.gmra.mrb[0].mxu0 %v9809
  %v9966 = vpop.f32.mrb[0].mxu0
  %v9967 = vadd.f32 0.0, %v9966
  %v9968 = vpop.f32.mrb[0].mxu0
  %v9969 = vpop.f32.mrb[0].mxu0
  %v9970 = vadd.f32 0.0, %v9969
  %v9971 = vpop.f32.mrb[0].mxu0
  %9972 = vmatprep.mubr.bf16.mxu0 0
  %9973 = vmatmul.mubr.bf16.gmra.mrb[0].mxu0 %v9812
  %v9974 = vpop.f32.mrb[0].mxu0
  %v9975 = vadd.f32 0.0, %v9974
  %v9976 = vpop.f32.mrb[0].mxu0
  %v9977 = vpop.f32.mrb[0].mxu0
  %v9978 = vadd.f32 0.0, %v9977
  %v9979 = vpop.f32.mrb[0].mxu0
  %9980 = vmatprep.mubr.bf16.mxu0 0
  %9981 = vmatmul.mubr.bf16.gmra.mrb[0].mxu0 %v9815
  %v9982 = vpop.f32.mrb[0].mxu0
  %v9983 = vadd.f32 0.0, %v9982
  %v9984 = vpop.f32.mrb[0].mxu0
  %v9985 = vpop.f32.mrb[0].mxu0
  %v9986 = vadd.f32 0.0, %v9985
  %v9987 = vpop.f32.mrb[0].mxu0
  %9988 = vmatprep.mubr.bf16.mxu0 0
  %9989 = vmatmul.mubr.bf16.gmra.mrb[0].mxu0 %v9818
  %v9990 = vpop.f32.mrb[0].mxu0
  %v9991 = vadd.f32 0.0, %v9990
  %v9992 = vpop.f32.mrb[0].mxu0
  %v9993 = vpop.f32.mrb[0].mxu0
  %v9994 = vadd.f32 0.0, %v9993
  %v9995 = vpop.f32.mrb[0].mxu0
  %9996 = vmatprep.mubr.bf16.mxu0 0
  %9997 = vmatmul.mubr.bf16.gmra.mrb[0].mxu0 %v9821
  %v9998 = vpop.f32.mrb[0].mxu0
  %v9999 = vadd.f32 0.0, %v9998
  %v10000 = vpop.f32.mrb[0].mxu0
  %v10001 = vpop.f32.mrb[0].mxu0
  %v10002 = vadd.f32 0.0, %v10001
  %v10003 = vpop.f32.mrb[0].mxu0
  %10004 = vmatprep.mubr.bf16.mxu0 0
  %10005 = vmatmul.mubr.bf16.gmra.mrb[0].mxu0 %v9824
  %v10006 = vpop.f32.mrb[0].mxu0
  %v10007 = vadd.f32 0.0, %v10006
  %v10008 = vpop.f32.mrb[0].mxu0
  %v10009 = vpop.f32.mrb[0].mxu0
  %v10010 = vadd.f32 0.0, %v10009
  %v10011 = vpop.f32.mrb[0].mxu0
  %10012 = vmatprep.mubr.bf16.mxu0 0
  %10013 = vmatmul.mubr.bf16.gmra.mrb[0].mxu0 %v9827
  %v10014 = vpop.f32.mrb[0].mxu0
  %v10015 = vadd.f32 0.0, %v10014
  %v10016 = vpop.f32.mrb[0].mxu0
  %v10017 = vpop.f32.mrb[0].mxu0
  %v10018 = vadd.f32 0.0, %v10017
  %v10019 = vpop.f32.mrb[0].mxu0
  %10020 = vmatprep.mubr.bf16.mxu0 0
  %10021 = vmatmul.mubr.bf16.gmra.mrb[0].mxu0 %v9830
  %v10022 = vpop.f32.mrb[0].mxu0
  %v10023 = vadd.f32 0.0, %v10022
  %v10024 = vpop.f32.mrb[0].mxu0
  %v10025 = vpop.f32.mrb[0].mxu0
  %v10026 = vadd.f32 0.0, %v10025
  %v10027 = vpop.f32.mrb[0].mxu0
  %10028 = vmatprep.mubr.bf16.mxu0 0
  %10029 = vmatmul.mubr.bf16.gmra.mrb[0].mxu0 %v9833
  %v10030 = vpop.f32.mrb[0].mxu0
  %v10031 = vadd.f32 0.0, %v10030
  %v10032 = vpop.f32.mrb[0].mxu0
  %v10033 = vpop.f32.mrb[0].mxu0
  %v10034 = vadd.f32 0.0, %v10033
  %v10035 = vpop.f32.mrb[0].mxu0
  %10036 = vmatprep.mubr.bf16.mxu0 0
  %10037 = vmatmul.mubr.bf16.gmra.mrb[0].mxu0 %v9836
  %v10038 = vpop.f32.mrb[0].mxu0
  %v10039 = vadd.f32 0.0, %v10038
  %v10040 = vpop.f32.mrb[0].mxu0
  %v10041 = vpop.f32.mrb[0].mxu0
  %v10042 = vadd.f32 0.0, %v10041
  %v10043 = vpop.f32.mrb[0].mxu0
  %10044 = vmatprep.mubr.bf16.mxu0 0
  %10045 = vmatmul.mubr.bf16.gmra.mrb[0].mxu0 %v9839
  %v10046 = vpop.f32.mrb[0].mxu0
  %v10047 = vadd.f32 0.0, %v10046
  %v10048 = vpop.f32.mrb[0].mxu0
  %v10049 = vpop.f32.mrb[0].mxu0
  %v10050 = vadd.f32 0.0, %v10049
  %v10051 = vpop.f32.mrb[0].mxu0
  %10052 = vmatprep.mubr.bf16.mxu0 0
  %10053 = vmatmul.mubr.bf16.gmra.mrb[0].mxu0 %v9842
  %v10054 = vpop.f32.mrb[0].mxu0
  %v10055 = vadd.f32 0.0, %v10054
  %v10056 = vpop.f32.mrb[0].mxu0
  %v10057 = vpop.f32.mrb[0].mxu0
  %v10058 = vadd.f32 0.0, %v10057
  %v10059 = vpop.f32.mrb[0].mxu0
  %10060 = vmatprep.mubr.bf16.mxu0 0
  %10061 = vmatmul.mubr.bf16.gmra.mrb[0].mxu0 %v9845
  %v10062 = vpop.f32.mrb[0].mxu0
  %v10063 = vadd.f32 0.0, %v10062
  %v10064 = vpop.f32.mrb[0].mxu0
  %v10065 = vpop.f32.mrb[0].mxu0
  %v10066 = vadd.f32 0.0, %v10065
  %v10067 = vpop.f32.mrb[0].mxu0
  %10068 = vmatprep.mubr.bf16.mxu0 0
  %10069 = vmatmul.mubr.bf16.gmra.mrb[0].mxu0 %v9848
  %v10070 = vpop.f32.mrb[0].mxu0
  %v10071 = vadd.f32 0.0, %v10070
  %v10072 = vpop.f32.mrb[0].mxu0
  %v10073 = vpop.f32.mrb[0].mxu0
  %v10074 = vadd.f32 0.0, %v10073
  %v10075 = vpop.f32.mrb[0].mxu0
  %10076 = vmatprep.mubr.bf16.mxu0 0
  %10077 = vmatmul.mubr.bf16.gmra.mrb[0].mxu0 %v9851
  %v10078 = vpop.f32.mrb[0].mxu0
  %v10079 = vadd.f32 0.0, %v10078
  %v10080 = vpop.f32.mrb[0].mxu0
  %v10081 = vpop.f32.mrb[0].mxu0
  %v10082 = vadd.f32 0.0, %v10081
  %v10083 = vpop.f32.mrb[0].mxu0
  %10084 = vmatprep.mubr.bf16.mxu0 0
  %10085 = vmatmul.mubr.bf16.gmra.mrb[0].mxu0 %v9854
  %v10086 = vpop.f32.mrb[0].mxu0
  %v10087 = vadd.f32 0.0, %v10086
  %v10088 = vpop.f32.mrb[0].mxu0
  %v10089 = vpop.f32.mrb[0].mxu0
  %v10090 = vadd.f32 0.0, %v10089
  %v10091 = vpop.f32.mrb[0].mxu0
  %10092 = vmatprep.mubr.bf16.mxu0 0
  %10093 = vmatmul.mubr.bf16.gmra.mrb[0].mxu0 %v9857
  %v10094 = vpop.f32.mrb[0].mxu0
  %v10095 = vadd.f32 0.0, %v10094
  %v10096 = vpop.f32.mrb[0].mxu0
  %v10097 = vpop.f32.mrb[0].mxu0
  %v10098 = vadd.f32 0.0, %v10097
  %v10099 = vpop.f32.mrb[0].mxu0
  %10100 = vmatprep.mubr.bf16.mxu0 0
  %10101 = vmatmul.mubr.bf16.gmra.mrb[0].mxu0 %v9860
  %v10102 = vpop.f32.mrb[0].mxu0
  %v10103 = vadd.f32 0.0, %v10102
  %v10104 = vpop.f32.mrb[0].mxu0
  %v10105 = vpop.f32.mrb[0].mxu0
  %v10106 = vadd.f32 0.0, %v10105
  %v10107 = vpop.f32.mrb[0].mxu0
  %10108 = vmatprep.mubr.bf16.mxu0 0
  %10109 = vmatmul.mubr.bf16.gmra.mrb[0].mxu0 %v9863
  %v10110 = vpop.f32.mrb[0].mxu0
  %v10111 = vadd.f32 0.0, %v10110
  %v10112 = vpop.f32.mrb[0].mxu0
  %v10113 = vpop.f32.mrb[0].mxu0
  %v10114 = vadd.f32 0.0, %v10113
  %v10115 = vpop.f32.mrb[0].mxu0
  %10116 = vmatprep.mubr.bf16.mxu0 0
  %10117 = vmatmul.mubr.bf16.gmra.mrb[0].mxu0 %v9866
  %v10118 = vpop.f32.mrb[0].mxu0
  %v10119 = vadd.f32 0.0, %v10118
  %v10120 = vpop.f32.mrb[0].mxu0
  %v10121 = vpop.f32.mrb[0].mxu0
  %v10122 = vadd.f32 0.0, %v10121
  %v10123 = vpop.f32.mrb[0].mxu0
  %10124 = vmatprep.mubr.bf16.mxu0 0
  %10125 = vmatmul.mubr.bf16.gmra.mrb[0].mxu0 %v9869
  %v10126 = vpop.f32.mrb[0].mxu0
  %v10127 = vadd.f32 0.0, %v10126
  %v10128 = vpop.f32.mrb[0].mxu0
  %v10129 = vpop.f32.mrb[0].mxu0
  %v10130 = vadd.f32 0.0, %v10129
  %v10131 = vpop.f32.mrb[0].mxu0
  %10132 = vmatprep.mubr.bf16.mxu0 0
  %10133 = vmatmul.mubr.bf16.gmra.mrb[0].mxu0 %v9872
  %v10134 = vpop.f32.mrb[0].mxu0
  %v10135 = vadd.f32 0.0, %v10134
  %v10136 = vpop.f32.mrb[0].mxu0
  %v10137 = vpop.f32.mrb[0].mxu0
  %v10138 = vadd.f32 0.0, %v10137
  %v10139 = vpop.f32.mrb[0].mxu0
  %10140 = vmatprep.mubr.bf16.mxu0 0
  %10141 = vmatmul.mubr.bf16.gmra.mrb[0].mxu0 %v9875
  %v10142 = vpop.f32.mrb[0].mxu0
  %v10143 = vadd.f32 0.0, %v10142
  %v10144 = vpop.f32.mrb[0].mxu0
  %v10145 = vpop.f32.mrb[0].mxu0
  %v10146 = vadd.f32 0.0, %v10145
  %v10147 = vpop.f32.mrb[0].mxu0
  %10148 = vmatprep.mubr.bf16.mxu0 0
  %10149 = vmatmul.mubr.bf16.gmra.mrb[0].mxu0 %v9878
  %v10150 = vpop.f32.mrb[0].mxu0
  %v10151 = vadd.f32 0.0, %v10150
  %v10152 = vpop.f32.mrb[0].mxu0
  %v10153 = vpop.f32.mrb[0].mxu0
  %v10154 = vadd.f32 0.0, %v10153
  %v10155 = vpop.f32.mrb[0].mxu0
  %10156 = vmatprep.mubr.bf16.mxu0 0
  %10157 = vmatmul.mubr.bf16.gmra.mrb[0].mxu0 %v9881
  %v10158 = vpop.f32.mrb[0].mxu0
  %v10159 = vadd.f32 0.0, %v10158
  %v10160 = vpop.f32.mrb[0].mxu0
  %v10161 = vpop.f32.mrb[0].mxu0
  %v10162 = vadd.f32 0.0, %v10161
  %v10163 = vpop.f32.mrb[0].mxu0
  %10164 = vmatprep.mubr.bf16.mxu0 0
  %10165 = vmatmul.mubr.bf16.gmra.mrb[0].mxu0 %v9884
  %v10166 = vpop.f32.mrb[0].mxu0
  %v10167 = vadd.f32 0.0, %v10166
  %v10168 = vpop.f32.mrb[0].mxu0
  %v10169 = vpop.f32.mrb[0].mxu0
  %v10170 = vadd.f32 0.0, %v10169
  %v10171 = vpop.f32.mrb[0].mxu0
  %10172 = vmatprep.mubr.bf16.mxu0 0
  %10173 = vmatmul.mubr.bf16.gmra.mrb[0].mxu0 %v9887
  %v10174 = vpop.f32.mrb[0].mxu0
  %v10175 = vadd.f32 0.0, %v10174
  %v10176 = vpop.f32.mrb[0].mxu0
  %v10177 = vpop.f32.mrb[0].mxu0
  %v10178 = vadd.f32 0.0, %v10177
  %v10179 = vpop.f32.mrb[0].mxu0
  %10180 = vdwg.mxu0
  %v10181 = vadd.f32 %v9567, %v9927
  %v10182 = vadd.f32 %v9568, %v9930
  %v10183 = vadd.f32 %v9569, %v9935
  %v10184 = vadd.f32 %v9570, %v9938
  %v10185 = vadd.f32 %v9571, %v9943
  %v10186 = vadd.f32 %v9572, %v9946
  %v10187 = vadd.f32 %v9573, %v9951
  %v10188 = vadd.f32 %v9574, %v9954
  %v10189 = vadd.f32 %v9575, %v9959
  %v10190 = vadd.f32 %v9576, %v9962
  %v10191 = vadd.f32 %v9577, %v9967
  %v10192 = vadd.f32 %v9578, %v9970
  %v10193 = vadd.f32 %v9579, %v9975
  %v10194 = vadd.f32 %v9580, %v9978
  %v10195 = vadd.f32 %v9581, %v9983
  %v10196 = vadd.f32 %v9582, %v9986
  %v10197 = vadd.f32 %v9583, %v9991
  %v10198 = vadd.f32 %v9584, %v9994
  %v10199 = vadd.f32 %v9585, %v9999
  %v10200 = vadd.f32 %v9586, %v10002
  %v10201 = vadd.f32 %v9587, %v10007
  %v10202 = vadd.f32 %v9588, %v10010
  %v10203 = vadd.f32 %v9589, %v10015
  %v10204 = vadd.f32 %v9590, %v10018
  %v10205 = vadd.f32 %v9591, %v10023
  %v10206 = vadd.f32 %v9592, %v10026
  %v10207 = vadd.f32 %v9593, %v10031
  %v10208 = vadd.f32 %v9594, %v10034
  %v10209 = vadd.f32 %v9595, %v10039
  %v10210 = vadd.f32 %v9596, %v10042
  %v10211 = vadd.f32 %v9597, %v10047
  %v10212 = vadd.f32 %v9598, %v10050
  %v10213 = vadd.f32 %v9599, %v10055
  %v10214 = vadd.f32 %v9600, %v10058
  %v10215 = vadd.f32 %v9601, %v10063
  %v10216 = vadd.f32 %v9602, %v10066
  %v10217 = vadd.f32 %v9603, %v10071
  %v10218 = vadd.f32 %v9604, %v10074
  %v10219 = vadd.f32 %v9605, %v10079
  %v10220 = vadd.f32 %v9606, %v10082
  %v10221 = vadd.f32 %v9607, %v10087
  %v10222 = vadd.f32 %v9608, %v10090
  %v10223 = vadd.f32 %v9609, %v10095
  %v10224 = vadd.f32 %v9610, %v10098
  %v10225 = vadd.f32 %v9611, %v10103
  %v10226 = vadd.f32 %v9612, %v10106
  %v10227 = vadd.f32 %v9613, %v10111
  %v10228 = vadd.f32 %v9614, %v10114
  %v10229 = vadd.f32 %v9615, %v10119
  %v10230 = vadd.f32 %v9616, %v10122
  %v10231 = vadd.f32 %v9617, %v10127
  %v10232 = vadd.f32 %v9618, %v10130
  %v10233 = vadd.f32 %v9619, %v10135
  %v10234 = vadd.f32 %v9620, %v10138
  %v10235 = vadd.f32 %v9621, %v10143
  %v10236 = vadd.f32 %v9622, %v10146
  %v10237 = vadd.f32 %v9623, %v10151
  %v10238 = vadd.f32 %v9624, %v10154
  %v10239 = vadd.f32 %v9625, %v10159
  %v10240 = vadd.f32 %v9626, %v10162
  %v10241 = vadd.f32 %v9627, %v10167
  %v10242 = vadd.f32 %v9628, %v10170
  %v10243 = vadd.f32 %v9629, %v10175
  %v10244 = vadd.f32 %v9630, %v10178
  %s10245 = scalar_lea.vmem %s4, 16
  %v10246 = vld [vmem:[%s10245] sm:$0xf]
  %v10311 = vunpack.c.l.b16 %v7593
  %v10312 = vunpack.c.l.b16 %v7594
  %v10313 = vunpack.c.l.b16 %v7595
  %v10314 = vunpack.c.l.b16 %v7596
  %v10315 = vunpack.c.l.b16 %v7597
  %v10316 = vunpack.c.l.b16 %v7598
  %v10317 = vunpack.c.l.b16 %v7599
  %v10318 = vunpack.c.l.b16 %v7600
  %v10319 = vunpack.c.l.b16 %v7601
  %v10320 = vunpack.c.l.b16 %v7602
  %v10321 = vunpack.c.l.b16 %v7603
  %v10322 = vunpack.c.l.b16 %v7604
  %v10323 = vunpack.c.l.b16 %v7605
  %v10324 = vunpack.c.l.b16 %v7606
  %v10325 = vunpack.c.l.b16 %v7607
  %v10326 = vunpack.c.l.b16 %v7608
  %v10327 = vunpack.c.l.b16 %v7609
  %v10328 = vunpack.c.l.b16 %v7610
  %v10329 = vunpack.c.l.b16 %v7611
  %v10330 = vunpack.c.l.b16 %v7612
  %v10331 = vunpack.c.l.b16 %v7613
  %v10332 = vunpack.c.l.b16 %v7614
  %v10333 = vunpack.c.l.b16 %v7615
  %v10334 = vunpack.c.l.b16 %v7616
  %v10335 = vunpack.c.l.b16 %v7617
  %v10336 = vunpack.c.l.b16 %v7618
  %v10337 = vunpack.c.l.b16 %v7619
  %v10338 = vunpack.c.l.b16 %v7620
  %v10339 = vunpack.c.l.b16 %v7621
  %v10340 = vunpack.c.l.b16 %v7622
  %v10341 = vunpack.c.l.b16 %v7623
  %v10342 = vunpack.c.l.b16 %v7624
  %v10343 = vunpack.c.l.b16 %v7625
  %v10344 = vunpack.c.l.b16 %v7626
  %v10345 = vunpack.c.l.b16 %v7627
  %v10346 = vunpack.c.l.b16 %v7628
  %v10347 = vunpack.c.l.b16 %v7629
  %v10348 = vunpack.c.l.b16 %v7630
  %v10349 = vunpack.c.l.b16 %v7631
  %v10350 = vunpack.c.l.b16 %v7632
  %v10351 = vunpack.c.l.b16 %v7633
  %v10352 = vunpack.c.l.b16 %v7634
  %v10353 = vunpack.c.l.b16 %v7635
  %v10354 = vunpack.c.l.b16 %v7636
  %v10355 = vunpack.c.l.b16 %v7637
  %v10356 = vunpack.c.l.b16 %v7638
  %v10357 = vunpack.c.l.b16 %v7639
  %v10358 = vunpack.c.l.b16 %v7640
  %v10359 = vunpack.c.l.b16 %v7641
  %v10360 = vunpack.c.l.b16 %v7642
  %v10361 = vunpack.c.l.b16 %v7643
  %v10362 = vunpack.c.l.b16 %v7644
  %v10363 = vunpack.c.l.b16 %v7645
  %v10364 = vunpack.c.l.b16 %v7646
  %v10365 = vunpack.c.l.b16 %v7647
  %v10366 = vunpack.c.l.b16 %v7648
  %v10367 = vunpack.c.l.b16 %v7649
  %v10368 = vunpack.c.l.b16 %v7650
  %v10369 = vunpack.c.l.b16 %v7651
  %v10370 = vunpack.c.l.b16 %v7652
  %v10371 = vunpack.c.l.b16 %v7653
  %v10372 = vunpack.c.l.b16 %v7654
  %v10373 = vunpack.c.l.b16 %v7655
  %v10374 = vunpack.c.l.b16 %v7656
  %v10375 = vpack.c.b16 %v10312, %v10311
  %v10376 = vpack.c.b16 %v10314, %v10313
  %v10377 = vpack.c.b16 %v10316, %v10315
  %v10378 = vpack.c.b16 %v10318, %v10317
  %v10379 = vpack.c.b16 %v10320, %v10319
  %v10380 = vpack.c.b16 %v10322, %v10321
  %v10381 = vpack.c.b16 %v10324, %v10323
  %v10382 = vpack.c.b16 %v10326, %v10325
  %v10383 = vpack.c.b16 %v10328, %v10327
  %v10384 = vpack.c.b16 %v10330, %v10329
  %v10385 = vpack.c.b16 %v10332, %v10331
  %v10386 = vpack.c.b16 %v10334, %v10333
  %v10387 = vpack.c.b16 %v10336, %v10335
  %v10388 = vpack.c.b16 %v10338, %v10337
  %v10389 = vpack.c.b16 %v10340, %v10339
  %v10390 = vpack.c.b16 %v10342, %v10341
  %v10391 = vpack.c.b16 %v10344, %v10343
  %v10392 = vpack.c.b16 %v10346, %v10345
  %v10393 = vpack.c.b16 %v10348, %v10347
  %v10394 = vpack.c.b16 %v10350, %v10349
  %v10395 = vpack.c.b16 %v10352, %v10351
  %v10396 = vpack.c.b16 %v10354, %v10353
  %v10397 = vpack.c.b16 %v10356, %v10355
  %v10398 = vpack.c.b16 %v10358, %v10357
  %v10399 = vpack.c.b16 %v10360, %v10359
  %v10400 = vpack.c.b16 %v10362, %v10361
  %v10401 = vpack.c.b16 %v10364, %v10363
  %v10402 = vpack.c.b16 %v10366, %v10365
  %v10403 = vpack.c.b16 %v10368, %v10367
  %v10404 = vpack.c.b16 %v10370, %v10369
  %v10405 = vpack.c.b16 %v10372, %v10371
  %v10406 = vpack.c.b16 %v10374, %v10373
  %v10408 = vsel %vm6561, %v10375, 0
  %v10411 = vsel %vm6561, %v10376, 0
  %v10414 = vsel %vm6561, %v10377, 0
  %v10417 = vsel %vm6561, %v10378, 0
  %v10420 = vsel %vm6561, %v10379, 0
  %v10423 = vsel %vm6561, %v10380, 0
  %v10426 = vsel %vm6561, %v10381, 0
  %v10429 = vsel %vm6561, %v10382, 0
  %v10432 = vsel %vm6561, %v10383, 0
  %v10435 = vsel %vm6561, %v10384, 0
  %v10438 = vsel %vm6561, %v10385, 0
  %v10441 = vsel %vm6561, %v10386, 0
  %v10444 = vsel %vm6561, %v10387, 0
  %v10447 = vsel %vm6561, %v10388, 0
  %v10450 = vsel %vm6561, %v10389, 0
  %v10453 = vsel %vm6561, %v10390, 0
  %v10456 = vsel %vm6561, %v10391, 0
  %v10459 = vsel %vm6561, %v10392, 0
  %v10462 = vsel %vm6561, %v10393, 0
  %v10465 = vsel %vm6561, %v10394, 0
  %v10468 = vsel %vm6561, %v10395, 0
  %v10471 = vsel %vm6561, %v10396, 0
  %v10474 = vsel %vm6561, %v10397, 0
  %v10477 = vsel %vm6561, %v10398, 0
  %v10480 = vsel %vm6561, %v10399, 0
  %v10483 = vsel %vm6561, %v10400, 0
  %v10486 = vsel %vm6561, %v10401, 0
  %v10489 = vsel %vm6561, %v10402, 0
  %v10492 = vsel %vm6561, %v10403, 0
  %v10495 = vsel %vm6561, %v10404, 0
  %v10498 = vsel %vm6561, %v10405, 0
  %v10501 = vsel %vm6561, %v10406, 0
  %v10504 = vsel %vm8176, %v10246, 0
  %10506 = vmatprep.subr.bf16.mxu0 0
  %10507 = vmatpush1.bf16.msra.mxu0 %v10504
  %10508 = vmatprep.subr.bf16.mxu0 0
  %10509 = vmatpush1.bf16.msra.mxu0 0
  %10510 = vmatprep.subr.bf16.mxu0 0
  %10511 = vmatpush1.bf16.msra.mxu0 0
  %10512 = vmatprep.subr.bf16.mxu0 0
  %10513 = vmatpush1.bf16.msra.mxu0 0
  %10514 = vmatprep.subr.bf16.mxu0 0
  %10515 = vmatpush1.bf16.msra.mxu0 0
  %10516 = vmatprep.subr.bf16.mxu0 0
  %10517 = vmatpush1.bf16.msra.mxu0 0
  %10518 = vmatprep.subr.bf16.mxu0 0
  %10519 = vmatpush1.bf16.msra.mxu0 0
  %10520 = vmatprep.subr.bf16.mxu0 0
  %10521 = vmatpush1.bf16.msra.mxu0 0
  %10522 = vmatprep.subr.bf16.mxu0 0
  %10523 = vmatpush1.bf16.msra.mxu0 0
  %10524 = vmatprep.subr.bf16.mxu0 0
  %10525 = vmatpush1.bf16.msra.mxu0 0
  %10526 = vmatprep.subr.bf16.mxu0 0
  %10527 = vmatpush1.bf16.msra.mxu0 0
  %10528 = vmatprep.subr.bf16.mxu0 0
  %10529 = vmatpush1.bf16.msra.mxu0 0
  %10530 = vmatprep.subr.bf16.mxu0 0
  %10531 = vmatpush1.bf16.msra.mxu0 0
  %10532 = vmatprep.subr.bf16.mxu0 0
  %10533 = vmatpush1.bf16.msra.mxu0 0
  %10534 = vmatprep.subr.bf16.mxu0 0
  %10535 = vmatpush1.bf16.msra.mxu0 0
  %10536 = vmatprep.subr.bf16.mxu0 0
  %10537 = vmatpush1.bf16.msra.mxu0 0
  %10538 = vmatprep.mubr.bf16.mxu0 0
  %10539 = vmatmul.mubr.bf16.gmra.mrb[0].mxu0 %v10408
  %v10540 = vpop.f32.mrb[0].mxu0
  %v10541 = vadd.f32 0.0, %v10540
  %v10542 = vpop.f32.mrb[0].mxu0
  %v10543 = vpop.f32.mrb[0].mxu0
  %v10544 = vadd.f32 0.0, %v10543
  %v10545 = vpop.f32.mrb[0].mxu0
  %10546 = vmatprep.mubr.bf16.mxu0 0
  %10547 = vmatmul.mubr.bf16.gmra.mrb[0].mxu0 %v10411
  %v10548 = vpop.f32.mrb[0].mxu0
  %v10549 = vadd.f32 0.0, %v10548
  %v10550 = vpop.f32.mrb[0].mxu0
  %v10551 = vpop.f32.mrb[0].mxu0
  %v10552 = vadd.f32 0.0, %v10551
  %v10553 = vpop.f32.mrb[0].mxu0
  %10554 = vmatprep.mubr.bf16.mxu0 0
  %10555 = vmatmul.mubr.bf16.gmra.mrb[0].mxu0 %v10414
  %v10556 = vpop.f32.mrb[0].mxu0
  %v10557 = vadd.f32 0.0, %v10556
  %v10558 = vpop.f32.mrb[0].mxu0
  %v10559 = vpop.f32.mrb[0].mxu0
  %v10560 = vadd.f32 0.0, %v10559
  %v10561 = vpop.f32.mrb[0].mxu0
  %10562 = vmatprep.mubr.bf16.mxu0 0
  %10563 = vmatmul.mubr.bf16.gmra.mrb[0].mxu0 %v10417
  %v10564 = vpop.f32.mrb[0].mxu0
  %v10565 = vadd.f32 0.0, %v10564
  %v10566 = vpop.f32.mrb[0].mxu0
  %v10567 = vpop.f32.mrb[0].mxu0
  %v10568 = vadd.f32 0.0, %v10567
  %v10569 = vpop.f32.mrb[0].mxu0
  %10570 = vmatprep.mubr.bf16.mxu0 0
  %10571 = vmatmul.mubr.bf16.gmra.mrb[0].mxu0 %v10420
  %v10572 = vpop.f32.mrb[0].mxu0
  %v10573 = vadd.f32 0.0, %v10572
  %v10574 = vpop.f32.mrb[0].mxu0
  %v10575 = vpop.f32.mrb[0].mxu0
  %v10576 = vadd.f32 0.0, %v10575
  %v10577 = vpop.f32.mrb[0].mxu0
  %10578 = vmatprep.mubr.bf16.mxu0 0
  %10579 = vmatmul.mubr.bf16.gmra.mrb[0].mxu0 %v10423
  %v10580 = vpop.f32.mrb[0].mxu0
  %v10581 = vadd.f32 0.0, %v10580
  %v10582 = vpop.f32.mrb[0].mxu0
  %v10583 = vpop.f32.mrb[0].mxu0
  %v10584 = vadd.f32 0.0, %v10583
  %v10585 = vpop.f32.mrb[0].mxu0
  %10586 = vmatprep.mubr.bf16.mxu0 0
  %10587 = vmatmul.mubr.bf16.gmra.mrb[0].mxu0 %v10426
  %v10588 = vpop.f32.mrb[0].mxu0
  %v10589 = vadd.f32 0.0, %v10588
  %v10590 = vpop.f32.mrb[0].mxu0
  %v10591 = vpop.f32.mrb[0].mxu0
  %v10592 = vadd.f32 0.0, %v10591
  %v10593 = vpop.f32.mrb[0].mxu0
  %10594 = vmatprep.mubr.bf16.mxu0 0
  %10595 = vmatmul.mubr.bf16.gmra.mrb[0].mxu0 %v10429
  %v10596 = vpop.f32.mrb[0].mxu0
  %v10597 = vadd.f32 0.0, %v10596
  %v10598 = vpop.f32.mrb[0].mxu0
  %v10599 = vpop.f32.mrb[0].mxu0
  %v10600 = vadd.f32 0.0, %v10599
  %v10601 = vpop.f32.mrb[0].mxu0
  %10602 = vmatprep.mubr.bf16.mxu0 0
  %10603 = vmatmul.mubr.bf16.gmra.mrb[0].mxu0 %v10432
  %v10604 = vpop.f32.mrb[0].mxu0
  %v10605 = vadd.f32 0.0, %v10604
  %v10606 = vpop.f32.mrb[0].mxu0
  %v10607 = vpop.f32.mrb[0].mxu0
  %v10608 = vadd.f32 0.0, %v10607
  %v10609 = vpop.f32.mrb[0].mxu0
  %10610 = vmatprep.mubr.bf16.mxu0 0
  %10611 = vmatmul.mubr.bf16.gmra.mrb[0].mxu0 %v10435
  %v10612 = vpop.f32.mrb[0].mxu0
  %v10613 = vadd.f32 0.0, %v10612
  %v10614 = vpop.f32.mrb[0].mxu0
  %v10615 = vpop.f32.mrb[0].mxu0
  %v10616 = vadd.f32 0.0, %v10615
  %v10617 = vpop.f32.mrb[0].mxu0
  %10618 = vmatprep.mubr.bf16.mxu0 0
  %10619 = vmatmul.mubr.bf16.gmra.mrb[0].mxu0 %v10438
  %v10620 = vpop.f32.mrb[0].mxu0
  %v10621 = vadd.f32 0.0, %v10620
  %v10622 = vpop.f32.mrb[0].mxu0
  %v10623 = vpop.f32.mrb[0].mxu0
  %v10624 = vadd.f32 0.0, %v10623
  %v10625 = vpop.f32.mrb[0].mxu0
  %10626 = vmatprep.mubr.bf16.mxu0 0
  %10627 = vmatmul.mubr.bf16.gmra.mrb[0].mxu0 %v10441
  %v10628 = vpop.f32.mrb[0].mxu0
  %v10629 = vadd.f32 0.0, %v10628
  %v10630 = vpop.f32.mrb[0].mxu0
  %v10631 = vpop.f32.mrb[0].mxu0
  %v10632 = vadd.f32 0.0, %v10631
  %v10633 = vpop.f32.mrb[0].mxu0
  %10634 = vmatprep.mubr.bf16.mxu0 0
  %10635 = vmatmul.mubr.bf16.gmra.mrb[0].mxu0 %v10444
  %v10636 = vpop.f32.mrb[0].mxu0
  %v10637 = vadd.f32 0.0, %v10636
  %v10638 = vpop.f32.mrb[0].mxu0
  %v10639 = vpop.f32.mrb[0].mxu0
  %v10640 = vadd.f32 0.0, %v10639
  %v10641 = vpop.f32.mrb[0].mxu0
  %10642 = vmatprep.mubr.bf16.mxu0 0
  %10643 = vmatmul.mubr.bf16.gmra.mrb[0].mxu0 %v10447
  %v10644 = vpop.f32.mrb[0].mxu0
  %v10645 = vadd.f32 0.0, %v10644
  %v10646 = vpop.f32.mrb[0].mxu0
  %v10647 = vpop.f32.mrb[0].mxu0
  %v10648 = vadd.f32 0.0, %v10647
  %v10649 = vpop.f32.mrb[0].mxu0
  %10650 = vmatprep.mubr.bf16.mxu0 0
  %10651 = vmatmul.mubr.bf16.gmra.mrb[0].mxu0 %v10450
  %v10652 = vpop.f32.mrb[0].mxu0
  %v10653 = vadd.f32 0.0, %v10652
  %v10654 = vpop.f32.mrb[0].mxu0
  %v10655 = vpop.f32.mrb[0].mxu0
  %v10656 = vadd.f32 0.0, %v10655
  %v10657 = vpop.f32.mrb[0].mxu0
  %10658 = vmatprep.mubr.bf16.mxu0 0
  %10659 = vmatmul.mubr.bf16.gmra.mrb[0].mxu0 %v10453
  %v10660 = vpop.f32.mrb[0].mxu0
  %v10661 = vadd.f32 0.0, %v10660
  %v10662 = vpop.f32.mrb[0].mxu0
  %v10663 = vpop.f32.mrb[0].mxu0
  %v10664 = vadd.f32 0.0, %v10663
  %v10665 = vpop.f32.mrb[0].mxu0
  %10666 = vmatprep.mubr.bf16.mxu0 0
  %10667 = vmatmul.mubr.bf16.gmra.mrb[0].mxu0 %v10456
  %v10668 = vpop.f32.mrb[0].mxu0
  %v10669 = vadd.f32 0.0, %v10668
  %v10670 = vpop.f32.mrb[0].mxu0
  %v10671 = vpop.f32.mrb[0].mxu0
  %v10672 = vadd.f32 0.0, %v10671
  %v10673 = vpop.f32.mrb[0].mxu0
  %10674 = vmatprep.mubr.bf16.mxu0 0
  %10675 = vmatmul.mubr.bf16.gmra.mrb[0].mxu0 %v10459
  %v10676 = vpop.f32.mrb[0].mxu0
  %v10677 = vadd.f32 0.0, %v10676
  %v10678 = vpop.f32.mrb[0].mxu0
  %v10679 = vpop.f32.mrb[0].mxu0
  %v10680 = vadd.f32 0.0, %v10679
  %v10681 = vpop.f32.mrb[0].mxu0
  %10682 = vmatprep.mubr.bf16.mxu0 0
  %10683 = vmatmul.mubr.bf16.gmra.mrb[0].mxu0 %v10462
  %v10684 = vpop.f32.mrb[0].mxu0
  %v10685 = vadd.f32 0.0, %v10684
  %v10686 = vpop.f32.mrb[0].mxu0
  %v10687 = vpop.f32.mrb[0].mxu0
  %v10688 = vadd.f32 0.0, %v10687
  %v10689 = vpop.f32.mrb[0].mxu0
  %10690 = vmatprep.mubr.bf16.mxu0 0
  %10691 = vmatmul.mubr.bf16.gmra.mrb[0].mxu0 %v10465
  %v10692 = vpop.f32.mrb[0].mxu0
  %v10693 = vadd.f32 0.0, %v10692
  %v10694 = vpop.f32.mrb[0].mxu0
  %v10695 = vpop.f32.mrb[0].mxu0
  %v10696 = vadd.f32 0.0, %v10695
  %v10697 = vpop.f32.mrb[0].mxu0
  %10698 = vmatprep.mubr.bf16.mxu0 0
  %10699 = vmatmul.mubr.bf16.gmra.mrb[0].mxu0 %v10468
  %v10700 = vpop.f32.mrb[0].mxu0
  %v10701 = vadd.f32 0.0, %v10700
  %v10702 = vpop.f32.mrb[0].mxu0
  %v10703 = vpop.f32.mrb[0].mxu0
  %v10704 = vadd.f32 0.0, %v10703
  %v10705 = vpop.f32.mrb[0].mxu0
  %10706 = vmatprep.mubr.bf16.mxu0 0
  %10707 = vmatmul.mubr.bf16.gmra.mrb[0].mxu0 %v10471
  %v10708 = vpop.f32.mrb[0].mxu0
  %v10709 = vadd.f32 0.0, %v10708
  %v10710 = vpop.f32.mrb[0].mxu0
  %v10711 = vpop.f32.mrb[0].mxu0
  %v10712 = vadd.f32 0.0, %v10711
  %v10713 = vpop.f32.mrb[0].mxu0
  %10714 = vmatprep.mubr.bf16.mxu0 0
  %10715 = vmatmul.mubr.bf16.gmra.mrb[0].mxu0 %v10474
  %v10716 = vpop.f32.mrb[0].mxu0
  %v10717 = vadd.f32 0.0, %v10716
  %v10718 = vpop.f32.mrb[0].mxu0
  %v10719 = vpop.f32.mrb[0].mxu0
  %v10720 = vadd.f32 0.0, %v10719
  %v10721 = vpop.f32.mrb[0].mxu0
  %10722 = vmatprep.mubr.bf16.mxu0 0
  %10723 = vmatmul.mubr.bf16.gmra.mrb[0].mxu0 %v10477
  %v10724 = vpop.f32.mrb[0].mxu0
  %v10725 = vadd.f32 0.0, %v10724
  %v10726 = vpop.f32.mrb[0].mxu0
  %v10727 = vpop.f32.mrb[0].mxu0
  %v10728 = vadd.f32 0.0, %v10727
  %v10729 = vpop.f32.mrb[0].mxu0
  %10730 = vmatprep.mubr.bf16.mxu0 0
  %10731 = vmatmul.mubr.bf16.gmra.mrb[0].mxu0 %v10480
  %v10732 = vpop.f32.mrb[0].mxu0
  %v10733 = vadd.f32 0.0, %v10732
  %v10734 = vpop.f32.mrb[0].mxu0
  %v10735 = vpop.f32.mrb[0].mxu0
  %v10736 = vadd.f32 0.0, %v10735
  %v10737 = vpop.f32.mrb[0].mxu0
  %10738 = vmatprep.mubr.bf16.mxu0 0
  %10739 = vmatmul.mubr.bf16.gmra.mrb[0].mxu0 %v10483
  %v10740 = vpop.f32.mrb[0].mxu0
  %v10741 = vadd.f32 0.0, %v10740
  %v10742 = vpop.f32.mrb[0].mxu0
  %v10743 = vpop.f32.mrb[0].mxu0
  %v10744 = vadd.f32 0.0, %v10743
  %v10745 = vpop.f32.mrb[0].mxu0
  %10746 = vmatprep.mubr.bf16.mxu0 0
  %10747 = vmatmul.mubr.bf16.gmra.mrb[0].mxu0 %v10486
  %v10748 = vpop.f32.mrb[0].mxu0
  %v10749 = vadd.f32 0.0, %v10748
  %v10750 = vpop.f32.mrb[0].mxu0
  %v10751 = vpop.f32.mrb[0].mxu0
  %v10752 = vadd.f32 0.0, %v10751
  %v10753 = vpop.f32.mrb[0].mxu0
  %10754 = vmatprep.mubr.bf16.mxu0 0
  %10755 = vmatmul.mubr.bf16.gmra.mrb[0].mxu0 %v10489
  %v10756 = vpop.f32.mrb[0].mxu0
  %v10757 = vadd.f32 0.0, %v10756
  %v10758 = vpop.f32.mrb[0].mxu0
  %v10759 = vpop.f32.mrb[0].mxu0
  %v10760 = vadd.f32 0.0, %v10759
  %v10761 = vpop.f32.mrb[0].mxu0
  %10762 = vmatprep.mubr.bf16.mxu0 0
  %10763 = vmatmul.mubr.bf16.gmra.mrb[0].mxu0 %v10492
  %v10764 = vpop.f32.mrb[0].mxu0
  %v10765 = vadd.f32 0.0, %v10764
  %v10766 = vpop.f32.mrb[0].mxu0
  %v10767 = vpop.f32.mrb[0].mxu0
  %v10768 = vadd.f32 0.0, %v10767
  %v10769 = vpop.f32.mrb[0].mxu0
  %10770 = vmatprep.mubr.bf16.mxu0 0
  %10771 = vmatmul.mubr.bf16.gmra.mrb[0].mxu0 %v10495
  %v10772 = vpop.f32.mrb[0].mxu0
  %v10773 = vadd.f32 0.0, %v10772
  %v10774 = vpop.f32.mrb[0].mxu0
  %v10775 = vpop.f32.mrb[0].mxu0
  %v10776 = vadd.f32 0.0, %v10775
  %v10777 = vpop.f32.mrb[0].mxu0
  %10778 = vmatprep.mubr.bf16.mxu0 0
  %10779 = vmatmul.mubr.bf16.gmra.mrb[0].mxu0 %v10498
  %v10780 = vpop.f32.mrb[0].mxu0
  %v10781 = vadd.f32 0.0, %v10780
  %v10782 = vpop.f32.mrb[0].mxu0
  %v10783 = vpop.f32.mrb[0].mxu0
  %v10784 = vadd.f32 0.0, %v10783
  %v10785 = vpop.f32.mrb[0].mxu0
  %10786 = vmatprep.mubr.bf16.mxu0 0
  %10787 = vmatmul.mubr.bf16.gmra.mrb[0].mxu0 %v10501
  %v10788 = vpop.f32.mrb[0].mxu0
  %v10789 = vadd.f32 0.0, %v10788
  %v10790 = vpop.f32.mrb[0].mxu0
  %v10791 = vpop.f32.mrb[0].mxu0
  %v10792 = vadd.f32 0.0, %v10791
  %v10793 = vpop.f32.mrb[0].mxu0
  %10794 = vdwg.mxu0
  %v10795 = vadd.f32 %v10181, %v10541
  %v10796 = vadd.f32 %v10182, %v10544
  %v10797 = vadd.f32 %v10183, %v10549
  %v10798 = vadd.f32 %v10184, %v10552
  %v10799 = vadd.f32 %v10185, %v10557
  %v10800 = vadd.f32 %v10186, %v10560
  %v10801 = vadd.f32 %v10187, %v10565
  %v10802 = vadd.f32 %v10188, %v10568
  %v10803 = vadd.f32 %v10189, %v10573
  %v10804 = vadd.f32 %v10190, %v10576
  %v10805 = vadd.f32 %v10191, %v10581
  %v10806 = vadd.f32 %v10192, %v10584
  %v10807 = vadd.f32 %v10193, %v10589
  %v10808 = vadd.f32 %v10194, %v10592
  %v10809 = vadd.f32 %v10195, %v10597
  %v10810 = vadd.f32 %v10196, %v10600
  %v10811 = vadd.f32 %v10197, %v10605
  %v10812 = vadd.f32 %v10198, %v10608
  %v10813 = vadd.f32 %v10199, %v10613
  %v10814 = vadd.f32 %v10200, %v10616
  %v10815 = vadd.f32 %v10201, %v10621
  %v10816 = vadd.f32 %v10202, %v10624
  %v10817 = vadd.f32 %v10203, %v10629
  %v10818 = vadd.f32 %v10204, %v10632
  %v10819 = vadd.f32 %v10205, %v10637
  %v10820 = vadd.f32 %v10206, %v10640
  %v10821 = vadd.f32 %v10207, %v10645
  %v10822 = vadd.f32 %v10208, %v10648
  %v10823 = vadd.f32 %v10209, %v10653
  %v10824 = vadd.f32 %v10210, %v10656
  %v10825 = vadd.f32 %v10211, %v10661
  %v10826 = vadd.f32 %v10212, %v10664
  %v10827 = vadd.f32 %v10213, %v10669
  %v10828 = vadd.f32 %v10214, %v10672
  %v10829 = vadd.f32 %v10215, %v10677
  %v10830 = vadd.f32 %v10216, %v10680
  %v10831 = vadd.f32 %v10217, %v10685
  %v10832 = vadd.f32 %v10218, %v10688
  %v10833 = vadd.f32 %v10219, %v10693
  %v10834 = vadd.f32 %v10220, %v10696
  %v10835 = vadd.f32 %v10221, %v10701
  %v10836 = vadd.f32 %v10222, %v10704
  %v10837 = vadd.f32 %v10223, %v10709
  %v10838 = vadd.f32 %v10224, %v10712
  %v10839 = vadd.f32 %v10225, %v10717
  %v10840 = vadd.f32 %v10226, %v10720
  %v10841 = vadd.f32 %v10227, %v10725
  %v10842 = vadd.f32 %v10228, %v10728
  %v10843 = vadd.f32 %v10229, %v10733
  %v10844 = vadd.f32 %v10230, %v10736
  %v10845 = vadd.f32 %v10231, %v10741
  %v10846 = vadd.f32 %v10232, %v10744
  %v10847 = vadd.f32 %v10233, %v10749
  %v10848 = vadd.f32 %v10234, %v10752
  %v10849 = vadd.f32 %v10235, %v10757
  %v10850 = vadd.f32 %v10236, %v10760
  %v10851 = vadd.f32 %v10237, %v10765
  %v10852 = vadd.f32 %v10238, %v10768
  %v10853 = vadd.f32 %v10239, %v10773
  %v10854 = vadd.f32 %v10240, %v10776
  %v10855 = vadd.f32 %v10241, %v10781
  %v10856 = vadd.f32 %v10242, %v10784
  %v10857 = vadd.f32 %v10243, %v10789
  %v10858 = vadd.f32 %v10244, %v10792
  %s10859 = scalar_lea.vmem %s4, 20
  %v10860 = vld [vmem:[%s10859] sm:$0xf]
  %v10925 = vunpack.c.l.b16 %v7658
  %v10926 = vunpack.c.l.b16 %v7659
  %v10927 = vunpack.c.l.b16 %v7660
  %v10928 = vunpack.c.l.b16 %v7661
  %v10929 = vunpack.c.l.b16 %v7662
  %v10930 = vunpack.c.l.b16 %v7663
  %v10931 = vunpack.c.l.b16 %v7664
  %v10932 = vunpack.c.l.b16 %v7665
  %v10933 = vunpack.c.l.b16 %v7666
  %v10934 = vunpack.c.l.b16 %v7667
  %v10935 = vunpack.c.l.b16 %v7668
  %v10936 = vunpack.c.l.b16 %v7669
  %v10937 = vunpack.c.l.b16 %v7670
  %v10938 = vunpack.c.l.b16 %v7671
  %v10939 = vunpack.c.l.b16 %v7672
  %v10940 = vunpack.c.l.b16 %v7673
  %v10941 = vunpack.c.l.b16 %v7674
  %v10942 = vunpack.c.l.b16 %v7675
  %v10943 = vunpack.c.l.b16 %v7676
  %v10944 = vunpack.c.l.b16 %v7677
  %v10945 = vunpack.c.l.b16 %v7678
  %v10946 = vunpack.c.l.b16 %v7679
  %v10947 = vunpack.c.l.b16 %v7680
  %v10948 = vunpack.c.l.b16 %v7681
  %v10949 = vunpack.c.l.b16 %v7682
  %v10950 = vunpack.c.l.b16 %v7683
  %v10951 = vunpack.c.l.b16 %v7684
  %v10952 = vunpack.c.l.b16 %v7685
  %v10953 = vunpack.c.l.b16 %v7686
  %v10954 = vunpack.c.l.b16 %v7687
  %v10955 = vunpack.c.l.b16 %v7688
  %v10956 = vunpack.c.l.b16 %v7689
  %v10957 = vunpack.c.l.b16 %v7690
  %v10958 = vunpack.c.l.b16 %v7691
  %v10959 = vunpack.c.l.b16 %v7692
  %v10960 = vunpack.c.l.b16 %v7693
  %v10961 = vunpack.c.l.b16 %v7694
  %v10962 = vunpack.c.l.b16 %v7695
  %v10963 = vunpack.c.l.b16 %v7696
  %v10964 = vunpack.c.l.b16 %v7697
  %v10965 = vunpack.c.l.b16 %v7698
  %v10966 = vunpack.c.l.b16 %v7699
  %v10967 = vunpack.c.l.b16 %v7700
  %v10968 = vunpack.c.l.b16 %v7701
  %v10969 = vunpack.c.l.b16 %v7702
  %v10970 = vunpack.c.l.b16 %v7703
  %v10971 = vunpack.c.l.b16 %v7704
  %v10972 = vunpack.c.l.b16 %v7705
  %v10973 = vunpack.c.l.b16 %v7706
  %v10974 = vunpack.c.l.b16 %v7707
  %v10975 = vunpack.c.l.b16 %v7708
  %v10976 = vunpack.c.l.b16 %v7709
  %v10977 = vunpack.c.l.b16 %v7710
  %v10978 = vunpack.c.l.b16 %v7711
  %v10979 = vunpack.c.l.b16 %v7712
  %v10980 = vunpack.c.l.b16 %v7713
  %v10981 = vunpack.c.l.b16 %v7714
  %v10982 = vunpack.c.l.b16 %v7715
  %v10983 = vunpack.c.l.b16 %v7716
  %v10984 = vunpack.c.l.b16 %v7717
  %v10985 = vunpack.c.l.b16 %v7718
  %v10986 = vunpack.c.l.b16 %v7719
  %v10987 = vunpack.c.l.b16 %v7720
  %v10988 = vunpack.c.l.b16 %v7721
  %v10989 = vpack.c.b16 %v10926, %v10925
  %v10990 = vpack.c.b16 %v10928, %v10927
  %v10991 = vpack.c.b16 %v10930, %v10929
  %v10992 = vpack.c.b16 %v10932, %v10931
  %v10993 = vpack.c.b16 %v10934, %v10933
  %v10994 = vpack.c.b16 %v10936, %v10935
  %v10995 = vpack.c.b16 %v10938, %v10937
  %v10996 = vpack.c.b16 %v10940, %v10939
  %v10997 = vpack.c.b16 %v10942, %v10941
  %v10998 = vpack.c.b16 %v10944, %v10943
  %v10999 = vpack.c.b16 %v10946, %v10945
  %v11000 = vpack.c.b16 %v10948, %v10947
  %v11001 = vpack.c.b16 %v10950, %v10949
  %v11002 = vpack.c.b16 %v10952, %v10951
  %v11003 = vpack.c.b16 %v10954, %v10953
  %v11004 = vpack.c.b16 %v10956, %v10955
  %v11005 = vpack.c.b16 %v10958, %v10957
  %v11006 = vpack.c.b16 %v10960, %v10959
  %v11007 = vpack.c.b16 %v10962, %v10961
  %v11008 = vpack.c.b16 %v10964, %v10963
  %v11009 = vpack.c.b16 %v10966, %v10965
  %v11010 = vpack.c.b16 %v10968, %v10967
  %v11011 = vpack.c.b16 %v10970, %v10969
  %v11012 = vpack.c.b16 %v10972, %v10971
  %v11013 = vpack.c.b16 %v10974, %v10973
  %v11014 = vpack.c.b16 %v10976, %v10975
  %v11015 = vpack.c.b16 %v10978, %v10977
  %v11016 = vpack.c.b16 %v10980, %v10979
  %v11017 = vpack.c.b16 %v10982, %v10981
  %v11018 = vpack.c.b16 %v10984, %v10983
  %v11019 = vpack.c.b16 %v10986, %v10985
  %v11020 = vpack.c.b16 %v10988, %v10987
  %v11022 = vsel %vm6561, %v10989, 0
  %v11025 = vsel %vm6561, %v10990, 0
  %v11028 = vsel %vm6561, %v10991, 0
  %v11031 = vsel %vm6561, %v10992, 0
  %v11034 = vsel %vm6561, %v10993, 0
  %v11037 = vsel %vm6561, %v10994, 0
  %v11040 = vsel %vm6561, %v10995, 0
  %v11043 = vsel %vm6561, %v10996, 0
  %v11046 = vsel %vm6561, %v10997, 0
  %v11049 = vsel %vm6561, %v10998, 0
  %v11052 = vsel %vm6561, %v10999, 0
  %v11055 = vsel %vm6561, %v11000, 0
  %v11058 = vsel %vm6561, %v11001, 0
  %v11061 = vsel %vm6561, %v11002, 0
  %v11064 = vsel %vm6561, %v11003, 0
  %v11067 = vsel %vm6561, %v11004, 0
  %v11070 = vsel %vm6561, %v11005, 0
  %v11073 = vsel %vm6561, %v11006, 0
  %v11076 = vsel %vm6561, %v11007, 0
  %v11079 = vsel %vm6561, %v11008, 0
  %v11082 = vsel %vm6561, %v11009, 0
  %v11085 = vsel %vm6561, %v11010, 0
  %v11088 = vsel %vm6561, %v11011, 0
  %v11091 = vsel %vm6561, %v11012, 0
  %v11094 = vsel %vm6561, %v11013, 0
  %v11097 = vsel %vm6561, %v11014, 0
  %v11100 = vsel %vm6561, %v11015, 0
  %v11103 = vsel %vm6561, %v11016, 0
  %v11106 = vsel %vm6561, %v11017, 0
  %v11109 = vsel %vm6561, %v11018, 0
  %v11112 = vsel %vm6561, %v11019, 0
  %v11115 = vsel %vm6561, %v11020, 0
  %v11118 = vsel %vm8176, %v10860, 0
  %11120 = vmatprep.subr.bf16.mxu0 0
  %11121 = vmatpush1.bf16.msra.mxu0 %v11118
  %11122 = vmatprep.subr.bf16.mxu0 0
  %11123 = vmatpush1.bf16.msra.mxu0 0
  %11124 = vmatprep.subr.bf16.mxu0 0
  %11125 = vmatpush1.bf16.msra.mxu0 0
  %11126 = vmatprep.subr.bf16.mxu0 0
  %11127 = vmatpush1.bf16.msra.mxu0 0
  %11128 = vmatprep.subr.bf16.mxu0 0
  %11129 = vmatpush1.bf16.msra.mxu0 0
  %11130 = vmatprep.subr.bf16.mxu0 0
  %11131 = vmatpush1.bf16.msra.mxu0 0
  %11132 = vmatprep.subr.bf16.mxu0 0
  %11133 = vmatpush1.bf16.msra.mxu0 0
  %11134 = vmatprep.subr.bf16.mxu0 0
  %11135 = vmatpush1.bf16.msra.mxu0 0
  %11136 = vmatprep.subr.bf16.mxu0 0
  %11137 = vmatpush1.bf16.msra.mxu0 0
  %11138 = vmatprep.subr.bf16.mxu0 0
  %11139 = vmatpush1.bf16.msra.mxu0 0
  %11140 = vmatprep.subr.bf16.mxu0 0
  %11141 = vmatpush1.bf16.msra.mxu0 0
  %11142 = vmatprep.subr.bf16.mxu0 0
  %11143 = vmatpush1.bf16.msra.mxu0 0
  %11144 = vmatprep.subr.bf16.mxu0 0
  %11145 = vmatpush1.bf16.msra.mxu0 0
  %11146 = vmatprep.subr.bf16.mxu0 0
  %11147 = vmatpush1.bf16.msra.mxu0 0
  %11148 = vmatprep.subr.bf16.mxu0 0
  %11149 = vmatpush1.bf16.msra.mxu0 0
  %11150 = vmatprep.subr.bf16.mxu0 0
  %11151 = vmatpush1.bf16.msra.mxu0 0
  %11152 = vmatprep.mubr.bf16.mxu0 0
  %11153 = vmatmul.mubr.bf16.gmra.mrb[0].mxu0 %v11022
  %v11154 = vpop.f32.mrb[0].mxu0
  %v11155 = vadd.f32 0.0, %v11154
  %v11156 = vpop.f32.mrb[0].mxu0
  %v11157 = vpop.f32.mrb[0].mxu0
  %v11158 = vadd.f32 0.0, %v11157
  %v11159 = vpop.f32.mrb[0].mxu0
  %11160 = vmatprep.mubr.bf16.mxu0 0
  %11161 = vmatmul.mubr.bf16.gmra.mrb[0].mxu0 %v11025
  %v11162 = vpop.f32.mrb[0].mxu0
  %v11163 = vadd.f32 0.0, %v11162
  %v11164 = vpop.f32.mrb[0].mxu0
  %v11165 = vpop.f32.mrb[0].mxu0
  %v11166 = vadd.f32 0.0, %v11165
  %v11167 = vpop.f32.mrb[0].mxu0
  %11168 = vmatprep.mubr.bf16.mxu0 0
  %11169 = vmatmul.mubr.bf16.gmra.mrb[0].mxu0 %v11028
  %v11170 = vpop.f32.mrb[0].mxu0
  %v11171 = vadd.f32 0.0, %v11170
  %v11172 = vpop.f32.mrb[0].mxu0
  %v11173 = vpop.f32.mrb[0].mxu0
  %v11174 = vadd.f32 0.0, %v11173
  %v11175 = vpop.f32.mrb[0].mxu0
  %11176 = vmatprep.mubr.bf16.mxu0 0
  %11177 = vmatmul.mubr.bf16.gmra.mrb[0].mxu0 %v11031
  %v11178 = vpop.f32.mrb[0].mxu0
  %v11179 = vadd.f32 0.0, %v11178
  %v11180 = vpop.f32.mrb[0].mxu0
  %v11181 = vpop.f32.mrb[0].mxu0
  %v11182 = vadd.f32 0.0, %v11181
  %v11183 = vpop.f32.mrb[0].mxu0
  %11184 = vmatprep.mubr.bf16.mxu0 0
  %11185 = vmatmul.mubr.bf16.gmra.mrb[0].mxu0 %v11034
  %v11186 = vpop.f32.mrb[0].mxu0
  %v11187 = vadd.f32 0.0, %v11186
  %v11188 = vpop.f32.mrb[0].mxu0
  %v11189 = vpop.f32.mrb[0].mxu0
  %v11190 = vadd.f32 0.0, %v11189
  %v11191 = vpop.f32.mrb[0].mxu0
  %11192 = vmatprep.mubr.bf16.mxu0 0
  %11193 = vmatmul.mubr.bf16.gmra.mrb[0].mxu0 %v11037
  %v11194 = vpop.f32.mrb[0].mxu0
  %v11195 = vadd.f32 0.0, %v11194
  %v11196 = vpop.f32.mrb[0].mxu0
  %v11197 = vpop.f32.mrb[0].mxu0
  %v11198 = vadd.f32 0.0, %v11197
  %v11199 = vpop.f32.mrb[0].mxu0
  %11200 = vmatprep.mubr.bf16.mxu0 0
  %11201 = vmatmul.mubr.bf16.gmra.mrb[0].mxu0 %v11040
  %v11202 = vpop.f32.mrb[0].mxu0
  %v11203 = vadd.f32 0.0, %v11202
  %v11204 = vpop.f32.mrb[0].mxu0
  %v11205 = vpop.f32.mrb[0].mxu0
  %v11206 = vadd.f32 0.0, %v11205
  %v11207 = vpop.f32.mrb[0].mxu0
  %11208 = vmatprep.mubr.bf16.mxu0 0
  %11209 = vmatmul.mubr.bf16.gmra.mrb[0].mxu0 %v11043
  %v11210 = vpop.f32.mrb[0].mxu0
  %v11211 = vadd.f32 0.0, %v11210
  %v11212 = vpop.f32.mrb[0].mxu0
  %v11213 = vpop.f32.mrb[0].mxu0
  %v11214 = vadd.f32 0.0, %v11213
  %v11215 = vpop.f32.mrb[0].mxu0
  %11216 = vmatprep.mubr.bf16.mxu0 0
  %11217 = vmatmul.mubr.bf16.gmra.mrb[0].mxu0 %v11046
  %v11218 = vpop.f32.mrb[0].mxu0
  %v11219 = vadd.f32 0.0, %v11218
  %v11220 = vpop.f32.mrb[0].mxu0
  %v11221 = vpop.f32.mrb[0].mxu0
  %v11222 = vadd.f32 0.0, %v11221
  %v11223 = vpop.f32.mrb[0].mxu0
  %11224 = vmatprep.mubr.bf16.mxu0 0
  %11225 = vmatmul.mubr.bf16.gmra.mrb[0].mxu0 %v11049
  %v11226 = vpop.f32.mrb[0].mxu0
  %v11227 = vadd.f32 0.0, %v11226
  %v11228 = vpop.f32.mrb[0].mxu0
  %v11229 = vpop.f32.mrb[0].mxu0
  %v11230 = vadd.f32 0.0, %v11229
  %v11231 = vpop.f32.mrb[0].mxu0
  %11232 = vmatprep.mubr.bf16.mxu0 0
  %11233 = vmatmul.mubr.bf16.gmra.mrb[0].mxu0 %v11052
  %v11234 = vpop.f32.mrb[0].mxu0
  %v11235 = vadd.f32 0.0, %v11234
  %v11236 = vpop.f32.mrb[0].mxu0
  %v11237 = vpop.f32.mrb[0].mxu0
  %v11238 = vadd.f32 0.0, %v11237
  %v11239 = vpop.f32.mrb[0].mxu0
  %11240 = vmatprep.mubr.bf16.mxu0 0
  %11241 = vmatmul.mubr.bf16.gmra.mrb[0].mxu0 %v11055
  %v11242 = vpop.f32.mrb[0].mxu0
  %v11243 = vadd.f32 0.0, %v11242
  %v11244 = vpop.f32.mrb[0].mxu0
  %v11245 = vpop.f32.mrb[0].mxu0
  %v11246 = vadd.f32 0.0, %v11245
  %v11247 = vpop.f32.mrb[0].mxu0
  %11248 = vmatprep.mubr.bf16.mxu0 0
  %11249 = vmatmul.mubr.bf16.gmra.mrb[0].mxu0 %v11058
  %v11250 = vpop.f32.mrb[0].mxu0
  %v11251 = vadd.f32 0.0, %v11250
  %v11252 = vpop.f32.mrb[0].mxu0
  %v11253 = vpop.f32.mrb[0].mxu0
  %v11254 = vadd.f32 0.0, %v11253
  %v11255 = vpop.f32.mrb[0].mxu0
  %11256 = vmatprep.mubr.bf16.mxu0 0
  %11257 = vmatmul.mubr.bf16.gmra.mrb[0].mxu0 %v11061
  %v11258 = vpop.f32.mrb[0].mxu0
  %v11259 = vadd.f32 0.0, %v11258
  %v11260 = vpop.f32.mrb[0].mxu0
  %v11261 = vpop.f32.mrb[0].mxu0
  %v11262 = vadd.f32 0.0, %v11261
  %v11263 = vpop.f32.mrb[0].mxu0
  %11264 = vmatprep.mubr.bf16.mxu0 0
  %11265 = vmatmul.mubr.bf16.gmra.mrb[0].mxu0 %v11064
  %v11266 = vpop.f32.mrb[0].mxu0
  %v11267 = vadd.f32 0.0, %v11266
  %v11268 = vpop.f32.mrb[0].mxu0
  %v11269 = vpop.f32.mrb[0].mxu0
  %v11270 = vadd.f32 0.0, %v11269
  %v11271 = vpop.f32.mrb[0].mxu0
  %11272 = vmatprep.mubr.bf16.mxu0 0
  %11273 = vmatmul.mubr.bf16.gmra.mrb[0].mxu0 %v11067
  %v11274 = vpop.f32.mrb[0].mxu0
  %v11275 = vadd.f32 0.0, %v11274
  %v11276 = vpop.f32.mrb[0].mxu0
  %v11277 = vpop.f32.mrb[0].mxu0
  %v11278 = vadd.f32 0.0, %v11277
  %v11279 = vpop.f32.mrb[0].mxu0
  %11280 = vmatprep.mubr.bf16.mxu0 0
  %11281 = vmatmul.mubr.bf16.gmra.mrb[0].mxu0 %v11070
  %v11282 = vpop.f32.mrb[0].mxu0
  %v11283 = vadd.f32 0.0, %v11282
  %v11284 = vpop.f32.mrb[0].mxu0
  %v11285 = vpop.f32.mrb[0].mxu0
  %v11286 = vadd.f32 0.0, %v11285
  %v11287 = vpop.f32.mrb[0].mxu0
  %11288 = vmatprep.mubr.bf16.mxu0 0
  %11289 = vmatmul.mubr.bf16.gmra.mrb[0].mxu0 %v11073
  %v11290 = vpop.f32.mrb[0].mxu0
  %v11291 = vadd.f32 0.0, %v11290
  %v11292 = vpop.f32.mrb[0].mxu0
  %v11293 = vpop.f32.mrb[0].mxu0
  %v11294 = vadd.f32 0.0, %v11293
  %v11295 = vpop.f32.mrb[0].mxu0
  %11296 = vmatprep.mubr.bf16.mxu0 0
  %11297 = vmatmul.mubr.bf16.gmra.mrb[0].mxu0 %v11076
  %v11298 = vpop.f32.mrb[0].mxu0
  %v11299 = vadd.f32 0.0, %v11298
  %v11300 = vpop.f32.mrb[0].mxu0
  %v11301 = vpop.f32.mrb[0].mxu0
  %v11302 = vadd.f32 0.0, %v11301
  %v11303 = vpop.f32.mrb[0].mxu0
  %11304 = vmatprep.mubr.bf16.mxu0 0
  %11305 = vmatmul.mubr.bf16.gmra.mrb[0].mxu0 %v11079
  %v11306 = vpop.f32.mrb[0].mxu0
  %v11307 = vadd.f32 0.0, %v11306
  %v11308 = vpop.f32.mrb[0].mxu0
  %v11309 = vpop.f32.mrb[0].mxu0
  %v11310 = vadd.f32 0.0, %v11309
  %v11311 = vpop.f32.mrb[0].mxu0
  %11312 = vmatprep.mubr.bf16.mxu0 0
  %11313 = vmatmul.mubr.bf16.gmra.mrb[0].mxu0 %v11082
  %v11314 = vpop.f32.mrb[0].mxu0
  %v11315 = vadd.f32 0.0, %v11314
  %v11316 = vpop.f32.mrb[0].mxu0
  %v11317 = vpop.f32.mrb[0].mxu0
  %v11318 = vadd.f32 0.0, %v11317
  %v11319 = vpop.f32.mrb[0].mxu0
  %11320 = vmatprep.mubr.bf16.mxu0 0
  %11321 = vmatmul.mubr.bf16.gmra.mrb[0].mxu0 %v11085
  %v11322 = vpop.f32.mrb[0].mxu0
  %v11323 = vadd.f32 0.0, %v11322
  %v11324 = vpop.f32.mrb[0].mxu0
  %v11325 = vpop.f32.mrb[0].mxu0
  %v11326 = vadd.f32 0.0, %v11325
  %v11327 = vpop.f32.mrb[0].mxu0
  %11328 = vmatprep.mubr.bf16.mxu0 0
  %11329 = vmatmul.mubr.bf16.gmra.mrb[0].mxu0 %v11088
  %v11330 = vpop.f32.mrb[0].mxu0
  %v11331 = vadd.f32 0.0, %v11330
  %v11332 = vpop.f32.mrb[0].mxu0
  %v11333 = vpop.f32.mrb[0].mxu0
  %v11334 = vadd.f32 0.0, %v11333
  %v11335 = vpop.f32.mrb[0].mxu0
  %11336 = vmatprep.mubr.bf16.mxu0 0
  %11337 = vmatmul.mubr.bf16.gmra.mrb[0].mxu0 %v11091
  %v11338 = vpop.f32.mrb[0].mxu0
  %v11339 = vadd.f32 0.0, %v11338
  %v11340 = vpop.f32.mrb[0].mxu0
  %v11341 = vpop.f32.mrb[0].mxu0
  %v11342 = vadd.f32 0.0, %v11341
  %v11343 = vpop.f32.mrb[0].mxu0
  %11344 = vmatprep.mubr.bf16.mxu0 0
  %11345 = vmatmul.mubr.bf16.gmra.mrb[0].mxu0 %v11094
  %v11346 = vpop.f32.mrb[0].mxu0
  %v11347 = vadd.f32 0.0, %v11346
  %v11348 = vpop.f32.mrb[0].mxu0
  %v11349 = vpop.f32.mrb[0].mxu0
  %v11350 = vadd.f32 0.0, %v11349
  %v11351 = vpop.f32.mrb[0].mxu0
  %11352 = vmatprep.mubr.bf16.mxu0 0
  %11353 = vmatmul.mubr.bf16.gmra.mrb[0].mxu0 %v11097
  %v11354 = vpop.f32.mrb[0].mxu0
  %v11355 = vadd.f32 0.0, %v11354
  %v11356 = vpop.f32.mrb[0].mxu0
  %v11357 = vpop.f32.mrb[0].mxu0
  %v11358 = vadd.f32 0.0, %v11357
  %v11359 = vpop.f32.mrb[0].mxu0
  %11360 = vmatprep.mubr.bf16.mxu0 0
  %11361 = vmatmul.mubr.bf16.gmra.mrb[0].mxu0 %v11100
  %v11362 = vpop.f32.mrb[0].mxu0
  %v11363 = vadd.f32 0.0, %v11362
  %v11364 = vpop.f32.mrb[0].mxu0
  %v11365 = vpop.f32.mrb[0].mxu0
  %v11366 = vadd.f32 0.0, %v11365
  %v11367 = vpop.f32.mrb[0].mxu0
  %11368 = vmatprep.mubr.bf16.mxu0 0
  %11369 = vmatmul.mubr.bf16.gmra.mrb[0].mxu0 %v11103
  %v11370 = vpop.f32.mrb[0].mxu0
  %v11371 = vadd.f32 0.0, %v11370
  %v11372 = vpop.f32.mrb[0].mxu0
  %v11373 = vpop.f32.mrb[0].mxu0
  %v11374 = vadd.f32 0.0, %v11373
  %v11375 = vpop.f32.mrb[0].mxu0
  %11376 = vmatprep.mubr.bf16.mxu0 0
  %11377 = vmatmul.mubr.bf16.gmra.mrb[0].mxu0 %v11106
  %v11378 = vpop.f32.mrb[0].mxu0
  %v11379 = vadd.f32 0.0, %v11378
  %v11380 = vpop.f32.mrb[0].mxu0
  %v11381 = vpop.f32.mrb[0].mxu0
  %v11382 = vadd.f32 0.0, %v11381
  %v11383 = vpop.f32.mrb[0].mxu0
  %11384 = vmatprep.mubr.bf16.mxu0 0
  %11385 = vmatmul.mubr.bf16.gmra.mrb[0].mxu0 %v11109
  %v11386 = vpop.f32.mrb[0].mxu0
  %v11387 = vadd.f32 0.0, %v11386
  %v11388 = vpop.f32.mrb[0].mxu0
  %v11389 = vpop.f32.mrb[0].mxu0
  %v11390 = vadd.f32 0.0, %v11389
  %v11391 = vpop.f32.mrb[0].mxu0
  %11392 = vmatprep.mubr.bf16.mxu0 0
  %11393 = vmatmul.mubr.bf16.gmra.mrb[0].mxu0 %v11112
  %v11394 = vpop.f32.mrb[0].mxu0
  %v11395 = vadd.f32 0.0, %v11394
  %v11396 = vpop.f32.mrb[0].mxu0
  %v11397 = vpop.f32.mrb[0].mxu0
  %v11398 = vadd.f32 0.0, %v11397
  %v11399 = vpop.f32.mrb[0].mxu0
  %11400 = vmatprep.mubr.bf16.mxu0 0
  %11401 = vmatmul.mubr.bf16.gmra.mrb[0].mxu0 %v11115
  %v11402 = vpop.f32.mrb[0].mxu0
  %v11403 = vadd.f32 0.0, %v11402
  %v11404 = vpop.f32.mrb[0].mxu0
  %v11405 = vpop.f32.mrb[0].mxu0
  %v11406 = vadd.f32 0.0, %v11405
  %v11407 = vpop.f32.mrb[0].mxu0
  %11408 = vdwg.mxu0
  %v11409 = vadd.f32 %v10795, %v11155
  %v11410 = vadd.f32 %v10796, %v11158
  %v11411 = vadd.f32 %v10797, %v11163
  %v11412 = vadd.f32 %v10798, %v11166
  %v11413 = vadd.f32 %v10799, %v11171
  %v11414 = vadd.f32 %v10800, %v11174
  %v11415 = vadd.f32 %v10801, %v11179
  %v11416 = vadd.f32 %v10802, %v11182
  %v11417 = vadd.f32 %v10803, %v11187
  %v11418 = vadd.f32 %v10804, %v11190
  %v11419 = vadd.f32 %v10805, %v11195
  %v11420 = vadd.f32 %v10806, %v11198
  %v11421 = vadd.f32 %v10807, %v11203
  %v11422 = vadd.f32 %v10808, %v11206
  %v11423 = vadd.f32 %v10809, %v11211
  %v11424 = vadd.f32 %v10810, %v11214
  %v11425 = vadd.f32 %v10811, %v11219
  %v11426 = vadd.f32 %v10812, %v11222
  %v11427 = vadd.f32 %v10813, %v11227
  %v11428 = vadd.f32 %v10814, %v11230
  %v11429 = vadd.f32 %v10815, %v11235
  %v11430 = vadd.f32 %v10816, %v11238
  %v11431 = vadd.f32 %v10817, %v11243
  %v11432 = vadd.f32 %v10818, %v11246
  %v11433 = vadd.f32 %v10819, %v11251
  %v11434 = vadd.f32 %v10820, %v11254
  %v11435 = vadd.f32 %v10821, %v11259
  %v11436 = vadd.f32 %v10822, %v11262
  %v11437 = vadd.f32 %v10823, %v11267
  %v11438 = vadd.f32 %v10824, %v11270
  %v11439 = vadd.f32 %v10825, %v11275
  %v11440 = vadd.f32 %v10826, %v11278
  %v11441 = vadd.f32 %v10827, %v11283
  %v11442 = vadd.f32 %v10828, %v11286
  %v11443 = vadd.f32 %v10829, %v11291
  %v11444 = vadd.f32 %v10830, %v11294
  %v11445 = vadd.f32 %v10831, %v11299
  %v11446 = vadd.f32 %v10832, %v11302
  %v11447 = vadd.f32 %v10833, %v11307
  %v11448 = vadd.f32 %v10834, %v11310
  %v11449 = vadd.f32 %v10835, %v11315
  %v11450 = vadd.f32 %v10836, %v11318
  %v11451 = vadd.f32 %v10837, %v11323
  %v11452 = vadd.f32 %v10838, %v11326
  %v11453 = vadd.f32 %v10839, %v11331
  %v11454 = vadd.f32 %v10840, %v11334
  %v11455 = vadd.f32 %v10841, %v11339
  %v11456 = vadd.f32 %v10842, %v11342
  %v11457 = vadd.f32 %v10843, %v11347
  %v11458 = vadd.f32 %v10844, %v11350
  %v11459 = vadd.f32 %v10845, %v11355
  %v11460 = vadd.f32 %v10846, %v11358
  %v11461 = vadd.f32 %v10847, %v11363
  %v11462 = vadd.f32 %v10848, %v11366
  %v11463 = vadd.f32 %v10849, %v11371
  %v11464 = vadd.f32 %v10850, %v11374
  %v11465 = vadd.f32 %v10851, %v11379
  %v11466 = vadd.f32 %v10852, %v11382
  %v11467 = vadd.f32 %v10853, %v11387
  %v11468 = vadd.f32 %v10854, %v11390
  %v11469 = vadd.f32 %v10855, %v11395
  %v11470 = vadd.f32 %v10856, %v11398
  %v11471 = vadd.f32 %v10857, %v11403
  %v11472 = vadd.f32 %v10858, %v11406
  %s11473 = scalar_lea.vmem %s4, 24
  %v11474 = vld [vmem:[%s11473] sm:$0xf]
  %v11539 = vunpack.c.l.b16 %v7723
  %v11540 = vunpack.c.l.b16 %v7724
  %v11541 = vunpack.c.l.b16 %v7725
  %v11542 = vunpack.c.l.b16 %v7726
  %v11543 = vunpack.c.l.b16 %v7727
  %v11544 = vunpack.c.l.b16 %v7728
  %v11545 = vunpack.c.l.b16 %v7729
  %v11546 = vunpack.c.l.b16 %v7730
  %v11547 = vunpack.c.l.b16 %v7731
  %v11548 = vunpack.c.l.b16 %v7732
  %v11549 = vunpack.c.l.b16 %v7733
  %v11550 = vunpack.c.l.b16 %v7734
  %v11551 = vunpack.c.l.b16 %v7735
  %v11552 = vunpack.c.l.b16 %v7736
  %v11553 = vunpack.c.l.b16 %v7737
  %v11554 = vunpack.c.l.b16 %v7738
  %v11555 = vunpack.c.l.b16 %v7739
  %v11556 = vunpack.c.l.b16 %v7740
  %v11557 = vunpack.c.l.b16 %v7741
  %v11558 = vunpack.c.l.b16 %v7742
  %v11559 = vunpack.c.l.b16 %v7743
  %v11560 = vunpack.c.l.b16 %v7744
  %v11561 = vunpack.c.l.b16 %v7745
  %v11562 = vunpack.c.l.b16 %v7746
  %v11563 = vunpack.c.l.b16 %v7747
  %v11564 = vunpack.c.l.b16 %v7748
  %v11565 = vunpack.c.l.b16 %v7749
  %v11566 = vunpack.c.l.b16 %v7750
  %v11567 = vunpack.c.l.b16 %v7751
  %v11568 = vunpack.c.l.b16 %v7752
  %v11569 = vunpack.c.l.b16 %v7753
  %v11570 = vunpack.c.l.b16 %v7754
  %v11571 = vunpack.c.l.b16 %v7755
  %v11572 = vunpack.c.l.b16 %v7756
  %v11573 = vunpack.c.l.b16 %v7757
  %v11574 = vunpack.c.l.b16 %v7758
  %v11575 = vunpack.c.l.b16 %v7759
  %v11576 = vunpack.c.l.b16 %v7760
  %v11577 = vunpack.c.l.b16 %v7761
  %v11578 = vunpack.c.l.b16 %v7762
  %v11579 = vunpack.c.l.b16 %v7763
  %v11580 = vunpack.c.l.b16 %v7764
  %v11581 = vunpack.c.l.b16 %v7765
  %v11582 = vunpack.c.l.b16 %v7766
  %v11583 = vunpack.c.l.b16 %v7767
  %v11584 = vunpack.c.l.b16 %v7768
  %v11585 = vunpack.c.l.b16 %v7769
  %v11586 = vunpack.c.l.b16 %v7770
  %v11587 = vunpack.c.l.b16 %v7771
  %v11588 = vunpack.c.l.b16 %v7772
  %v11589 = vunpack.c.l.b16 %v7773
  %v11590 = vunpack.c.l.b16 %v7774
  %v11591 = vunpack.c.l.b16 %v7775
  %v11592 = vunpack.c.l.b16 %v7776
  %v11593 = vunpack.c.l.b16 %v7777
  %v11594 = vunpack.c.l.b16 %v7778
  %v11595 = vunpack.c.l.b16 %v7779
  %v11596 = vunpack.c.l.b16 %v7780
  %v11597 = vunpack.c.l.b16 %v7781
  %v11598 = vunpack.c.l.b16 %v7782
  %v11599 = vunpack.c.l.b16 %v7783
  %v11600 = vunpack.c.l.b16 %v7784
  %v11601 = vunpack.c.l.b16 %v7785
  %v11602 = vunpack.c.l.b16 %v7786
  %v11603 = vpack.c.b16 %v11540, %v11539
  %v11604 = vpack.c.b16 %v11542, %v11541
  %v11605 = vpack.c.b16 %v11544, %v11543
  %v11606 = vpack.c.b16 %v11546, %v11545
  %v11607 = vpack.c.b16 %v11548, %v11547
  %v11608 = vpack.c.b16 %v11550, %v11549
  %v11609 = vpack.c.b16 %v11552, %v11551
  %v11610 = vpack.c.b16 %v11554, %v11553
  %v11611 = vpack.c.b16 %v11556, %v11555
  %v11612 = vpack.c.b16 %v11558, %v11557
  %v11613 = vpack.c.b16 %v11560, %v11559
  %v11614 = vpack.c.b16 %v11562, %v11561
  %v11615 = vpack.c.b16 %v11564, %v11563
  %v11616 = vpack.c.b16 %v11566, %v11565
  %v11617 = vpack.c.b16 %v11568, %v11567
  %v11618 = vpack.c.b16 %v11570, %v11569
  %v11619 = vpack.c.b16 %v11572, %v11571
  %v11620 = vpack.c.b16 %v11574, %v11573
  %v11621 = vpack.c.b16 %v11576, %v11575
  %v11622 = vpack.c.b16 %v11578, %v11577
  %v11623 = vpack.c.b16 %v11580, %v11579
  %v11624 = vpack.c.b16 %v11582, %v11581
  %v11625 = vpack.c.b16 %v11584, %v11583
  %v11626 = vpack.c.b16 %v11586, %v11585
  %v11627 = vpack.c.b16 %v11588, %v11587
  %v11628 = vpack.c.b16 %v11590, %v11589
  %v11629 = vpack.c.b16 %v11592, %v11591
  %v11630 = vpack.c.b16 %v11594, %v11593
  %v11631 = vpack.c.b16 %v11596, %v11595
  %v11632 = vpack.c.b16 %v11598, %v11597
  %v11633 = vpack.c.b16 %v11600, %v11599
  %v11634 = vpack.c.b16 %v11602, %v11601
  %v11636 = vsel %vm6561, %v11603, 0
  %v11639 = vsel %vm6561, %v11604, 0
  %v11642 = vsel %vm6561, %v11605, 0
  %v11645 = vsel %vm6561, %v11606, 0
  %v11648 = vsel %vm6561, %v11607, 0
  %v11651 = vsel %vm6561, %v11608, 0
  %v11654 = vsel %vm6561, %v11609, 0
  %v11657 = vsel %vm6561, %v11610, 0
  %v11660 = vsel %vm6561, %v11611, 0
  %v11663 = vsel %vm6561, %v11612, 0
  %v11666 = vsel %vm6561, %v11613, 0
  %v11669 = vsel %vm6561, %v11614, 0
  %v11672 = vsel %vm6561, %v11615, 0
  %v11675 = vsel %vm6561, %v11616, 0
  %v11678 = vsel %vm6561, %v11617, 0
  %v11681 = vsel %vm6561, %v11618, 0
  %v11684 = vsel %vm6561, %v11619, 0
  %v11687 = vsel %vm6561, %v11620, 0
  %v11690 = vsel %vm6561, %v11621, 0
  %v11693 = vsel %vm6561, %v11622, 0
  %v11696 = vsel %vm6561, %v11623, 0
  %v11699 = vsel %vm6561, %v11624, 0
  %v11702 = vsel %vm6561, %v11625, 0
  %v11705 = vsel %vm6561, %v11626, 0
  %v11708 = vsel %vm6561, %v11627, 0
  %v11711 = vsel %vm6561, %v11628, 0
  %v11714 = vsel %vm6561, %v11629, 0
  %v11717 = vsel %vm6561, %v11630, 0
  %v11720 = vsel %vm6561, %v11631, 0
  %v11723 = vsel %vm6561, %v11632, 0
  %v11726 = vsel %vm6561, %v11633, 0
  %v11729 = vsel %vm6561, %v11634, 0
  %v11732 = vsel %vm8176, %v11474, 0
  %11734 = vmatprep.subr.bf16.mxu0 0
  %11735 = vmatpush1.bf16.msra.mxu0 %v11732
  %11736 = vmatprep.subr.bf16.mxu0 0
  %11737 = vmatpush1.bf16.msra.mxu0 0
  %11738 = vmatprep.subr.bf16.mxu0 0
  %11739 = vmatpush1.bf16.msra.mxu0 0
  %11740 = vmatprep.subr.bf16.mxu0 0
  %11741 = vmatpush1.bf16.msra.mxu0 0
  %11742 = vmatprep.subr.bf16.mxu0 0
  %11743 = vmatpush1.bf16.msra.mxu0 0
  %11744 = vmatprep.subr.bf16.mxu0 0
  %11745 = vmatpush1.bf16.msra.mxu0 0
  %11746 = vmatprep.subr.bf16.mxu0 0
  %11747 = vmatpush1.bf16.msra.mxu0 0
  %11748 = vmatprep.subr.bf16.mxu0 0
  %11749 = vmatpush1.bf16.msra.mxu0 0
  %11750 = vmatprep.subr.bf16.mxu0 0
  %11751 = vmatpush1.bf16.msra.mxu0 0
  %11752 = vmatprep.subr.bf16.mxu0 0
  %11753 = vmatpush1.bf16.msra.mxu0 0
  %11754 = vmatprep.subr.bf16.mxu0 0
  %11755 = vmatpush1.bf16.msra.mxu0 0
  %11756 = vmatprep.subr.bf16.mxu0 0
  %11757 = vmatpush1.bf16.msra.mxu0 0
  %11758 = vmatprep.subr.bf16.mxu0 0
  %11759 = vmatpush1.bf16.msra.mxu0 0
  %11760 = vmatprep.subr.bf16.mxu0 0
  %11761 = vmatpush1.bf16.msra.mxu0 0
  %11762 = vmatprep.subr.bf16.mxu0 0
  %11763 = vmatpush1.bf16.msra.mxu0 0
  %11764 = vmatprep.subr.bf16.mxu0 0
  %11765 = vmatpush1.bf16.msra.mxu0 0
  %11766 = vmatprep.mubr.bf16.mxu0 0
  %11767 = vmatmul.mubr.bf16.gmra.mrb[0].mxu0 %v11636
  %v11768 = vpop.f32.mrb[0].mxu0
  %v11769 = vadd.f32 0.0, %v11768
  %v11770 = vpop.f32.mrb[0].mxu0
  %v11771 = vpop.f32.mrb[0].mxu0
  %v11772 = vadd.f32 0.0, %v11771
  %v11773 = vpop.f32.mrb[0].mxu0
  %11774 = vmatprep.mubr.bf16.mxu0 0
  %11775 = vmatmul.mubr.bf16.gmra.mrb[0].mxu0 %v11639
  %v11776 = vpop.f32.mrb[0].mxu0
  %v11777 = vadd.f32 0.0, %v11776
  %v11778 = vpop.f32.mrb[0].mxu0
  %v11779 = vpop.f32.mrb[0].mxu0
  %v11780 = vadd.f32 0.0, %v11779
  %v11781 = vpop.f32.mrb[0].mxu0
  %11782 = vmatprep.mubr.bf16.mxu0 0
  %11783 = vmatmul.mubr.bf16.gmra.mrb[0].mxu0 %v11642
  %v11784 = vpop.f32.mrb[0].mxu0
  %v11785 = vadd.f32 0.0, %v11784
  %v11786 = vpop.f32.mrb[0].mxu0
  %v11787 = vpop.f32.mrb[0].mxu0
  %v11788 = vadd.f32 0.0, %v11787
  %v11789 = vpop.f32.mrb[0].mxu0
  %11790 = vmatprep.mubr.bf16.mxu0 0
  %11791 = vmatmul.mubr.bf16.gmra.mrb[0].mxu0 %v11645
  %v11792 = vpop.f32.mrb[0].mxu0
  %v11793 = vadd.f32 0.0, %v11792
  %v11794 = vpop.f32.mrb[0].mxu0
  %v11795 = vpop.f32.mrb[0].mxu0
  %v11796 = vadd.f32 0.0, %v11795
  %v11797 = vpop.f32.mrb[0].mxu0
  %11798 = vmatprep.mubr.bf16.mxu0 0
  %11799 = vmatmul.mubr.bf16.gmra.mrb[0].mxu0 %v11648
  %v11800 = vpop.f32.mrb[0].mxu0
  %v11801 = vadd.f32 0.0, %v11800
  %v11802 = vpop.f32.mrb[0].mxu0
  %v11803 = vpop.f32.mrb[0].mxu0
  %v11804 = vadd.f32 0.0, %v11803
  %v11805 = vpop.f32.mrb[0].mxu0
  %11806 = vmatprep.mubr.bf16.mxu0 0
  %11807 = vmatmul.mubr.bf16.gmra.mrb[0].mxu0 %v11651
  %v11808 = vpop.f32.mrb[0].mxu0
  %v11809 = vadd.f32 0.0, %v11808
  %v11810 = vpop.f32.mrb[0].mxu0
  %v11811 = vpop.f32.mrb[0].mxu0
  %v11812 = vadd.f32 0.0, %v11811
  %v11813 = vpop.f32.mrb[0].mxu0
  %11814 = vmatprep.mubr.bf16.mxu0 0
  %11815 = vmatmul.mubr.bf16.gmra.mrb[0].mxu0 %v11654
  %v11816 = vpop.f32.mrb[0].mxu0
  %v11817 = vadd.f32 0.0, %v11816
  %v11818 = vpop.f32.mrb[0].mxu0
  %v11819 = vpop.f32.mrb[0].mxu0
  %v11820 = vadd.f32 0.0, %v11819
  %v11821 = vpop.f32.mrb[0].mxu0
  %11822 = vmatprep.mubr.bf16.mxu0 0
  %11823 = vmatmul.mubr.bf16.gmra.mrb[0].mxu0 %v11657
  %v11824 = vpop.f32.mrb[0].mxu0
  %v11825 = vadd.f32 0.0, %v11824
  %v11826 = vpop.f32.mrb[0].mxu0
  %v11827 = vpop.f32.mrb[0].mxu0
  %v11828 = vadd.f32 0.0, %v11827
  %v11829 = vpop.f32.mrb[0].mxu0
  %11830 = vmatprep.mubr.bf16.mxu0 0
  %11831 = vmatmul.mubr.bf16.gmra.mrb[0].mxu0 %v11660
  %v11832 = vpop.f32.mrb[0].mxu0
  %v11833 = vadd.f32 0.0, %v11832
  %v11834 = vpop.f32.mrb[0].mxu0
  %v11835 = vpop.f32.mrb[0].mxu0
  %v11836 = vadd.f32 0.0, %v11835
  %v11837 = vpop.f32.mrb[0].mxu0
  %11838 = vmatprep.mubr.bf16.mxu0 0
  %11839 = vmatmul.mubr.bf16.gmra.mrb[0].mxu0 %v11663
  %v11840 = vpop.f32.mrb[0].mxu0
  %v11841 = vadd.f32 0.0, %v11840
  %v11842 = vpop.f32.mrb[0].mxu0
  %v11843 = vpop.f32.mrb[0].mxu0
  %v11844 = vadd.f32 0.0, %v11843
  %v11845 = vpop.f32.mrb[0].mxu0
  %11846 = vmatprep.mubr.bf16.mxu0 0
  %11847 = vmatmul.mubr.bf16.gmra.mrb[0].mxu0 %v11666
  %v11848 = vpop.f32.mrb[0].mxu0
  %v11849 = vadd.f32 0.0, %v11848
  %v11850 = vpop.f32.mrb[0].mxu0
  %v11851 = vpop.f32.mrb[0].mxu0
  %v11852 = vadd.f32 0.0, %v11851
  %v11853 = vpop.f32.mrb[0].mxu0
  %11854 = vmatprep.mubr.bf16.mxu0 0
  %11855 = vmatmul.mubr.bf16.gmra.mrb[0].mxu0 %v11669
  %v11856 = vpop.f32.mrb[0].mxu0
  %v11857 = vadd.f32 0.0, %v11856
  %v11858 = vpop.f32.mrb[0].mxu0
  %v11859 = vpop.f32.mrb[0].mxu0
  %v11860 = vadd.f32 0.0, %v11859
  %v11861 = vpop.f32.mrb[0].mxu0
  %11862 = vmatprep.mubr.bf16.mxu0 0
  %11863 = vmatmul.mubr.bf16.gmra.mrb[0].mxu0 %v11672
  %v11864 = vpop.f32.mrb[0].mxu0
  %v11865 = vadd.f32 0.0, %v11864
  %v11866 = vpop.f32.mrb[0].mxu0
  %v11867 = vpop.f32.mrb[0].mxu0
  %v11868 = vadd.f32 0.0, %v11867
  %v11869 = vpop.f32.mrb[0].mxu0
  %11870 = vmatprep.mubr.bf16.mxu0 0
  %11871 = vmatmul.mubr.bf16.gmra.mrb[0].mxu0 %v11675
  %v11872 = vpop.f32.mrb[0].mxu0
  %v11873 = vadd.f32 0.0, %v11872
  %v11874 = vpop.f32.mrb[0].mxu0
  %v11875 = vpop.f32.mrb[0].mxu0
  %v11876 = vadd.f32 0.0, %v11875
  %v11877 = vpop.f32.mrb[0].mxu0
  %11878 = vmatprep.mubr.bf16.mxu0 0
  %11879 = vmatmul.mubr.bf16.gmra.mrb[0].mxu0 %v11678
  %v11880 = vpop.f32.mrb[0].mxu0
  %v11881 = vadd.f32 0.0, %v11880
  %v11882 = vpop.f32.mrb[0].mxu0
  %v11883 = vpop.f32.mrb[0].mxu0
  %v11884 = vadd.f32 0.0, %v11883
  %v11885 = vpop.f32.mrb[0].mxu0
  %11886 = vmatprep.mubr.bf16.mxu0 0
  %11887 = vmatmul.mubr.bf16.gmra.mrb[0].mxu0 %v11681
  %v11888 = vpop.f32.mrb[0].mxu0
  %v11889 = vadd.f32 0.0, %v11888
  %v11890 = vpop.f32.mrb[0].mxu0
  %v11891 = vpop.f32.mrb[0].mxu0
  %v11892 = vadd.f32 0.0, %v11891
  %v11893 = vpop.f32.mrb[0].mxu0
  %11894 = vmatprep.mubr.bf16.mxu0 0
  %11895 = vmatmul.mubr.bf16.gmra.mrb[0].mxu0 %v11684
  %v11896 = vpop.f32.mrb[0].mxu0
  %v11897 = vadd.f32 0.0, %v11896
  %v11898 = vpop.f32.mrb[0].mxu0
  %v11899 = vpop.f32.mrb[0].mxu0
  %v11900 = vadd.f32 0.0, %v11899
  %v11901 = vpop.f32.mrb[0].mxu0
  %11902 = vmatprep.mubr.bf16.mxu0 0
  %11903 = vmatmul.mubr.bf16.gmra.mrb[0].mxu0 %v11687
  %v11904 = vpop.f32.mrb[0].mxu0
  %v11905 = vadd.f32 0.0, %v11904
  %v11906 = vpop.f32.mrb[0].mxu0
  %v11907 = vpop.f32.mrb[0].mxu0
  %v11908 = vadd.f32 0.0, %v11907
  %v11909 = vpop.f32.mrb[0].mxu0
  %11910 = vmatprep.mubr.bf16.mxu0 0
  %11911 = vmatmul.mubr.bf16.gmra.mrb[0].mxu0 %v11690
  %v11912 = vpop.f32.mrb[0].mxu0
  %v11913 = vadd.f32 0.0, %v11912
  %v11914 = vpop.f32.mrb[0].mxu0
  %v11915 = vpop.f32.mrb[0].mxu0
  %v11916 = vadd.f32 0.0, %v11915
  %v11917 = vpop.f32.mrb[0].mxu0
  %11918 = vmatprep.mubr.bf16.mxu0 0
  %11919 = vmatmul.mubr.bf16.gmra.mrb[0].mxu0 %v11693
  %v11920 = vpop.f32.mrb[0].mxu0
  %v11921 = vadd.f32 0.0, %v11920
  %v11922 = vpop.f32.mrb[0].mxu0
  %v11923 = vpop.f32.mrb[0].mxu0
  %v11924 = vadd.f32 0.0, %v11923
  %v11925 = vpop.f32.mrb[0].mxu0
  %11926 = vmatprep.mubr.bf16.mxu0 0
  %11927 = vmatmul.mubr.bf16.gmra.mrb[0].mxu0 %v11696
  %v11928 = vpop.f32.mrb[0].mxu0
  %v11929 = vadd.f32 0.0, %v11928
  %v11930 = vpop.f32.mrb[0].mxu0
  %v11931 = vpop.f32.mrb[0].mxu0
  %v11932 = vadd.f32 0.0, %v11931
  %v11933 = vpop.f32.mrb[0].mxu0
  %11934 = vmatprep.mubr.bf16.mxu0 0
  %11935 = vmatmul.mubr.bf16.gmra.mrb[0].mxu0 %v11699
  %v11936 = vpop.f32.mrb[0].mxu0
  %v11937 = vadd.f32 0.0, %v11936
  %v11938 = vpop.f32.mrb[0].mxu0
  %v11939 = vpop.f32.mrb[0].mxu0
  %v11940 = vadd.f32 0.0, %v11939
  %v11941 = vpop.f32.mrb[0].mxu0
  %11942 = vmatprep.mubr.bf16.mxu0 0
  %11943 = vmatmul.mubr.bf16.gmra.mrb[0].mxu0 %v11702
  %v11944 = vpop.f32.mrb[0].mxu0
  %v11945 = vadd.f32 0.0, %v11944
  %v11946 = vpop.f32.mrb[0].mxu0
  %v11947 = vpop.f32.mrb[0].mxu0
  %v11948 = vadd.f32 0.0, %v11947
  %v11949 = vpop.f32.mrb[0].mxu0
  %11950 = vmatprep.mubr.bf16.mxu0 0
  %11951 = vmatmul.mubr.bf16.gmra.mrb[0].mxu0 %v11705
  %v11952 = vpop.f32.mrb[0].mxu0
  %v11953 = vadd.f32 0.0, %v11952
  %v11954 = vpop.f32.mrb[0].mxu0
  %v11955 = vpop.f32.mrb[0].mxu0
  %v11956 = vadd.f32 0.0, %v11955
  %v11957 = vpop.f32.mrb[0].mxu0
  %11958 = vmatprep.mubr.bf16.mxu0 0
  %11959 = vmatmul.mubr.bf16.gmra.mrb[0].mxu0 %v11708
  %v11960 = vpop.f32.mrb[0].mxu0
  %v11961 = vadd.f32 0.0, %v11960
  %v11962 = vpop.f32.mrb[0].mxu0
  %v11963 = vpop.f32.mrb[0].mxu0
  %v11964 = vadd.f32 0.0, %v11963
  %v11965 = vpop.f32.mrb[0].mxu0
  %11966 = vmatprep.mubr.bf16.mxu0 0
  %11967 = vmatmul.mubr.bf16.gmra.mrb[0].mxu0 %v11711
  %v11968 = vpop.f32.mrb[0].mxu0
  %v11969 = vadd.f32 0.0, %v11968
  %v11970 = vpop.f32.mrb[0].mxu0
  %v11971 = vpop.f32.mrb[0].mxu0
  %v11972 = vadd.f32 0.0, %v11971
  %v11973 = vpop.f32.mrb[0].mxu0
  %11974 = vmatprep.mubr.bf16.mxu0 0
  %11975 = vmatmul.mubr.bf16.gmra.mrb[0].mxu0 %v11714
  %v11976 = vpop.f32.mrb[0].mxu0
  %v11977 = vadd.f32 0.0, %v11976
  %v11978 = vpop.f32.mrb[0].mxu0
  %v11979 = vpop.f32.mrb[0].mxu0
  %v11980 = vadd.f32 0.0, %v11979
  %v11981 = vpop.f32.mrb[0].mxu0
  %11982 = vmatprep.mubr.bf16.mxu0 0
  %11983 = vmatmul.mubr.bf16.gmra.mrb[0].mxu0 %v11717
  %v11984 = vpop.f32.mrb[0].mxu0
  %v11985 = vadd.f32 0.0, %v11984
  %v11986 = vpop.f32.mrb[0].mxu0
  %v11987 = vpop.f32.mrb[0].mxu0
  %v11988 = vadd.f32 0.0, %v11987
  %v11989 = vpop.f32.mrb[0].mxu0
  %11990 = vmatprep.mubr.bf16.mxu0 0
  %11991 = vmatmul.mubr.bf16.gmra.mrb[0].mxu0 %v11720
  %v11992 = vpop.f32.mrb[0].mxu0
  %v11993 = vadd.f32 0.0, %v11992
  %v11994 = vpop.f32.mrb[0].mxu0
  %v11995 = vpop.f32.mrb[0].mxu0
  %v11996 = vadd.f32 0.0, %v11995
  %v11997 = vpop.f32.mrb[0].mxu0
  %11998 = vmatprep.mubr.bf16.mxu0 0
  %11999 = vmatmul.mubr.bf16.gmra.mrb[0].mxu0 %v11723
  %v12000 = vpop.f32.mrb[0].mxu0
  %v12001 = vadd.f32 0.0, %v12000
  %v12002 = vpop.f32.mrb[0].mxu0
  %v12003 = vpop.f32.mrb[0].mxu0
  %v12004 = vadd.f32 0.0, %v12003
  %v12005 = vpop.f32.mrb[0].mxu0
  %12006 = vmatprep.mubr.bf16.mxu0 0
  %12007 = vmatmul.mubr.bf16.gmra.mrb[0].mxu0 %v11726
  %v12008 = vpop.f32.mrb[0].mxu0
  %v12009 = vadd.f32 0.0, %v12008
  %v12010 = vpop.f32.mrb[0].mxu0
  %v12011 = vpop.f32.mrb[0].mxu0
  %v12012 = vadd.f32 0.0, %v12011
  %v12013 = vpop.f32.mrb[0].mxu0
  %12014 = vmatprep.mubr.bf16.mxu0 0
  %12015 = vmatmul.mubr.bf16.gmra.mrb[0].mxu0 %v11729
  %v12016 = vpop.f32.mrb[0].mxu0
  %v12017 = vadd.f32 0.0, %v12016
  %v12018 = vpop.f32.mrb[0].mxu0
  %v12019 = vpop.f32.mrb[0].mxu0
  %v12020 = vadd.f32 0.0, %v12019
  %v12021 = vpop.f32.mrb[0].mxu0
  %12022 = vdwg.mxu0
  %v12023 = vadd.f32 %v11409, %v11769
  %v12024 = vadd.f32 %v11410, %v11772
  %v12025 = vadd.f32 %v11411, %v11777
  %v12026 = vadd.f32 %v11412, %v11780
  %v12027 = vadd.f32 %v11413, %v11785
  %v12028 = vadd.f32 %v11414, %v11788
  %v12029 = vadd.f32 %v11415, %v11793
  %v12030 = vadd.f32 %v11416, %v11796
  %v12031 = vadd.f32 %v11417, %v11801
  %v12032 = vadd.f32 %v11418, %v11804
  %v12033 = vadd.f32 %v11419, %v11809
  %v12034 = vadd.f32 %v11420, %v11812
  %v12035 = vadd.f32 %v11421, %v11817
  %v12036 = vadd.f32 %v11422, %v11820
  %v12037 = vadd.f32 %v11423, %v11825
  %v12038 = vadd.f32 %v11424, %v11828
  %v12039 = vadd.f32 %v11425, %v11833
  %v12040 = vadd.f32 %v11426, %v11836
  %v12041 = vadd.f32 %v11427, %v11841
  %v12042 = vadd.f32 %v11428, %v11844
  %v12043 = vadd.f32 %v11429, %v11849
  %v12044 = vadd.f32 %v11430, %v11852
  %v12045 = vadd.f32 %v11431, %v11857
  %v12046 = vadd.f32 %v11432, %v11860
  %v12047 = vadd.f32 %v11433, %v11865
  %v12048 = vadd.f32 %v11434, %v11868
  %v12049 = vadd.f32 %v11435, %v11873
  %v12050 = vadd.f32 %v11436, %v11876
  %v12051 = vadd.f32 %v11437, %v11881
  %v12052 = vadd.f32 %v11438, %v11884
  %v12053 = vadd.f32 %v11439, %v11889
  %v12054 = vadd.f32 %v11440, %v11892
  %v12055 = vadd.f32 %v11441, %v11897
  %v12056 = vadd.f32 %v11442, %v11900
  %v12057 = vadd.f32 %v11443, %v11905
  %v12058 = vadd.f32 %v11444, %v11908
  %v12059 = vadd.f32 %v11445, %v11913
  %v12060 = vadd.f32 %v11446, %v11916
  %v12061 = vadd.f32 %v11447, %v11921
  %v12062 = vadd.f32 %v11448, %v11924
  %v12063 = vadd.f32 %v11449, %v11929
  %v12064 = vadd.f32 %v11450, %v11932
  %v12065 = vadd.f32 %v11451, %v11937
  %v12066 = vadd.f32 %v11452, %v11940
  %v12067 = vadd.f32 %v11453, %v11945
  %v12068 = vadd.f32 %v11454, %v11948
  %v12069 = vadd.f32 %v11455, %v11953
  %v12070 = vadd.f32 %v11456, %v11956
  %v12071 = vadd.f32 %v11457, %v11961
  %v12072 = vadd.f32 %v11458, %v11964
  %v12073 = vadd.f32 %v11459, %v11969
  %v12074 = vadd.f32 %v11460, %v11972
  %v12075 = vadd.f32 %v11461, %v11977
  %v12076 = vadd.f32 %v11462, %v11980
  %v12077 = vadd.f32 %v11463, %v11985
  %v12078 = vadd.f32 %v11464, %v11988
  %v12079 = vadd.f32 %v11465, %v11993
  %v12080 = vadd.f32 %v11466, %v11996
  %v12081 = vadd.f32 %v11467, %v12001
  %v12082 = vadd.f32 %v11468, %v12004
  %v12083 = vadd.f32 %v11469, %v12009
  %v12084 = vadd.f32 %v11470, %v12012
  %v12085 = vadd.f32 %v11471, %v12017
  %v12086 = vadd.f32 %v11472, %v12020
  %s12087 = scalar_lea.vmem %s4, 28
  %v12088 = vld [vmem:[%s12087] sm:$0xf]
  %v12153 = vunpack.c.l.b16 %v7788
  %v12154 = vunpack.c.l.b16 %v7789
  %v12155 = vunpack.c.l.b16 %v7790
  %v12156 = vunpack.c.l.b16 %v7791
  %v12157 = vunpack.c.l.b16 %v7792
  %v12158 = vunpack.c.l.b16 %v7793
  %v12159 = vunpack.c.l.b16 %v7794
  %v12160 = vunpack.c.l.b16 %v7795
  %v12161 = vunpack.c.l.b16 %v7796
  %v12162 = vunpack.c.l.b16 %v7797
  %v12163 = vunpack.c.l.b16 %v7798
  %v12164 = vunpack.c.l.b16 %v7799
  %v12165 = vunpack.c.l.b16 %v7800
  %v12166 = vunpack.c.l.b16 %v7801
  %v12167 = vunpack.c.l.b16 %v7802
  %v12168 = vunpack.c.l.b16 %v7803
  %v12169 = vunpack.c.l.b16 %v7804
  %v12170 = vunpack.c.l.b16 %v7805
  %v12171 = vunpack.c.l.b16 %v7806
  %v12172 = vunpack.c.l.b16 %v7807
  %v12173 = vunpack.c.l.b16 %v7808
  %v12174 = vunpack.c.l.b16 %v7809
  %v12175 = vunpack.c.l.b16 %v7810
  %v12176 = vunpack.c.l.b16 %v7811
  %v12177 = vunpack.c.l.b16 %v7812
  %v12178 = vunpack.c.l.b16 %v7813
  %v12179 = vunpack.c.l.b16 %v7814
  %v12180 = vunpack.c.l.b16 %v7815
  %v12181 = vunpack.c.l.b16 %v7816
  %v12182 = vunpack.c.l.b16 %v7817
  %v12183 = vunpack.c.l.b16 %v7818
  %v12184 = vunpack.c.l.b16 %v7819
  %v12185 = vunpack.c.l.b16 %v7820
  %v12186 = vunpack.c.l.b16 %v7821
  %v12187 = vunpack.c.l.b16 %v7822
  %v12188 = vunpack.c.l.b16 %v7823
  %v12189 = vunpack.c.l.b16 %v7824
  %v12190 = vunpack.c.l.b16 %v7825
  %v12191 = vunpack.c.l.b16 %v7826
  %v12192 = vunpack.c.l.b16 %v7827
  %v12193 = vunpack.c.l.b16 %v7828
  %v12194 = vunpack.c.l.b16 %v7829
  %v12195 = vunpack.c.l.b16 %v7830
  %v12196 = vunpack.c.l.b16 %v7831
  %v12197 = vunpack.c.l.b16 %v7832
  %v12198 = vunpack.c.l.b16 %v7833
  %v12199 = vunpack.c.l.b16 %v7834
  %v12200 = vunpack.c.l.b16 %v7835
  %v12201 = vunpack.c.l.b16 %v7836
  %v12202 = vunpack.c.l.b16 %v7837
  %v12203 = vunpack.c.l.b16 %v7838
  %v12204 = vunpack.c.l.b16 %v7839
  %v12205 = vunpack.c.l.b16 %v7840
  %v12206 = vunpack.c.l.b16 %v7841
  %v12207 = vunpack.c.l.b16 %v7842
  %v12208 = vunpack.c.l.b16 %v7843
  %v12209 = vunpack.c.l.b16 %v7844
  %v12210 = vunpack.c.l.b16 %v7845
  %v12211 = vunpack.c.l.b16 %v7846
  %v12212 = vunpack.c.l.b16 %v7847
  %v12213 = vunpack.c.l.b16 %v7848
  %v12214 = vunpack.c.l.b16 %v7849
  %v12215 = vunpack.c.l.b16 %v7850
  %v12216 = vunpack.c.l.b16 %v7851
  %v12217 = vpack.c.b16 %v12154, %v12153
  %v12218 = vpack.c.b16 %v12156, %v12155
  %v12219 = vpack.c.b16 %v12158, %v12157
  %v12220 = vpack.c.b16 %v12160, %v12159
  %v12221 = vpack.c.b16 %v12162, %v12161
  %v12222 = vpack.c.b16 %v12164, %v12163
  %v12223 = vpack.c.b16 %v12166, %v12165
  %v12224 = vpack.c.b16 %v12168, %v12167
  %v12225 = vpack.c.b16 %v12170, %v12169
  %v12226 = vpack.c.b16 %v12172, %v12171
  %v12227 = vpack.c.b16 %v12174, %v12173
  %v12228 = vpack.c.b16 %v12176, %v12175
  %v12229 = vpack.c.b16 %v12178, %v12177
  %v12230 = vpack.c.b16 %v12180, %v12179
  %v12231 = vpack.c.b16 %v12182, %v12181
  %v12232 = vpack.c.b16 %v12184, %v12183
  %v12233 = vpack.c.b16 %v12186, %v12185
  %v12234 = vpack.c.b16 %v12188, %v12187
  %v12235 = vpack.c.b16 %v12190, %v12189
  %v12236 = vpack.c.b16 %v12192, %v12191
  %v12237 = vpack.c.b16 %v12194, %v12193
  %v12238 = vpack.c.b16 %v12196, %v12195
  %v12239 = vpack.c.b16 %v12198, %v12197
  %v12240 = vpack.c.b16 %v12200, %v12199
  %v12241 = vpack.c.b16 %v12202, %v12201
  %v12242 = vpack.c.b16 %v12204, %v12203
  %v12243 = vpack.c.b16 %v12206, %v12205
  %v12244 = vpack.c.b16 %v12208, %v12207
  %v12245 = vpack.c.b16 %v12210, %v12209
  %v12246 = vpack.c.b16 %v12212, %v12211
  %v12247 = vpack.c.b16 %v12214, %v12213
  %v12248 = vpack.c.b16 %v12216, %v12215
  %v12250 = vsel %vm6561, %v12217, 0
  %v12253 = vsel %vm6561, %v12218, 0
  %v12256 = vsel %vm6561, %v12219, 0
  %v12259 = vsel %vm6561, %v12220, 0
  %v12262 = vsel %vm6561, %v12221, 0
  %v12265 = vsel %vm6561, %v12222, 0
  %v12268 = vsel %vm6561, %v12223, 0
  %v12271 = vsel %vm6561, %v12224, 0
  %v12274 = vsel %vm6561, %v12225, 0
  %v12277 = vsel %vm6561, %v12226, 0
  %v12280 = vsel %vm6561, %v12227, 0
  %v12283 = vsel %vm6561, %v12228, 0
  %v12286 = vsel %vm6561, %v12229, 0
  %v12289 = vsel %vm6561, %v12230, 0
  %v12292 = vsel %vm6561, %v12231, 0
  %v12295 = vsel %vm6561, %v12232, 0
  %v12298 = vsel %vm6561, %v12233, 0
  %v12301 = vsel %vm6561, %v12234, 0
  %v12304 = vsel %vm6561, %v12235, 0
  %v12307 = vsel %vm6561, %v12236, 0
  %v12310 = vsel %vm6561, %v12237, 0
  %v12313 = vsel %vm6561, %v12238, 0
  %v12316 = vsel %vm6561, %v12239, 0
  %v12319 = vsel %vm6561, %v12240, 0
  %v12322 = vsel %vm6561, %v12241, 0
  %v12325 = vsel %vm6561, %v12242, 0
  %v12328 = vsel %vm6561, %v12243, 0
  %v12331 = vsel %vm6561, %v12244, 0
  %v12334 = vsel %vm6561, %v12245, 0
  %v12337 = vsel %vm6561, %v12246, 0
  %v12340 = vsel %vm6561, %v12247, 0
  %v12343 = vsel %vm6561, %v12248, 0
  %v12346 = vsel %vm8176, %v12088, 0
  %12348 = vmatprep.subr.bf16.mxu0 0
  %12349 = vmatpush1.bf16.msra.mxu0 %v12346
  %12350 = vmatprep.subr.bf16.mxu0 0
  %12351 = vmatpush1.bf16.msra.mxu0 0
  %12352 = vmatprep.subr.bf16.mxu0 0
  %12353 = vmatpush1.bf16.msra.mxu0 0
  %12354 = vmatprep.subr.bf16.mxu0 0
  %12355 = vmatpush1.bf16.msra.mxu0 0
  %12356 = vmatprep.subr.bf16.mxu0 0
  %12357 = vmatpush1.bf16.msra.mxu0 0
  %12358 = vmatprep.subr.bf16.mxu0 0
  %12359 = vmatpush1.bf16.msra.mxu0 0
  %12360 = vmatprep.subr.bf16.mxu0 0
  %12361 = vmatpush1.bf16.msra.mxu0 0
  %12362 = vmatprep.subr.bf16.mxu0 0
  %12363 = vmatpush1.bf16.msra.mxu0 0
  %12364 = vmatprep.subr.bf16.mxu0 0
  %12365 = vmatpush1.bf16.msra.mxu0 0
  %12366 = vmatprep.subr.bf16.mxu0 0
  %12367 = vmatpush1.bf16.msra.mxu0 0
  %12368 = vmatprep.subr.bf16.mxu0 0
  %12369 = vmatpush1.bf16.msra.mxu0 0
  %12370 = vmatprep.subr.bf16.mxu0 0
  %12371 = vmatpush1.bf16.msra.mxu0 0
  %12372 = vmatprep.subr.bf16.mxu0 0
  %12373 = vmatpush1.bf16.msra.mxu0 0
  %12374 = vmatprep.subr.bf16.mxu0 0
  %12375 = vmatpush1.bf16.msra.mxu0 0
  %12376 = vmatprep.subr.bf16.mxu0 0
  %12377 = vmatpush1.bf16.msra.mxu0 0
  %12378 = vmatprep.subr.bf16.mxu0 0
  %12379 = vmatpush1.bf16.msra.mxu0 0
  %12380 = vmatprep.mubr.bf16.mxu0 0
  %12381 = vmatmul.mubr.bf16.gmra.mrb[0].mxu0 %v12250
  %v12382 = vpop.f32.mrb[0].mxu0
  %v12383 = vadd.f32 0.0, %v12382
  %v12384 = vpop.f32.mrb[0].mxu0
  %v12385 = vpop.f32.mrb[0].mxu0
  %v12386 = vadd.f32 0.0, %v12385
  %v12387 = vpop.f32.mrb[0].mxu0
  %12388 = vmatprep.mubr.bf16.mxu0 0
  %12389 = vmatmul.mubr.bf16.gmra.mrb[0].mxu0 %v12253
  %v12390 = vpop.f32.mrb[0].mxu0
  %v12391 = vadd.f32 0.0, %v12390
  %v12392 = vpop.f32.mrb[0].mxu0
  %v12393 = vpop.f32.mrb[0].mxu0
  %v12394 = vadd.f32 0.0, %v12393
  %v12395 = vpop.f32.mrb[0].mxu0
  %12396 = vmatprep.mubr.bf16.mxu0 0
  %12397 = vmatmul.mubr.bf16.gmra.mrb[0].mxu0 %v12256
  %v12398 = vpop.f32.mrb[0].mxu0
  %v12399 = vadd.f32 0.0, %v12398
  %v12400 = vpop.f32.mrb[0].mxu0
  %v12401 = vpop.f32.mrb[0].mxu0
  %v12402 = vadd.f32 0.0, %v12401
  %v12403 = vpop.f32.mrb[0].mxu0
  %12404 = vmatprep.mubr.bf16.mxu0 0
  %12405 = vmatmul.mubr.bf16.gmra.mrb[0].mxu0 %v12259
  %v12406 = vpop.f32.mrb[0].mxu0
  %v12407 = vadd.f32 0.0, %v12406
  %v12408 = vpop.f32.mrb[0].mxu0
  %v12409 = vpop.f32.mrb[0].mxu0
  %v12410 = vadd.f32 0.0, %v12409
  %v12411 = vpop.f32.mrb[0].mxu0
  %12412 = vmatprep.mubr.bf16.mxu0 0
  %12413 = vmatmul.mubr.bf16.gmra.mrb[0].mxu0 %v12262
  %v12414 = vpop.f32.mrb[0].mxu0
  %v12415 = vadd.f32 0.0, %v12414
  %v12416 = vpop.f32.mrb[0].mxu0
  %v12417 = vpop.f32.mrb[0].mxu0
  %v12418 = vadd.f32 0.0, %v12417
  %v12419 = vpop.f32.mrb[0].mxu0
  %12420 = vmatprep.mubr.bf16.mxu0 0
  %12421 = vmatmul.mubr.bf16.gmra.mrb[0].mxu0 %v12265
  %v12422 = vpop.f32.mrb[0].mxu0
  %v12423 = vadd.f32 0.0, %v12422
  %v12424 = vpop.f32.mrb[0].mxu0
  %v12425 = vpop.f32.mrb[0].mxu0
  %v12426 = vadd.f32 0.0, %v12425
  %v12427 = vpop.f32.mrb[0].mxu0
  %12428 = vmatprep.mubr.bf16.mxu0 0
  %12429 = vmatmul.mubr.bf16.gmra.mrb[0].mxu0 %v12268
  %v12430 = vpop.f32.mrb[0].mxu0
  %v12431 = vadd.f32 0.0, %v12430
  %v12432 = vpop.f32.mrb[0].mxu0
  %v12433 = vpop.f32.mrb[0].mxu0
  %v12434 = vadd.f32 0.0, %v12433
  %v12435 = vpop.f32.mrb[0].mxu0
  %12436 = vmatprep.mubr.bf16.mxu0 0
  %12437 = vmatmul.mubr.bf16.gmra.mrb[0].mxu0 %v12271
  %v12438 = vpop.f32.mrb[0].mxu0
  %v12439 = vadd.f32 0.0, %v12438
  %v12440 = vpop.f32.mrb[0].mxu0
  %v12441 = vpop.f32.mrb[0].mxu0
  %v12442 = vadd.f32 0.0, %v12441
  %v12443 = vpop.f32.mrb[0].mxu0
  %12444 = vmatprep.mubr.bf16.mxu0 0
  %12445 = vmatmul.mubr.bf16.gmra.mrb[0].mxu0 %v12274
  %v12446 = vpop.f32.mrb[0].mxu0
  %v12447 = vadd.f32 0.0, %v12446
  %v12448 = vpop.f32.mrb[0].mxu0
  %v12449 = vpop.f32.mrb[0].mxu0
  %v12450 = vadd.f32 0.0, %v12449
  %v12451 = vpop.f32.mrb[0].mxu0
  %12452 = vmatprep.mubr.bf16.mxu0 0
  %12453 = vmatmul.mubr.bf16.gmra.mrb[0].mxu0 %v12277
  %v12454 = vpop.f32.mrb[0].mxu0
  %v12455 = vadd.f32 0.0, %v12454
  %v12456 = vpop.f32.mrb[0].mxu0
  %v12457 = vpop.f32.mrb[0].mxu0
  %v12458 = vadd.f32 0.0, %v12457
  %v12459 = vpop.f32.mrb[0].mxu0
  %12460 = vmatprep.mubr.bf16.mxu0 0
  %12461 = vmatmul.mubr.bf16.gmra.mrb[0].mxu0 %v12280
  %v12462 = vpop.f32.mrb[0].mxu0
  %v12463 = vadd.f32 0.0, %v12462
  %v12464 = vpop.f32.mrb[0].mxu0
  %v12465 = vpop.f32.mrb[0].mxu0
  %v12466 = vadd.f32 0.0, %v12465
  %v12467 = vpop.f32.mrb[0].mxu0
  %12468 = vmatprep.mubr.bf16.mxu0 0
  %12469 = vmatmul.mubr.bf16.gmra.mrb[0].mxu0 %v12283
  %v12470 = vpop.f32.mrb[0].mxu0
  %v12471 = vadd.f32 0.0, %v12470
  %v12472 = vpop.f32.mrb[0].mxu0
  %v12473 = vpop.f32.mrb[0].mxu0
  %v12474 = vadd.f32 0.0, %v12473
  %v12475 = vpop.f32.mrb[0].mxu0
  %12476 = vmatprep.mubr.bf16.mxu0 0
  %12477 = vmatmul.mubr.bf16.gmra.mrb[0].mxu0 %v12286
  %v12478 = vpop.f32.mrb[0].mxu0
  %v12479 = vadd.f32 0.0, %v12478
  %v12480 = vpop.f32.mrb[0].mxu0
  %v12481 = vpop.f32.mrb[0].mxu0
  %v12482 = vadd.f32 0.0, %v12481
  %v12483 = vpop.f32.mrb[0].mxu0
  %12484 = vmatprep.mubr.bf16.mxu0 0
  %12485 = vmatmul.mubr.bf16.gmra.mrb[0].mxu0 %v12289
  %v12486 = vpop.f32.mrb[0].mxu0
  %v12487 = vadd.f32 0.0, %v12486
  %v12488 = vpop.f32.mrb[0].mxu0
  %v12489 = vpop.f32.mrb[0].mxu0
  %v12490 = vadd.f32 0.0, %v12489
  %v12491 = vpop.f32.mrb[0].mxu0
  %12492 = vmatprep.mubr.bf16.mxu0 0
  %12493 = vmatmul.mubr.bf16.gmra.mrb[0].mxu0 %v12292
  %v12494 = vpop.f32.mrb[0].mxu0
  %v12495 = vadd.f32 0.0, %v12494
  %v12496 = vpop.f32.mrb[0].mxu0
  %v12497 = vpop.f32.mrb[0].mxu0
  %v12498 = vadd.f32 0.0, %v12497
  %v12499 = vpop.f32.mrb[0].mxu0
  %12500 = vmatprep.mubr.bf16.mxu0 0
  %12501 = vmatmul.mubr.bf16.gmra.mrb[0].mxu0 %v12295
  %v12502 = vpop.f32.mrb[0].mxu0
  %v12503 = vadd.f32 0.0, %v12502
  %v12504 = vpop.f32.mrb[0].mxu0
  %v12505 = vpop.f32.mrb[0].mxu0
  %v12506 = vadd.f32 0.0, %v12505
  %v12507 = vpop.f32.mrb[0].mxu0
  %12508 = vmatprep.mubr.bf16.mxu0 0
  %12509 = vmatmul.mubr.bf16.gmra.mrb[0].mxu0 %v12298
  %v12510 = vpop.f32.mrb[0].mxu0
  %v12511 = vadd.f32 0.0, %v12510
  %v12512 = vpop.f32.mrb[0].mxu0
  %v12513 = vpop.f32.mrb[0].mxu0
  %v12514 = vadd.f32 0.0, %v12513
  %v12515 = vpop.f32.mrb[0].mxu0
  %12516 = vmatprep.mubr.bf16.mxu0 0
  %12517 = vmatmul.mubr.bf16.gmra.mrb[0].mxu0 %v12301
  %v12518 = vpop.f32.mrb[0].mxu0
  %v12519 = vadd.f32 0.0, %v12518
  %v12520 = vpop.f32.mrb[0].mxu0
  %v12521 = vpop.f32.mrb[0].mxu0
  %v12522 = vadd.f32 0.0, %v12521
  %v12523 = vpop.f32.mrb[0].mxu0
  %12524 = vmatprep.mubr.bf16.mxu0 0
  %12525 = vmatmul.mubr.bf16.gmra.mrb[0].mxu0 %v12304
  %v12526 = vpop.f32.mrb[0].mxu0
  %v12527 = vadd.f32 0.0, %v12526
  %v12528 = vpop.f32.mrb[0].mxu0
  %v12529 = vpop.f32.mrb[0].mxu0
  %v12530 = vadd.f32 0.0, %v12529
  %v12531 = vpop.f32.mrb[0].mxu0
  %12532 = vmatprep.mubr.bf16.mxu0 0
  %12533 = vmatmul.mubr.bf16.gmra.mrb[0].mxu0 %v12307
  %v12534 = vpop.f32.mrb[0].mxu0
  %v12535 = vadd.f32 0.0, %v12534
  %v12536 = vpop.f32.mrb[0].mxu0
  %v12537 = vpop.f32.mrb[0].mxu0
  %v12538 = vadd.f32 0.0, %v12537
  %v12539 = vpop.f32.mrb[0].mxu0
  %12540 = vmatprep.mubr.bf16.mxu0 0
  %12541 = vmatmul.mubr.bf16.gmra.mrb[0].mxu0 %v12310
  %v12542 = vpop.f32.mrb[0].mxu0
  %v12543 = vadd.f32 0.0, %v12542
  %v12544 = vpop.f32.mrb[0].mxu0
  %v12545 = vpop.f32.mrb[0].mxu0
  %v12546 = vadd.f32 0.0, %v12545
  %v12547 = vpop.f32.mrb[0].mxu0
  %12548 = vmatprep.mubr.bf16.mxu0 0
  %12549 = vmatmul.mubr.bf16.gmra.mrb[0].mxu0 %v12313
  %v12550 = vpop.f32.mrb[0].mxu0
  %v12551 = vadd.f32 0.0, %v12550
  %v12552 = vpop.f32.mrb[0].mxu0
  %v12553 = vpop.f32.mrb[0].mxu0
  %v12554 = vadd.f32 0.0, %v12553
  %v12555 = vpop.f32.mrb[0].mxu0
  %12556 = vmatprep.mubr.bf16.mxu0 0
  %12557 = vmatmul.mubr.bf16.gmra.mrb[0].mxu0 %v12316
  %v12558 = vpop.f32.mrb[0].mxu0
  %v12559 = vadd.f32 0.0, %v12558
  %v12560 = vpop.f32.mrb[0].mxu0
  %v12561 = vpop.f32.mrb[0].mxu0
  %v12562 = vadd.f32 0.0, %v12561
  %v12563 = vpop.f32.mrb[0].mxu0
  %12564 = vmatprep.mubr.bf16.mxu0 0
  %12565 = vmatmul.mubr.bf16.gmra.mrb[0].mxu0 %v12319
  %v12566 = vpop.f32.mrb[0].mxu0
  %v12567 = vadd.f32 0.0, %v12566
  %v12568 = vpop.f32.mrb[0].mxu0
  %v12569 = vpop.f32.mrb[0].mxu0
  %v12570 = vadd.f32 0.0, %v12569
  %v12571 = vpop.f32.mrb[0].mxu0
  %12572 = vmatprep.mubr.bf16.mxu0 0
  %12573 = vmatmul.mubr.bf16.gmra.mrb[0].mxu0 %v12322
  %v12574 = vpop.f32.mrb[0].mxu0
  %v12575 = vadd.f32 0.0, %v12574
  %v12576 = vpop.f32.mrb[0].mxu0
  %v12577 = vpop.f32.mrb[0].mxu0
  %v12578 = vadd.f32 0.0, %v12577
  %v12579 = vpop.f32.mrb[0].mxu0
  %12580 = vmatprep.mubr.bf16.mxu0 0
  %12581 = vmatmul.mubr.bf16.gmra.mrb[0].mxu0 %v12325
  %v12582 = vpop.f32.mrb[0].mxu0
  %v12583 = vadd.f32 0.0, %v12582
  %v12584 = vpop.f32.mrb[0].mxu0
  %v12585 = vpop.f32.mrb[0].mxu0
  %v12586 = vadd.f32 0.0, %v12585
  %v12587 = vpop.f32.mrb[0].mxu0
  %12588 = vmatprep.mubr.bf16.mxu0 0
  %12589 = vmatmul.mubr.bf16.gmra.mrb[0].mxu0 %v12328
  %v12590 = vpop.f32.mrb[0].mxu0
  %v12591 = vadd.f32 0.0, %v12590
  %v12592 = vpop.f32.mrb[0].mxu0
  %v12593 = vpop.f32.mrb[0].mxu0
  %v12594 = vadd.f32 0.0, %v12593
  %v12595 = vpop.f32.mrb[0].mxu0
  %12596 = vmatprep.mubr.bf16.mxu0 0
  %12597 = vmatmul.mubr.bf16.gmra.mrb[0].mxu0 %v12331
  %v12598 = vpop.f32.mrb[0].mxu0
  %v12599 = vadd.f32 0.0, %v12598
  %v12600 = vpop.f32.mrb[0].mxu0
  %v12601 = vpop.f32.mrb[0].mxu0
  %v12602 = vadd.f32 0.0, %v12601
  %v12603 = vpop.f32.mrb[0].mxu0
  %12604 = vmatprep.mubr.bf16.mxu0 0
  %12605 = vmatmul.mubr.bf16.gmra.mrb[0].mxu0 %v12334
  %v12606 = vpop.f32.mrb[0].mxu0
  %v12607 = vadd.f32 0.0, %v12606
  %v12608 = vpop.f32.mrb[0].mxu0
  %v12609 = vpop.f32.mrb[0].mxu0
  %v12610 = vadd.f32 0.0, %v12609
  %v12611 = vpop.f32.mrb[0].mxu0
  %12612 = vmatprep.mubr.bf16.mxu0 0
  %12613 = vmatmul.mubr.bf16.gmra.mrb[0].mxu0 %v12337
  %v12614 = vpop.f32.mrb[0].mxu0
  %v12615 = vadd.f32 0.0, %v12614
  %v12616 = vpop.f32.mrb[0].mxu0
  %v12617 = vpop.f32.mrb[0].mxu0
  %v12618 = vadd.f32 0.0, %v12617
  %v12619 = vpop.f32.mrb[0].mxu0
  %12620 = vmatprep.mubr.bf16.mxu0 0
  %12621 = vmatmul.mubr.bf16.gmra.mrb[0].mxu0 %v12340
  %v12622 = vpop.f32.mrb[0].mxu0
  %v12623 = vadd.f32 0.0, %v12622
  %v12624 = vpop.f32.mrb[0].mxu0
  %v12625 = vpop.f32.mrb[0].mxu0
  %v12626 = vadd.f32 0.0, %v12625
  %v12627 = vpop.f32.mrb[0].mxu0
  %12628 = vmatprep.mubr.bf16.mxu0 0
  %12629 = vmatmul.mubr.bf16.gmra.mrb[0].mxu0 %v12343
  %v12630 = vpop.f32.mrb[0].mxu0
  %v12631 = vadd.f32 0.0, %v12630
  %v12632 = vpop.f32.mrb[0].mxu0
  %v12633 = vpop.f32.mrb[0].mxu0
  %v12634 = vadd.f32 0.0, %v12633
  %v12635 = vpop.f32.mrb[0].mxu0
  %12636 = vdwg.mxu0
  %v12637 = vadd.f32 %v12023, %v12383
  %v12638 = vadd.f32 %v12024, %v12386
  %v12639 = vadd.f32 %v12025, %v12391
  %v12640 = vadd.f32 %v12026, %v12394
  %v12641 = vadd.f32 %v12027, %v12399
  %v12642 = vadd.f32 %v12028, %v12402
  %v12643 = vadd.f32 %v12029, %v12407
  %v12644 = vadd.f32 %v12030, %v12410
  %v12645 = vadd.f32 %v12031, %v12415
  %v12646 = vadd.f32 %v12032, %v12418
  %v12647 = vadd.f32 %v12033, %v12423
  %v12648 = vadd.f32 %v12034, %v12426
  %v12649 = vadd.f32 %v12035, %v12431
  %v12650 = vadd.f32 %v12036, %v12434
  %v12651 = vadd.f32 %v12037, %v12439
  %v12652 = vadd.f32 %v12038, %v12442
  %v12653 = vadd.f32 %v12039, %v12447
  %v12654 = vadd.f32 %v12040, %v12450
  %v12655 = vadd.f32 %v12041, %v12455
  %v12656 = vadd.f32 %v12042, %v12458
  %v12657 = vadd.f32 %v12043, %v12463
  %v12658 = vadd.f32 %v12044, %v12466
  %v12659 = vadd.f32 %v12045, %v12471
  %v12660 = vadd.f32 %v12046, %v12474
  %v12661 = vadd.f32 %v12047, %v12479
  %v12662 = vadd.f32 %v12048, %v12482
  %v12663 = vadd.f32 %v12049, %v12487
  %v12664 = vadd.f32 %v12050, %v12490
  %v12665 = vadd.f32 %v12051, %v12495
  %v12666 = vadd.f32 %v12052, %v12498
  %v12667 = vadd.f32 %v12053, %v12503
  %v12668 = vadd.f32 %v12054, %v12506
  %v12669 = vadd.f32 %v12055, %v12511
  %v12670 = vadd.f32 %v12056, %v12514
  %v12671 = vadd.f32 %v12057, %v12519
  %v12672 = vadd.f32 %v12058, %v12522
  %v12673 = vadd.f32 %v12059, %v12527
  %v12674 = vadd.f32 %v12060, %v12530
  %v12675 = vadd.f32 %v12061, %v12535
  %v12676 = vadd.f32 %v12062, %v12538
  %v12677 = vadd.f32 %v12063, %v12543
  %v12678 = vadd.f32 %v12064, %v12546
  %v12679 = vadd.f32 %v12065, %v12551
  %v12680 = vadd.f32 %v12066, %v12554
  %v12681 = vadd.f32 %v12067, %v12559
  %v12682 = vadd.f32 %v12068, %v12562
  %v12683 = vadd.f32 %v12069, %v12567
  %v12684 = vadd.f32 %v12070, %v12570
  %v12685 = vadd.f32 %v12071, %v12575
  %v12686 = vadd.f32 %v12072, %v12578
  %v12687 = vadd.f32 %v12073, %v12583
  %v12688 = vadd.f32 %v12074, %v12586
  %v12689 = vadd.f32 %v12075, %v12591
  %v12690 = vadd.f32 %v12076, %v12594
  %v12691 = vadd.f32 %v12077, %v12599
  %v12692 = vadd.f32 %v12078, %v12602
  %v12693 = vadd.f32 %v12079, %v12607
  %v12694 = vadd.f32 %v12080, %v12610
  %v12695 = vadd.f32 %v12081, %v12615
  %v12696 = vadd.f32 %v12082, %v12618
  %v12697 = vadd.f32 %v12083, %v12623
  %v12698 = vadd.f32 %v12084, %v12626
  %v12699 = vadd.f32 %v12085, %v12631
  %v12700 = vadd.f32 %v12086, %v12634
  %s12701 = scalar_lea.vmem %s4, 32
  %v12702 = vld [vmem:[%s12701] sm:$0xf]
  %v12767 = vunpack.c.l.b16 %v7853
  %v12768 = vunpack.c.l.b16 %v7854
  %v12769 = vunpack.c.l.b16 %v7855
  %v12770 = vunpack.c.l.b16 %v7856
  %v12771 = vunpack.c.l.b16 %v7857
  %v12772 = vunpack.c.l.b16 %v7858
  %v12773 = vunpack.c.l.b16 %v7859
  %v12774 = vunpack.c.l.b16 %v7860
  %v12775 = vunpack.c.l.b16 %v7861
  %v12776 = vunpack.c.l.b16 %v7862
  %v12777 = vunpack.c.l.b16 %v7863
  %v12778 = vunpack.c.l.b16 %v7864
  %v12779 = vunpack.c.l.b16 %v7865
  %v12780 = vunpack.c.l.b16 %v7866
  %v12781 = vunpack.c.l.b16 %v7867
  %v12782 = vunpack.c.l.b16 %v7868
  %v12783 = vunpack.c.l.b16 %v7869
  %v12784 = vunpack.c.l.b16 %v7870
  %v12785 = vunpack.c.l.b16 %v7871
  %v12786 = vunpack.c.l.b16 %v7872
  %v12787 = vunpack.c.l.b16 %v7873
  %v12788 = vunpack.c.l.b16 %v7874
  %v12789 = vunpack.c.l.b16 %v7875
  %v12790 = vunpack.c.l.b16 %v7876
  %v12791 = vunpack.c.l.b16 %v7877
  %v12792 = vunpack.c.l.b16 %v7878
  %v12793 = vunpack.c.l.b16 %v7879
  %v12794 = vunpack.c.l.b16 %v7880
  %v12795 = vunpack.c.l.b16 %v7881
  %v12796 = vunpack.c.l.b16 %v7882
  %v12797 = vunpack.c.l.b16 %v7883
  %v12798 = vunpack.c.l.b16 %v7884
  %v12799 = vunpack.c.l.b16 %v7885
  %v12800 = vunpack.c.l.b16 %v7886
  %v12801 = vunpack.c.l.b16 %v7887
  %v12802 = vunpack.c.l.b16 %v7888
  %v12803 = vunpack.c.l.b16 %v7889
  %v12804 = vunpack.c.l.b16 %v7890
  %v12805 = vunpack.c.l.b16 %v7891
  %v12806 = vunpack.c.l.b16 %v7892
  %v12807 = vunpack.c.l.b16 %v7893
  %v12808 = vunpack.c.l.b16 %v7894
  %v12809 = vunpack.c.l.b16 %v7895
  %v12810 = vunpack.c.l.b16 %v7896
  %v12811 = vunpack.c.l.b16 %v7897
  %v12812 = vunpack.c.l.b16 %v7898
  %v12813 = vunpack.c.l.b16 %v7899
  %v12814 = vunpack.c.l.b16 %v7900
  %v12815 = vunpack.c.l.b16 %v7901
  %v12816 = vunpack.c.l.b16 %v7902
  %v12817 = vunpack.c.l.b16 %v7903
  %v12818 = vunpack.c.l.b16 %v7904
  %v12819 = vunpack.c.l.b16 %v7905
  %v12820 = vunpack.c.l.b16 %v7906
  %v12821 = vunpack.c.l.b16 %v7907
  %v12822 = vunpack.c.l.b16 %v7908
  %v12823 = vunpack.c.l.b16 %v7909
  %v12824 = vunpack.c.l.b16 %v7910
  %v12825 = vunpack.c.l.b16 %v7911
  %v12826 = vunpack.c.l.b16 %v7912
  %v12827 = vunpack.c.l.b16 %v7913
  %v12828 = vunpack.c.l.b16 %v7914
  %v12829 = vunpack.c.l.b16 %v7915
  %v12830 = vunpack.c.l.b16 %v7916
  %v12831 = vpack.c.b16 %v12768, %v12767
  %v12832 = vpack.c.b16 %v12770, %v12769
  %v12833 = vpack.c.b16 %v12772, %v12771
  %v12834 = vpack.c.b16 %v12774, %v12773
  %v12835 = vpack.c.b16 %v12776, %v12775
  %v12836 = vpack.c.b16 %v12778, %v12777
  %v12837 = vpack.c.b16 %v12780, %v12779
  %v12838 = vpack.c.b16 %v12782, %v12781
  %v12839 = vpack.c.b16 %v12784, %v12783
  %v12840 = vpack.c.b16 %v12786, %v12785
  %v12841 = vpack.c.b16 %v12788, %v12787
  %v12842 = vpack.c.b16 %v12790, %v12789
  %v12843 = vpack.c.b16 %v12792, %v12791
  %v12844 = vpack.c.b16 %v12794, %v12793
  %v12845 = vpack.c.b16 %v12796, %v12795
  %v12846 = vpack.c.b16 %v12798, %v12797
  %v12847 = vpack.c.b16 %v12800, %v12799
  %v12848 = vpack.c.b16 %v12802, %v12801
  %v12849 = vpack.c.b16 %v12804, %v12803
  %v12850 = vpack.c.b16 %v12806, %v12805
  %v12851 = vpack.c.b16 %v12808, %v12807
  %v12852 = vpack.c.b16 %v12810, %v12809
  %v12853 = vpack.c.b16 %v12812, %v12811
  %v12854 = vpack.c.b16 %v12814, %v12813
  %v12855 = vpack.c.b16 %v12816, %v12815
  %v12856 = vpack.c.b16 %v12818, %v12817
  %v12857 = vpack.c.b16 %v12820, %v12819
  %v12858 = vpack.c.b16 %v12822, %v12821
  %v12859 = vpack.c.b16 %v12824, %v12823
  %v12860 = vpack.c.b16 %v12826, %v12825
  %v12861 = vpack.c.b16 %v12828, %v12827
  %v12862 = vpack.c.b16 %v12830, %v12829
  %v12864 = vsel %vm6561, %v12831, 0
  %v12867 = vsel %vm6561, %v12832, 0
  %v12870 = vsel %vm6561, %v12833, 0
  %v12873 = vsel %vm6561, %v12834, 0
  %v12876 = vsel %vm6561, %v12835, 0
  %v12879 = vsel %vm6561, %v12836, 0
  %v12882 = vsel %vm6561, %v12837, 0
  %v12885 = vsel %vm6561, %v12838, 0
  %v12888 = vsel %vm6561, %v12839, 0
  %v12891 = vsel %vm6561, %v12840, 0
  %v12894 = vsel %vm6561, %v12841, 0
  %v12897 = vsel %vm6561, %v12842, 0
  %v12900 = vsel %vm6561, %v12843, 0
  %v12903 = vsel %vm6561, %v12844, 0
  %v12906 = vsel %vm6561, %v12845, 0
  %v12909 = vsel %vm6561, %v12846, 0
  %v12912 = vsel %vm6561, %v12847, 0
  %v12915 = vsel %vm6561, %v12848, 0
  %v12918 = vsel %vm6561, %v12849, 0
  %v12921 = vsel %vm6561, %v12850, 0
  %v12924 = vsel %vm6561, %v12851, 0
  %v12927 = vsel %vm6561, %v12852, 0
  %v12930 = vsel %vm6561, %v12853, 0
  %v12933 = vsel %vm6561, %v12854, 0
  %v12936 = vsel %vm6561, %v12855, 0
  %v12939 = vsel %vm6561, %v12856, 0
  %v12942 = vsel %vm6561, %v12857, 0
  %v12945 = vsel %vm6561, %v12858, 0
  %v12948 = vsel %vm6561, %v12859, 0
  %v12951 = vsel %vm6561, %v12860, 0
  %v12954 = vsel %vm6561, %v12861, 0
  %v12957 = vsel %vm6561, %v12862, 0
  %v12960 = vsel %vm8176, %v12702, 0
  %12962 = vmatprep.subr.bf16.mxu0 0
  %12963 = vmatpush1.bf16.msra.mxu0 %v12960
  %12964 = vmatprep.subr.bf16.mxu0 0
  %12965 = vmatpush1.bf16.msra.mxu0 0
  %12966 = vmatprep.subr.bf16.mxu0 0
  %12967 = vmatpush1.bf16.msra.mxu0 0
  %12968 = vmatprep.subr.bf16.mxu0 0
  %12969 = vmatpush1.bf16.msra.mxu0 0
  %12970 = vmatprep.subr.bf16.mxu0 0
  %12971 = vmatpush1.bf16.msra.mxu0 0
  %12972 = vmatprep.subr.bf16.mxu0 0
  %12973 = vmatpush1.bf16.msra.mxu0 0
  %12974 = vmatprep.subr.bf16.mxu0 0
  %12975 = vmatpush1.bf16.msra.mxu0 0
  %12976 = vmatprep.subr.bf16.mxu0 0
  %12977 = vmatpush1.bf16.msra.mxu0 0
  %12978 = vmatprep.subr.bf16.mxu0 0
  %12979 = vmatpush1.bf16.msra.mxu0 0
  %12980 = vmatprep.subr.bf16.mxu0 0
  %12981 = vmatpush1.bf16.msra.mxu0 0
  %12982 = vmatprep.subr.bf16.mxu0 0
  %12983 = vmatpush1.bf16.msra.mxu0 0
  %12984 = vmatprep.subr.bf16.mxu0 0
  %12985 = vmatpush1.bf16.msra.mxu0 0
  %12986 = vmatprep.subr.bf16.mxu0 0
  %12987 = vmatpush1.bf16.msra.mxu0 0
  %12988 = vmatprep.subr.bf16.mxu0 0
  %12989 = vmatpush1.bf16.msra.mxu0 0
  %12990 = vmatprep.subr.bf16.mxu0 0
  %12991 = vmatpush1.bf16.msra.mxu0 0
  %12992 = vmatprep.subr.bf16.mxu0 0
  %12993 = vmatpush1.bf16.msra.mxu0 0
  %12994 = vmatprep.mubr.bf16.mxu0 0
  %12995 = vmatmul.mubr.bf16.gmra.mrb[0].mxu0 %v12864
  %v12996 = vpop.f32.mrb[0].mxu0
  %v12997 = vadd.f32 0.0, %v12996
  %v12998 = vpop.f32.mrb[0].mxu0
  %v12999 = vpop.f32.mrb[0].mxu0
  %v13000 = vadd.f32 0.0, %v12999
  %v13001 = vpop.f32.mrb[0].mxu0
  %13002 = vmatprep.mubr.bf16.mxu0 0
  %13003 = vmatmul.mubr.bf16.gmra.mrb[0].mxu0 %v12867
  %v13004 = vpop.f32.mrb[0].mxu0
  %v13005 = vadd.f32 0.0, %v13004
  %v13006 = vpop.f32.mrb[0].mxu0
  %v13007 = vpop.f32.mrb[0].mxu0
  %v13008 = vadd.f32 0.0, %v13007
  %v13009 = vpop.f32.mrb[0].mxu0
  %13010 = vmatprep.mubr.bf16.mxu0 0
  %13011 = vmatmul.mubr.bf16.gmra.mrb[0].mxu0 %v12870
  %v13012 = vpop.f32.mrb[0].mxu0
  %v13013 = vadd.f32 0.0, %v13012
  %v13014 = vpop.f32.mrb[0].mxu0
  %v13015 = vpop.f32.mrb[0].mxu0
  %v13016 = vadd.f32 0.0, %v13015
  %v13017 = vpop.f32.mrb[0].mxu0
  %13018 = vmatprep.mubr.bf16.mxu0 0
  %13019 = vmatmul.mubr.bf16.gmra.mrb[0].mxu0 %v12873
  %v13020 = vpop.f32.mrb[0].mxu0
  %v13021 = vadd.f32 0.0, %v13020
  %v13022 = vpop.f32.mrb[0].mxu0
  %v13023 = vpop.f32.mrb[0].mxu0
  %v13024 = vadd.f32 0.0, %v13023
  %v13025 = vpop.f32.mrb[0].mxu0
  %13026 = vmatprep.mubr.bf16.mxu0 0
  %13027 = vmatmul.mubr.bf16.gmra.mrb[0].mxu0 %v12876
  %v13028 = vpop.f32.mrb[0].mxu0
  %v13029 = vadd.f32 0.0, %v13028
  %v13030 = vpop.f32.mrb[0].mxu0
  %v13031 = vpop.f32.mrb[0].mxu0
  %v13032 = vadd.f32 0.0, %v13031
  %v13033 = vpop.f32.mrb[0].mxu0
  %13034 = vmatprep.mubr.bf16.mxu0 0
  %13035 = vmatmul.mubr.bf16.gmra.mrb[0].mxu0 %v12879
  %v13036 = vpop.f32.mrb[0].mxu0
  %v13037 = vadd.f32 0.0, %v13036
  %v13038 = vpop.f32.mrb[0].mxu0
  %v13039 = vpop.f32.mrb[0].mxu0
  %v13040 = vadd.f32 0.0, %v13039
  %v13041 = vpop.f32.mrb[0].mxu0
  %13042 = vmatprep.mubr.bf16.mxu0 0
  %13043 = vmatmul.mubr.bf16.gmra.mrb[0].mxu0 %v12882
  %v13044 = vpop.f32.mrb[0].mxu0
  %v13045 = vadd.f32 0.0, %v13044
  %v13046 = vpop.f32.mrb[0].mxu0
  %v13047 = vpop.f32.mrb[0].mxu0
  %v13048 = vadd.f32 0.0, %v13047
  %v13049 = vpop.f32.mrb[0].mxu0
  %13050 = vmatprep.mubr.bf16.mxu0 0
  %13051 = vmatmul.mubr.bf16.gmra.mrb[0].mxu0 %v12885
  %v13052 = vpop.f32.mrb[0].mxu0
  %v13053 = vadd.f32 0.0, %v13052
  %v13054 = vpop.f32.mrb[0].mxu0
  %v13055 = vpop.f32.mrb[0].mxu0
  %v13056 = vadd.f32 0.0, %v13055
  %v13057 = vpop.f32.mrb[0].mxu0
  %13058 = vmatprep.mubr.bf16.mxu0 0
  %13059 = vmatmul.mubr.bf16.gmra.mrb[0].mxu0 %v12888
  %v13060 = vpop.f32.mrb[0].mxu0
  %v13061 = vadd.f32 0.0, %v13060
  %v13062 = vpop.f32.mrb[0].mxu0
  %v13063 = vpop.f32.mrb[0].mxu0
  %v13064 = vadd.f32 0.0, %v13063
  %v13065 = vpop.f32.mrb[0].mxu0
  %13066 = vmatprep.mubr.bf16.mxu0 0
  %13067 = vmatmul.mubr.bf16.gmra.mrb[0].mxu0 %v12891
  %v13068 = vpop.f32.mrb[0].mxu0
  %v13069 = vadd.f32 0.0, %v13068
  %v13070 = vpop.f32.mrb[0].mxu0
  %v13071 = vpop.f32.mrb[0].mxu0
  %v13072 = vadd.f32 0.0, %v13071
  %v13073 = vpop.f32.mrb[0].mxu0
  %13074 = vmatprep.mubr.bf16.mxu0 0
  %13075 = vmatmul.mubr.bf16.gmra.mrb[0].mxu0 %v12894
  %v13076 = vpop.f32.mrb[0].mxu0
  %v13077 = vadd.f32 0.0, %v13076
  %v13078 = vpop.f32.mrb[0].mxu0
  %v13079 = vpop.f32.mrb[0].mxu0
  %v13080 = vadd.f32 0.0, %v13079
  %v13081 = vpop.f32.mrb[0].mxu0
  %13082 = vmatprep.mubr.bf16.mxu0 0
  %13083 = vmatmul.mubr.bf16.gmra.mrb[0].mxu0 %v12897
  %v13084 = vpop.f32.mrb[0].mxu0
  %v13085 = vadd.f32 0.0, %v13084
  %v13086 = vpop.f32.mrb[0].mxu0
  %v13087 = vpop.f32.mrb[0].mxu0
  %v13088 = vadd.f32 0.0, %v13087
  %v13089 = vpop.f32.mrb[0].mxu0
  %13090 = vmatprep.mubr.bf16.mxu0 0
  %13091 = vmatmul.mubr.bf16.gmra.mrb[0].mxu0 %v12900
  %v13092 = vpop.f32.mrb[0].mxu0
  %v13093 = vadd.f32 0.0, %v13092
  %v13094 = vpop.f32.mrb[0].mxu0
  %v13095 = vpop.f32.mrb[0].mxu0
  %v13096 = vadd.f32 0.0, %v13095
  %v13097 = vpop.f32.mrb[0].mxu0
  %13098 = vmatprep.mubr.bf16.mxu0 0
  %13099 = vmatmul.mubr.bf16.gmra.mrb[0].mxu0 %v12903
  %v13100 = vpop.f32.mrb[0].mxu0
  %v13101 = vadd.f32 0.0, %v13100
  %v13102 = vpop.f32.mrb[0].mxu0
  %v13103 = vpop.f32.mrb[0].mxu0
  %v13104 = vadd.f32 0.0, %v13103
  %v13105 = vpop.f32.mrb[0].mxu0
  %13106 = vmatprep.mubr.bf16.mxu0 0
  %13107 = vmatmul.mubr.bf16.gmra.mrb[0].mxu0 %v12906
  %v13108 = vpop.f32.mrb[0].mxu0
  %v13109 = vadd.f32 0.0, %v13108
  %v13110 = vpop.f32.mrb[0].mxu0
  %v13111 = vpop.f32.mrb[0].mxu0
  %v13112 = vadd.f32 0.0, %v13111
  %v13113 = vpop.f32.mrb[0].mxu0
  %13114 = vmatprep.mubr.bf16.mxu0 0
  %13115 = vmatmul.mubr.bf16.gmra.mrb[0].mxu0 %v12909
  %v13116 = vpop.f32.mrb[0].mxu0
  %v13117 = vadd.f32 0.0, %v13116
  %v13118 = vpop.f32.mrb[0].mxu0
  %v13119 = vpop.f32.mrb[0].mxu0
  %v13120 = vadd.f32 0.0, %v13119
  %v13121 = vpop.f32.mrb[0].mxu0
  %13122 = vmatprep.mubr.bf16.mxu0 0
  %13123 = vmatmul.mubr.bf16.gmra.mrb[0].mxu0 %v12912
  %v13124 = vpop.f32.mrb[0].mxu0
  %v13125 = vadd.f32 0.0, %v13124
  %v13126 = vpop.f32.mrb[0].mxu0
  %v13127 = vpop.f32.mrb[0].mxu0
  %v13128 = vadd.f32 0.0, %v13127
  %v13129 = vpop.f32.mrb[0].mxu0
  %13130 = vmatprep.mubr.bf16.mxu0 0
  %13131 = vmatmul.mubr.bf16.gmra.mrb[0].mxu0 %v12915
  %v13132 = vpop.f32.mrb[0].mxu0
  %v13133 = vadd.f32 0.0, %v13132
  %v13134 = vpop.f32.mrb[0].mxu0
  %v13135 = vpop.f32.mrb[0].mxu0
  %v13136 = vadd.f32 0.0, %v13135
  %v13137 = vpop.f32.mrb[0].mxu0
  %13138 = vmatprep.mubr.bf16.mxu0 0
  %13139 = vmatmul.mubr.bf16.gmra.mrb[0].mxu0 %v12918
  %v13140 = vpop.f32.mrb[0].mxu0
  %v13141 = vadd.f32 0.0, %v13140
  %v13142 = vpop.f32.mrb[0].mxu0
  %v13143 = vpop.f32.mrb[0].mxu0
  %v13144 = vadd.f32 0.0, %v13143
  %v13145 = vpop.f32.mrb[0].mxu0
  %13146 = vmatprep.mubr.bf16.mxu0 0
  %13147 = vmatmul.mubr.bf16.gmra.mrb[0].mxu0 %v12921
  %v13148 = vpop.f32.mrb[0].mxu0
  %v13149 = vadd.f32 0.0, %v13148
  %v13150 = vpop.f32.mrb[0].mxu0
  %v13151 = vpop.f32.mrb[0].mxu0
  %v13152 = vadd.f32 0.0, %v13151
  %v13153 = vpop.f32.mrb[0].mxu0
  %13154 = vmatprep.mubr.bf16.mxu0 0
  %13155 = vmatmul.mubr.bf16.gmra.mrb[0].mxu0 %v12924
  %v13156 = vpop.f32.mrb[0].mxu0
  %v13157 = vadd.f32 0.0, %v13156
  %v13158 = vpop.f32.mrb[0].mxu0
  %v13159 = vpop.f32.mrb[0].mxu0
  %v13160 = vadd.f32 0.0, %v13159
  %v13161 = vpop.f32.mrb[0].mxu0
  %13162 = vmatprep.mubr.bf16.mxu0 0
  %13163 = vmatmul.mubr.bf16.gmra.mrb[0].mxu0 %v12927
  %v13164 = vpop.f32.mrb[0].mxu0
  %v13165 = vadd.f32 0.0, %v13164
  %v13166 = vpop.f32.mrb[0].mxu0
  %v13167 = vpop.f32.mrb[0].mxu0
  %v13168 = vadd.f32 0.0, %v13167
  %v13169 = vpop.f32.mrb[0].mxu0
  %13170 = vmatprep.mubr.bf16.mxu0 0
  %13171 = vmatmul.mubr.bf16.gmra.mrb[0].mxu0 %v12930
  %v13172 = vpop.f32.mrb[0].mxu0
  %v13173 = vadd.f32 0.0, %v13172
  %v13174 = vpop.f32.mrb[0].mxu0
  %v13175 = vpop.f32.mrb[0].mxu0
  %v13176 = vadd.f32 0.0, %v13175
  %v13177 = vpop.f32.mrb[0].mxu0
  %13178 = vmatprep.mubr.bf16.mxu0 0
  %13179 = vmatmul.mubr.bf16.gmra.mrb[0].mxu0 %v12933
  %v13180 = vpop.f32.mrb[0].mxu0
  %v13181 = vadd.f32 0.0, %v13180
  %v13182 = vpop.f32.mrb[0].mxu0
  %v13183 = vpop.f32.mrb[0].mxu0
  %v13184 = vadd.f32 0.0, %v13183
  %v13185 = vpop.f32.mrb[0].mxu0
  %13186 = vmatprep.mubr.bf16.mxu0 0
  %13187 = vmatmul.mubr.bf16.gmra.mrb[0].mxu0 %v12936
  %v13188 = vpop.f32.mrb[0].mxu0
  %v13189 = vadd.f32 0.0, %v13188
  %v13190 = vpop.f32.mrb[0].mxu0
  %v13191 = vpop.f32.mrb[0].mxu0
  %v13192 = vadd.f32 0.0, %v13191
  %v13193 = vpop.f32.mrb[0].mxu0
  %13194 = vmatprep.mubr.bf16.mxu0 0
  %13195 = vmatmul.mubr.bf16.gmra.mrb[0].mxu0 %v12939
  %v13196 = vpop.f32.mrb[0].mxu0
  %v13197 = vadd.f32 0.0, %v13196
  %v13198 = vpop.f32.mrb[0].mxu0
  %v13199 = vpop.f32.mrb[0].mxu0
  %v13200 = vadd.f32 0.0, %v13199
  %v13201 = vpop.f32.mrb[0].mxu0
  %13202 = vmatprep.mubr.bf16.mxu0 0
  %13203 = vmatmul.mubr.bf16.gmra.mrb[0].mxu0 %v12942
  %v13204 = vpop.f32.mrb[0].mxu0
  %v13205 = vadd.f32 0.0, %v13204
  %v13206 = vpop.f32.mrb[0].mxu0
  %v13207 = vpop.f32.mrb[0].mxu0
  %v13208 = vadd.f32 0.0, %v13207
  %v13209 = vpop.f32.mrb[0].mxu0
  %13210 = vmatprep.mubr.bf16.mxu0 0
  %13211 = vmatmul.mubr.bf16.gmra.mrb[0].mxu0 %v12945
  %v13212 = vpop.f32.mrb[0].mxu0
  %v13213 = vadd.f32 0.0, %v13212
  %v13214 = vpop.f32.mrb[0].mxu0
  %v13215 = vpop.f32.mrb[0].mxu0
  %v13216 = vadd.f32 0.0, %v13215
  %v13217 = vpop.f32.mrb[0].mxu0
  %13218 = vmatprep.mubr.bf16.mxu0 0
  %13219 = vmatmul.mubr.bf16.gmra.mrb[0].mxu0 %v12948
  %v13220 = vpop.f32.mrb[0].mxu0
  %v13221 = vadd.f32 0.0, %v13220
  %v13222 = vpop.f32.mrb[0].mxu0
  %v13223 = vpop.f32.mrb[0].mxu0
  %v13224 = vadd.f32 0.0, %v13223
  %v13225 = vpop.f32.mrb[0].mxu0
  %13226 = vmatprep.mubr.bf16.mxu0 0
  %13227 = vmatmul.mubr.bf16.gmra.mrb[0].mxu0 %v12951
  %v13228 = vpop.f32.mrb[0].mxu0
  %v13229 = vadd.f32 0.0, %v13228
  %v13230 = vpop.f32.mrb[0].mxu0
  %v13231 = vpop.f32.mrb[0].mxu0
  %v13232 = vadd.f32 0.0, %v13231
  %v13233 = vpop.f32.mrb[0].mxu0
  %13234 = vmatprep.mubr.bf16.mxu0 0
  %13235 = vmatmul.mubr.bf16.gmra.mrb[0].mxu0 %v12954
  %v13236 = vpop.f32.mrb[0].mxu0
  %v13237 = vadd.f32 0.0, %v13236
  %v13238 = vpop.f32.mrb[0].mxu0
  %v13239 = vpop.f32.mrb[0].mxu0
  %v13240 = vadd.f32 0.0, %v13239
  %v13241 = vpop.f32.mrb[0].mxu0
  %13242 = vmatprep.mubr.bf16.mxu0 0
  %13243 = vmatmul.mubr.bf16.gmra.mrb[0].mxu0 %v12957
  %v13244 = vpop.f32.mrb[0].mxu0
  %v13245 = vadd.f32 0.0, %v13244
  %v13246 = vpop.f32.mrb[0].mxu0
  %v13247 = vpop.f32.mrb[0].mxu0
  %v13248 = vadd.f32 0.0, %v13247
  %v13249 = vpop.f32.mrb[0].mxu0
  %13250 = vdwg.mxu0
  %v13251 = vadd.f32 %v12637, %v12997
  %v13252 = vadd.f32 %v12638, %v13000
  %v13253 = vadd.f32 %v12639, %v13005
  %v13254 = vadd.f32 %v12640, %v13008
  %v13255 = vadd.f32 %v12641, %v13013
  %v13256 = vadd.f32 %v12642, %v13016
  %v13257 = vadd.f32 %v12643, %v13021
  %v13258 = vadd.f32 %v12644, %v13024
  %v13259 = vadd.f32 %v12645, %v13029
  %v13260 = vadd.f32 %v12646, %v13032
  %v13261 = vadd.f32 %v12647, %v13037
  %v13262 = vadd.f32 %v12648, %v13040
  %v13263 = vadd.f32 %v12649, %v13045
  %v13264 = vadd.f32 %v12650, %v13048
  %v13265 = vadd.f32 %v12651, %v13053
  %v13266 = vadd.f32 %v12652, %v13056
  %v13267 = vadd.f32 %v12653, %v13061
  %v13268 = vadd.f32 %v12654, %v13064
  %v13269 = vadd.f32 %v12655, %v13069
  %v13270 = vadd.f32 %v12656, %v13072
  %v13271 = vadd.f32 %v12657, %v13077
  %v13272 = vadd.f32 %v12658, %v13080
  %v13273 = vadd.f32 %v12659, %v13085
  %v13274 = vadd.f32 %v12660, %v13088
  %v13275 = vadd.f32 %v12661, %v13093
  %v13276 = vadd.f32 %v12662, %v13096
  %v13277 = vadd.f32 %v12663, %v13101
  %v13278 = vadd.f32 %v12664, %v13104
  %v13279 = vadd.f32 %v12665, %v13109
  %v13280 = vadd.f32 %v12666, %v13112
  %v13281 = vadd.f32 %v12667, %v13117
  %v13282 = vadd.f32 %v12668, %v13120
  %v13283 = vadd.f32 %v12669, %v13125
  %v13284 = vadd.f32 %v12670, %v13128
  %v13285 = vadd.f32 %v12671, %v13133
  %v13286 = vadd.f32 %v12672, %v13136
  %v13287 = vadd.f32 %v12673, %v13141
  %v13288 = vadd.f32 %v12674, %v13144
  %v13289 = vadd.f32 %v12675, %v13149
  %v13290 = vadd.f32 %v12676, %v13152
  %v13291 = vadd.f32 %v12677, %v13157
  %v13292 = vadd.f32 %v12678, %v13160
  %v13293 = vadd.f32 %v12679, %v13165
  %v13294 = vadd.f32 %v12680, %v13168
  %v13295 = vadd.f32 %v12681, %v13173
  %v13296 = vadd.f32 %v12682, %v13176
  %v13297 = vadd.f32 %v12683, %v13181
  %v13298 = vadd.f32 %v12684, %v13184
  %v13299 = vadd.f32 %v12685, %v13189
  %v13300 = vadd.f32 %v12686, %v13192
  %v13301 = vadd.f32 %v12687, %v13197
  %v13302 = vadd.f32 %v12688, %v13200
  %v13303 = vadd.f32 %v12689, %v13205
  %v13304 = vadd.f32 %v12690, %v13208
  %v13305 = vadd.f32 %v12691, %v13213
  %v13306 = vadd.f32 %v12692, %v13216
  %v13307 = vadd.f32 %v12693, %v13221
  %v13308 = vadd.f32 %v12694, %v13224
  %v13309 = vadd.f32 %v12695, %v13229
  %v13310 = vadd.f32 %v12696, %v13232
  %v13311 = vadd.f32 %v12697, %v13237
  %v13312 = vadd.f32 %v12698, %v13240
  %v13313 = vadd.f32 %v12699, %v13245
  %v13314 = vadd.f32 %v12700, %v13248
  %v13315 = vsel %vm6561, %v13251, 0.0
  %v13316 = vsel %vm6561, %v13252, 0.0
  %v13317 = vadd.f32 %v13315, %v13316
  %v13318 = vsel %vm6561, %v13253, 0.0
  %v13319 = vadd.f32 %v13317, %v13318
  %v13320 = vsel %vm6561, %v13254, 0.0
  %v13321 = vadd.f32 %v13319, %v13320
  %v13322 = vsel %vm6561, %v13255, 0.0
  %v13323 = vadd.f32 %v13321, %v13322
  %v13324 = vsel %vm6561, %v13256, 0.0
  %v13325 = vadd.f32 %v13323, %v13324
  %v13326 = vsel %vm6561, %v13257, 0.0
  %v13327 = vadd.f32 %v13325, %v13326
  %v13328 = vsel %vm6561, %v13258, 0.0
  %v13329 = vadd.f32 %v13327, %v13328
  %v13330 = vsel %vm6561, %v13259, 0.0
  %v13331 = vadd.f32 %v13329, %v13330
  %v13332 = vsel %vm6561, %v13260, 0.0
  %v13333 = vadd.f32 %v13331, %v13332
  %v13334 = vsel %vm6561, %v13261, 0.0
  %v13335 = vadd.f32 %v13333, %v13334
  %v13336 = vsel %vm6561, %v13262, 0.0
  %v13337 = vadd.f32 %v13335, %v13336
  %v13338 = vsel %vm6561, %v13263, 0.0
  %v13339 = vadd.f32 %v13337, %v13338
  %v13340 = vsel %vm6561, %v13264, 0.0
  %v13341 = vadd.f32 %v13339, %v13340
  %v13342 = vsel %vm6561, %v13265, 0.0
  %v13343 = vadd.f32 %v13341, %v13342
  %v13344 = vsel %vm6561, %v13266, 0.0
  %v13345 = vadd.f32 %v13343, %v13344
  %v13346 = vsel %vm6561, %v13267, 0.0
  %v13347 = vadd.f32 %v13345, %v13346
  %v13348 = vsel %vm6561, %v13268, 0.0
  %v13349 = vadd.f32 %v13347, %v13348
  %v13350 = vsel %vm6561, %v13269, 0.0
  %v13351 = vadd.f32 %v13349, %v13350
  %v13352 = vsel %vm6561, %v13270, 0.0
  %v13353 = vadd.f32 %v13351, %v13352
  %v13354 = vsel %vm6561, %v13271, 0.0
  %v13355 = vadd.f32 %v13353, %v13354
  %v13356 = vsel %vm6561, %v13272, 0.0
  %v13357 = vadd.f32 %v13355, %v13356
  %v13358 = vsel %vm6561, %v13273, 0.0
  %v13359 = vadd.f32 %v13357, %v13358
  %v13360 = vsel %vm6561, %v13274, 0.0
  %v13361 = vadd.f32 %v13359, %v13360
  %v13362 = vsel %vm6561, %v13275, 0.0
  %v13363 = vadd.f32 %v13361, %v13362
  %v13364 = vsel %vm6561, %v13276, 0.0
  %v13365 = vadd.f32 %v13363, %v13364
  %v13366 = vsel %vm6561, %v13277, 0.0
  %v13367 = vadd.f32 %v13365, %v13366
  %v13368 = vsel %vm6561, %v13278, 0.0
  %v13369 = vadd.f32 %v13367, %v13368
  %v13370 = vsel %vm6561, %v13279, 0.0
  %v13371 = vadd.f32 %v13369, %v13370
  %v13372 = vsel %vm6561, %v13280, 0.0
  %v13373 = vadd.f32 %v13371, %v13372
  %v13374 = vsel %vm6561, %v13281, 0.0
  %v13375 = vadd.f32 %v13373, %v13374
  %v13376 = vsel %vm6561, %v13282, 0.0
  %v13377 = vadd.f32 %v13375, %v13376
  %v13378 = vsel %vm6561, %v13283, 0.0
  %v13379 = vadd.f32 %v13377, %v13378
  %v13380 = vsel %vm6561, %v13284, 0.0
  %v13381 = vadd.f32 %v13379, %v13380
  %v13382 = vsel %vm6561, %v13285, 0.0
  %v13383 = vadd.f32 %v13381, %v13382
  %v13384 = vsel %vm6561, %v13286, 0.0
  %v13385 = vadd.f32 %v13383, %v13384
  %v13386 = vsel %vm6561, %v13287, 0.0
  %v13387 = vadd.f32 %v13385, %v13386
  %v13388 = vsel %vm6561, %v13288, 0.0
  %v13389 = vadd.f32 %v13387, %v13388
  %v13390 = vsel %vm6561, %v13289, 0.0
  %v13391 = vadd.f32 %v13389, %v13390
  %v13392 = vsel %vm6561, %v13290, 0.0
  %v13393 = vadd.f32 %v13391, %v13392
  %v13394 = vsel %vm6561, %v13291, 0.0
  %v13395 = vadd.f32 %v13393, %v13394
  %v13396 = vsel %vm6561, %v13292, 0.0
  %v13397 = vadd.f32 %v13395, %v13396
  %v13398 = vsel %vm6561, %v13293, 0.0
  %v13399 = vadd.f32 %v13397, %v13398
  %v13400 = vsel %vm6561, %v13294, 0.0
  %v13401 = vadd.f32 %v13399, %v13400
  %v13402 = vsel %vm6561, %v13295, 0.0
  %v13403 = vadd.f32 %v13401, %v13402
  %v13404 = vsel %vm6561, %v13296, 0.0
  %v13405 = vadd.f32 %v13403, %v13404
  %v13406 = vsel %vm6561, %v13297, 0.0
  %v13407 = vadd.f32 %v13405, %v13406
  %v13408 = vsel %vm6561, %v13298, 0.0
  %v13409 = vadd.f32 %v13407, %v13408
  %v13410 = vsel %vm6561, %v13299, 0.0
  %v13411 = vadd.f32 %v13409, %v13410
  %v13412 = vsel %vm6561, %v13300, 0.0
  %v13413 = vadd.f32 %v13411, %v13412
  %v13414 = vsel %vm6561, %v13301, 0.0
  %v13415 = vadd.f32 %v13413, %v13414
  %v13416 = vsel %vm6561, %v13302, 0.0
  %v13417 = vadd.f32 %v13415, %v13416
  %v13418 = vsel %vm6561, %v13303, 0.0
  %v13419 = vadd.f32 %v13417, %v13418
  %v13420 = vsel %vm6561, %v13304, 0.0
  %v13421 = vadd.f32 %v13419, %v13420
  %v13422 = vsel %vm6561, %v13305, 0.0
  %v13423 = vadd.f32 %v13421, %v13422
  %v13424 = vsel %vm6561, %v13306, 0.0
  %v13425 = vadd.f32 %v13423, %v13424
  %v13426 = vsel %vm6561, %v13307, 0.0
  %v13427 = vadd.f32 %v13425, %v13426
  %v13428 = vsel %vm6561, %v13308, 0.0
  %v13429 = vadd.f32 %v13427, %v13428
  %v13430 = vsel %vm6561, %v13309, 0.0
  %v13431 = vadd.f32 %v13429, %v13430
  %v13432 = vsel %vm6561, %v13310, 0.0
  %v13433 = vadd.f32 %v13431, %v13432
  %v13434 = vsel %vm6561, %v13311, 0.0
  %v13435 = vadd.f32 %v13433, %v13434
  %v13436 = vsel %vm6561, %v13312, 0.0
  %v13437 = vadd.f32 %v13435, %v13436
  %v13438 = vsel %vm6561, %v13313, 0.0
  %v13439 = vadd.f32 %v13437, %v13438
  %v13440 = vsel %vm6561, %v13314, 0.0
  %v13441 = vadd.f32 %v13439, %v13440
  %v13442 = vrot.slane %v13441, 4
  %v13443 = vadd.f32 %v13441, %v13442
  %v13444 = vrot.slane %v13443, 2
  %v13445 = vadd.f32 %v13443, %v13444
  %v13446 = vrot.slane %v13445, 1
  %v13447 = vadd.f32 %v13445, %v13446
  %v13448 = vmul.f32 %v13447, %v6695
  %v13449 = vsub.f32 %v13251, %v13448
  %v13450 = vsub.f32 %v13252, %v13448
  %v13451 = vsub.f32 %v13253, %v13448
  %v13452 = vsub.f32 %v13254, %v13448
  %v13453 = vsub.f32 %v13255, %v13448
  %v13454 = vsub.f32 %v13256, %v13448
  %v13455 = vsub.f32 %v13257, %v13448
  %v13456 = vsub.f32 %v13258, %v13448
  %v13457 = vsub.f32 %v13259, %v13448
  %v13458 = vsub.f32 %v13260, %v13448
  %v13459 = vsub.f32 %v13261, %v13448
  %v13460 = vsub.f32 %v13262, %v13448
  %v13461 = vsub.f32 %v13263, %v13448
  %v13462 = vsub.f32 %v13264, %v13448
  %v13463 = vsub.f32 %v13265, %v13448
  %v13464 = vsub.f32 %v13266, %v13448
  %v13465 = vsub.f32 %v13267, %v13448
  %v13466 = vsub.f32 %v13268, %v13448
  %v13467 = vsub.f32 %v13269, %v13448
  %v13468 = vsub.f32 %v13270, %v13448
  %v13469 = vsub.f32 %v13271, %v13448
  %v13470 = vsub.f32 %v13272, %v13448
  %v13471 = vsub.f32 %v13273, %v13448
  %v13472 = vsub.f32 %v13274, %v13448
  %v13473 = vsub.f32 %v13275, %v13448
  %v13474 = vsub.f32 %v13276, %v13448
  %v13475 = vsub.f32 %v13277, %v13448
  %v13476 = vsub.f32 %v13278, %v13448
  %v13477 = vsub.f32 %v13279, %v13448
  %v13478 = vsub.f32 %v13280, %v13448
  %v13479 = vsub.f32 %v13281, %v13448
  %v13480 = vsub.f32 %v13282, %v13448
  %v13481 = vsub.f32 %v13283, %v13448
  %v13482 = vsub.f32 %v13284, %v13448
  %v13483 = vsub.f32 %v13285, %v13448
  %v13484 = vsub.f32 %v13286, %v13448
  %v13485 = vsub.f32 %v13287, %v13448
  %v13486 = vsub.f32 %v13288, %v13448
  %v13487 = vsub.f32 %v13289, %v13448
  %v13488 = vsub.f32 %v13290, %v13448
  %v13489 = vsub.f32 %v13291, %v13448
  %v13490 = vsub.f32 %v13292, %v13448
  %v13491 = vsub.f32 %v13293, %v13448
  %v13492 = vsub.f32 %v13294, %v13448
  %v13493 = vsub.f32 %v13295, %v13448
  %v13494 = vsub.f32 %v13296, %v13448
  %v13495 = vsub.f32 %v13297, %v13448
  %v13496 = vsub.f32 %v13298, %v13448
  %v13497 = vsub.f32 %v13299, %v13448
  %v13498 = vsub.f32 %v13300, %v13448
  %v13499 = vsub.f32 %v13301, %v13448
  %v13500 = vsub.f32 %v13302, %v13448
  %v13501 = vsub.f32 %v13303, %v13448
  %v13502 = vsub.f32 %v13304, %v13448
  %v13503 = vsub.f32 %v13305, %v13448
  %v13504 = vsub.f32 %v13306, %v13448
  %v13505 = vsub.f32 %v13307, %v13448
  %v13506 = vsub.f32 %v13308, %v13448
  %v13507 = vsub.f32 %v13309, %v13448
  %v13508 = vsub.f32 %v13310, %v13448
  %v13509 = vsub.f32 %v13311, %v13448
  %v13510 = vsub.f32 %v13312, %v13448
  %v13511 = vsub.f32 %v13313, %v13448
  %v13512 = vsub.f32 %v13314, %v13448
  %v13513 = vmul.f32 %v13449, %v13449
  %v13514 = vmul.f32 %v13450, %v13450
  %v13515 = vmul.f32 %v13451, %v13451
  %v13516 = vmul.f32 %v13452, %v13452
  %v13517 = vmul.f32 %v13453, %v13453
  %v13518 = vmul.f32 %v13454, %v13454
  %v13519 = vmul.f32 %v13455, %v13455
  %v13520 = vmul.f32 %v13456, %v13456
  %v13521 = vmul.f32 %v13457, %v13457
  %v13522 = vmul.f32 %v13458, %v13458
  %v13523 = vmul.f32 %v13459, %v13459
  %v13524 = vmul.f32 %v13460, %v13460
  %v13525 = vmul.f32 %v13461, %v13461
  %v13526 = vmul.f32 %v13462, %v13462
  %v13527 = vmul.f32 %v13463, %v13463
  %v13528 = vmul.f32 %v13464, %v13464
  %v13529 = vmul.f32 %v13465, %v13465
  %v13530 = vmul.f32 %v13466, %v13466
  %v13531 = vmul.f32 %v13467, %v13467
  %v13532 = vmul.f32 %v13468, %v13468
  %v13533 = vmul.f32 %v13469, %v13469
  %v13534 = vmul.f32 %v13470, %v13470
  %v13535 = vmul.f32 %v13471, %v13471
  %v13536 = vmul.f32 %v13472, %v13472
  %v13537 = vmul.f32 %v13473, %v13473
  %v13538 = vmul.f32 %v13474, %v13474
  %v13539 = vmul.f32 %v13475, %v13475
  %v13540 = vmul.f32 %v13476, %v13476
  %v13541 = vmul.f32 %v13477, %v13477
  %v13542 = vmul.f32 %v13478, %v13478
  %v13543 = vmul.f32 %v13479, %v13479
  %v13544 = vmul.f32 %v13480, %v13480
  %v13545 = vmul.f32 %v13481, %v13481
  %v13546 = vmul.f32 %v13482, %v13482
  %v13547 = vmul.f32 %v13483, %v13483
  %v13548 = vmul.f32 %v13484, %v13484
  %v13549 = vmul.f32 %v13485, %v13485
  %v13550 = vmul.f32 %v13486, %v13486
  %v13551 = vmul.f32 %v13487, %v13487
  %v13552 = vmul.f32 %v13488, %v13488
  %v13553 = vmul.f32 %v13489, %v13489
  %v13554 = vmul.f32 %v13490, %v13490
  %v13555 = vmul.f32 %v13491, %v13491
  %v13556 = vmul.f32 %v13492, %v13492
  %v13557 = vmul.f32 %v13493, %v13493
  %v13558 = vmul.f32 %v13494, %v13494
  %v13559 = vmul.f32 %v13495, %v13495
  %v13560 = vmul.f32 %v13496, %v13496
  %v13561 = vmul.f32 %v13497, %v13497
  %v13562 = vmul.f32 %v13498, %v13498
  %v13563 = vmul.f32 %v13499, %v13499
  %v13564 = vmul.f32 %v13500, %v13500
  %v13565 = vmul.f32 %v13501, %v13501
  %v13566 = vmul.f32 %v13502, %v13502
  %v13567 = vmul.f32 %v13503, %v13503
  %v13568 = vmul.f32 %v13504, %v13504
  %v13569 = vmul.f32 %v13505, %v13505
  %v13570 = vmul.f32 %v13506, %v13506
  %v13571 = vmul.f32 %v13507, %v13507
  %v13572 = vmul.f32 %v13508, %v13508
  %v13573 = vmul.f32 %v13509, %v13509
  %v13574 = vmul.f32 %v13510, %v13510
  %v13575 = vmul.f32 %v13511, %v13511
  %v13576 = vmul.f32 %v13512, %v13512
  %v13577 = vsel %vm6561, %v13513, 0.0
  %v13578 = vsel %vm6561, %v13514, 0.0
  %v13579 = vadd.f32 %v13577, %v13578
  %v13580 = vsel %vm6561, %v13515, 0.0
  %v13581 = vadd.f32 %v13579, %v13580
  %v13582 = vsel %vm6561, %v13516, 0.0
  %v13583 = vadd.f32 %v13581, %v13582
  %v13584 = vsel %vm6561, %v13517, 0.0
  %v13585 = vadd.f32 %v13583, %v13584
  %v13586 = vsel %vm6561, %v13518, 0.0
  %v13587 = vadd.f32 %v13585, %v13586
  %v13588 = vsel %vm6561, %v13519, 0.0
  %v13589 = vadd.f32 %v13587, %v13588
  %v13590 = vsel %vm6561, %v13520, 0.0
  %v13591 = vadd.f32 %v13589, %v13590
  %v13592 = vsel %vm6561, %v13521, 0.0
  %v13593 = vadd.f32 %v13591, %v13592
  %v13594 = vsel %vm6561, %v13522, 0.0
  %v13595 = vadd.f32 %v13593, %v13594
  %v13596 = vsel %vm6561, %v13523, 0.0
  %v13597 = vadd.f32 %v13595, %v13596
  %v13598 = vsel %vm6561, %v13524, 0.0
  %v13599 = vadd.f32 %v13597, %v13598
  %v13600 = vsel %vm6561, %v13525, 0.0
  %v13601 = vadd.f32 %v13599, %v13600
  %v13602 = vsel %vm6561, %v13526, 0.0
  %v13603 = vadd.f32 %v13601, %v13602
  %v13604 = vsel %vm6561, %v13527, 0.0
  %v13605 = vadd.f32 %v13603, %v13604
  %v13606 = vsel %vm6561, %v13528, 0.0
  %v13607 = vadd.f32 %v13605, %v13606
  %v13608 = vsel %vm6561, %v13529, 0.0
  %v13609 = vadd.f32 %v13607, %v13608
  %v13610 = vsel %vm6561, %v13530, 0.0
  %v13611 = vadd.f32 %v13609, %v13610
  %v13612 = vsel %vm6561, %v13531, 0.0
  %v13613 = vadd.f32 %v13611, %v13612
  %v13614 = vsel %vm6561, %v13532, 0.0
  %v13615 = vadd.f32 %v13613, %v13614
  %v13616 = vsel %vm6561, %v13533, 0.0
  %v13617 = vadd.f32 %v13615, %v13616
  %v13618 = vsel %vm6561, %v13534, 0.0
  %v13619 = vadd.f32 %v13617, %v13618
  %v13620 = vsel %vm6561, %v13535, 0.0
  %v13621 = vadd.f32 %v13619, %v13620
  %v13622 = vsel %vm6561, %v13536, 0.0
  %v13623 = vadd.f32 %v13621, %v13622
  %v13624 = vsel %vm6561, %v13537, 0.0
  %v13625 = vadd.f32 %v13623, %v13624
  %v13626 = vsel %vm6561, %v13538, 0.0
  %v13627 = vadd.f32 %v13625, %v13626
  %v13628 = vsel %vm6561, %v13539, 0.0
  %v13629 = vadd.f32 %v13627, %v13628
  %v13630 = vsel %vm6561, %v13540, 0.0
  %v13631 = vadd.f32 %v13629, %v13630
  %v13632 = vsel %vm6561, %v13541, 0.0
  %v13633 = vadd.f32 %v13631, %v13632
  %v13634 = vsel %vm6561, %v13542, 0.0
  %v13635 = vadd.f32 %v13633, %v13634
  %v13636 = vsel %vm6561, %v13543, 0.0
  %v13637 = vadd.f32 %v13635, %v13636
  %v13638 = vsel %vm6561, %v13544, 0.0
  %v13639 = vadd.f32 %v13637, %v13638
  %v13640 = vsel %vm6561, %v13545, 0.0
  %v13641 = vadd.f32 %v13639, %v13640
  %v13642 = vsel %vm6561, %v13546, 0.0
  %v13643 = vadd.f32 %v13641, %v13642
  %v13644 = vsel %vm6561, %v13547, 0.0
  %v13645 = vadd.f32 %v13643, %v13644
  %v13646 = vsel %vm6561, %v13548, 0.0
  %v13647 = vadd.f32 %v13645, %v13646
  %v13648 = vsel %vm6561, %v13549, 0.0
  %v13649 = vadd.f32 %v13647, %v13648
  %v13650 = vsel %vm6561, %v13550, 0.0
  %v13651 = vadd.f32 %v13649, %v13650
  %v13652 = vsel %vm6561, %v13551, 0.0
  %v13653 = vadd.f32 %v13651, %v13652
  %v13654 = vsel %vm6561, %v13552, 0.0
  %v13655 = vadd.f32 %v13653, %v13654
  %v13656 = vsel %vm6561, %v13553, 0.0
  %v13657 = vadd.f32 %v13655, %v13656
  %v13658 = vsel %vm6561, %v13554, 0.0
  %v13659 = vadd.f32 %v13657, %v13658
  %v13660 = vsel %vm6561, %v13555, 0.0
  %v13661 = vadd.f32 %v13659, %v13660
  %v13662 = vsel %vm6561, %v13556, 0.0
  %v13663 = vadd.f32 %v13661, %v13662
  %v13664 = vsel %vm6561, %v13557, 0.0
  %v13665 = vadd.f32 %v13663, %v13664
  %v13666 = vsel %vm6561, %v13558, 0.0
  %v13667 = vadd.f32 %v13665, %v13666
  %v13668 = vsel %vm6561, %v13559, 0.0
  %v13669 = vadd.f32 %v13667, %v13668
  %v13670 = vsel %vm6561, %v13560, 0.0
  %v13671 = vadd.f32 %v13669, %v13670
  %v13672 = vsel %vm6561, %v13561, 0.0
  %v13673 = vadd.f32 %v13671, %v13672
  %v13674 = vsel %vm6561, %v13562, 0.0
  %v13675 = vadd.f32 %v13673, %v13674
  %v13676 = vsel %vm6561, %v13563, 0.0
  %v13677 = vadd.f32 %v13675, %v13676
  %v13678 = vsel %vm6561, %v13564, 0.0
  %v13679 = vadd.f32 %v13677, %v13678
  %v13680 = vsel %vm6561, %v13565, 0.0
  %v13681 = vadd.f32 %v13679, %v13680
  %v13682 = vsel %vm6561, %v13566, 0.0
  %v13683 = vadd.f32 %v13681, %v13682
  %v13684 = vsel %vm6561, %v13567, 0.0
  %v13685 = vadd.f32 %v13683, %v13684
  %v13686 = vsel %vm6561, %v13568, 0.0
  %v13687 = vadd.f32 %v13685, %v13686
  %v13688 = vsel %vm6561, %v13569, 0.0
  %v13689 = vadd.f32 %v13687, %v13688
  %v13690 = vsel %vm6561, %v13570, 0.0
  %v13691 = vadd.f32 %v13689, %v13690
  %v13692 = vsel %vm6561, %v13571, 0.0
  %v13693 = vadd.f32 %v13691, %v13692
  %v13694 = vsel %vm6561, %v13572, 0.0
  %v13695 = vadd.f32 %v13693, %v13694
  %v13696 = vsel %vm6561, %v13573, 0.0
  %v13697 = vadd.f32 %v13695, %v13696
  %v13698 = vsel %vm6561, %v13574, 0.0
  %v13699 = vadd.f32 %v13697, %v13698
  %v13700 = vsel %vm6561, %v13575, 0.0
  %v13701 = vadd.f32 %v13699, %v13700
  %v13702 = vsel %vm6561, %v13576, 0.0
  %v13703 = vadd.f32 %v13701, %v13702
  %v13704 = vrot.slane %v13703, 4
  %v13705 = vadd.f32 %v13703, %v13704
  %v13706 = vrot.slane %v13705, 2
  %v13707 = vadd.f32 %v13705, %v13706
  %v13708 = vrot.slane %v13707, 1
  %v13709 = vadd.f32 %v13707, %v13708
  %v13710 = vmul.f32 %v13709, %v6695
  %v13711 = vadd.f32 %v13710, 1e-05
  %v13712 = vrsqrt.pop %v13711
  %v13713 = vld [vmem:[%s5] sm:$0x1]
  %v13714 = vmul.f32 %v13712, %v13713
  %v13715 = vlaneseq
  %v13716 = vshrl.u32 %v13715, 7
  %v13717 = vsub.s32 0, %v13716
  %v13718 = vrot.slane %v13714, %v13717
  %v13719 = vmul.f32 %v13449, %v13718
  %v13720 = vmul.f32 %v13450, %v13718
  %v13721 = vmul.f32 %v13451, %v13718
  %v13722 = vmul.f32 %v13452, %v13718
  %v13723 = vmul.f32 %v13453, %v13718
  %v13724 = vmul.f32 %v13454, %v13718
  %v13725 = vmul.f32 %v13455, %v13718
  %v13726 = vmul.f32 %v13456, %v13718
  %v13727 = vmul.f32 %v13457, %v13718
  %v13728 = vmul.f32 %v13458, %v13718
  %v13729 = vmul.f32 %v13459, %v13718
  %v13730 = vmul.f32 %v13460, %v13718
  %v13731 = vmul.f32 %v13461, %v13718
  %v13732 = vmul.f32 %v13462, %v13718
  %v13733 = vmul.f32 %v13463, %v13718
  %v13734 = vmul.f32 %v13464, %v13718
  %v13735 = vmul.f32 %v13465, %v13718
  %v13736 = vmul.f32 %v13466, %v13718
  %v13737 = vmul.f32 %v13467, %v13718
  %v13738 = vmul.f32 %v13468, %v13718
  %v13739 = vmul.f32 %v13469, %v13718
  %v13740 = vmul.f32 %v13470, %v13718
  %v13741 = vmul.f32 %v13471, %v13718
  %v13742 = vmul.f32 %v13472, %v13718
  %v13743 = vmul.f32 %v13473, %v13718
  %v13744 = vmul.f32 %v13474, %v13718
  %v13745 = vmul.f32 %v13475, %v13718
  %v13746 = vmul.f32 %v13476, %v13718
  %v13747 = vmul.f32 %v13477, %v13718
  %v13748 = vmul.f32 %v13478, %v13718
  %v13749 = vmul.f32 %v13479, %v13718
  %v13750 = vmul.f32 %v13480, %v13718
  %v13751 = vmul.f32 %v13481, %v13718
  %v13752 = vmul.f32 %v13482, %v13718
  %v13753 = vmul.f32 %v13483, %v13718
  %v13754 = vmul.f32 %v13484, %v13718
  %v13755 = vmul.f32 %v13485, %v13718
  %v13756 = vmul.f32 %v13486, %v13718
  %v13757 = vmul.f32 %v13487, %v13718
  %v13758 = vmul.f32 %v13488, %v13718
  %v13759 = vmul.f32 %v13489, %v13718
  %v13760 = vmul.f32 %v13490, %v13718
  %v13761 = vmul.f32 %v13491, %v13718
  %v13762 = vmul.f32 %v13492, %v13718
  %v13763 = vmul.f32 %v13493, %v13718
  %v13764 = vmul.f32 %v13494, %v13718
  %v13765 = vmul.f32 %v13495, %v13718
  %v13766 = vmul.f32 %v13496, %v13718
  %v13767 = vmul.f32 %v13497, %v13718
  %v13768 = vmul.f32 %v13498, %v13718
  %v13769 = vmul.f32 %v13499, %v13718
  %v13770 = vmul.f32 %v13500, %v13718
  %v13771 = vmul.f32 %v13501, %v13718
  %v13772 = vmul.f32 %v13502, %v13718
  %v13773 = vmul.f32 %v13503, %v13718
  %v13774 = vmul.f32 %v13504, %v13718
  %v13775 = vmul.f32 %v13505, %v13718
  %v13776 = vmul.f32 %v13506, %v13718
  %v13777 = vmul.f32 %v13507, %v13718
  %v13778 = vmul.f32 %v13508, %v13718
  %v13779 = vmul.f32 %v13509, %v13718
  %v13780 = vmul.f32 %v13510, %v13718
  %v13781 = vmul.f32 %v13511, %v13718
  %v13782 = vmul.f32 %v13512, %v13718
  %v13783 = vld [vmem:[%s6] sm:$0x1]
  %v13785 = vlaneseq
  %v13786 = vshrl.u32 %v13785, 7
  %v13787 = vsub.s32 0, %v13786
  %v13788 = vrot.slane %v13783, %v13787
  %v13790 = vadd.f32 %v13719, %v13788
  %v13791 = vadd.f32 %v13720, %v13788
  %v13792 = vadd.f32 %v13721, %v13788
  %v13793 = vadd.f32 %v13722, %v13788
  %v13794 = vadd.f32 %v13723, %v13788
  %v13795 = vadd.f32 %v13724, %v13788
  %v13796 = vadd.f32 %v13725, %v13788
  %v13797 = vadd.f32 %v13726, %v13788
  %v13798 = vadd.f32 %v13727, %v13788
  %v13799 = vadd.f32 %v13728, %v13788
  %v13800 = vadd.f32 %v13729, %v13788
  %v13801 = vadd.f32 %v13730, %v13788
  %v13802 = vadd.f32 %v13731, %v13788
  %v13803 = vadd.f32 %v13732, %v13788
  %v13804 = vadd.f32 %v13733, %v13788
  %v13805 = vadd.f32 %v13734, %v13788
  %v13806 = vadd.f32 %v13735, %v13788
  %v13807 = vadd.f32 %v13736, %v13788
  %v13808 = vadd.f32 %v13737, %v13788
  %v13809 = vadd.f32 %v13738, %v13788
  %v13810 = vadd.f32 %v13739, %v13788
  %v13811 = vadd.f32 %v13740, %v13788
  %v13812 = vadd.f32 %v13741, %v13788
  %v13813 = vadd.f32 %v13742, %v13788
  %v13814 = vadd.f32 %v13743, %v13788
  %v13815 = vadd.f32 %v13744, %v13788
  %v13816 = vadd.f32 %v13745, %v13788
  %v13817 = vadd.f32 %v13746, %v13788
  %v13818 = vadd.f32 %v13747, %v13788
  %v13819 = vadd.f32 %v13748, %v13788
  %v13820 = vadd.f32 %v13749, %v13788
  %v13821 = vadd.f32 %v13750, %v13788
  %v13822 = vadd.f32 %v13751, %v13788
  %v13823 = vadd.f32 %v13752, %v13788
  %v13824 = vadd.f32 %v13753, %v13788
  %v13825 = vadd.f32 %v13754, %v13788
  %v13826 = vadd.f32 %v13755, %v13788
  %v13827 = vadd.f32 %v13756, %v13788
  %v13828 = vadd.f32 %v13757, %v13788
  %v13829 = vadd.f32 %v13758, %v13788
  %v13830 = vadd.f32 %v13759, %v13788
  %v13831 = vadd.f32 %v13760, %v13788
  %v13832 = vadd.f32 %v13761, %v13788
  %v13833 = vadd.f32 %v13762, %v13788
  %v13834 = vadd.f32 %v13763, %v13788
  %v13835 = vadd.f32 %v13764, %v13788
  %v13836 = vadd.f32 %v13765, %v13788
  %v13837 = vadd.f32 %v13766, %v13788
  %v13838 = vadd.f32 %v13767, %v13788
  %v13839 = vadd.f32 %v13768, %v13788
  %v13840 = vadd.f32 %v13769, %v13788
  %v13841 = vadd.f32 %v13770, %v13788
  %v13842 = vadd.f32 %v13771, %v13788
  %v13843 = vadd.f32 %v13772, %v13788
  %v13844 = vadd.f32 %v13773, %v13788
  %v13845 = vadd.f32 %v13774, %v13788
  %v13846 = vadd.f32 %v13775, %v13788
  %v13847 = vadd.f32 %v13776, %v13788
  %v13848 = vadd.f32 %v13777, %v13788
  %v13849 = vadd.f32 %v13778, %v13788
  %v13850 = vadd.f32 %v13779, %v13788
  %v13851 = vadd.f32 %v13780, %v13788
  %v13852 = vadd.f32 %v13781, %v13788
  %v13853 = vadd.f32 %v13782, %v13788
  %v13854 = vmax.f32 %v13790, 0.0
  %v13855 = vmax.f32 %v13791, 0.0
  %v13856 = vmax.f32 %v13792, 0.0
  %v13857 = vmax.f32 %v13793, 0.0
  %v13858 = vmax.f32 %v13794, 0.0
  %v13859 = vmax.f32 %v13795, 0.0
  %v13860 = vmax.f32 %v13796, 0.0
  %v13861 = vmax.f32 %v13797, 0.0
  %v13862 = vmax.f32 %v13798, 0.0
  %v13863 = vmax.f32 %v13799, 0.0
  %v13864 = vmax.f32 %v13800, 0.0
  %v13865 = vmax.f32 %v13801, 0.0
  %v13866 = vmax.f32 %v13802, 0.0
  %v13867 = vmax.f32 %v13803, 0.0
  %v13868 = vmax.f32 %v13804, 0.0
  %v13869 = vmax.f32 %v13805, 0.0
  %v13870 = vmax.f32 %v13806, 0.0
  %v13871 = vmax.f32 %v13807, 0.0
  %v13872 = vmax.f32 %v13808, 0.0
  %v13873 = vmax.f32 %v13809, 0.0
  %v13874 = vmax.f32 %v13810, 0.0
  %v13875 = vmax.f32 %v13811, 0.0
  %v13876 = vmax.f32 %v13812, 0.0
  %v13877 = vmax.f32 %v13813, 0.0
  %v13878 = vmax.f32 %v13814, 0.0
  %v13879 = vmax.f32 %v13815, 0.0
  %v13880 = vmax.f32 %v13816, 0.0
  %v13881 = vmax.f32 %v13817, 0.0
  %v13882 = vmax.f32 %v13818, 0.0
  %v13883 = vmax.f32 %v13819, 0.0
  %v13884 = vmax.f32 %v13820, 0.0
  %v13885 = vmax.f32 %v13821, 0.0
  %v13886 = vmax.f32 %v13822, 0.0
  %v13887 = vmax.f32 %v13823, 0.0
  %v13888 = vmax.f32 %v13824, 0.0
  %v13889 = vmax.f32 %v13825, 0.0
  %v13890 = vmax.f32 %v13826, 0.0
  %v13891 = vmax.f32 %v13827, 0.0
  %v13892 = vmax.f32 %v13828, 0.0
  %v13893 = vmax.f32 %v13829, 0.0
  %v13894 = vmax.f32 %v13830, 0.0
  %v13895 = vmax.f32 %v13831, 0.0
  %v13896 = vmax.f32 %v13832, 0.0
  %v13897 = vmax.f32 %v13833, 0.0
  %v13898 = vmax.f32 %v13834, 0.0
  %v13899 = vmax.f32 %v13835, 0.0
  %v13900 = vmax.f32 %v13836, 0.0
  %v13901 = vmax.f32 %v13837, 0.0
  %v13902 = vmax.f32 %v13838, 0.0
  %v13903 = vmax.f32 %v13839, 0.0
  %v13904 = vmax.f32 %v13840, 0.0
  %v13905 = vmax.f32 %v13841, 0.0
  %v13906 = vmax.f32 %v13842, 0.0
  %v13907 = vmax.f32 %v13843, 0.0
  %v13908 = vmax.f32 %v13844, 0.0
  %v13909 = vmax.f32 %v13845, 0.0
  %v13910 = vmax.f32 %v13846, 0.0
  %v13911 = vmax.f32 %v13847, 0.0
  %v13912 = vmax.f32 %v13848, 0.0
  %v13913 = vmax.f32 %v13849, 0.0
  %v13914 = vmax.f32 %v13850, 0.0
  %v13915 = vmax.f32 %v13851, 0.0
  %v13916 = vmax.f32 %v13852, 0.0
  %v13917 = vmax.f32 %v13853, 0.0
  %13918 = vst.msk [vmem:[%s7] sm:$0xff] %vm6561, %v13854
  %13919 = vst.msk [vmem:[%s7 + $0x8] sm:$0xff] %vm6561, %v13855
  %13920 = vst.msk [vmem:[%s7 + $0x10] sm:$0xff] %vm6561, %v13856
  %13921 = vst.msk [vmem:[%s7 + $0x18] sm:$0xff] %vm6561, %v13857
  %13922 = vst.msk [vmem:[%s7 + $0x20] sm:$0xff] %vm6561, %v13858
  %13923 = vst.msk [vmem:[%s7 + $0x28] sm:$0xff] %vm6561, %v13859
  %13924 = vst.msk [vmem:[%s7 + $0x30] sm:$0xff] %vm6561, %v13860
  %13925 = vst.msk [vmem:[%s7 + $0x38] sm:$0xff] %vm6561, %v13861
  %13926 = vst.msk [vmem:[%s7 + $0x40] sm:$0xff] %vm6561, %v13862
  %13927 = vst.msk [vmem:[%s7 + $0x48] sm:$0xff] %vm6561, %v13863
  %13928 = vst.msk [vmem:[%s7 + $0x50] sm:$0xff] %vm6561, %v13864
  %13929 = vst.msk [vmem:[%s7 + $0x58] sm:$0xff] %vm6561, %v13865
  %13930 = vst.msk [vmem:[%s7 + $0x60] sm:$0xff] %vm6561, %v13866
  %13931 = vst.msk [vmem:[%s7 + $0x68] sm:$0xff] %vm6561, %v13867
  %13932 = vst.msk [vmem:[%s7 + $0x70] sm:$0xff] %vm6561, %v13868
  %13933 = vst.msk [vmem:[%s7 + $0x78] sm:$0xff] %vm6561, %v13869
  %13934 = vst.msk [vmem:[%s7 + $0x80] sm:$0xff] %vm6561, %v13870
  %13935 = vst.msk [vmem:[%s7 + $0x88] sm:$0xff] %vm6561, %v13871
  %13936 = vst.msk [vmem:[%s7 + $0x90] sm:$0xff] %vm6561, %v13872
  %13937 = vst.msk [vmem:[%s7 + $0x98] sm:$0xff] %vm6561, %v13873
  %13938 = vst.msk [vmem:[%s7 + $0xa0] sm:$0xff] %vm6561, %v13874
  %13939 = vst.msk [vmem:[%s7 + $0xa8] sm:$0xff] %vm6561, %v13875
  %13940 = vst.msk [vmem:[%s7 + $0xb0] sm:$0xff] %vm6561, %v13876
  %13941 = vst.msk [vmem:[%s7 + $0xb8] sm:$0xff] %vm6561, %v13877
  %13942 = vst.msk [vmem:[%s7 + $0xc0] sm:$0xff] %vm6561, %v13878
  %13943 = vst.msk [vmem:[%s7 + $0xc8] sm:$0xff] %vm6561, %v13879
  %13944 = vst.msk [vmem:[%s7 + $0xd0] sm:$0xff] %vm6561, %v13880
  %13945 = vst.msk [vmem:[%s7 + $0xd8] sm:$0xff] %vm6561, %v13881
  %13946 = vst.msk [vmem:[%s7 + $0xe0] sm:$0xff] %vm6561, %v13882
  %13947 = vst.msk [vmem:[%s7 + $0xe8] sm:$0xff] %vm6561, %v13883
  %13948 = vst.msk [vmem:[%s7 + $0xf0] sm:$0xff] %vm6561, %v13884
  %13949 = vst.msk [vmem:[%s7 + $0xf8] sm:$0xff] %vm6561, %v13885
  %13950 = vst.msk [vmem:[%s7 + $0x100] sm:$0xff] %vm6561, %v13886
  %13951 = vst.msk [vmem:[%s7 + $0x108] sm:$0xff] %vm6561, %v13887
  %13952 = vst.msk [vmem:[%s7 + $0x110] sm:$0xff] %vm6561, %v13888
  %13953 = vst.msk [vmem:[%s7 + $0x118] sm:$0xff] %vm6561, %v13889
  %13954 = vst.msk [vmem:[%s7 + $0x120] sm:$0xff] %vm6561, %v13890
  %13955 = vst.msk [vmem:[%s7 + $0x128] sm:$0xff] %vm6561, %v13891
  %13956 = vst.msk [vmem:[%s7 + $0x130] sm:$0xff] %vm6561, %v13892
  %13957 = vst.msk [vmem:[%s7 + $0x138] sm:$0xff] %vm6561, %v13893
  %13958 = vst.msk [vmem:[%s7 + $0x140] sm:$0xff] %vm6561, %v13894
  %13959 = vst.msk [vmem:[%s7 + $0x148] sm:$0xff] %vm6561, %v13895
  %13960 = vst.msk [vmem:[%s7 + $0x150] sm:$0xff] %vm6561, %v13896
  %13961 = vst.msk [vmem:[%s7 + $0x158] sm:$0xff] %vm6561, %v13897
  %13962 = vst.msk [vmem:[%s7 + $0x160] sm:$0xff] %vm6561, %v13898
  %13963 = vst.msk [vmem:[%s7 + $0x168] sm:$0xff] %vm6561, %v13899
  %13964 = vst.msk [vmem:[%s7 + $0x170] sm:$0xff] %vm6561, %v13900
  %13965 = vst.msk [vmem:[%s7 + $0x178] sm:$0xff] %vm6561, %v13901
  %13966 = vst.msk [vmem:[%s7 + $0x180] sm:$0xff] %vm6561, %v13902
  %13967 = vst.msk [vmem:[%s7 + $0x188] sm:$0xff] %vm6561, %v13903
  %13968 = vst.msk [vmem:[%s7 + $0x190] sm:$0xff] %vm6561, %v13904
  %13969 = vst.msk [vmem:[%s7 + $0x198] sm:$0xff] %vm6561, %v13905
  %13970 = vst.msk [vmem:[%s7 + $0x1a0] sm:$0xff] %vm6561, %v13906
  %13971 = vst.msk [vmem:[%s7 + $0x1a8] sm:$0xff] %vm6561, %v13907
  %13972 = vst.msk [vmem:[%s7 + $0x1b0] sm:$0xff] %vm6561, %v13908
  %13973 = vst.msk [vmem:[%s7 + $0x1b8] sm:$0xff] %vm6561, %v13909
  %13974 = vst.msk [vmem:[%s7 + $0x1c0] sm:$0xff] %vm6561, %v13910
  %13975 = vst.msk [vmem:[%s7 + $0x1c8] sm:$0xff] %vm6561, %v13911
  %13976 = vst.msk [vmem:[%s7 + $0x1d0] sm:$0xff] %vm6561, %v13912
  %13977 = vst.msk [vmem:[%s7 + $0x1d8] sm:$0xff] %vm6561, %v13913
  %13978 = vst.msk [vmem:[%s7 + $0x1e0] sm:$0xff] %vm6561, %v13914
  %13979 = vst.msk [vmem:[%s7 + $0x1e8] sm:$0xff] %vm6561, %v13915
  %13980 = vst.msk [vmem:[%s7 + $0x1f0] sm:$0xff] %vm6561, %v13916
  %13981 = vst.msk [vmem:[%s7 + $0x1f8] sm:$0xff] %vm6561, %v13917
  // Predicated region
  $region30: #{tpu_custom_call.1} parent=0 // pred_check
    _
  $region31: #{tpu_custom_call.1} parent=0 // pred_check_branch
    %13983 = sbr.rel (0) target = $region33
  $region32: #{tpu_custom_call.1} parent=0 // pred_region
    _
  $region33: #{tpu_custom_call.1} parent=0 // pred_fallthru
    _
  // Predicated region
  $region34: #{tpu_custom_call.1} parent=0 // pred_check
    _
  $region35: #{tpu_custom_call.1} parent=0 // pred_check_branch
    %13985 = sbr.rel (0) target = $region37
  $region36: #{tpu_custom_call.1} parent=0 // pred_region
    _
  $region37: #{tpu_custom_call.1} parent=0 // pred_fallthru
    _

</llo_original>
